<compile_context>
chip_gen: v6e
topology: v6e:2x2x1
jax: 0.10.0
libtpu: 0.0.40
codegen_flags: <defaults>
</compile_context>

<pallas_src>
import functools
from itertools import combinations

import numpy as np
import jax
import jax.numpy as jnp
from jax.experimental import pallas as pl
from jax.experimental.pallas import tpu as pltpu


def _round_up(x, m):
    return (x + m - 1) // m * m


NODE_DIM = 128
FACTOR_DIM = 128
EDGE_DIM = 16
HIDDEN_DIMS = [64 * 2, 64 * 2, 128 * 2, 128 * 2, 256 * 2, 256 * 2,
               128 * 2, 128 * 2, 64 * 2, 64 * 2, NODE_DIM]
N_LAYERS = len(HIDDEN_DIMS)
WEIGHT_DTYPE = jnp.bfloat16

# Per-layer input widths.
_C_IN = []
_c = NODE_DIM
for _co in HIDDEN_DIMS:
    _C_IN.append(_c)
    _c = _co

# ---- packed weight-slab layout (bf16, lane-padded to 512) ----
# chunk 0            : edge_fc weight split [wfc_a ; wfc_b]   (256 rows)
# chunk 1 + l        : fgnn layer l          [W_l ; We_l]     (c_in + 16 rows)
# every chunk row count / offset is a multiple of 16 -> bf16 (16,128) aligned.
W_LANES = max(HIDDEN_DIMS)                                  # 512
CHUNK_ROWS = [2 * NODE_DIM] + [c_in + EDGE_DIM for c_in in _C_IN]
CHUNK_OFFS = [0]
for _r in CHUNK_ROWS[:-1]:
    CHUNK_OFFS.append(CHUNK_OFFS[-1] + _r)
W_ROWS = sum(CHUNK_ROWS)                                    # 3120
MAX_CHUNK = max(CHUNK_ROWS)                                 # 528
N_CHUNKS = len(CHUNK_ROWS)                                  # 12
NBUF = 3                                                    # weight-stream depth

# ---- packed bias-slab layout (f32, lane-padded to 512) ----
# row 0: edge_fc bias; rows 1+2l / 2+2l: b_l / be_l.
BIAS_ROWS = 1 + 2 * N_LAYERS
BIAS_ROWS_PAD = _round_up(BIAS_ROWS, 8)


# ------------------------------ graph helpers ------------------------------

@functools.lru_cache(maxsize=100)
def get_graph(n):
    # Exact reproduction of MotionFgnn.get_graph (rectangular only for n<=3,
    # just like torch.tensor(g) in the original).
    assert n > 1
    cn2 = n * (n - 1) // 2
    g = [[] for _ in range(n + cn2)]
    for i, (u, v) in enumerate(combinations(range(n), 2)):
        g[i + n].extend([u, v])
        g[u].append(i + n)
        g[v].append(i + n)
    for l in g:
        while len(l) < 2:
            l.append(l[-1])
    return tuple(tuple(l) for l in g)


@functools.lru_cache(maxsize=100)
def _graph_const(n):
    """Trace-time numpy constant [48, 8] f32.

    rows  0:16  AA   = [A ; A]      nff duplicated over both neighbor slots
    rows 16:32  S01A = S01 @ A      neighbor features directly from x (folded)
    rows 32:48  S01  = [S0 ; S1]    per-layer neighbor gather selector
    Padded rows are all-zero so padded entities never leak into valid rows.
    """
    cn2 = n * (n - 1) // 2
    E = n + cn2
    E_pad = _round_up(E, 8)
    n_pad = _round_up(n, 8)
    assert E_pad == n_pad == 8          # holds for the supported 2 <= n <= 3
    graph = get_graph(n)

    A = np.zeros((E_pad, n_pad), np.float32)
    for i in range(n):
        A[i, i] = 1.0
    for k, (u, v) in enumerate(combinations(range(n), 2)):
        A[n + k, u] = 0.5
        A[n + k, v] = 0.5

    S0 = np.zeros((E_pad, E_pad), np.float32)
    S1 = np.zeros((E_pad, E_pad), np.float32)
    for i in range(E):
        S0[i, graph[i][0]] = 1.0
        S1[i, graph[i][1]] = 1.0
    S01 = np.vstack([S0, S1])
    G = np.vstack([np.vstack([A, A]), S01 @ A, S01]).astype(np.float32)
    return G


# ------------------------------ parameters ------------------------------

def _kaiming(key, shape, dtype):
    fan_in = shape[0]
    w = jax.random.normal(key, shape, jnp.float32) * jnp.sqrt(2.0 / fan_in)
    return w.astype(dtype)


def init_params(key):
    keys = jax.random.split(key, 2 + 2 * N_LAYERS)
    params = {
        "edge_fc_w": _kaiming(keys[0], (2 * NODE_DIM, EDGE_DIM), WEIGHT_DTYPE),
        "edge_fc_b": jnp.zeros((1, EDGE_DIM), jnp.float32),
        "fgnn": [],
    }
    c_in = NODE_DIM
    for i, c_out in enumerate(HIDDEN_DIMS):
        params["fgnn"].append({
            "w": _kaiming(keys[2 + 2 * i], (c_in, c_out), WEIGHT_DTYPE),
            "b": jnp.zeros((1, c_out), jnp.float32),
            "we": _kaiming(keys[3 + 2 * i], (EDGE_DIM, c_out), WEIGHT_DTYPE),
            "be": jnp.zeros((1, c_out), jnp.float32),
        })
        c_in = c_out
    return params


def pack_params(params):
    """Pack all weights/biases into two flat HBM buffers (done once, host side)."""
    lane_pad = lambda a: jnp.pad(a, ((0, 0), (0, W_LANES - a.shape[1])))
    wrows = [lane_pad(params["edge_fc_w"])]
    brows = [lane_pad(params["edge_fc_b"])]
    for layer in params["fgnn"]:
        wrows.append(lane_pad(layer["w"]))
        wrows.append(lane_pad(layer["we"]))
        brows.append(lane_pad(layer["b"]))
        brows.append(lane_pad(layer["be"]))
    wbuf = jnp.concatenate(wrows, axis=0).astype(WEIGHT_DTYPE)
    bbuf = jnp.concatenate(brows, axis=0).astype(jnp.float32)
    bbuf = jnp.pad(bbuf, ((0, BIAS_ROWS_PAD - bbuf.shape[0]), (0, 0)))
    assert wbuf.shape == (W_ROWS, W_LANES)
    return {"wbuf": wbuf, "bbuf": bbuf}


# ----------------------------- fused Pallas kernel -----------------------------

def _fused_forward_kernel(x_ref, g_ref, b_ref, w_hbm, o_ref, wvmem, sem):
    f32 = jnp.float32
    bf16 = WEIGHT_DTYPE

    # --- stream packed weight chunks HBM -> VMEM (NBUF-deep ring), overlapped
    # with compute of the previous layer.  All offsets/extents are static.
    def start_chunk(ci):
        slot = ci % NBUF
        off = CHUNK_OFFS[ci]
        rows = CHUNK_ROWS[ci]
        cp = pltpu.make_async_copy(w_hbm.at[off:off + rows, :],
                                   wvmem.at[slot, 0:rows, :],
                                   sem.at[slot])
        cp.start()
        return cp

    copies = [start_chunk(ci) for ci in range(min(NBUF, N_CHUNKS))]

    # --- graph-structure matmuls (f32; graph constants folded at trace time):
    #   gx[0:16]  = [nff ; nff]   node feats + pair-mean factor feats (x2)
    #   gx[16:32] = [nb0 ; nb1]   neighbor features nff[graph[:, k]]
    gx = jnp.dot(g_ref[0:32, :], x_ref[...], preferred_element_type=f32)
    nff = gx[0:8, :]
    s01 = g_ref[32:48, :]                                     # [16, 8] selector

    # --- edge_fc on both neighbor slots at once (chunk 0 = split fc weight);
    # split-weight matmuls avoid the lane-axis concat; result never leaves VMEM.
    copies[0].wait()
    wfc_a = wvmem[0, 0:NODE_DIM, 0:EDGE_DIM]
    wfc_b = wvmem[0, NODE_DIM:2 * NODE_DIM, 0:EDGE_DIM]
    e_pre = (jnp.dot(gx[0:16, :].astype(bf16), wfc_a, preferred_element_type=f32)
             + jnp.dot(gx[16:32, :].astype(bf16), wfc_b, preferred_element_type=f32)
             + b_ref[0:1, 0:EDGE_DIM])
    edge01 = jnp.maximum(e_pre, 0.0).astype(bf16)             # [16, 16], all layers

    # --- factor_mpnn stack, fully unrolled.  Per layer (both neighbor slots
    # stacked, split at the free 8-aligned sublane boundary):
    #   hp = relu(h @ W + b)              g = relu(edge01 @ We + be)
    #   m  = S01 @ hp  (exact f32 gather) h = hp + max(g*m[:8], g*m[8:])
    h = nff
    c_in = NODE_DIM
    for l in range(N_LAYERS):
        c_out = HIDDEN_DIMS[l]
        ci = l + 1
        slot = ci % NBUF
        copies[ci].wait()
        if ci + NBUF - 1 < N_CHUNKS:                          # keep the ring full
            copies.append(start_chunk(ci + NBUF - 1))

        w = wvmem[slot, 0:c_in, 0:c_out]                      # bf16, MXU-native
        we = wvmem[slot, c_in:c_in + EDGE_DIM, 0:c_out]
        b = b_ref[1 + 2 * l:2 + 2 * l, 0:c_out]
        be = b_ref[2 + 2 * l:3 + 2 * l, 0:c_out]

        hp = jnp.maximum(
            jnp.dot(h.astype(bf16), w, preferred_element_type=f32) + b, 0.0)
        g = jnp.maximum(
            jnp.dot(edge01, we, preferred_element_type=f32) + be, 0.0)   # [16,c]
        m = jnp.dot(s01, hp, preferred_element_type=f32)                 # [16,c]
        gm = g * m
        h = hp + jnp.maximum(gm[0:8, :], gm[8:16, :])
        c_in = c_out

    # Full (8,128)-aligned, unmasked store; valid rows sliced in the wrapper.
    o_ref[...] = h


# ------------------------------ forward ------------------------------

def motion_fgnn_forward(packed, node_feats):
    """node_feats: [n, NODE_DIM] float32 -> [n, NODE_DIM] float32."""
    n, d = node_feats.shape
    assert d == NODE_DIM
    # get_graph (and torch.tensor(...) on it in the original) is only
    # rectangular for n <= 3; reject larger n instead of silently mis-building.
    assert 1 < n <= 3, "MotionFgnn.get_graph is only well-formed for 2 <= n <= 3"

    G = jnp.asarray(_graph_const(n))                 # [48, 8] trace-time constant
    n_pad = 8
    x_pad = jnp.pad(node_feats.astype(jnp.float32), ((0, n_pad - n), (0, 0)))

    wbuf = packed["wbuf"]
    bbuf = packed["bbuf"]

    # Advisory cost model; explicit VMEM budget (resident: 3-slot weight ring
    # ~1.6 MiB + biases/graph/io ~0.2 MiB, rest is headroom for temporaries —
    # fits v7x's smaller 64 MiB VMEM with room to spare).
    flops = 2 * 32 * 8 * NODE_DIM + 2 * 2 * 16 * NODE_DIM * EDGE_DIM
    c_in = NODE_DIM
    for c_out in HIDDEN_DIMS:
        flops += 2 * 8 * c_in * c_out                # h @ W
        flops += 2 * 16 * EDGE_DIM * c_out           # edge gates
        flops += 2 * 16 * 8 * c_out                  # neighbor gather
        c_in = c_out
    bytes_accessed = (wbuf.size * wbuf.dtype.itemsize
                      + bbuf.size * bbuf.dtype.itemsize
                      + G.size * 4 + x_pad.size * 4 + 8 * NODE_DIM * 4)

    vmem = pltpu.MemorySpace.VMEM
    out = pl.pallas_call(
        _fused_forward_kernel,
        out_shape=jax.ShapeDtypeStruct((8, NODE_DIM), jnp.float32),
        in_specs=[pl.BlockSpec(memory_space=vmem),        # x_pad      [8,128] f32
                  pl.BlockSpec(memory_space=vmem),        # graph mats [48,8]  f32
                  pl.BlockSpec(memory_space=vmem),        # biases     [24,512] f32
                  pl.BlockSpec(memory_space=pl.ANY)],     # weights    [3120,512] bf16 (HBM)
        out_specs=pl.BlockSpec(memory_space=vmem),
        scratch_shapes=[pltpu.VMEM((NBUF, MAX_CHUNK, W_LANES), WEIGHT_DTYPE),
                        pltpu.SemaphoreType.DMA((NBUF,))],
        compiler_params=pltpu.CompilerParams(
            vmem_limit_bytes=24 * 1024 * 1024),
        cost_estimate=pl.CostEstimate(flops=int(flops), transcendentals=0,
                                      bytes_accessed=int(bytes_accessed)),
    )(x_pad, G, bbuf, wbuf)

    # fgnn returns node features only -> rows 0..n-1 (sliced outside the kernel
    # so the kernel store stays a full unmasked tile).
    return out[:n]


motion_fgnn = jax.jit(motion_fgnn_forward)


# --------------------- pure-JAX reference (same dtype policy) ---------------------

def reference_forward(params, node_feats):
    """Mirror of the kernel math (bf16 MXU inputs, f32 accumulation), pure jnp."""
    f32, bf16 = jnp.float32, WEIGHT_DTYPE
    n = node_feats.shape[0]
    graph = np.asarray(get_graph(n), np.int32)
    pairs = np.asarray(list(combinations(range(n), 2)), np.int32)

    x = node_feats.astype(f32)
    ff = 0.5 * (x[pairs[:, 0]] + x[pairs[:, 1]])
    nff = jnp.concatenate([x, ff], axis=0)

    def fc(a, w, b):
        return jnp.maximum(
            jnp.dot(a.astype(bf16), w, preferred_element_type=f32) + b, 0.0)

    e0 = fc(jnp.concatenate([nff, nff[graph[:, 0]]], axis=-1),
            params["edge_fc_w"], params["edge_fc_b"])
    e1 = fc(jnp.concatenate([nff, nff[graph[:, 1]]], axis=-1),
            params["edge_fc_w"], params["edge_fc_b"])

    h = nff
    for layer in params["fgnn"]:
        hp = fc(h, layer["w"], layer["b"])
        g0 = fc(e0, layer["we"], layer["be"])
        g1 = fc(e1, layer["we"], layer["be"])
        h = hp + jnp.maximum(g0 * hp[graph[:, 0]], g1 * hp[graph[:, 1]])
    return h[:n]


# ------------------------------ main ------------------------------

if __name__ == "__main__":
    key = jax.random.PRNGKey(0)
    pkey, xkey = jax.random.split(key)

    params = init_params(pkey)
    packed = pack_params(params)              # two flat HBM buffers, packed once

    # n = 3 nodes (get_graph is rectangular only for n <= 3), node_dim = 128.
    n = 3
    node_feats = jax.random.normal(xkey, (n, NODE_DIM), jnp.float32)

    out = motion_fgnn(packed, node_feats)
    out = jax.block_until_ready(out)

    assert out.shape == (n, NODE_DIM)
    assert bool(jnp.all(jnp.isfinite(out)))

    ref = reference_forward(params, node_feats)
    err = float(jnp.max(jnp.abs(out - ref)))
    tol = 1e-2 + 1e-2 * float(jnp.max(jnp.abs(ref)))
    assert err <= tol, f"kernel vs reference mismatch: {err} > {tol}"

    print("KERNEL_OK")
</pallas_src>

<mosaic_0001>
module attributes {stable_mosaic.version = 11 : i64} {
  func.func @_fused_forward_kernel(%arg0: memref<8x128xf32, #tpu.memory_space<vmem>>, %arg1: memref<48x8xf32, #tpu.memory_space<vmem>>, %arg2: memref<24x512xf32, #tpu.memory_space<vmem>>, %arg3: memref<3120x512xbf16, #tpu.memory_space<any>>, %arg4: memref<8x128xf32, #tpu.memory_space<vmem>>, %arg5: memref<3x528x512xbf16, #tpu.memory_space<vmem>>, %arg6: memref<3x!tpu.dma_semaphore, #tpu.memory_space<semaphore_mem>>) attributes {dimension_semantics = [], scalar_prefetch = 0 : i64, scratch_operands = 2 : i64, tpu.core_type = #tpu.core_type<tc>} {
    %c0_i32 = arith.constant 0 : i32
    %c0_i32_0 = arith.constant 0 : i32
    %c0_i32_1 = arith.constant 0 : i32
    %c0_i32_2 = arith.constant 0 : i32
    %0 = tpu.memref_slice %arg3[%c0_i32_1, %c0_i32_2] : memref<3120x512xbf16, #tpu.memory_space<any>> -> memref<256x512xbf16, #tpu.memory_space<any>>
    %c0_i32_3 = arith.constant 0 : i32
    %c0_i32_4 = arith.constant 0 : i32
    %1 = tpu.memref_slice %arg5[%c0_i32, %c0_i32_3, %c0_i32_4] : memref<3x528x512xbf16, #tpu.memory_space<vmem>> -> memref<1x256x512xbf16, #tpu.memory_space<vmem>>
    %2 = tpu.memref_squeeze %1 : memref<1x256x512xbf16, #tpu.memory_space<vmem>> -> memref<256x512xbf16, #tpu.memory_space<vmem>>
    %3 = tpu.memref_slice %arg6[%c0_i32_0] : memref<3x!tpu.dma_semaphore, #tpu.memory_space<semaphore_mem>> -> memref<1x!tpu.dma_semaphore, #tpu.memory_space<semaphore_mem>>
    %4 = tpu.memref_squeeze %3 : memref<1x!tpu.dma_semaphore, #tpu.memory_space<semaphore_mem>> -> memref<!tpu.dma_semaphore, #tpu.memory_space<semaphore_mem>>
    tpu.enqueue_dma source(%0 : memref<256x512xbf16, #tpu.memory_space<any>>) target(%2 : memref<256x512xbf16, #tpu.memory_space<vmem>>) target_semaphore(%4 : memref<!tpu.dma_semaphore, #tpu.memory_space<semaphore_mem>>)
    %c1_i32 = arith.constant 1 : i32
    %c1_i32_5 = arith.constant 1 : i32
    %c256_i32 = arith.constant 256 : i32
    %c0_i32_6 = arith.constant 0 : i32
    %5 = tpu.memref_slice %arg3[%c256_i32, %c0_i32_6] : memref<3120x512xbf16, #tpu.memory_space<any>> -> memref<144x512xbf16, #tpu.memory_space<any>>
    %c0_i32_7 = arith.constant 0 : i32
    %c0_i32_8 = arith.constant 0 : i32
    %6 = tpu.memref_slice %arg5[%c1_i32, %c0_i32_7, %c0_i32_8] : memref<3x528x512xbf16, #tpu.memory_space<vmem>> -> memref<1x144x512xbf16, #tpu.memory_space<vmem>>
    %7 = tpu.memref_squeeze %6 : memref<1x144x512xbf16, #tpu.memory_space<vmem>> -> memref<144x512xbf16, #tpu.memory_space<vmem>>
    %8 = tpu.memref_slice %arg6[%c1_i32_5] : memref<3x!tpu.dma_semaphore, #tpu.memory_space<semaphore_mem>> -> memref<1x!tpu.dma_semaphore, #tpu.memory_space<semaphore_mem>>
    %9 = tpu.memref_squeeze %8 : memref<1x!tpu.dma_semaphore, #tpu.memory_space<semaphore_mem>> -> memref<!tpu.dma_semaphore, #tpu.memory_space<semaphore_mem>>
    tpu.enqueue_dma source(%5 : memref<144x512xbf16, #tpu.memory_space<any>>) target(%7 : memref<144x512xbf16, #tpu.memory_space<vmem>>) target_semaphore(%9 : memref<!tpu.dma_semaphore, #tpu.memory_space<semaphore_mem>>)
    %c2_i32 = arith.constant 2 : i32
    %c2_i32_9 = arith.constant 2 : i32
    %c400_i32 = arith.constant 400 : i32
    %c0_i32_10 = arith.constant 0 : i32
    %10 = tpu.memref_slice %arg3[%c400_i32, %c0_i32_10] : memref<3120x512xbf16, #tpu.memory_space<any>> -> memref<144x512xbf16, #tpu.memory_space<any>>
    %c0_i32_11 = arith.constant 0 : i32
    %c0_i32_12 = arith.constant 0 : i32
    %11 = tpu.memref_slice %arg5[%c2_i32, %c0_i32_11, %c0_i32_12] : memref<3x528x512xbf16, #tpu.memory_space<vmem>> -> memref<1x144x512xbf16, #tpu.memory_space<vmem>>
    %12 = tpu.memref_squeeze %11 : memref<1x144x512xbf16, #tpu.memory_space<vmem>> -> memref<144x512xbf16, #tpu.memory_space<vmem>>
    %13 = tpu.memref_slice %arg6[%c2_i32_9] : memref<3x!tpu.dma_semaphore, #tpu.memory_space<semaphore_mem>> -> memref<1x!tpu.dma_semaphore, #tpu.memory_space<semaphore_mem>>
    %14 = tpu.memref_squeeze %13 : memref<1x!tpu.dma_semaphore, #tpu.memory_space<semaphore_mem>> -> memref<!tpu.dma_semaphore, #tpu.memory_space<semaphore_mem>>
    tpu.enqueue_dma source(%10 : memref<144x512xbf16, #tpu.memory_space<any>>) target(%12 : memref<144x512xbf16, #tpu.memory_space<vmem>>) target_semaphore(%14 : memref<!tpu.dma_semaphore, #tpu.memory_space<semaphore_mem>>)
    %c0 = arith.constant 0 : index
    %c0_13 = arith.constant 0 : index
    %15 = vector.load %arg1[%c0, %c0_13] : memref<48x8xf32, #tpu.memory_space<vmem>>, vector<32x8xf32>
    %c0_14 = arith.constant 0 : index
    %c0_15 = arith.constant 0 : index
    %16 = vector.load %arg0[%c0_14, %c0_15] : memref<8x128xf32, #tpu.memory_space<vmem>>, vector<8x128xf32>
    %cst = arith.constant dense<0.000000e+00> : vector<32x128xf32>
    %17 = tpu.matmul %15, %16, %cst {dimension_numbers = #tpu.dot_dimension_numbers<[1], [0], [0], [1], [0, 0, 1, 1], [], []>} : vector<32x8xf32>, vector<8x128xf32>, vector<32x128xf32> -> vector<32x128xf32>
    %18 = vector.extract_strided_slice %17 {offsets = [0, 0], sizes = [8, 128], strides = [1, 1]} : vector<32x128xf32> to vector<8x128xf32>
    %c32 = arith.constant 32 : index
    %c0_16 = arith.constant 0 : index
    %19 = vector.load %arg1[%c32, %c0_16] : memref<48x8xf32, #tpu.memory_space<vmem>>, vector<16x8xf32>
    %c0_i32_17 = arith.constant 0 : i32
    %c0_i32_18 = arith.constant 0 : i32
    %c0_i32_19 = arith.constant 0 : i32
    %c0_i32_20 = arith.constant 0 : i32
    %20 = tpu.memref_slice %arg3[%c0_i32_19, %c0_i32_20] : memref<3120x512xbf16, #tpu.memory_space<any>> -> memref<256x512xbf16, #tpu.memory_space<any>>
    %c0_i32_21 = arith.constant 0 : i32
    %c0_i32_22 = arith.constant 0 : i32
    %21 = tpu.memref_slice %arg5[%c0_i32_17, %c0_i32_21, %c0_i32_22] : memref<3x528x512xbf16, #tpu.memory_space<vmem>> -> memref<1x256x512xbf16, #tpu.memory_space<vmem>>
    %22 = tpu.memref_squeeze %21 : memref<1x256x512xbf16, #tpu.memory_space<vmem>> -> memref<256x512xbf16, #tpu.memory_space<vmem>>
    %23 = tpu.memref_slice %arg6[%c0_i32_18] : memref<3x!tpu.dma_semaphore, #tpu.memory_space<semaphore_mem>> -> memref<1x!tpu.dma_semaphore, #tpu.memory_space<semaphore_mem>>
    %24 = tpu.memref_squeeze %23 : memref<1x!tpu.dma_semaphore, #tpu.memory_space<semaphore_mem>> -> memref<!tpu.dma_semaphore, #tpu.memory_space<semaphore_mem>>
    tpu.wait_dma2 semaphore(%24 : memref<!tpu.dma_semaphore, #tpu.memory_space<semaphore_mem>>) src(%20 : memref<256x512xbf16, #tpu.memory_space<any>>) dst(%22 : memref<256x512xbf16, #tpu.memory_space<vmem>>)
    %c0_23 = arith.constant 0 : index
    %c0_24 = arith.constant 0 : index
    %c0_25 = arith.constant 0 : index
    %25 = vector.load %arg5[%c0_23, %c0_24, %c0_25] : memref<3x528x512xbf16, #tpu.memory_space<vmem>>, vector<1x128x16xbf16>
    %26 = vector.shape_cast %25 : vector<1x128x16xbf16> to vector<128x16xbf16>
    %c0_26 = arith.constant 0 : index
    %c128 = arith.constant 128 : index
    %c0_27 = arith.constant 0 : index
    %27 = vector.load %arg5[%c0_26, %c128, %c0_27] : memref<3x528x512xbf16, #tpu.memory_space<vmem>>, vector<1x128x16xbf16>
    %28 = vector.shape_cast %27 : vector<1x128x16xbf16> to vector<128x16xbf16>
    %29 = vector.extract_strided_slice %17 {offsets = [0, 0], sizes = [16, 128], strides = [1, 1]} : vector<32x128xf32> to vector<16x128xf32>
    %30 = arith.truncf %29 : vector<16x128xf32> to vector<16x128xbf16>
    %cst_28 = arith.constant dense<0.000000e+00> : vector<16x16xf32>
    %31 = tpu.matmul %30, %26, %cst_28 {dimension_numbers = #tpu.dot_dimension_numbers<[1], [0], [0], [1], [0, 0, 1, 1], [], []>} : vector<16x128xbf16>, vector<128x16xbf16>, vector<16x16xf32> -> vector<16x16xf32>
    %32 = vector.extract_strided_slice %17 {offsets = [16, 0], sizes = [16, 128], strides = [1, 1]} : vector<32x128xf32> to vector<16x128xf32>
    %33 = arith.truncf %32 : vector<16x128xf32> to vector<16x128xbf16>
    %cst_29 = arith.constant dense<0.000000e+00> : vector<16x16xf32>
    %34 = tpu.matmul %33, %28, %cst_29 {dimension_numbers = #tpu.dot_dimension_numbers<[1], [0], [0], [1], [0, 0, 1, 1], [], []>} : vector<16x128xbf16>, vector<128x16xbf16>, vector<16x16xf32> -> vector<16x16xf32>
    %35 = arith.addf %31, %34 : vector<16x16xf32>
    %c0_30 = arith.constant 0 : index
    %c0_31 = arith.constant 0 : index
    %36 = vector.load %arg2[%c0_30, %c0_31] : memref<24x512xf32, #tpu.memory_space<vmem>>, vector<1x16xf32>
    %37 = vector.broadcast %36 : vector<1x16xf32> to vector<16x16xf32>
    %38 = arith.addf %35, %37 : vector<16x16xf32>
    %cst_32 = arith.constant 0.000000e+00 : f32
    %39 = vector.broadcast %cst_32 : f32 to vector<16x16xf32>
    %40 = arith.maximumf %38, %39 : vector<16x16xf32>
    %41 = arith.truncf %40 : vector<16x16xf32> to vector<16x16xbf16>
    %c1_i32_33 = arith.constant 1 : i32
    %c1_i32_34 = arith.constant 1 : i32
    %c256_i32_35 = arith.constant 256 : i32
    %c0_i32_36 = arith.constant 0 : i32
    %42 = tpu.memref_slice %arg3[%c256_i32_35, %c0_i32_36] : memref<3120x512xbf16, #tpu.memory_space<any>> -> memref<144x512xbf16, #tpu.memory_space<any>>
    %c0_i32_37 = arith.constant 0 : i32
    %c0_i32_38 = arith.constant 0 : i32
    %43 = tpu.memref_slice %arg5[%c1_i32_33, %c0_i32_37, %c0_i32_38] : memref<3x528x512xbf16, #tpu.memory_space<vmem>> -> memref<1x144x512xbf16, #tpu.memory_space<vmem>>
    %44 = tpu.memref_squeeze %43 : memref<1x144x512xbf16, #tpu.memory_space<vmem>> -> memref<144x512xbf16, #tpu.memory_space<vmem>>
    %45 = tpu.memref_slice %arg6[%c1_i32_34] : memref<3x!tpu.dma_semaphore, #tpu.memory_space<semaphore_mem>> -> memref<1x!tpu.dma_semaphore, #tpu.memory_space<semaphore_mem>>
    %46 = tpu.memref_squeeze %45 : memref<1x!tpu.dma_semaphore, #tpu.memory_space<semaphore_mem>> -> memref<!tpu.dma_semaphore, #tpu.memory_space<semaphore_mem>>
    tpu.wait_dma2 semaphore(%46 : memref<!tpu.dma_semaphore, #tpu.memory_space<semaphore_mem>>) src(%42 : memref<144x512xbf16, #tpu.memory_space<any>>) dst(%44 : memref<144x512xbf16, #tpu.memory_space<vmem>>)
    %c0_i32_39 = arith.constant 0 : i32
    %c0_i32_40 = arith.constant 0 : i32
    %c544_i32 = arith.constant 544 : i32
    %c0_i32_41 = arith.constant 0 : i32
    %47 = tpu.memref_slice %arg3[%c544_i32, %c0_i32_41] : memref<3120x512xbf16, #tpu.memory_space<any>> -> memref<144x512xbf16, #tpu.memory_space<any>>
    %c0_i32_42 = arith.constant 0 : i32
    %c0_i32_43 = arith.constant 0 : i32
    %48 = tpu.memref_slice %arg5[%c0_i32_39, %c0_i32_42, %c0_i32_43] : memref<3x528x512xbf16, #tpu.memory_space<vmem>> -> memref<1x144x512xbf16, #tpu.memory_space<vmem>>
    %49 = tpu.memref_squeeze %48 : memref<1x144x512xbf16, #tpu.memory_space<vmem>> -> memref<144x512xbf16, #tpu.memory_space<vmem>>
    %50 = tpu.memref_slice %arg6[%c0_i32_40] : memref<3x!tpu.dma_semaphore, #tpu.memory_space<semaphore_mem>> -> memref<1x!tpu.dma_semaphore, #tpu.memory_space<semaphore_mem>>
    %51 = tpu.memref_squeeze %50 : memref<1x!tpu.dma_semaphore, #tpu.memory_space<semaphore_mem>> -> memref<!tpu.dma_semaphore, #tpu.memory_space<semaphore_mem>>
    tpu.enqueue_dma source(%47 : memref<144x512xbf16, #tpu.memory_space<any>>) target(%49 : memref<144x512xbf16, #tpu.memory_space<vmem>>) target_semaphore(%51 : memref<!tpu.dma_semaphore, #tpu.memory_space<semaphore_mem>>)
    %c1 = arith.constant 1 : index
    %c0_44 = arith.constant 0 : index
    %c0_45 = arith.constant 0 : index
    %52 = vector.load %arg5[%c1, %c0_44, %c0_45] : memref<3x528x512xbf16, #tpu.memory_space<vmem>>, vector<1x128x128xbf16>
    %53 = vector.shape_cast %52 : vector<1x128x128xbf16> to vector<128x128xbf16>
    %c1_46 = arith.constant 1 : index
    %c128_47 = arith.constant 128 : index
    %c0_48 = arith.constant 0 : index
    %54 = vector.load %arg5[%c1_46, %c128_47, %c0_48] : memref<3x528x512xbf16, #tpu.memory_space<vmem>>, vector<1x16x128xbf16>
    %55 = vector.shape_cast %54 : vector<1x16x128xbf16> to vector<16x128xbf16>
    %c1_49 = arith.constant 1 : index
    %c0_50 = arith.constant 0 : index
    %56 = vector.load %arg2[%c1_49, %c0_50] : memref<24x512xf32, #tpu.memory_space<vmem>>, vector<1x128xf32>
    %c2 = arith.constant 2 : index
    %c0_51 = arith.constant 0 : index
    %57 = vector.load %arg2[%c2, %c0_51] : memref<24x512xf32, #tpu.memory_space<vmem>>, vector<1x128xf32>
    %58 = arith.truncf %18 : vector<8x128xf32> to vector<8x128xbf16>
    %cst_52 = arith.constant dense<0.000000e+00> : vector<8x128xf32>
    %59 = tpu.matmul %58, %53, %cst_52 {dimension_numbers = #tpu.dot_dimension_numbers<[1], [0], [0], [1], [0, 0, 1, 1], [], []>} : vector<8x128xbf16>, vector<128x128xbf16>, vector<8x128xf32> -> vector<8x128xf32>
    %60 = vector.broadcast %56 : vector<1x128xf32> to vector<8x128xf32>
    %61 = arith.addf %59, %60 : vector<8x128xf32>
    %cst_53 = arith.constant 0.000000e+00 : f32
    %62 = vector.broadcast %cst_53 : f32 to vector<8x128xf32>
    %63 = arith.maximumf %61, %62 : vector<8x128xf32>
    %cst_54 = arith.constant dense<0.000000e+00> : vector<16x128xf32>
    %64 = tpu.matmul %41, %55, %cst_54 {dimension_numbers = #tpu.dot_dimension_numbers<[1], [0], [0], [1], [0, 0, 1, 1], [], []>} : vector<16x16xbf16>, vector<16x128xbf16>, vector<16x128xf32> -> vector<16x128xf32>
    %65 = vector.broadcast %57 : vector<1x128xf32> to vector<16x128xf32>
    %66 = arith.addf %64, %65 : vector<16x128xf32>
    %cst_55 = arith.constant 0.000000e+00 : f32
    %67 = vector.broadcast %cst_55 : f32 to vector<16x128xf32>
    %68 = arith.maximumf %66, %67 : vector<16x128xf32>
    %cst_56 = arith.constant dense<0.000000e+00> : vector<16x128xf32>
    %69 = tpu.matmul %19, %63, %cst_56 {dimension_numbers = #tpu.dot_dimension_numbers<[1], [0], [0], [1], [0, 0, 1, 1], [], []>} : vector<16x8xf32>, vector<8x128xf32>, vector<16x128xf32> -> vector<16x128xf32>
    %70 = arith.mulf %68, %69 : vector<16x128xf32>
    %71 = vector.extract_strided_slice %70 {offsets = [0, 0], sizes = [8, 128], strides = [1, 1]} : vector<16x128xf32> to vector<8x128xf32>
    %72 = vector.extract_strided_slice %70 {offsets = [8, 0], sizes = [8, 128], strides = [1, 1]} : vector<16x128xf32> to vector<8x128xf32>
    %73 = arith.maximumf %71, %72 : vector<8x128xf32>
    %74 = arith.addf %63, %73 : vector<8x128xf32>
    %c2_i32_57 = arith.constant 2 : i32
    %c2_i32_58 = arith.constant 2 : i32
    %c400_i32_59 = arith.constant 400 : i32
    %c0_i32_60 = arith.constant 0 : i32
    %75 = tpu.memref_slice %arg3[%c400_i32_59, %c0_i32_60] : memref<3120x512xbf16, #tpu.memory_space<any>> -> memref<144x512xbf16, #tpu.memory_space<any>>
    %c0_i32_61 = arith.constant 0 : i32
    %c0_i32_62 = arith.constant 0 : i32
    %76 = tpu.memref_slice %arg5[%c2_i32_57, %c0_i32_61, %c0_i32_62] : memref<3x528x512xbf16, #tpu.memory_space<vmem>> -> memref<1x144x512xbf16, #tpu.memory_space<vmem>>
    %77 = tpu.memref_squeeze %76 : memref<1x144x512xbf16, #tpu.memory_space<vmem>> -> memref<144x512xbf16, #tpu.memory_space<vmem>>
    %78 = tpu.memref_slice %arg6[%c2_i32_58] : memref<3x!tpu.dma_semaphore, #tpu.memory_space<semaphore_mem>> -> memref<1x!tpu.dma_semaphore, #tpu.memory_space<semaphore_mem>>
    %79 = tpu.memref_squeeze %78 : memref<1x!tpu.dma_semaphore, #tpu.memory_space<semaphore_mem>> -> memref<!tpu.dma_semaphore, #tpu.memory_space<semaphore_mem>>
    tpu.wait_dma2 semaphore(%79 : memref<!tpu.dma_semaphore, #tpu.memory_space<semaphore_mem>>) src(%75 : memref<144x512xbf16, #tpu.memory_space<any>>) dst(%77 : memref<144x512xbf16, #tpu.memory_space<vmem>>)
    %c1_i32_63 = arith.constant 1 : i32
    %c1_i32_64 = arith.constant 1 : i32
    %c688_i32 = arith.constant 688 : i32
    %c0_i32_65 = arith.constant 0 : i32
    %80 = tpu.memref_slice %arg3[%c688_i32, %c0_i32_65] : memref<3120x512xbf16, #tpu.memory_space<any>> -> memref<272x512xbf16, #tpu.memory_space<any>>
    %c0_i32_66 = arith.constant 0 : i32
    %c0_i32_67 = arith.constant 0 : i32
    %81 = tpu.memref_slice %arg5[%c1_i32_63, %c0_i32_66, %c0_i32_67] : memref<3x528x512xbf16, #tpu.memory_space<vmem>> -> memref<1x272x512xbf16, #tpu.memory_space<vmem>>
    %82 = tpu.memref_squeeze %81 : memref<1x272x512xbf16, #tpu.memory_space<vmem>> -> memref<272x512xbf16, #tpu.memory_space<vmem>>
    %83 = tpu.memref_slice %arg6[%c1_i32_64] : memref<3x!tpu.dma_semaphore, #tpu.memory_space<semaphore_mem>> -> memref<1x!tpu.dma_semaphore, #tpu.memory_space<semaphore_mem>>
    %84 = tpu.memref_squeeze %83 : memref<1x!tpu.dma_semaphore, #tpu.memory_space<semaphore_mem>> -> memref<!tpu.dma_semaphore, #tpu.memory_space<semaphore_mem>>
    tpu.enqueue_dma source(%80 : memref<272x512xbf16, #tpu.memory_space<any>>) target(%82 : memref<272x512xbf16, #tpu.memory_space<vmem>>) target_semaphore(%84 : memref<!tpu.dma_semaphore, #tpu.memory_space<semaphore_mem>>)
    %c2_68 = arith.constant 2 : index
    %c0_69 = arith.constant 0 : index
    %c0_70 = arith.constant 0 : index
    %85 = vector.load %arg5[%c2_68, %c0_69, %c0_70] : memref<3x528x512xbf16, #tpu.memory_space<vmem>>, vector<1x128x128xbf16>
    %86 = vector.shape_cast %85 : vector<1x128x128xbf16> to vector<128x128xbf16>
    %c2_71 = arith.constant 2 : index
    %c128_72 = arith.constant 128 : index
    %c0_73 = arith.constant 0 : index
    %87 = vector.load %arg5[%c2_71, %c128_72, %c0_73] : memref<3x528x512xbf16, #tpu.memory_space<vmem>>, vector<1x16x128xbf16>
    %88 = vector.shape_cast %87 : vector<1x16x128xbf16> to vector<16x128xbf16>
    %c3 = arith.constant 3 : index
    %c0_74 = arith.constant 0 : index
    %89 = vector.load %arg2[%c3, %c0_74] : memref<24x512xf32, #tpu.memory_space<vmem>>, vector<1x128xf32>
    %c4 = arith.constant 4 : index
    %c0_75 = arith.constant 0 : index
    %90 = vector.load %arg2[%c4, %c0_75] : memref<24x512xf32, #tpu.memory_space<vmem>>, vector<1x128xf32>
    %91 = arith.truncf %74 : vector<8x128xf32> to vector<8x128xbf16>
    %cst_76 = arith.constant dense<0.000000e+00> : vector<8x128xf32>
    %92 = tpu.matmul %91, %86, %cst_76 {dimension_numbers = #tpu.dot_dimension_numbers<[1], [0], [0], [1], [0, 0, 1, 1], [], []>} : vector<8x128xbf16>, vector<128x128xbf16>, vector<8x128xf32> -> vector<8x128xf32>
    %93 = vector.broadcast %89 : vector<1x128xf32> to vector<8x128xf32>
    %94 = arith.addf %92, %93 : vector<8x128xf32>
    %cst_77 = arith.constant 0.000000e+00 : f32
    %95 = vector.broadcast %cst_77 : f32 to vector<8x128xf32>
    %96 = arith.maximumf %94, %95 : vector<8x128xf32>
    %cst_78 = arith.constant dense<0.000000e+00> : vector<16x128xf32>
    %97 = tpu.matmul %41, %88, %cst_78 {dimension_numbers = #tpu.dot_dimension_numbers<[1], [0], [0], [1], [0, 0, 1, 1], [], []>} : vector<16x16xbf16>, vector<16x128xbf16>, vector<16x128xf32> -> vector<16x128xf32>
    %98 = vector.broadcast %90 : vector<1x128xf32> to vector<16x128xf32>
    %99 = arith.addf %97, %98 : vector<16x128xf32>
    %cst_79 = arith.constant 0.000000e+00 : f32
    %100 = vector.broadcast %cst_79 : f32 to vector<16x128xf32>
    %101 = arith.maximumf %99, %100 : vector<16x128xf32>
    %cst_80 = arith.constant dense<0.000000e+00> : vector<16x128xf32>
    %102 = tpu.matmul %19, %96, %cst_80 {dimension_numbers = #tpu.dot_dimension_numbers<[1], [0], [0], [1], [0, 0, 1, 1], [], []>} : vector<16x8xf32>, vector<8x128xf32>, vector<16x128xf32> -> vector<16x128xf32>
    %103 = arith.mulf %101, %102 : vector<16x128xf32>
    %104 = vector.extract_strided_slice %103 {offsets = [0, 0], sizes = [8, 128], strides = [1, 1]} : vector<16x128xf32> to vector<8x128xf32>
    %105 = vector.extract_strided_slice %103 {offsets = [8, 0], sizes = [8, 128], strides = [1, 1]} : vector<16x128xf32> to vector<8x128xf32>
    %106 = arith.maximumf %104, %105 : vector<8x128xf32>
    %107 = arith.addf %96, %106 : vector<8x128xf32>
    %c0_i32_81 = arith.constant 0 : i32
    %c0_i32_82 = arith.constant 0 : i32
    %c544_i32_83 = arith.constant 544 : i32
    %c0_i32_84 = arith.constant 0 : i32
    %108 = tpu.memref_slice %arg3[%c544_i32_83, %c0_i32_84] : memref<3120x512xbf16, #tpu.memory_space<any>> -> memref<144x512xbf16, #tpu.memory_space<any>>
    %c0_i32_85 = arith.constant 0 : i32
    %c0_i32_86 = arith.constant 0 : i32
    %109 = tpu.memref_slice %arg5[%c0_i32_81, %c0_i32_85, %c0_i32_86] : memref<3x528x512xbf16, #tpu.memory_space<vmem>> -> memref<1x144x512xbf16, #tpu.memory_space<vmem>>
    %110 = tpu.memref_squeeze %109 : memref<1x144x512xbf16, #tpu.memory_space<vmem>> -> memref<144x512xbf16, #tpu.memory_space<vmem>>
    %111 = tpu.memref_slice %arg6[%c0_i32_82] : memref<3x!tpu.dma_semaphore, #tpu.memory_space<semaphore_mem>> -> memref<1x!tpu.dma_semaphore, #tpu.memory_space<semaphore_mem>>
    %112 = tpu.memref_squeeze %111 : memref<1x!tpu.dma_semaphore, #tpu.memory_space<semaphore_mem>> -> memref<!tpu.dma_semaphore, #tpu.memory_space<semaphore_mem>>
    tpu.wait_dma2 semaphore(%112 : memref<!tpu.dma_semaphore, #tpu.memory_space<semaphore_mem>>) src(%108 : memref<144x512xbf16, #tpu.memory_space<any>>) dst(%110 : memref<144x512xbf16, #tpu.memory_space<vmem>>)
    %c2_i32_87 = arith.constant 2 : i32
    %c2_i32_88 = arith.constant 2 : i32
    %c960_i32 = arith.constant 960 : i32
    %c0_i32_89 = arith.constant 0 : i32
    %113 = tpu.memref_slice %arg3[%c960_i32, %c0_i32_89] : memref<3120x512xbf16, #tpu.memory_space<any>> -> memref<272x512xbf16, #tpu.memory_space<any>>
    %c0_i32_90 = arith.constant 0 : i32
    %c0_i32_91 = arith.constant 0 : i32
    %114 = tpu.memref_slice %arg5[%c2_i32_87, %c0_i32_90, %c0_i32_91] : memref<3x528x512xbf16, #tpu.memory_space<vmem>> -> memref<1x272x512xbf16, #tpu.memory_space<vmem>>
    %115 = tpu.memref_squeeze %114 : memref<1x272x512xbf16, #tpu.memory_space<vmem>> -> memref<272x512xbf16, #tpu.memory_space<vmem>>
    %116 = tpu.memref_slice %arg6[%c2_i32_88] : memref<3x!tpu.dma_semaphore, #tpu.memory_space<semaphore_mem>> -> memref<1x!tpu.dma_semaphore, #tpu.memory_space<semaphore_mem>>
    %117 = tpu.memref_squeeze %116 : memref<1x!tpu.dma_semaphore, #tpu.memory_space<semaphore_mem>> -> memref<!tpu.dma_semaphore, #tpu.memory_space<semaphore_mem>>
    tpu.enqueue_dma source(%113 : memref<272x512xbf16, #tpu.memory_space<any>>) target(%115 : memref<272x512xbf16, #tpu.memory_space<vmem>>) target_semaphore(%117 : memref<!tpu.dma_semaphore, #tpu.memory_space<semaphore_mem>>)
    %c0_92 = arith.constant 0 : index
    %c0_93 = arith.constant 0 : index
    %c0_94 = arith.constant 0 : index
    %118 = vector.load %arg5[%c0_92, %c0_93, %c0_94] : memref<3x528x512xbf16, #tpu.memory_space<vmem>>, vector<1x128x256xbf16>
    %119 = vector.shape_cast %118 : vector<1x128x256xbf16> to vector<128x256xbf16>
    %c0_95 = arith.constant 0 : index
    %c128_96 = arith.constant 128 : index
    %c0_97 = arith.constant 0 : index
    %120 = vector.load %arg5[%c0_95, %c128_96, %c0_97] : memref<3x528x512xbf16, #tpu.memory_space<vmem>>, vector<1x16x256xbf16>
    %121 = vector.shape_cast %120 : vector<1x16x256xbf16> to vector<16x256xbf16>
    %c5 = arith.constant 5 : index
    %c0_98 = arith.constant 0 : index
    %122 = vector.load %arg2[%c5, %c0_98] : memref<24x512xf32, #tpu.memory_space<vmem>>, vector<1x256xf32>
    %c6 = arith.constant 6 : index
    %c0_99 = arith.constant 0 : index
    %123 = vector.load %arg2[%c6, %c0_99] : memref<24x512xf32, #tpu.memory_space<vmem>>, vector<1x256xf32>
    %124 = arith.truncf %107 : vector<8x128xf32> to vector<8x128xbf16>
    %cst_100 = arith.constant dense<0.000000e+00> : vector<8x256xf32>
    %125 = tpu.matmul %124, %119, %cst_100 {dimension_numbers = #tpu.dot_dimension_numbers<[1], [0], [0], [1], [0, 0, 1, 1], [], []>} : vector<8x128xbf16>, vector<128x256xbf16>, vector<8x256xf32> -> vector<8x256xf32>
    %126 = vector.broadcast %122 : vector<1x256xf32> to vector<8x256xf32>
    %127 = arith.addf %125, %126 : vector<8x256xf32>
    %cst_101 = arith.constant 0.000000e+00 : f32
    %128 = vector.broadcast %cst_101 : f32 to vector<8x256xf32>
    %129 = arith.maximumf %127, %128 : vector<8x256xf32>
    %cst_102 = arith.constant dense<0.000000e+00> : vector<16x256xf32>
    %130 = tpu.matmul %41, %121, %cst_102 {dimension_numbers = #tpu.dot_dimension_numbers<[1], [0], [0], [1], [0, 0, 1, 1], [], []>} : vector<16x16xbf16>, vector<16x256xbf16>, vector<16x256xf32> -> vector<16x256xf32>
    %131 = vector.broadcast %123 : vector<1x256xf32> to vector<16x256xf32>
    %132 = arith.addf %130, %131 : vector<16x256xf32>
    %cst_103 = arith.constant 0.000000e+00 : f32
    %133 = vector.broadcast %cst_103 : f32 to vector<16x256xf32>
    %134 = arith.maximumf %132, %133 : vector<16x256xf32>
    %cst_104 = arith.constant dense<0.000000e+00> : vector<16x256xf32>
    %135 = tpu.matmul %19, %129, %cst_104 {dimension_numbers = #tpu.dot_dimension_numbers<[1], [0], [0], [1], [0, 0, 1, 1], [], []>} : vector<16x8xf32>, vector<8x256xf32>, vector<16x256xf32> -> vector<16x256xf32>
    %136 = arith.mulf %134, %135 : vector<16x256xf32>
    %137 = vector.extract_strided_slice %136 {offsets = [0, 0], sizes = [8, 256], strides = [1, 1]} : vector<16x256xf32> to vector<8x256xf32>
    %138 = vector.extract_strided_slice %136 {offsets = [8, 0], sizes = [8, 256], strides = [1, 1]} : vector<16x256xf32> to vector<8x256xf32>
    %139 = arith.maximumf %137, %138 : vector<8x256xf32>
    %140 = arith.addf %129, %139 : vector<8x256xf32>
    %c1_i32_105 = arith.constant 1 : i32
    %c1_i32_106 = arith.constant 1 : i32
    %c688_i32_107 = arith.constant 688 : i32
    %c0_i32_108 = arith.constant 0 : i32
    %141 = tpu.memref_slice %arg3[%c688_i32_107, %c0_i32_108] : memref<3120x512xbf16, #tpu.memory_space<any>> -> memref<272x512xbf16, #tpu.memory_space<any>>
    %c0_i32_109 = arith.constant 0 : i32
    %c0_i32_110 = arith.constant 0 : i32
    %142 = tpu.memref_slice %arg5[%c1_i32_105, %c0_i32_109, %c0_i32_110] : memref<3x528x512xbf16, #tpu.memory_space<vmem>> -> memref<1x272x512xbf16, #tpu.memory_space<vmem>>
    %143 = tpu.memref_squeeze %142 : memref<1x272x512xbf16, #tpu.memory_space<vmem>> -> memref<272x512xbf16, #tpu.memory_space<vmem>>
    %144 = tpu.memref_slice %arg6[%c1_i32_106] : memref<3x!tpu.dma_semaphore, #tpu.memory_space<semaphore_mem>> -> memref<1x!tpu.dma_semaphore, #tpu.memory_space<semaphore_mem>>
    %145 = tpu.memref_squeeze %144 : memref<1x!tpu.dma_semaphore, #tpu.memory_space<semaphore_mem>> -> memref<!tpu.dma_semaphore, #tpu.memory_space<semaphore_mem>>
    tpu.wait_dma2 semaphore(%145 : memref<!tpu.dma_semaphore, #tpu.memory_space<semaphore_mem>>) src(%141 : memref<272x512xbf16, #tpu.memory_space<any>>) dst(%143 : memref<272x512xbf16, #tpu.memory_space<vmem>>)
    %c0_i32_111 = arith.constant 0 : i32
    %c0_i32_112 = arith.constant 0 : i32
    %c1232_i32 = arith.constant 1232 : i32
    %c0_i32_113 = arith.constant 0 : i32
    %146 = tpu.memref_slice %arg3[%c1232_i32, %c0_i32_113] : memref<3120x512xbf16, #tpu.memory_space<any>> -> memref<528x512xbf16, #tpu.memory_space<any>>
    %c0_i32_114 = arith.constant 0 : i32
    %c0_i32_115 = arith.constant 0 : i32
    %147 = tpu.memref_slice %arg5[%c0_i32_111, %c0_i32_114, %c0_i32_115] : memref<3x528x512xbf16, #tpu.memory_space<vmem>> -> memref<1x528x512xbf16, #tpu.memory_space<vmem>>
    %148 = tpu.memref_squeeze %147 : memref<1x528x512xbf16, #tpu.memory_space<vmem>> -> memref<528x512xbf16, #tpu.memory_space<vmem>>
    %149 = tpu.memref_slice %arg6[%c0_i32_112] : memref<3x!tpu.dma_semaphore, #tpu.memory_space<semaphore_mem>> -> memref<1x!tpu.dma_semaphore, #tpu.memory_space<semaphore_mem>>
    %150 = tpu.memref_squeeze %149 : memref<1x!tpu.dma_semaphore, #tpu.memory_space<semaphore_mem>> -> memref<!tpu.dma_semaphore, #tpu.memory_space<semaphore_mem>>
    tpu.enqueue_dma source(%146 : memref<528x512xbf16, #tpu.memory_space<any>>) target(%148 : memref<528x512xbf16, #tpu.memory_space<vmem>>) target_semaphore(%150 : memref<!tpu.dma_semaphore, #tpu.memory_space<semaphore_mem>>)
    %c1_116 = arith.constant 1 : index
    %c0_117 = arith.constant 0 : index
    %c0_118 = arith.constant 0 : index
    %151 = vector.load %arg5[%c1_116, %c0_117, %c0_118] : memref<3x528x512xbf16, #tpu.memory_space<vmem>>, vector<1x256x256xbf16>
    %152 = vector.shape_cast %151 : vector<1x256x256xbf16> to vector<256x256xbf16>
    %c1_119 = arith.constant 1 : index
    %c256 = arith.constant 256 : index
    %c0_120 = arith.constant 0 : index
    %153 = vector.load %arg5[%c1_119, %c256, %c0_120] : memref<3x528x512xbf16, #tpu.memory_space<vmem>>, vector<1x16x256xbf16>
    %154 = vector.shape_cast %153 : vector<1x16x256xbf16> to vector<16x256xbf16>
    %c7 = arith.constant 7 : index
    %c0_121 = arith.constant 0 : index
    %155 = vector.load %arg2[%c7, %c0_121] : memref<24x512xf32, #tpu.memory_space<vmem>>, vector<1x256xf32>
    %c8 = arith.constant 8 : index
    %c0_122 = arith.constant 0 : index
    %156 = vector.load %arg2[%c8, %c0_122] : memref<24x512xf32, #tpu.memory_space<vmem>>, vector<1x256xf32>
    %157 = arith.truncf %140 : vector<8x256xf32> to vector<8x256xbf16>
    %cst_123 = arith.constant dense<0.000000e+00> : vector<8x256xf32>
    %158 = tpu.matmul %157, %152, %cst_123 {dimension_numbers = #tpu.dot_dimension_numbers<[1], [0], [0], [1], [0, 0, 1, 1], [], []>} : vector<8x256xbf16>, vector<256x256xbf16>, vector<8x256xf32> -> vector<8x256xf32>
    %159 = vector.broadcast %155 : vector<1x256xf32> to vector<8x256xf32>
    %160 = arith.addf %158, %159 : vector<8x256xf32>
    %cst_124 = arith.constant 0.000000e+00 : f32
    %161 = vector.broadcast %cst_124 : f32 to vector<8x256xf32>
    %162 = arith.maximumf %160, %161 : vector<8x256xf32>
    %cst_125 = arith.constant dense<0.000000e+00> : vector<16x256xf32>
    %163 = tpu.matmul %41, %154, %cst_125 {dimension_numbers = #tpu.dot_dimension_numbers<[1], [0], [0], [1], [0, 0, 1, 1], [], []>} : vector<16x16xbf16>, vector<16x256xbf16>, vector<16x256xf32> -> vector<16x256xf32>
    %164 = vector.broadcast %156 : vector<1x256xf32> to vector<16x256xf32>
    %165 = arith.addf %163, %164 : vector<16x256xf32>
    %cst_126 = arith.constant 0.000000e+00 : f32
    %166 = vector.broadcast %cst_126 : f32 to vector<16x256xf32>
    %167 = arith.maximumf %165, %166 : vector<16x256xf32>
    %cst_127 = arith.constant dense<0.000000e+00> : vector<16x256xf32>
    %168 = tpu.matmul %19, %162, %cst_127 {dimension_numbers = #tpu.dot_dimension_numbers<[1], [0], [0], [1], [0, 0, 1, 1], [], []>} : vector<16x8xf32>, vector<8x256xf32>, vector<16x256xf32> -> vector<16x256xf32>
    %169 = arith.mulf %167, %168 : vector<16x256xf32>
    %170 = vector.extract_strided_slice %169 {offsets = [0, 0], sizes = [8, 256], strides = [1, 1]} : vector<16x256xf32> to vector<8x256xf32>
    %171 = vector.extract_strided_slice %169 {offsets = [8, 0], sizes = [8, 256], strides = [1, 1]} : vector<16x256xf32> to vector<8x256xf32>
    %172 = arith.maximumf %170, %171 : vector<8x256xf32>
    %173 = arith.addf %162, %172 : vector<8x256xf32>
    %c2_i32_128 = arith.constant 2 : i32
    %c2_i32_129 = arith.constant 2 : i32
    %c960_i32_130 = arith.constant 960 : i32
    %c0_i32_131 = arith.constant 0 : i32
    %174 = tpu.memref_slice %arg3[%c960_i32_130, %c0_i32_131] : memref<3120x512xbf16, #tpu.memory_space<any>> -> memref<272x512xbf16, #tpu.memory_space<any>>
    %c0_i32_132 = arith.constant 0 : i32
    %c0_i32_133 = arith.constant 0 : i32
    %175 = tpu.memref_slice %arg5[%c2_i32_128, %c0_i32_132, %c0_i32_133] : memref<3x528x512xbf16, #tpu.memory_space<vmem>> -> memref<1x272x512xbf16, #tpu.memory_space<vmem>>
    %176 = tpu.memref_squeeze %175 : memref<1x272x512xbf16, #tpu.memory_space<vmem>> -> memref<272x512xbf16, #tpu.memory_space<vmem>>
    %177 = tpu.memref_slice %arg6[%c2_i32_129] : memref<3x!tpu.dma_semaphore, #tpu.memory_space<semaphore_mem>> -> memref<1x!tpu.dma_semaphore, #tpu.memory_space<semaphore_mem>>
    %178 = tpu.memref_squeeze %177 : memref<1x!tpu.dma_semaphore, #tpu.memory_space<semaphore_mem>> -> memref<!tpu.dma_semaphore, #tpu.memory_space<semaphore_mem>>
    tpu.wait_dma2 semaphore(%178 : memref<!tpu.dma_semaphore, #tpu.memory_space<semaphore_mem>>) src(%174 : memref<272x512xbf16, #tpu.memory_space<any>>) dst(%176 : memref<272x512xbf16, #tpu.memory_space<vmem>>)
    %c1_i32_134 = arith.constant 1 : i32
    %c1_i32_135 = arith.constant 1 : i32
    %c1760_i32 = arith.constant 1760 : i32
    %c0_i32_136 = arith.constant 0 : i32
    %179 = tpu.memref_slice %arg3[%c1760_i32, %c0_i32_136] : memref<3120x512xbf16, #tpu.memory_space<any>> -> memref<528x512xbf16, #tpu.memory_space<any>>
    %c0_i32_137 = arith.constant 0 : i32
    %c0_i32_138 = arith.constant 0 : i32
    %180 = tpu.memref_slice %arg5[%c1_i32_134, %c0_i32_137, %c0_i32_138] : memref<3x528x512xbf16, #tpu.memory_space<vmem>> -> memref<1x528x512xbf16, #tpu.memory_space<vmem>>
    %181 = tpu.memref_squeeze %180 : memref<1x528x512xbf16, #tpu.memory_space<vmem>> -> memref<528x512xbf16, #tpu.memory_space<vmem>>
    %182 = tpu.memref_slice %arg6[%c1_i32_135] : memref<3x!tpu.dma_semaphore, #tpu.memory_space<semaphore_mem>> -> memref<1x!tpu.dma_semaphore, #tpu.memory_space<semaphore_mem>>
    %183 = tpu.memref_squeeze %182 : memref<1x!tpu.dma_semaphore, #tpu.memory_space<semaphore_mem>> -> memref<!tpu.dma_semaphore, #tpu.memory_space<semaphore_mem>>
    tpu.enqueue_dma source(%179 : memref<528x512xbf16, #tpu.memory_space<any>>) target(%181 : memref<528x512xbf16, #tpu.memory_space<vmem>>) target_semaphore(%183 : memref<!tpu.dma_semaphore, #tpu.memory_space<semaphore_mem>>)
    %c2_139 = arith.constant 2 : index
    %c0_140 = arith.constant 0 : index
    %c0_141 = arith.constant 0 : index
    %184 = vector.load %arg5[%c2_139, %c0_140, %c0_141] : memref<3x528x512xbf16, #tpu.memory_space<vmem>>, vector<1x256x512xbf16>
    %185 = vector.shape_cast %184 : vector<1x256x512xbf16> to vector<256x512xbf16>
    %c2_142 = arith.constant 2 : index
    %c256_143 = arith.constant 256 : index
    %c0_144 = arith.constant 0 : index
    %186 = vector.load %arg5[%c2_142, %c256_143, %c0_144] : memref<3x528x512xbf16, #tpu.memory_space<vmem>>, vector<1x16x512xbf16>
    %187 = vector.shape_cast %186 : vector<1x16x512xbf16> to vector<16x512xbf16>
    %c9 = arith.constant 9 : index
    %c0_145 = arith.constant 0 : index
    %188 = vector.load %arg2[%c9, %c0_145] : memref<24x512xf32, #tpu.memory_space<vmem>>, vector<1x512xf32>
    %c10 = arith.constant 10 : index
    %c0_146 = arith.constant 0 : index
    %189 = vector.load %arg2[%c10, %c0_146] : memref<24x512xf32, #tpu.memory_space<vmem>>, vector<1x512xf32>
    %190 = arith.truncf %173 : vector<8x256xf32> to vector<8x256xbf16>
    %cst_147 = arith.constant dense<0.000000e+00> : vector<8x512xf32>
    %191 = tpu.matmul %190, %185, %cst_147 {dimension_numbers = #tpu.dot_dimension_numbers<[1], [0], [0], [1], [0, 0, 1, 1], [], []>} : vector<8x256xbf16>, vector<256x512xbf16>, vector<8x512xf32> -> vector<8x512xf32>
    %192 = vector.broadcast %188 : vector<1x512xf32> to vector<8x512xf32>
    %193 = arith.addf %191, %192 : vector<8x512xf32>
    %cst_148 = arith.constant 0.000000e+00 : f32
    %194 = vector.broadcast %cst_148 : f32 to vector<8x512xf32>
    %195 = arith.maximumf %193, %194 : vector<8x512xf32>
    %cst_149 = arith.constant dense<0.000000e+00> : vector<16x512xf32>
    %196 = tpu.matmul %41, %187, %cst_149 {dimension_numbers = #tpu.dot_dimension_numbers<[1], [0], [0], [1], [0, 0, 1, 1], [], []>} : vector<16x16xbf16>, vector<16x512xbf16>, vector<16x512xf32> -> vector<16x512xf32>
    %197 = vector.broadcast %189 : vector<1x512xf32> to vector<16x512xf32>
    %198 = arith.addf %196, %197 : vector<16x512xf32>
    %cst_150 = arith.constant 0.000000e+00 : f32
    %199 = vector.broadcast %cst_150 : f32 to vector<16x512xf32>
    %200 = arith.maximumf %198, %199 : vector<16x512xf32>
    %cst_151 = arith.constant dense<0.000000e+00> : vector<16x512xf32>
    %201 = tpu.matmul %19, %195, %cst_151 {dimension_numbers = #tpu.dot_dimension_numbers<[1], [0], [0], [1], [0, 0, 1, 1], [], []>} : vector<16x8xf32>, vector<8x512xf32>, vector<16x512xf32> -> vector<16x512xf32>
    %202 = arith.mulf %200, %201 : vector<16x512xf32>
    %203 = vector.extract_strided_slice %202 {offsets = [0, 0], sizes = [8, 512], strides = [1, 1]} : vector<16x512xf32> to vector<8x512xf32>
    %204 = vector.extract_strided_slice %202 {offsets = [8, 0], sizes = [8, 512], strides = [1, 1]} : vector<16x512xf32> to vector<8x512xf32>
    %205 = arith.maximumf %203, %204 : vector<8x512xf32>
    %206 = arith.addf %195, %205 : vector<8x512xf32>
    %c0_i32_152 = arith.constant 0 : i32
    %c0_i32_153 = arith.constant 0 : i32
    %c1232_i32_154 = arith.constant 1232 : i32
    %c0_i32_155 = arith.constant 0 : i32
    %207 = tpu.memref_slice %arg3[%c1232_i32_154, %c0_i32_155] : memref<3120x512xbf16, #tpu.memory_space<any>> -> memref<528x512xbf16, #tpu.memory_space<any>>
    %c0_i32_156 = arith.constant 0 : i32
    %c0_i32_157 = arith.constant 0 : i32
    %208 = tpu.memref_slice %arg5[%c0_i32_152, %c0_i32_156, %c0_i32_157] : memref<3x528x512xbf16, #tpu.memory_space<vmem>> -> memref<1x528x512xbf16, #tpu.memory_space<vmem>>
    %209 = tpu.memref_squeeze %208 : memref<1x528x512xbf16, #tpu.memory_space<vmem>> -> memref<528x512xbf16, #tpu.memory_space<vmem>>
    %210 = tpu.memref_slice %arg6[%c0_i32_153] : memref<3x!tpu.dma_semaphore, #tpu.memory_space<semaphore_mem>> -> memref<1x!tpu.dma_semaphore, #tpu.memory_space<semaphore_mem>>
    %211 = tpu.memref_squeeze %210 : memref<1x!tpu.dma_semaphore, #tpu.memory_space<semaphore_mem>> -> memref<!tpu.dma_semaphore, #tpu.memory_space<semaphore_mem>>
    tpu.wait_dma2 semaphore(%211 : memref<!tpu.dma_semaphore, #tpu.memory_space<semaphore_mem>>) src(%207 : memref<528x512xbf16, #tpu.memory_space<any>>) dst(%209 : memref<528x512xbf16, #tpu.memory_space<vmem>>)
    %c2_i32_158 = arith.constant 2 : i32
    %c2_i32_159 = arith.constant 2 : i32
    %c2288_i32 = arith.constant 2288 : i32
    %c0_i32_160 = arith.constant 0 : i32
    %212 = tpu.memref_slice %arg3[%c2288_i32, %c0_i32_160] : memref<3120x512xbf16, #tpu.memory_space<any>> -> memref<272x512xbf16, #tpu.memory_space<any>>
    %c0_i32_161 = arith.constant 0 : i32
    %c0_i32_162 = arith.constant 0 : i32
    %213 = tpu.memref_slice %arg5[%c2_i32_158, %c0_i32_161, %c0_i32_162] : memref<3x528x512xbf16, #tpu.memory_space<vmem>> -> memref<1x272x512xbf16, #tpu.memory_space<vmem>>
    %214 = tpu.memref_squeeze %213 : memref<1x272x512xbf16, #tpu.memory_space<vmem>> -> memref<272x512xbf16, #tpu.memory_space<vmem>>
    %215 = tpu.memref_slice %arg6[%c2_i32_159] : memref<3x!tpu.dma_semaphore, #tpu.memory_space<semaphore_mem>> -> memref<1x!tpu.dma_semaphore, #tpu.memory_space<semaphore_mem>>
    %216 = tpu.memref_squeeze %215 : memref<1x!tpu.dma_semaphore, #tpu.memory_space<semaphore_mem>> -> memref<!tpu.dma_semaphore, #tpu.memory_space<semaphore_mem>>
    tpu.enqueue_dma source(%212 : memref<272x512xbf16, #tpu.memory_space<any>>) target(%214 : memref<272x512xbf16, #tpu.memory_space<vmem>>) target_semaphore(%216 : memref<!tpu.dma_semaphore, #tpu.memory_space<semaphore_mem>>)
    %c0_163 = arith.constant 0 : index
    %c0_164 = arith.constant 0 : index
    %c0_165 = arith.constant 0 : index
    %217 = vector.load %arg5[%c0_163, %c0_164, %c0_165] : memref<3x528x512xbf16, #tpu.memory_space<vmem>>, vector<1x512x512xbf16>
    %218 = vector.shape_cast %217 : vector<1x512x512xbf16> to vector<512x512xbf16>
    %c0_166 = arith.constant 0 : index
    %c512 = arith.constant 512 : index
    %c0_167 = arith.constant 0 : index
    %219 = vector.load %arg5[%c0_166, %c512, %c0_167] : memref<3x528x512xbf16, #tpu.memory_space<vmem>>, vector<1x16x512xbf16>
    %220 = vector.shape_cast %219 : vector<1x16x512xbf16> to vector<16x512xbf16>
    %c11 = arith.constant 11 : index
    %c0_168 = arith.constant 0 : index
    %221 = vector.load %arg2[%c11, %c0_168] : memref<24x512xf32, #tpu.memory_space<vmem>>, vector<1x512xf32>
    %c12 = arith.constant 12 : index
    %c0_169 = arith.constant 0 : index
    %222 = vector.load %arg2[%c12, %c0_169] : memref<24x512xf32, #tpu.memory_space<vmem>>, vector<1x512xf32>
    %223 = arith.truncf %206 : vector<8x512xf32> to vector<8x512xbf16>
    %cst_170 = arith.constant dense<0.000000e+00> : vector<8x512xf32>
    %224 = tpu.matmul %223, %218, %cst_170 {dimension_numbers = #tpu.dot_dimension_numbers<[1], [0], [0], [1], [0, 0, 1, 1], [], []>} : vector<8x512xbf16>, vector<512x512xbf16>, vector<8x512xf32> -> vector<8x512xf32>
    %225 = vector.broadcast %221 : vector<1x512xf32> to vector<8x512xf32>
    %226 = arith.addf %224, %225 : vector<8x512xf32>
    %cst_171 = arith.constant 0.000000e+00 : f32
    %227 = vector.broadcast %cst_171 : f32 to vector<8x512xf32>
    %228 = arith.maximumf %226, %227 : vector<8x512xf32>
    %cst_172 = arith.constant dense<0.000000e+00> : vector<16x512xf32>
    %229 = tpu.matmul %41, %220, %cst_172 {dimension_numbers = #tpu.dot_dimension_numbers<[1], [0], [0], [1], [0, 0, 1, 1], [], []>} : vector<16x16xbf16>, vector<16x512xbf16>, vector<16x512xf32> -> vector<16x512xf32>
    %230 = vector.broadcast %222 : vector<1x512xf32> to vector<16x512xf32>
    %231 = arith.addf %229, %230 : vector<16x512xf32>
    %cst_173 = arith.constant 0.000000e+00 : f32
    %232 = vector.broadcast %cst_173 : f32 to vector<16x512xf32>
    %233 = arith.maximumf %231, %232 : vector<16x512xf32>
    %cst_174 = arith.constant dense<0.000000e+00> : vector<16x512xf32>
    %234 = tpu.matmul %19, %228, %cst_174 {dimension_numbers = #tpu.dot_dimension_numbers<[1], [0], [0], [1], [0, 0, 1, 1], [], []>} : vector<16x8xf32>, vector<8x512xf32>, vector<16x512xf32> -> vector<16x512xf32>
    %235 = arith.mulf %233, %234 : vector<16x512xf32>
    %236 = vector.extract_strided_slice %235 {offsets = [0, 0], sizes = [8, 512], strides = [1, 1]} : vector<16x512xf32> to vector<8x512xf32>
    %237 = vector.extract_strided_slice %235 {offsets = [8, 0], sizes = [8, 512], strides = [1, 1]} : vector<16x512xf32> to vector<8x512xf32>
    %238 = arith.maximumf %236, %237 : vector<8x512xf32>
    %239 = arith.addf %228, %238 : vector<8x512xf32>
    %c1_i32_175 = arith.constant 1 : i32
    %c1_i32_176 = arith.constant 1 : i32
    %c1760_i32_177 = arith.constant 1760 : i32
    %c0_i32_178 = arith.constant 0 : i32
    %240 = tpu.memref_slice %arg3[%c1760_i32_177, %c0_i32_178] : memref<3120x512xbf16, #tpu.memory_space<any>> -> memref<528x512xbf16, #tpu.memory_space<any>>
    %c0_i32_179 = arith.constant 0 : i32
    %c0_i32_180 = arith.constant 0 : i32
    %241 = tpu.memref_slice %arg5[%c1_i32_175, %c0_i32_179, %c0_i32_180] : memref<3x528x512xbf16, #tpu.memory_space<vmem>> -> memref<1x528x512xbf16, #tpu.memory_space<vmem>>
    %242 = tpu.memref_squeeze %241 : memref<1x528x512xbf16, #tpu.memory_space<vmem>> -> memref<528x512xbf16, #tpu.memory_space<vmem>>
    %243 = tpu.memref_slice %arg6[%c1_i32_176] : memref<3x!tpu.dma_semaphore, #tpu.memory_space<semaphore_mem>> -> memref<1x!tpu.dma_semaphore, #tpu.memory_space<semaphore_mem>>
    %244 = tpu.memref_squeeze %243 : memref<1x!tpu.dma_semaphore, #tpu.memory_space<semaphore_mem>> -> memref<!tpu.dma_semaphore, #tpu.memory_space<semaphore_mem>>
    tpu.wait_dma2 semaphore(%244 : memref<!tpu.dma_semaphore, #tpu.memory_space<semaphore_mem>>) src(%240 : memref<528x512xbf16, #tpu.memory_space<any>>) dst(%242 : memref<528x512xbf16, #tpu.memory_space<vmem>>)
    %c0_i32_181 = arith.constant 0 : i32
    %c0_i32_182 = arith.constant 0 : i32
    %c2560_i32 = arith.constant 2560 : i32
    %c0_i32_183 = arith.constant 0 : i32
    %245 = tpu.memref_slice %arg3[%c2560_i32, %c0_i32_183] : memref<3120x512xbf16, #tpu.memory_space<any>> -> memref<272x512xbf16, #tpu.memory_space<any>>
    %c0_i32_184 = arith.constant 0 : i32
    %c0_i32_185 = arith.constant 0 : i32
    %246 = tpu.memref_slice %arg5[%c0_i32_181, %c0_i32_184, %c0_i32_185] : memref<3x528x512xbf16, #tpu.memory_space<vmem>> -> memref<1x272x512xbf16, #tpu.memory_space<vmem>>
    %247 = tpu.memref_squeeze %246 : memref<1x272x512xbf16, #tpu.memory_space<vmem>> -> memref<272x512xbf16, #tpu.memory_space<vmem>>
    %248 = tpu.memref_slice %arg6[%c0_i32_182] : memref<3x!tpu.dma_semaphore, #tpu.memory_space<semaphore_mem>> -> memref<1x!tpu.dma_semaphore, #tpu.memory_space<semaphore_mem>>
    %249 = tpu.memref_squeeze %248 : memref<1x!tpu.dma_semaphore, #tpu.memory_space<semaphore_mem>> -> memref<!tpu.dma_semaphore, #tpu.memory_space<semaphore_mem>>
    tpu.enqueue_dma source(%245 : memref<272x512xbf16, #tpu.memory_space<any>>) target(%247 : memref<272x512xbf16, #tpu.memory_space<vmem>>) target_semaphore(%249 : memref<!tpu.dma_semaphore, #tpu.memory_space<semaphore_mem>>)
    %c1_186 = arith.constant 1 : index
    %c0_187 = arith.constant 0 : index
    %c0_188 = arith.constant 0 : index
    %250 = vector.load %arg5[%c1_186, %c0_187, %c0_188] : memref<3x528x512xbf16, #tpu.memory_space<vmem>>, vector<1x512x256xbf16>
    %251 = vector.shape_cast %250 : vector<1x512x256xbf16> to vector<512x256xbf16>
    %c1_189 = arith.constant 1 : index
    %c512_190 = arith.constant 512 : index
    %c0_191 = arith.constant 0 : index
    %252 = vector.load %arg5[%c1_189, %c512_190, %c0_191] : memref<3x528x512xbf16, #tpu.memory_space<vmem>>, vector<1x16x256xbf16>
    %253 = vector.shape_cast %252 : vector<1x16x256xbf16> to vector<16x256xbf16>
    %c13 = arith.constant 13 : index
    %c0_192 = arith.constant 0 : index
    %254 = vector.load %arg2[%c13, %c0_192] : memref<24x512xf32, #tpu.memory_space<vmem>>, vector<1x256xf32>
    %c14 = arith.constant 14 : index
    %c0_193 = arith.constant 0 : index
    %255 = vector.load %arg2[%c14, %c0_193] : memref<24x512xf32, #tpu.memory_space<vmem>>, vector<1x256xf32>
    %256 = arith.truncf %239 : vector<8x512xf32> to vector<8x512xbf16>
    %cst_194 = arith.constant dense<0.000000e+00> : vector<8x256xf32>
    %257 = tpu.matmul %256, %251, %cst_194 {dimension_numbers = #tpu.dot_dimension_numbers<[1], [0], [0], [1], [0, 0, 1, 1], [], []>} : vector<8x512xbf16>, vector<512x256xbf16>, vector<8x256xf32> -> vector<8x256xf32>
    %258 = vector.broadcast %254 : vector<1x256xf32> to vector<8x256xf32>
    %259 = arith.addf %257, %258 : vector<8x256xf32>
    %cst_195 = arith.constant 0.000000e+00 : f32
    %260 = vector.broadcast %cst_195 : f32 to vector<8x256xf32>
    %261 = arith.maximumf %259, %260 : vector<8x256xf32>
    %cst_196 = arith.constant dense<0.000000e+00> : vector<16x256xf32>
    %262 = tpu.matmul %41, %253, %cst_196 {dimension_numbers = #tpu.dot_dimension_numbers<[1], [0], [0], [1], [0, 0, 1, 1], [], []>} : vector<16x16xbf16>, vector<16x256xbf16>, vector<16x256xf32> -> vector<16x256xf32>
    %263 = vector.broadcast %255 : vector<1x256xf32> to vector<16x256xf32>
    %264 = arith.addf %262, %263 : vector<16x256xf32>
    %cst_197 = arith.constant 0.000000e+00 : f32
    %265 = vector.broadcast %cst_197 : f32 to vector<16x256xf32>
    %266 = arith.maximumf %264, %265 : vector<16x256xf32>
    %cst_198 = arith.constant dense<0.000000e+00> : vector<16x256xf32>
    %267 = tpu.matmul %19, %261, %cst_198 {dimension_numbers = #tpu.dot_dimension_numbers<[1], [0], [0], [1], [0, 0, 1, 1], [], []>} : vector<16x8xf32>, vector<8x256xf32>, vector<16x256xf32> -> vector<16x256xf32>
    %268 = arith.mulf %266, %267 : vector<16x256xf32>
    %269 = vector.extract_strided_slice %268 {offsets = [0, 0], sizes = [8, 256], strides = [1, 1]} : vector<16x256xf32> to vector<8x256xf32>
    %270 = vector.extract_strided_slice %268 {offsets = [8, 0], sizes = [8, 256], strides = [1, 1]} : vector<16x256xf32> to vector<8x256xf32>
    %271 = arith.maximumf %269, %270 : vector<8x256xf32>
    %272 = arith.addf %261, %271 : vector<8x256xf32>
    %c2_i32_199 = arith.constant 2 : i32
    %c2_i32_200 = arith.constant 2 : i32
    %c2288_i32_201 = arith.constant 2288 : i32
    %c0_i32_202 = arith.constant 0 : i32
    %273 = tpu.memref_slice %arg3[%c2288_i32_201, %c0_i32_202] : memref<3120x512xbf16, #tpu.memory_space<any>> -> memref<272x512xbf16, #tpu.memory_space<any>>
    %c0_i32_203 = arith.constant 0 : i32
    %c0_i32_204 = arith.constant 0 : i32
    %274 = tpu.memref_slice %arg5[%c2_i32_199, %c0_i32_203, %c0_i32_204] : memref<3x528x512xbf16, #tpu.memory_space<vmem>> -> memref<1x272x512xbf16, #tpu.memory_space<vmem>>
    %275 = tpu.memref_squeeze %274 : memref<1x272x512xbf16, #tpu.memory_space<vmem>> -> memref<272x512xbf16, #tpu.memory_space<vmem>>
    %276 = tpu.memref_slice %arg6[%c2_i32_200] : memref<3x!tpu.dma_semaphore, #tpu.memory_space<semaphore_mem>> -> memref<1x!tpu.dma_semaphore, #tpu.memory_space<semaphore_mem>>
    %277 = tpu.memref_squeeze %276 : memref<1x!tpu.dma_semaphore, #tpu.memory_space<semaphore_mem>> -> memref<!tpu.dma_semaphore, #tpu.memory_space<semaphore_mem>>
    tpu.wait_dma2 semaphore(%277 : memref<!tpu.dma_semaphore, #tpu.memory_space<semaphore_mem>>) src(%273 : memref<272x512xbf16, #tpu.memory_space<any>>) dst(%275 : memref<272x512xbf16, #tpu.memory_space<vmem>>)
    %c1_i32_205 = arith.constant 1 : i32
    %c1_i32_206 = arith.constant 1 : i32
    %c2832_i32 = arith.constant 2832 : i32
    %c0_i32_207 = arith.constant 0 : i32
    %278 = tpu.memref_slice %arg3[%c2832_i32, %c0_i32_207] : memref<3120x512xbf16, #tpu.memory_space<any>> -> memref<144x512xbf16, #tpu.memory_space<any>>
    %c0_i32_208 = arith.constant 0 : i32
    %c0_i32_209 = arith.constant 0 : i32
    %279 = tpu.memref_slice %arg5[%c1_i32_205, %c0_i32_208, %c0_i32_209] : memref<3x528x512xbf16, #tpu.memory_space<vmem>> -> memref<1x144x512xbf16, #tpu.memory_space<vmem>>
    %280 = tpu.memref_squeeze %279 : memref<1x144x512xbf16, #tpu.memory_space<vmem>> -> memref<144x512xbf16, #tpu.memory_space<vmem>>
    %281 = tpu.memref_slice %arg6[%c1_i32_206] : memref<3x!tpu.dma_semaphore, #tpu.memory_space<semaphore_mem>> -> memref<1x!tpu.dma_semaphore, #tpu.memory_space<semaphore_mem>>
    %282 = tpu.memref_squeeze %281 : memref<1x!tpu.dma_semaphore, #tpu.memory_space<semaphore_mem>> -> memref<!tpu.dma_semaphore, #tpu.memory_space<semaphore_mem>>
    tpu.enqueue_dma source(%278 : memref<144x512xbf16, #tpu.memory_space<any>>) target(%280 : memref<144x512xbf16, #tpu.memory_space<vmem>>) target_semaphore(%282 : memref<!tpu.dma_semaphore, #tpu.memory_space<semaphore_mem>>)
    %c2_210 = arith.constant 2 : index
    %c0_211 = arith.constant 0 : index
    %c0_212 = arith.constant 0 : index
    %283 = vector.load %arg5[%c2_210, %c0_211, %c0_212] : memref<3x528x512xbf16, #tpu.memory_space<vmem>>, vector<1x256x256xbf16>
    %284 = vector.shape_cast %283 : vector<1x256x256xbf16> to vector<256x256xbf16>
    %c2_213 = arith.constant 2 : index
    %c256_214 = arith.constant 256 : index
    %c0_215 = arith.constant 0 : index
    %285 = vector.load %arg5[%c2_213, %c256_214, %c0_215] : memref<3x528x512xbf16, #tpu.memory_space<vmem>>, vector<1x16x256xbf16>
    %286 = vector.shape_cast %285 : vector<1x16x256xbf16> to vector<16x256xbf16>
    %c15 = arith.constant 15 : index
    %c0_216 = arith.constant 0 : index
    %287 = vector.load %arg2[%c15, %c0_216] : memref<24x512xf32, #tpu.memory_space<vmem>>, vector<1x256xf32>
    %c16 = arith.constant 16 : index
    %c0_217 = arith.constant 0 : index
    %288 = vector.load %arg2[%c16, %c0_217] : memref<24x512xf32, #tpu.memory_space<vmem>>, vector<1x256xf32>
    %289 = arith.truncf %272 : vector<8x256xf32> to vector<8x256xbf16>
    %cst_218 = arith.constant dense<0.000000e+00> : vector<8x256xf32>
    %290 = tpu.matmul %289, %284, %cst_218 {dimension_numbers = #tpu.dot_dimension_numbers<[1], [0], [0], [1], [0, 0, 1, 1], [], []>} : vector<8x256xbf16>, vector<256x256xbf16>, vector<8x256xf32> -> vector<8x256xf32>
    %291 = vector.broadcast %287 : vector<1x256xf32> to vector<8x256xf32>
    %292 = arith.addf %290, %291 : vector<8x256xf32>
    %cst_219 = arith.constant 0.000000e+00 : f32
    %293 = vector.broadcast %cst_219 : f32 to vector<8x256xf32>
    %294 = arith.maximumf %292, %293 : vector<8x256xf32>
    %cst_220 = arith.constant dense<0.000000e+00> : vector<16x256xf32>
    %295 = tpu.matmul %41, %286, %cst_220 {dimension_numbers = #tpu.dot_dimension_numbers<[1], [0], [0], [1], [0, 0, 1, 1], [], []>} : vector<16x16xbf16>, vector<16x256xbf16>, vector<16x256xf32> -> vector<16x256xf32>
    %296 = vector.broadcast %288 : vector<1x256xf32> to vector<16x256xf32>
    %297 = arith.addf %295, %296 : vector<16x256xf32>
    %cst_221 = arith.constant 0.000000e+00 : f32
    %298 = vector.broadcast %cst_221 : f32 to vector<16x256xf32>
    %299 = arith.maximumf %297, %298 : vector<16x256xf32>
    %cst_222 = arith.constant dense<0.000000e+00> : vector<16x256xf32>
    %300 = tpu.matmul %19, %294, %cst_222 {dimension_numbers = #tpu.dot_dimension_numbers<[1], [0], [0], [1], [0, 0, 1, 1], [], []>} : vector<16x8xf32>, vector<8x256xf32>, vector<16x256xf32> -> vector<16x256xf32>
    %301 = arith.mulf %299, %300 : vector<16x256xf32>
    %302 = vector.extract_strided_slice %301 {offsets = [0, 0], sizes = [8, 256], strides = [1, 1]} : vector<16x256xf32> to vector<8x256xf32>
    %303 = vector.extract_strided_slice %301 {offsets = [8, 0], sizes = [8, 256], strides = [1, 1]} : vector<16x256xf32> to vector<8x256xf32>
    %304 = arith.maximumf %302, %303 : vector<8x256xf32>
    %305 = arith.addf %294, %304 : vector<8x256xf32>
    %c0_i32_223 = arith.constant 0 : i32
    %c0_i32_224 = arith.constant 0 : i32
    %c2560_i32_225 = arith.constant 2560 : i32
    %c0_i32_226 = arith.constant 0 : i32
    %306 = tpu.memref_slice %arg3[%c2560_i32_225, %c0_i32_226] : memref<3120x512xbf16, #tpu.memory_space<any>> -> memref<272x512xbf16, #tpu.memory_space<any>>
    %c0_i32_227 = arith.constant 0 : i32
    %c0_i32_228 = arith.constant 0 : i32
    %307 = tpu.memref_slice %arg5[%c0_i32_223, %c0_i32_227, %c0_i32_228] : memref<3x528x512xbf16, #tpu.memory_space<vmem>> -> memref<1x272x512xbf16, #tpu.memory_space<vmem>>
    %308 = tpu.memref_squeeze %307 : memref<1x272x512xbf16, #tpu.memory_space<vmem>> -> memref<272x512xbf16, #tpu.memory_space<vmem>>
    %309 = tpu.memref_slice %arg6[%c0_i32_224] : memref<3x!tpu.dma_semaphore, #tpu.memory_space<semaphore_mem>> -> memref<1x!tpu.dma_semaphore, #tpu.memory_space<semaphore_mem>>
    %310 = tpu.memref_squeeze %309 : memref<1x!tpu.dma_semaphore, #tpu.memory_space<semaphore_mem>> -> memref<!tpu.dma_semaphore, #tpu.memory_space<semaphore_mem>>
    tpu.wait_dma2 semaphore(%310 : memref<!tpu.dma_semaphore, #tpu.memory_space<semaphore_mem>>) src(%306 : memref<272x512xbf16, #tpu.memory_space<any>>) dst(%308 : memref<272x512xbf16, #tpu.memory_space<vmem>>)
    %c2_i32_229 = arith.constant 2 : i32
    %c2_i32_230 = arith.constant 2 : i32
    %c2976_i32 = arith.constant 2976 : i32
    %c0_i32_231 = arith.constant 0 : i32
    %311 = tpu.memref_slice %arg3[%c2976_i32, %c0_i32_231] : memref<3120x512xbf16, #tpu.memory_space<any>> -> memref<144x512xbf16, #tpu.memory_space<any>>
    %c0_i32_232 = arith.constant 0 : i32
    %c0_i32_233 = arith.constant 0 : i32
    %312 = tpu.memref_slice %arg5[%c2_i32_229, %c0_i32_232, %c0_i32_233] : memref<3x528x512xbf16, #tpu.memory_space<vmem>> -> memref<1x144x512xbf16, #tpu.memory_space<vmem>>
    %313 = tpu.memref_squeeze %312 : memref<1x144x512xbf16, #tpu.memory_space<vmem>> -> memref<144x512xbf16, #tpu.memory_space<vmem>>
    %314 = tpu.memref_slice %arg6[%c2_i32_230] : memref<3x!tpu.dma_semaphore, #tpu.memory_space<semaphore_mem>> -> memref<1x!tpu.dma_semaphore, #tpu.memory_space<semaphore_mem>>
    %315 = tpu.memref_squeeze %314 : memref<1x!tpu.dma_semaphore, #tpu.memory_space<semaphore_mem>> -> memref<!tpu.dma_semaphore, #tpu.memory_space<semaphore_mem>>
    tpu.enqueue_dma source(%311 : memref<144x512xbf16, #tpu.memory_space<any>>) target(%313 : memref<144x512xbf16, #tpu.memory_space<vmem>>) target_semaphore(%315 : memref<!tpu.dma_semaphore, #tpu.memory_space<semaphore_mem>>)
    %c0_234 = arith.constant 0 : index
    %c0_235 = arith.constant 0 : index
    %c0_236 = arith.constant 0 : index
    %316 = vector.load %arg5[%c0_234, %c0_235, %c0_236] : memref<3x528x512xbf16, #tpu.memory_space<vmem>>, vector<1x256x128xbf16>
    %317 = vector.shape_cast %316 : vector<1x256x128xbf16> to vector<256x128xbf16>
    %c0_237 = arith.constant 0 : index
    %c256_238 = arith.constant 256 : index
    %c0_239 = arith.constant 0 : index
    %318 = vector.load %arg5[%c0_237, %c256_238, %c0_239] : memref<3x528x512xbf16, #tpu.memory_space<vmem>>, vector<1x16x128xbf16>
    %319 = vector.shape_cast %318 : vector<1x16x128xbf16> to vector<16x128xbf16>
    %c17 = arith.constant 17 : index
    %c0_240 = arith.constant 0 : index
    %320 = vector.load %arg2[%c17, %c0_240] : memref<24x512xf32, #tpu.memory_space<vmem>>, vector<1x128xf32>
    %c18 = arith.constant 18 : index
    %c0_241 = arith.constant 0 : index
    %321 = vector.load %arg2[%c18, %c0_241] : memref<24x512xf32, #tpu.memory_space<vmem>>, vector<1x128xf32>
    %322 = arith.truncf %305 : vector<8x256xf32> to vector<8x256xbf16>
    %cst_242 = arith.constant dense<0.000000e+00> : vector<8x128xf32>
    %323 = tpu.matmul %322, %317, %cst_242 {dimension_numbers = #tpu.dot_dimension_numbers<[1], [0], [0], [1], [0, 0, 1, 1], [], []>} : vector<8x256xbf16>, vector<256x128xbf16>, vector<8x128xf32> -> vector<8x128xf32>
    %324 = vector.broadcast %320 : vector<1x128xf32> to vector<8x128xf32>
    %325 = arith.addf %323, %324 : vector<8x128xf32>
    %cst_243 = arith.constant 0.000000e+00 : f32
    %326 = vector.broadcast %cst_243 : f32 to vector<8x128xf32>
    %327 = arith.maximumf %325, %326 : vector<8x128xf32>
    %cst_244 = arith.constant dense<0.000000e+00> : vector<16x128xf32>
    %328 = tpu.matmul %41, %319, %cst_244 {dimension_numbers = #tpu.dot_dimension_numbers<[1], [0], [0], [1], [0, 0, 1, 1], [], []>} : vector<16x16xbf16>, vector<16x128xbf16>, vector<16x128xf32> -> vector<16x128xf32>
    %329 = vector.broadcast %321 : vector<1x128xf32> to vector<16x128xf32>
    %330 = arith.addf %328, %329 : vector<16x128xf32>
    %cst_245 = arith.constant 0.000000e+00 : f32
    %331 = vector.broadcast %cst_245 : f32 to vector<16x128xf32>
    %332 = arith.maximumf %330, %331 : vector<16x128xf32>
    %cst_246 = arith.constant dense<0.000000e+00> : vector<16x128xf32>
    %333 = tpu.matmul %19, %327, %cst_246 {dimension_numbers = #tpu.dot_dimension_numbers<[1], [0], [0], [1], [0, 0, 1, 1], [], []>} : vector<16x8xf32>, vector<8x128xf32>, vector<16x128xf32> -> vector<16x128xf32>
    %334 = arith.mulf %332, %333 : vector<16x128xf32>
    %335 = vector.extract_strided_slice %334 {offsets = [0, 0], sizes = [8, 128], strides = [1, 1]} : vector<16x128xf32> to vector<8x128xf32>
    %336 = vector.extract_strided_slice %334 {offsets = [8, 0], sizes = [8, 128], strides = [1, 1]} : vector<16x128xf32> to vector<8x128xf32>
    %337 = arith.maximumf %335, %336 : vector<8x128xf32>
    %338 = arith.addf %327, %337 : vector<8x128xf32>
    %c1_i32_247 = arith.constant 1 : i32
    %c1_i32_248 = arith.constant 1 : i32
    %c2832_i32_249 = arith.constant 2832 : i32
    %c0_i32_250 = arith.constant 0 : i32
    %339 = tpu.memref_slice %arg3[%c2832_i32_249, %c0_i32_250] : memref<3120x512xbf16, #tpu.memory_space<any>> -> memref<144x512xbf16, #tpu.memory_space<any>>
    %c0_i32_251 = arith.constant 0 : i32
    %c0_i32_252 = arith.constant 0 : i32
    %340 = tpu.memref_slice %arg5[%c1_i32_247, %c0_i32_251, %c0_i32_252] : memref<3x528x512xbf16, #tpu.memory_space<vmem>> -> memref<1x144x512xbf16, #tpu.memory_space<vmem>>
    %341 = tpu.memref_squeeze %340 : memref<1x144x512xbf16, #tpu.memory_space<vmem>> -> memref<144x512xbf16, #tpu.memory_space<vmem>>
    %342 = tpu.memref_slice %arg6[%c1_i32_248] : memref<3x!tpu.dma_semaphore, #tpu.memory_space<semaphore_mem>> -> memref<1x!tpu.dma_semaphore, #tpu.memory_space<semaphore_mem>>
    %343 = tpu.memref_squeeze %342 : memref<1x!tpu.dma_semaphore, #tpu.memory_space<semaphore_mem>> -> memref<!tpu.dma_semaphore, #tpu.memory_space<semaphore_mem>>
    tpu.wait_dma2 semaphore(%343 : memref<!tpu.dma_semaphore, #tpu.memory_space<semaphore_mem>>) src(%339 : memref<144x512xbf16, #tpu.memory_space<any>>) dst(%341 : memref<144x512xbf16, #tpu.memory_space<vmem>>)
    %c1_253 = arith.constant 1 : index
    %c0_254 = arith.constant 0 : index
    %c0_255 = arith.constant 0 : index
    %344 = vector.load %arg5[%c1_253, %c0_254, %c0_255] : memref<3x528x512xbf16, #tpu.memory_space<vmem>>, vector<1x128x128xbf16>
    %345 = vector.shape_cast %344 : vector<1x128x128xbf16> to vector<128x128xbf16>
    %c1_256 = arith.constant 1 : index
    %c128_257 = arith.constant 128 : index
    %c0_258 = arith.constant 0 : index
    %346 = vector.load %arg5[%c1_256, %c128_257, %c0_258] : memref<3x528x512xbf16, #tpu.memory_space<vmem>>, vector<1x16x128xbf16>
    %347 = vector.shape_cast %346 : vector<1x16x128xbf16> to vector<16x128xbf16>
    %c19 = arith.constant 19 : index
    %c0_259 = arith.constant 0 : index
    %348 = vector.load %arg2[%c19, %c0_259] : memref<24x512xf32, #tpu.memory_space<vmem>>, vector<1x128xf32>
    %c20 = arith.constant 20 : index
    %c0_260 = arith.constant 0 : index
    %349 = vector.load %arg2[%c20, %c0_260] : memref<24x512xf32, #tpu.memory_space<vmem>>, vector<1x128xf32>
    %350 = arith.truncf %338 : vector<8x128xf32> to vector<8x128xbf16>
    %cst_261 = arith.constant dense<0.000000e+00> : vector<8x128xf32>
    %351 = tpu.matmul %350, %345, %cst_261 {dimension_numbers = #tpu.dot_dimension_numbers<[1], [0], [0], [1], [0, 0, 1, 1], [], []>} : vector<8x128xbf16>, vector<128x128xbf16>, vector<8x128xf32> -> vector<8x128xf32>
    %352 = vector.broadcast %348 : vector<1x128xf32> to vector<8x128xf32>
    %353 = arith.addf %351, %352 : vector<8x128xf32>
    %cst_262 = arith.constant 0.000000e+00 : f32
    %354 = vector.broadcast %cst_262 : f32 to vector<8x128xf32>
    %355 = arith.maximumf %353, %354 : vector<8x128xf32>
    %cst_263 = arith.constant dense<0.000000e+00> : vector<16x128xf32>
    %356 = tpu.matmul %41, %347, %cst_263 {dimension_numbers = #tpu.dot_dimension_numbers<[1], [0], [0], [1], [0, 0, 1, 1], [], []>} : vector<16x16xbf16>, vector<16x128xbf16>, vector<16x128xf32> -> vector<16x128xf32>
    %357 = vector.broadcast %349 : vector<1x128xf32> to vector<16x128xf32>
    %358 = arith.addf %356, %357 : vector<16x128xf32>
    %cst_264 = arith.constant 0.000000e+00 : f32
    %359 = vector.broadcast %cst_264 : f32 to vector<16x128xf32>
    %360 = arith.maximumf %358, %359 : vector<16x128xf32>
    %cst_265 = arith.constant dense<0.000000e+00> : vector<16x128xf32>
    %361 = tpu.matmul %19, %355, %cst_265 {dimension_numbers = #tpu.dot_dimension_numbers<[1], [0], [0], [1], [0, 0, 1, 1], [], []>} : vector<16x8xf32>, vector<8x128xf32>, vector<16x128xf32> -> vector<16x128xf32>
    %362 = arith.mulf %360, %361 : vector<16x128xf32>
    %363 = vector.extract_strided_slice %362 {offsets = [0, 0], sizes = [8, 128], strides = [1, 1]} : vector<16x128xf32> to vector<8x128xf32>
    %364 = vector.extract_strided_slice %362 {offsets = [8, 0], sizes = [8, 128], strides = [1, 1]} : vector<16x128xf32> to vector<8x128xf32>
    %365 = arith.maximumf %363, %364 : vector<8x128xf32>
    %366 = arith.addf %355, %365 : vector<8x128xf32>
    %c2_i32_266 = arith.constant 2 : i32
    %c2_i32_267 = arith.constant 2 : i32
    %c2976_i32_268 = arith.constant 2976 : i32
    %c0_i32_269 = arith.constant 0 : i32
    %367 = tpu.memref_slice %arg3[%c2976_i32_268, %c0_i32_269] : memref<3120x512xbf16, #tpu.memory_space<any>> -> memref<144x512xbf16, #tpu.memory_space<any>>
    %c0_i32_270 = arith.constant 0 : i32
    %c0_i32_271 = arith.constant 0 : i32
    %368 = tpu.memref_slice %arg5[%c2_i32_266, %c0_i32_270, %c0_i32_271] : memref<3x528x512xbf16, #tpu.memory_space<vmem>> -> memref<1x144x512xbf16, #tpu.memory_space<vmem>>
    %369 = tpu.memref_squeeze %368 : memref<1x144x512xbf16, #tpu.memory_space<vmem>> -> memref<144x512xbf16, #tpu.memory_space<vmem>>
    %370 = tpu.memref_slice %arg6[%c2_i32_267] : memref<3x!tpu.dma_semaphore, #tpu.memory_space<semaphore_mem>> -> memref<1x!tpu.dma_semaphore, #tpu.memory_space<semaphore_mem>>
    %371 = tpu.memref_squeeze %370 : memref<1x!tpu.dma_semaphore, #tpu.memory_space<semaphore_mem>> -> memref<!tpu.dma_semaphore, #tpu.memory_space<semaphore_mem>>
    tpu.wait_dma2 semaphore(%371 : memref<!tpu.dma_semaphore, #tpu.memory_space<semaphore_mem>>) src(%367 : memref<144x512xbf16, #tpu.memory_space<any>>) dst(%369 : memref<144x512xbf16, #tpu.memory_space<vmem>>)
    %c2_272 = arith.constant 2 : index
    %c0_273 = arith.constant 0 : index
    %c0_274 = arith.constant 0 : index
    %372 = vector.load %arg5[%c2_272, %c0_273, %c0_274] : memref<3x528x512xbf16, #tpu.memory_space<vmem>>, vector<1x128x128xbf16>
    %373 = vector.shape_cast %372 : vector<1x128x128xbf16> to vector<128x128xbf16>
    %c2_275 = arith.constant 2 : index
    %c128_276 = arith.constant 128 : index
    %c0_277 = arith.constant 0 : index
    %374 = vector.load %arg5[%c2_275, %c128_276, %c0_277] : memref<3x528x512xbf16, #tpu.memory_space<vmem>>, vector<1x16x128xbf16>
    %375 = vector.shape_cast %374 : vector<1x16x128xbf16> to vector<16x128xbf16>
    %c21 = arith.constant 21 : index
    %c0_278 = arith.constant 0 : index
    %376 = vector.load %arg2[%c21, %c0_278] : memref<24x512xf32, #tpu.memory_space<vmem>>, vector<1x128xf32>
    %c22 = arith.constant 22 : index
    %c0_279 = arith.constant 0 : index
    %377 = vector.load %arg2[%c22, %c0_279] : memref<24x512xf32, #tpu.memory_space<vmem>>, vector<1x128xf32>
    %378 = arith.truncf %366 : vector<8x128xf32> to vector<8x128xbf16>
    %cst_280 = arith.constant dense<0.000000e+00> : vector<8x128xf32>
    %379 = tpu.matmul %378, %373, %cst_280 {dimension_numbers = #tpu.dot_dimension_numbers<[1], [0], [0], [1], [0, 0, 1, 1], [], []>} : vector<8x128xbf16>, vector<128x128xbf16>, vector<8x128xf32> -> vector<8x128xf32>
    %380 = vector.broadcast %376 : vector<1x128xf32> to vector<8x128xf32>
    %381 = arith.addf %379, %380 : vector<8x128xf32>
    %cst_281 = arith.constant 0.000000e+00 : f32
    %382 = vector.broadcast %cst_281 : f32 to vector<8x128xf32>
    %383 = arith.maximumf %381, %382 : vector<8x128xf32>
    %cst_282 = arith.constant dense<0.000000e+00> : vector<16x128xf32>
    %384 = tpu.matmul %41, %375, %cst_282 {dimension_numbers = #tpu.dot_dimension_numbers<[1], [0], [0], [1], [0, 0, 1, 1], [], []>} : vector<16x16xbf16>, vector<16x128xbf16>, vector<16x128xf32> -> vector<16x128xf32>
    %385 = vector.broadcast %377 : vector<1x128xf32> to vector<16x128xf32>
    %386 = arith.addf %384, %385 : vector<16x128xf32>
    %cst_283 = arith.constant 0.000000e+00 : f32
    %387 = vector.broadcast %cst_283 : f32 to vector<16x128xf32>
    %388 = arith.maximumf %386, %387 : vector<16x128xf32>
    %cst_284 = arith.constant dense<0.000000e+00> : vector<16x128xf32>
    %389 = tpu.matmul %19, %383, %cst_284 {dimension_numbers = #tpu.dot_dimension_numbers<[1], [0], [0], [1], [0, 0, 1, 1], [], []>} : vector<16x8xf32>, vector<8x128xf32>, vector<16x128xf32> -> vector<16x128xf32>
    %390 = arith.mulf %388, %389 : vector<16x128xf32>
    %391 = vector.extract_strided_slice %390 {offsets = [0, 0], sizes = [8, 128], strides = [1, 1]} : vector<16x128xf32> to vector<8x128xf32>
    %392 = vector.extract_strided_slice %390 {offsets = [8, 0], sizes = [8, 128], strides = [1, 1]} : vector<16x128xf32> to vector<8x128xf32>
    %393 = arith.maximumf %391, %392 : vector<8x128xf32>
    %394 = arith.addf %383, %393 : vector<8x128xf32>
    %c0_285 = arith.constant 0 : index
    %c0_286 = arith.constant 0 : index
    %395 = vector.load %arg4[%c0_285, %c0_286] : memref<8x128xf32, #tpu.memory_space<vmem>>, vector<8x128xf32>
    tpu.vector_store %arg4[%c0_285, %c0_286], %394 {strides = array<i32>} : memref<8x128xf32, #tpu.memory_space<vmem>>, vector<8x128xf32>,
    return
  }
}

</mosaic_0001>

<llo_original>
// kernel: motion_fgnn_forward.1
$region0: #{motion_fgnn_forward.1}
  #allocation0 [shape = 'u32[]', space=smem, size = 0x4, offset = 0x4, fixed_abs, tag = 'smem constant byte address 0x4 - core index']
  #allocation1 [shape = 'u32[144,128]{1,0:T(1,128)}', space=vmem, size = 0x12000, scoped, tag = 'internal scratch']
  #allocation2 [shape = 'bf16[3,528,512]{2,1,0:T(8,128)(2,1)}', space=vmem, size = 0x18c000, scoped, tag = 'scratch operand']
  #allocation3 [shape = 's32[3]{0}', space=sflag, size = 0xc, scoped, tag = 'scratch operand']
  #allocation8 [shape = 's32[]', space=sflag, size = 0x4, offset = 0, fixed_abs, tag = 'sflag constant byte address 0x0 - dummy sync flag']
  #allocation9 [shape = 's32[]', space=sflag, size = 0x4, offset = 0, fixed_abs, tag = 'sflag constant byte address 0x0 - dummy sync flag']
  #allocation10 [shape = 'u32[]', space=smem, size = 0x4, offset = 0x44, fixed_abs, tag = 'smem constant byte address 0x44 - assertion arg 0']
  #allocation11 [shape = 'u32[]', space=smem, size = 0x4, offset = 0x48, fixed_abs, tag = 'smem constant byte address 0x48 - assertion arg 1']
  #allocation12 [shape = 's32[]', space=sflag, size = 0x4, offset = 0, fixed_abs, tag = 'sflag constant byte address 0x0 - dummy sync flag']
  #allocation13 [shape = 's32[]', space=sflag, size = 0x4, offset = 0, fixed_abs, tag = 'sflag constant byte address 0x0 - dummy sync flag']
  #allocation14 [shape = 's32[]', space=sflag, size = 0x4, offset = 0, fixed_abs, tag = 'sflag constant byte address 0x0 - dummy sync flag']
  #allocation15 [shape = 's32[]', space=sflag, size = 0x4, offset = 0, fixed_abs, tag = 'sflag constant byte address 0x0 - dummy sync flag']
  #allocation16 [shape = 's32[]', space=sflag, size = 0x4, offset = 0, fixed_abs, tag = 'sflag constant byte address 0x0 - dummy sync flag']
  #allocation17 [shape = 's32[]', space=sflag, size = 0x4, offset = 0, fixed_abs, tag = 'sflag constant byte address 0x0 - dummy sync flag']
  #allocation18 [shape = 's32[]', space=sflag, size = 0x4, offset = 0, fixed_abs, tag = 'sflag constant byte address 0x0 - dummy sync flag']
  #allocation19 [shape = 's32[]', space=sflag, size = 0x4, offset = 0, fixed_abs, tag = 'sflag constant byte address 0x0 - dummy sync flag']
  #allocation20 [shape = 's32[]', space=sflag, size = 0x4, offset = 0, fixed_abs, tag = 'sflag constant byte address 0x0 - dummy sync flag']
  #allocation21 [shape = 's32[]', space=sflag, size = 0x4, offset = 0, fixed_abs, tag = 'sflag constant byte address 0x0 - dummy sync flag']
  #allocation22 [shape = 's32[]', space=sflag, size = 0x4, offset = 0, fixed_abs, tag = 'sflag constant byte address 0x0 - dummy sync flag']
  #allocation23 [shape = 's32[]', space=sflag, size = 0x4, offset = 0, fixed_abs, tag = 'sflag constant byte address 0x0 - dummy sync flag']
  #allocation24 [shape = 's32[]', space=sflag, size = 0x4, offset = 0, fixed_abs, tag = 'sflag constant byte address 0x0 - dummy sync flag']
  #allocation25 [shape = 's32[]', space=sflag, size = 0x4, offset = 0, fixed_abs, tag = 'sflag constant byte address 0x0 - dummy sync flag']
  #allocation26 [shape = 's32[]', space=sflag, size = 0x4, offset = 0, fixed_abs, tag = 'sflag constant byte address 0x0 - dummy sync flag']
  #allocation27 [shape = 's32[]', space=sflag, size = 0x4, offset = 0, fixed_abs, tag = 'sflag constant byte address 0x0 - dummy sync flag']
  #allocation28 [shape = 's32[]', space=sflag, size = 0x4, offset = 0, fixed_abs, tag = 'sflag constant byte address 0x0 - dummy sync flag']
  #allocation29 [shape = 's32[]', space=sflag, size = 0x4, offset = 0, fixed_abs, tag = 'sflag constant byte address 0x0 - dummy sync flag']
  #allocation30 [shape = 's32[]', space=sflag, size = 0x4, offset = 0, fixed_abs, tag = 'sflag constant byte address 0x0 - dummy sync flag']
  #allocation31 [shape = 's32[]', space=sflag, size = 0x4, offset = 0, fixed_abs, tag = 'sflag constant byte address 0x0 - dummy sync flag']
  #allocation32 [shape = 's32[]', space=sflag, size = 0x4, offset = 0, fixed_abs, tag = 'sflag constant byte address 0x0 - dummy sync flag']
  #allocation33 [shape = 's32[]', space=sflag, size = 0x4, offset = 0, fixed_abs, tag = 'sflag constant byte address 0x0 - dummy sync flag']
  %s0 = inlined_call_operand.vmem [shape: f32[8,128], index: 0, kind: input, shape index: {}]
  %s1 = inlined_call_operand.hbm [shape: f32[48,8], index: 1, kind: input, shape index: {}]
  %s2 = inlined_call_operand.hbm [shape: f32[24,512], index: 2, kind: input, shape index: {}]
  %s3 = inlined_call_operand.hbm [shape: bf16[3120,512], index: 3, kind: input, shape index: {}]
  %s4 = inlined_call_operand.vmem [shape: f32[8,128], index: 4, kind: output, shape index: {}]
  %s5 = sld [smem:[#allocation0]]
  $region78: #{motion_fgnn_forward.1} parent=0
    _
  %s7 = ssub.s32 1, %s5
  %s8 = scalar_select 0, %s7, %s5
  $region1: #{motion_fgnn_forward.1} parent=0
    #allocation4 [shape = 'u8[24576]{0}', space=vmem, size = 0x6000, scoped, tag = 'input window, operand 1, single buffered']
    #allocation5 [shape = 's32[1]{0}', space=sflag, size = 0x4, scoped, tag = 'scoped memory for motion_fgnn_forward.1']
    #allocation6 [shape = 'u8[49152]{0}', space=vmem, size = 0xc000, scoped, tag = 'input window, operand 2, single buffered']
    #allocation7 [shape = 's32[1]{0}', space=sflag, size = 0x4, scoped, tag = 'scoped memory for motion_fgnn_forward.1']
    %9 = vsyncpa [#allocation5], 0
    %10 = vsyncpa [#allocation7], 0
    // Predicated region
    $region2: #{motion_fgnn_forward.1} parent=1 // pred_check
      _
    $region3: #{motion_fgnn_forward.1} parent=1 // pred_check_branch
      %12 = sbr.rel (0) target = $region5
    $region4: #{motion_fgnn_forward.1} parent=1 // pred_region
      _
    $region5: #{motion_fgnn_forward.1} parent=1 // pred_fallthru
      _
    // Predicated region
    $region6: #{motion_fgnn_forward.1} parent=1 // pred_check
      _
    $region7: #{motion_fgnn_forward.1} parent=1 // pred_check_branch
      %14 = sbr.rel (0) target = $region9
    $region8: #{motion_fgnn_forward.1} parent=1 // pred_region
      %s16 = ssub.s32 768, 768
      %17 = vsyncadd [#allocation5], %s16
      %s18 = sshll.u32 [#allocation4], 4
      %s19 = int_to_ptr.vmem [resolvable:$true] %s18
      %24 = dma.hbm_to_vmem [thread:$0]  %s1, 768, %s19, [#allocation5], 128, 128, 8
    $region9: #{motion_fgnn_forward.1} parent=1 // pred_fallthru
      _
    // Predicated region
    $region10: #{motion_fgnn_forward.1} parent=1 // pred_check
      _
    $region11: #{motion_fgnn_forward.1} parent=1 // pred_check_branch
      %26 = sbr.rel (0) target = $region13
    $region12: #{motion_fgnn_forward.1} parent=1 // pred_region
      %s28 = ssub.s32 1536, 1536
      %29 = vsyncadd [#allocation7], %s28
      %s30 = sshll.u32 [#allocation6], 4
      %s31 = int_to_ptr.vmem [resolvable:$true] %s30
      %36 = dma.hbm_to_vmem [thread:$0]  %s2, 1536, %s31, [#allocation7], 512, 512, 32
    $region13: #{motion_fgnn_forward.1} parent=1 // pred_fallthru
      _
    // Predicated region
    $region14: #{motion_fgnn_forward.1} parent=1 // pred_check
      _
    $region15: #{motion_fgnn_forward.1} parent=1 // pred_check_branch
      %38 = sbr.rel (0) target = $region17
    $region16: #{motion_fgnn_forward.1} parent=1 // pred_region
      %39 = dma.done [#allocation5], 768
    $region17: #{motion_fgnn_forward.1} parent=1 // pred_fallthru
      _
    // Predicated region
    $region18: #{motion_fgnn_forward.1} parent=1 // pred_check
      _
    $region19: #{motion_fgnn_forward.1} parent=1 // pred_check_branch
      %41 = sbr.rel (0) target = $region21
    $region20: #{motion_fgnn_forward.1} parent=1 // pred_region
      %42 = dma.done [#allocation7], 1536
    $region21: #{motion_fgnn_forward.1} parent=1 // pred_fallthru
      _
    // Predicated region
    $region22: #{motion_fgnn_forward.1} parent=1 // pred_check
      _
    $region23: #{motion_fgnn_forward.1} parent=1 // pred_check_branch
      %45 = sbr.rel target = $region25
    $region24: #{motion_fgnn_forward.1} parent=1 // pred_region
      %46 = sst [smem:[#allocation10]] [#allocation9]
      %47 = sst [smem:[#allocation11]] [#allocation8]
    $region25: #{motion_fgnn_forward.1} parent=1 // pred_fallthru
      _
    %49 = shalt.err (0)
    %s51 = sshll.u32 [#allocation2], 4
    %s52 = int_to_ptr.vmem [resolvable:$true] %s51
    %54 = dma.hbm_to_vmem [thread:$0]  %s3, 8192, %s52, [#allocation3]
    %s55 = scalar_lea.hbm %s3, 8192
    %s56 = scalar_lea.vmem [#allocation2], 1056
    %s57 = scalar_lea.sflag [#allocation3], 1
    // Predicated region
    $region26: #{motion_fgnn_forward.1} parent=1 // pred_check
      _
    $region27: #{motion_fgnn_forward.1} parent=1 // pred_check_branch
      %59 = sbr.rel target = $region29
    $region28: #{motion_fgnn_forward.1} parent=1 // pred_region
      %60 = sst [smem:[#allocation10]] [#allocation13]
      %61 = sst [smem:[#allocation11]] [#allocation12]
    $region29: #{motion_fgnn_forward.1} parent=1 // pred_fallthru
      _
    %63 = shalt.err (0)
    %s65 = sshll.u32 %s56, 4
    %s66 = int_to_ptr.vmem [resolvable:$true] %s65
    %68 = dma.hbm_to_vmem [thread:$0]  %s55, 4608, %s66, %s57
    %s69 = scalar_lea.hbm %s3, 12800
    %s70 = scalar_lea.vmem [#allocation2], 2112
    %s71 = scalar_lea.sflag [#allocation3], 2
    // Predicated region
    $region30: #{motion_fgnn_forward.1} parent=1 // pred_check
      _
    $region31: #{motion_fgnn_forward.1} parent=1 // pred_check_branch
      %73 = sbr.rel target = $region33
    $region32: #{motion_fgnn_forward.1} parent=1 // pred_region
      %74 = sst [smem:[#allocation10]] [#allocation15]
      %75 = sst [smem:[#allocation11]] [#allocation14]
    $region33: #{motion_fgnn_forward.1} parent=1 // pred_fallthru
      _
    %77 = shalt.err (0)
    %s79 = sshll.u32 %s70, 4
    %s80 = int_to_ptr.vmem [resolvable:$true] %s79
    %82 = dma.hbm_to_vmem [thread:$0]  %s69, 4608, %s80, %s71
    %v83 = vld [vmem:[#allocation4] sm:$0xff]
    %v84 = vld [vmem:[#allocation4 + $0x8] sm:$0xff]
    %v85 = vld [vmem:[#allocation4 + $0x10] sm:$0xff]
    %v86 = vld [vmem:[#allocation4 + $0x18] sm:$0xff]
    %v87 = vld [vmem:[%s0] sm:$0xff]
    %vm88 = vcmask 64512
    %v90 = vsel %vm88, %v83, 0
    %v93 = vsel %vm88, %v84, 0
    %v96 = vsel %vm88, %v85, 0
    %v99 = vsel %vm88, %v86, 0
    %101 = vmatprep.subr.mxu0 0.0
    %102 = vmatpush1.msra.mxu0 0.0
    %103 = vmatprep.subr.mxu0 0.0
    %104 = vmatpush1.msra.mxu0 0.0
    %105 = vmatprep.subr.mxu0 0.0
    %106 = vmatpush1.msra.mxu0 0.0
    %107 = vmatprep.subr.mxu0 0.0
    %108 = vmatpush1.msra.mxu0 0.0
    %109 = vmatprep.subr.mxu0 0.0
    %110 = vmatpush1.msra.mxu0 0.0
    %111 = vmatprep.subr.mxu0 0.0
    %112 = vmatpush1.msra.mxu0 0.0
    %113 = vmatprep.subr.mxu0 0.0
    %114 = vmatpush1.msra.mxu0 0.0
    %115 = vmatprep.subr.mxu0 0.0
    %116 = vmatpush1.msra.mxu0 0.0
    %117 = vmatprep.subr.mxu0 0.0
    %118 = vmatpush1.msra.mxu0 0.0
    %119 = vmatprep.subr.mxu0 0.0
    %120 = vmatpush1.msra.mxu0 0.0
    %121 = vmatprep.subr.mxu0 0.0
    %122 = vmatpush1.msra.mxu0 0.0
    %123 = vmatprep.subr.mxu0 0.0
    %124 = vmatpush1.msra.mxu0 0.0
    %125 = vmatprep.subr.mxu0 0.0
    %126 = vmatpush1.msra.mxu0 0.0
    %127 = vmatprep.subr.mxu0 0.0
    %128 = vmatpush1.msra.mxu0 0.0
    %129 = vmatprep.subr.mxu0 0.0
    %130 = vmatpush1.msra.mxu0 0.0
    %131 = vmatprep.subr.mxu0 0.0
    %132 = vmatpush1.msra.mxu0 %v87
    %133 = vmatprep.subr.mxu0 0.0
    %134 = vmatpush2.msra.mxu0 0.0
    %135 = vmatprep.subr.mxu0 0.0
    %136 = vmatpush2.msra.mxu0 0.0
    %137 = vmatprep.subr.mxu0 0.0
    %138 = vmatpush2.msra.mxu0 0.0
    %139 = vmatprep.subr.mxu0 0.0
    %140 = vmatpush2.msra.mxu0 0.0
    %141 = vmatprep.subr.mxu0 0.0
    %142 = vmatpush2.msra.mxu0 0.0
    %143 = vmatprep.subr.mxu0 0.0
    %144 = vmatpush2.msra.mxu0 0.0
    %145 = vmatprep.subr.mxu0 0.0
    %146 = vmatpush2.msra.mxu0 0.0
    %147 = vmatprep.subr.mxu0 0.0
    %148 = vmatpush2.msra.mxu0 0.0
    %149 = vmatprep.subr.mxu0 0.0
    %150 = vmatpush2.msra.mxu0 0.0
    %151 = vmatprep.subr.mxu0 0.0
    %152 = vmatpush2.msra.mxu0 0.0
    %153 = vmatprep.subr.mxu0 0.0
    %154 = vmatpush2.msra.mxu0 0.0
    %155 = vmatprep.subr.mxu0 0.0
    %156 = vmatpush2.msra.mxu0 0.0
    %157 = vmatprep.subr.mxu0 0.0
    %158 = vmatpush2.msra.mxu0 0.0
    %159 = vmatprep.subr.mxu0 0.0
    %160 = vmatpush2.msra.mxu0 0.0
    %161 = vmatprep.subr.mxu0 0.0
    %162 = vmatpush2.msra.mxu0 0.0
    %163 = vmatprep.subr.mxu0 0.0
    %164 = vmatpush2.msra.mxu0 0.0
    %165 = vmatprep.mubr.f32.mxu0 0.0
    %166 = vmatmul.mubr.f32.gmra.mxu0 %v90
    %v167 = vpop.f32.mrf.mxu0
    %v168 = vadd.f32 0.0, %v167
    %v169 = vpop.f32.mrf.mxu0
    %170 = vmatprep.mubr.f32.mxu0 0.0
    %171 = vmatmul.mubr.f32.gmra.mxu0 %v93
    %v172 = vpop.f32.mrf.mxu0
    %v173 = vadd.f32 0.0, %v172
    %v174 = vpop.f32.mrf.mxu0
    %175 = vmatprep.mubr.f32.mxu0 0.0
    %176 = vmatmul.mubr.f32.gmra.mxu0 %v96
    %v177 = vpop.f32.mrf.mxu0
    %v178 = vadd.f32 0.0, %v177
    %v179 = vpop.f32.mrf.mxu0
    %180 = vmatprep.mubr.f32.mxu0 0.0
    %181 = vmatmul.mubr.f32.gmra.mxu0 %v99
    %v182 = vpop.f32.mrf.mxu0
    %v183 = vadd.f32 0.0, %v182
    %v184 = vpop.f32.mrf.mxu0
    %185 = vdwg.mxu0
    %v186 = vld [vmem:[#allocation4 + $0x20] sm:$0xff]
    %v187 = vld [vmem:[#allocation4 + $0x28] sm:$0xff]
    %s188 = smul.u32 4, 32
    %s189 = smul.u32 %s188, 4
    %s190 = sshll.u32 %s189, 4
    %191 = dma.done [#allocation3], %s190
    %v192 = vld [vmem:[#allocation2] sm:$0xf]
    %v193 = vld [vmem:[#allocation2 + $0x10] sm:$0xf]
    %v194 = vld [vmem:[#allocation2 + $0x20] sm:$0xf]
    %v195 = vld [vmem:[#allocation2 + $0x30] sm:$0xf]
    %v196 = vld [vmem:[#allocation2 + $0x40] sm:$0xf]
    %v197 = vld [vmem:[#allocation2 + $0x50] sm:$0xf]
    %v198 = vld [vmem:[#allocation2 + $0x60] sm:$0xf]
    %v199 = vld [vmem:[#allocation2 + $0x70] sm:$0xf]
    %v200 = vld [vmem:[#allocation2 + $0x80] sm:$0xf]
    %v201 = vld [vmem:[#allocation2 + $0x90] sm:$0xf]
    %v202 = vld [vmem:[#allocation2 + $0xa0] sm:$0xf]
    %v203 = vld [vmem:[#allocation2 + $0xb0] sm:$0xf]
    %v204 = vld [vmem:[#allocation2 + $0xc0] sm:$0xf]
    %v205 = vld [vmem:[#allocation2 + $0xd0] sm:$0xf]
    %v206 = vld [vmem:[#allocation2 + $0xe0] sm:$0xf]
    %v207 = vld [vmem:[#allocation2 + $0xf0] sm:$0xf]
    %v208 = vld [vmem:[#allocation2 + $0x100] sm:$0xf]
    %v209 = vld [vmem:[#allocation2 + $0x110] sm:$0xf]
    %v210 = vld [vmem:[#allocation2 + $0x120] sm:$0xf]
    %v211 = vld [vmem:[#allocation2 + $0x130] sm:$0xf]
    %v212 = vld [vmem:[#allocation2 + $0x140] sm:$0xf]
    %v213 = vld [vmem:[#allocation2 + $0x150] sm:$0xf]
    %v214 = vld [vmem:[#allocation2 + $0x160] sm:$0xf]
    %v215 = vld [vmem:[#allocation2 + $0x170] sm:$0xf]
    %v216 = vld [vmem:[#allocation2 + $0x180] sm:$0xf]
    %v217 = vld [vmem:[#allocation2 + $0x190] sm:$0xf]
    %v218 = vld [vmem:[#allocation2 + $0x1a0] sm:$0xf]
    %v219 = vld [vmem:[#allocation2 + $0x1b0] sm:$0xf]
    %v220 = vld [vmem:[#allocation2 + $0x1c0] sm:$0xf]
    %v221 = vld [vmem:[#allocation2 + $0x1d0] sm:$0xf]
    %v222 = vld [vmem:[#allocation2 + $0x1e0] sm:$0xf]
    %v223 = vld [vmem:[#allocation2 + $0x1f0] sm:$0xf]
    %v224 = vpack.c.bf16 %v173, %v168
    %v225 = vpack.c.bf16 %v183, %v178
    %v242 = vunpack.c.l.b16 %v208
    %v243 = vunpack.c.l.b16 %v209
    %v244 = vunpack.c.l.b16 %v210
    %v245 = vunpack.c.l.b16 %v211
    %v246 = vunpack.c.l.b16 %v212
    %v247 = vunpack.c.l.b16 %v213
    %v248 = vunpack.c.l.b16 %v214
    %v249 = vunpack.c.l.b16 %v215
    %v250 = vunpack.c.l.b16 %v216
    %v251 = vunpack.c.l.b16 %v217
    %v252 = vunpack.c.l.b16 %v218
    %v253 = vunpack.c.l.b16 %v219
    %v254 = vunpack.c.l.b16 %v220
    %v255 = vunpack.c.l.b16 %v221
    %v256 = vunpack.c.l.b16 %v222
    %v257 = vunpack.c.l.b16 %v223
    %v258 = vpack.c.b16 %v243, %v242
    %v259 = vpack.c.b16 %v245, %v244
    %v260 = vpack.c.b16 %v247, %v246
    %v261 = vpack.c.b16 %v249, %v248
    %v262 = vpack.c.b16 %v251, %v250
    %v263 = vpack.c.b16 %v253, %v252
    %v264 = vpack.c.b16 %v255, %v254
    %v265 = vpack.c.b16 %v257, %v256
    %274 = vmatprep.subr.bf16.mxu0 0
    %275 = vmatpush1.bf16.msra.mxu0 %v265
    %276 = vmatprep.subr.bf16.mxu0 0
    %277 = vmatpush1.bf16.msra.mxu0 %v264
    %278 = vmatprep.subr.bf16.mxu0 0
    %279 = vmatpush1.bf16.msra.mxu0 %v263
    %280 = vmatprep.subr.bf16.mxu0 0
    %281 = vmatpush1.bf16.msra.mxu0 %v262
    %282 = vmatprep.subr.bf16.mxu0 0
    %283 = vmatpush1.bf16.msra.mxu0 %v261
    %284 = vmatprep.subr.bf16.mxu0 0
    %285 = vmatpush1.bf16.msra.mxu0 %v260
    %286 = vmatprep.subr.bf16.mxu0 0
    %287 = vmatpush1.bf16.msra.mxu0 %v259
    %288 = vmatprep.subr.bf16.mxu0 0
    %289 = vmatpush1.bf16.msra.mxu0 %v258
    %290 = vmatprep.subr.bf16.mxu0 0
    %291 = vmatpush2.bf16.msra.mxu0 0
    %292 = vmatprep.subr.bf16.mxu0 0
    %293 = vmatpush2.bf16.msra.mxu0 0
    %294 = vmatprep.subr.bf16.mxu0 0
    %295 = vmatpush2.bf16.msra.mxu0 0
    %296 = vmatprep.subr.bf16.mxu0 0
    %297 = vmatpush2.bf16.msra.mxu0 0
    %298 = vmatprep.subr.bf16.mxu0 0
    %299 = vmatpush2.bf16.msra.mxu0 0
    %300 = vmatprep.subr.bf16.mxu0 0
    %301 = vmatpush2.bf16.msra.mxu0 0
    %302 = vmatprep.subr.bf16.mxu0 0
    %303 = vmatpush2.bf16.msra.mxu0 0
    %304 = vmatprep.subr.bf16.mxu0 0
    %305 = vmatpush2.bf16.msra.mxu0 0
    %306 = vmatprep.mubr.bf16.mxu0 0
    %307 = vmatmul.mubr.bf16.gmra.mxu0 %v225
    %v308 = vpop.f32.mrf.mxu0
    %v309 = vadd.f32 0.0, %v308
    %v310 = vpop.f32.mrf.mxu0
    %v311 = vpop.f32.mrf.mxu0
    %v312 = vadd.f32 0.0, %v311
    %v313 = vpop.f32.mrf.mxu0
    %314 = vdwg.mxu0
    %v331 = vunpack.c.l.b16 %v192
    %v332 = vunpack.c.l.b16 %v193
    %v333 = vunpack.c.l.b16 %v194
    %v334 = vunpack.c.l.b16 %v195
    %v335 = vunpack.c.l.b16 %v196
    %v336 = vunpack.c.l.b16 %v197
    %v337 = vunpack.c.l.b16 %v198
    %v338 = vunpack.c.l.b16 %v199
    %v339 = vunpack.c.l.b16 %v200
    %v340 = vunpack.c.l.b16 %v201
    %v341 = vunpack.c.l.b16 %v202
    %v342 = vunpack.c.l.b16 %v203
    %v343 = vunpack.c.l.b16 %v204
    %v344 = vunpack.c.l.b16 %v205
    %v345 = vunpack.c.l.b16 %v206
    %v346 = vunpack.c.l.b16 %v207
    %v347 = vpack.c.b16 %v332, %v331
    %v348 = vpack.c.b16 %v334, %v333
    %v349 = vpack.c.b16 %v336, %v335
    %v350 = vpack.c.b16 %v338, %v337
    %v351 = vpack.c.b16 %v340, %v339
    %v352 = vpack.c.b16 %v342, %v341
    %v353 = vpack.c.b16 %v344, %v343
    %v354 = vpack.c.b16 %v346, %v345
    %363 = vmatprep.subr.bf16.mxu0 0
    %364 = vmatpush1.bf16.msra.mxu0 %v354
    %365 = vmatprep.subr.bf16.mxu0 0
    %366 = vmatpush1.bf16.msra.mxu0 %v353
    %367 = vmatprep.subr.bf16.mxu0 0
    %368 = vmatpush1.bf16.msra.mxu0 %v352
    %369 = vmatprep.subr.bf16.mxu0 0
    %370 = vmatpush1.bf16.msra.mxu0 %v351
    %371 = vmatprep.subr.bf16.mxu0 0
    %372 = vmatpush1.bf16.msra.mxu0 %v350
    %373 = vmatprep.subr.bf16.mxu0 0
    %374 = vmatpush1.bf16.msra.mxu0 %v349
    %375 = vmatprep.subr.bf16.mxu0 0
    %376 = vmatpush1.bf16.msra.mxu0 %v348
    %377 = vmatprep.subr.bf16.mxu0 0
    %378 = vmatpush1.bf16.msra.mxu0 %v347
    %379 = vmatprep.subr.bf16.mxu0 0
    %380 = vmatpush2.bf16.msra.mxu0 0
    %381 = vmatprep.subr.bf16.mxu0 0
    %382 = vmatpush2.bf16.msra.mxu0 0
    %383 = vmatprep.subr.bf16.mxu0 0
    %384 = vmatpush2.bf16.msra.mxu0 0
    %385 = vmatprep.subr.bf16.mxu0 0
    %386 = vmatpush2.bf16.msra.mxu0 0
    %387 = vmatprep.subr.bf16.mxu0 0
    %388 = vmatpush2.bf16.msra.mxu0 0
    %389 = vmatprep.subr.bf16.mxu0 0
    %390 = vmatpush2.bf16.msra.mxu0 0
    %391 = vmatprep.subr.bf16.mxu0 0
    %392 = vmatpush2.bf16.msra.mxu0 0
    %393 = vmatprep.subr.bf16.mxu0 0
    %394 = vmatpush2.bf16.msra.mxu0 0
    %395 = vmatprep.mubr.bf16.mxu0 0
    %396 = vmatmul.mubr.bf16.gmra.mxu0 %v224
    %v397 = vpop.f32.mrf.mxu0
    %v398 = vadd.f32 %v309, %v397
    %v399 = vpop.f32.mrf.mxu0
    %v400 = vpop.f32.mrf.mxu0
    %v401 = vadd.f32 %v312, %v400
    %v402 = vpop.f32.mrf.mxu0
    %403 = vdwg.mxu0
    %v404 = vld [vmem:[#allocation6] ss:$0 sm:$0xff]
    %v405 = vadd.f32 %v398, %v404
    %v406 = vadd.f32 %v401, %v404
    %v407 = vmax.f32 %v405, 0.0
    %v408 = vmax.f32 %v406, 0.0
    %v409 = vpack.c.bf16 %v408, %v407
    %s410 = smul.u32 4, 18
    %s411 = smul.u32 %s410, 4
    %s412 = sshll.u32 %s411, 4
    %413 = dma.done %s57, %s412
    %s414 = scalar_lea.hbm %s3, 17408
    // Predicated region
    $region34: #{motion_fgnn_forward.1} parent=1 // pred_check
      _
    $region35: #{motion_fgnn_forward.1} parent=1 // pred_check_branch
      %416 = sbr.rel target = $region37
    $region36: #{motion_fgnn_forward.1} parent=1 // pred_region
      %417 = sst [smem:[#allocation10]] [#allocation17]
      %418 = sst [smem:[#allocation11]] [#allocation16]
    $region37: #{motion_fgnn_forward.1} parent=1 // pred_fallthru
      _
    %420 = shalt.err (0)
    %s422 = sshll.u32 [#allocation2], 4
    %s423 = int_to_ptr.vmem [resolvable:$true] %s422
    %425 = dma.hbm_to_vmem [thread:$0]  %s414, 4608, %s423, [#allocation3]
    %v426 = vld [vmem:[%s56] sm:$0xf]
    %v427 = vld [vmem:[%s56 + $0x10] sm:$0xf]
    %v428 = vld [vmem:[%s56 + $0x20] sm:$0xf]
    %v429 = vld [vmem:[%s56 + $0x30] sm:$0xf]
    %v430 = vld [vmem:[%s56 + $0x40] sm:$0xf]
    %v431 = vld [vmem:[%s56 + $0x50] sm:$0xf]
    %v432 = vld [vmem:[%s56 + $0x60] sm:$0xf]
    %v433 = vld [vmem:[%s56 + $0x70] sm:$0xf]
    %v434 = vld [vmem:[%s56 + $0x80] sm:$0xf]
    %v435 = vld [vmem:[%s56 + $0x90] sm:$0xf]
    %v436 = vld [vmem:[%s56 + $0xa0] sm:$0xf]
    %v437 = vld [vmem:[%s56 + $0xb0] sm:$0xf]
    %v438 = vld [vmem:[%s56 + $0xc0] sm:$0xf]
    %v439 = vld [vmem:[%s56 + $0xd0] sm:$0xf]
    %v440 = vld [vmem:[%s56 + $0xe0] sm:$0xf]
    %v441 = vld [vmem:[%s56 + $0xf0] sm:$0xf]
    %v442 = vld [vmem:[%s56 + $0x100] sm:$0xf]
    %v443 = vld [vmem:[%s56 + $0x110] sm:$0xf]
    %v444 = vld [vmem:[#allocation6 + $0x1] ss:$0 sm:$0xff]
    %v445 = vld [vmem:[#allocation6 + $0x2] ss:$0 sm:$0xff]
    %v446 = vpack.c.bf16 %v168, %v168
    %v463 = vunpack.c.l.b16 %v426
    %v464 = vunpack.c.l.b16 %v427
    %v465 = vunpack.c.l.b16 %v428
    %v466 = vunpack.c.l.b16 %v429
    %v467 = vunpack.c.l.b16 %v430
    %v468 = vunpack.c.l.b16 %v431
    %v469 = vunpack.c.l.b16 %v432
    %v470 = vunpack.c.l.b16 %v433
    %v471 = vunpack.c.l.b16 %v434
    %v472 = vunpack.c.l.b16 %v435
    %v473 = vunpack.c.l.b16 %v436
    %v474 = vunpack.c.l.b16 %v437
    %v475 = vunpack.c.l.b16 %v438
    %v476 = vunpack.c.l.b16 %v439
    %v477 = vunpack.c.l.b16 %v440
    %v478 = vunpack.c.l.b16 %v441
    %v479 = vpack.c.b16 %v464, %v463
    %v480 = vpack.c.b16 %v466, %v465
    %v481 = vpack.c.b16 %v468, %v467
    %v482 = vpack.c.b16 %v470, %v469
    %v483 = vpack.c.b16 %v472, %v471
    %v484 = vpack.c.b16 %v474, %v473
    %v485 = vpack.c.b16 %v476, %v475
    %v486 = vpack.c.b16 %v478, %v477
    %495 = vmatprep.subr.bf16.mxu0 0
    %496 = vmatpush1.bf16.msra.mxu0 %v486
    %497 = vmatprep.subr.bf16.mxu0 0
    %498 = vmatpush1.bf16.msra.mxu0 %v485
    %499 = vmatprep.subr.bf16.mxu0 0
    %500 = vmatpush1.bf16.msra.mxu0 %v484
    %501 = vmatprep.subr.bf16.mxu0 0
    %502 = vmatpush1.bf16.msra.mxu0 %v483
    %503 = vmatprep.subr.bf16.mxu0 0
    %504 = vmatpush1.bf16.msra.mxu0 %v482
    %505 = vmatprep.subr.bf16.mxu0 0
    %506 = vmatpush1.bf16.msra.mxu0 %v481
    %507 = vmatprep.subr.bf16.mxu0 0
    %508 = vmatpush1.bf16.msra.mxu0 %v480
    %509 = vmatprep.subr.bf16.mxu0 0
    %510 = vmatpush1.bf16.msra.mxu0 %v479
    %511 = vmatprep.subr.bf16.mxu0 0
    %512 = vmatpush2.bf16.msra.mxu0 0
    %513 = vmatprep.subr.bf16.mxu0 0
    %514 = vmatpush2.bf16.msra.mxu0 0
    %515 = vmatprep.subr.bf16.mxu0 0
    %516 = vmatpush2.bf16.msra.mxu0 0
    %517 = vmatprep.subr.bf16.mxu0 0
    %518 = vmatpush2.bf16.msra.mxu0 0
    %519 = vmatprep.subr.bf16.mxu0 0
    %520 = vmatpush2.bf16.msra.mxu0 0
    %521 = vmatprep.subr.bf16.mxu0 0
    %522 = vmatpush2.bf16.msra.mxu0 0
    %523 = vmatprep.subr.bf16.mxu0 0
    %524 = vmatpush2.bf16.msra.mxu0 0
    %525 = vmatprep.subr.bf16.mxu0 0
    %526 = vmatpush2.bf16.msra.mxu0 0
    %527 = vmatprep.mubr.bf16.mxu0 0
    %528 = vmatmul.mubr.bf16.gmra.mxu0 %v446
    %v529 = vpop.f32.mrf.mxu0
    %v530 = vadd.f32 %v444, %v529
    %v531 = vpop.f32.mrf.mxu0
    %v532 = vpop.f32.mrf.mxu0
    %v533 = vpop.f32.mrf.mxu0
    %534 = vdwg.mxu0
    %v535 = vmax.f32 %v530, 0.0
    %v538 = vunpack.c.l.b16 %v442
    %v539 = vunpack.c.l.b16 %v443
    %v540 = vpack.c.b16 %v539, %v538
    %vm542 = vcmask 130048
    %v544 = vsel %vm542, %v409, 0
    %546 = vmatprep.subr.bf16.mxu0 0
    %547 = vmatpush1.bf16.msra.mxu0 0
    %548 = vmatprep.subr.bf16.mxu0 0
    %549 = vmatpush1.bf16.msra.mxu0 0
    %550 = vmatprep.subr.bf16.mxu0 0
    %551 = vmatpush1.bf16.msra.mxu0 0
    %552 = vmatprep.subr.bf16.mxu0 0
    %553 = vmatpush1.bf16.msra.mxu0 0
    %554 = vmatprep.subr.bf16.mxu0 0
    %555 = vmatpush1.bf16.msra.mxu0 0
    %556 = vmatprep.subr.bf16.mxu0 0
    %557 = vmatpush1.bf16.msra.mxu0 0
    %558 = vmatprep.subr.bf16.mxu0 0
    %559 = vmatpush1.bf16.msra.mxu0 0
    %560 = vmatprep.subr.bf16.mxu0 0
    %561 = vmatpush1.bf16.msra.mxu0 %v540
    %562 = vmatprep.subr.bf16.mxu0 0
    %563 = vmatpush2.bf16.msra.mxu0 0
    %564 = vmatprep.subr.bf16.mxu0 0
    %565 = vmatpush2.bf16.msra.mxu0 0
    %566 = vmatprep.subr.bf16.mxu0 0
    %567 = vmatpush2.bf16.msra.mxu0 0
    %568 = vmatprep.subr.bf16.mxu0 0
    %569 = vmatpush2.bf16.msra.mxu0 0
    %570 = vmatprep.subr.bf16.mxu0 0
    %571 = vmatpush2.bf16.msra.mxu0 0
    %572 = vmatprep.subr.bf16.mxu0 0
    %573 = vmatpush2.bf16.msra.mxu0 0
    %574 = vmatprep.subr.bf16.mxu0 0
    %575 = vmatpush2.bf16.msra.mxu0 0
    %576 = vmatprep.subr.bf16.mxu0 0
    %577 = vmatpush2.bf16.msra.mxu0 0
    %578 = vmatprep.mubr.bf16.mxu0 0
    %579 = vmatmul.mubr.bf16.gmra.mxu0 %v544
    %v580 = vpop.f32.mrf.mxu0
    %v581 = vadd.f32 %v445, %v580
    %v582 = vpop.f32.mrf.mxu0
    %v583 = vpop.f32.mrf.mxu0
    %v584 = vadd.f32 %v445, %v583
    %v585 = vpop.f32.mrf.mxu0
    %586 = vdwg.mxu0
    %v587 = vmax.f32 %v581, 0.0
    %v588 = vmax.f32 %v584, 0.0
    %v590 = vsel %vm88, %v186, 0
    %v593 = vsel %vm88, %v187, 0
    %595 = vmatprep.subr.mxu0 0.0
    %596 = vmatpush1.msra.mxu0 0.0
    %597 = vmatprep.subr.mxu0 0.0
    %598 = vmatpush1.msra.mxu0 0.0
    %599 = vmatprep.subr.mxu0 0.0
    %600 = vmatpush1.msra.mxu0 0.0
    %601 = vmatprep.subr.mxu0 0.0
    %602 = vmatpush1.msra.mxu0 0.0
    %603 = vmatprep.subr.mxu0 0.0
    %604 = vmatpush1.msra.mxu0 0.0
    %605 = vmatprep.subr.mxu0 0.0
    %606 = vmatpush1.msra.mxu0 0.0
    %607 = vmatprep.subr.mxu0 0.0
    %608 = vmatpush1.msra.mxu0 0.0
    %609 = vmatprep.subr.mxu0 0.0
    %610 = vmatpush1.msra.mxu0 0.0
    %611 = vmatprep.subr.mxu0 0.0
    %612 = vmatpush1.msra.mxu0 0.0
    %613 = vmatprep.subr.mxu0 0.0
    %614 = vmatpush1.msra.mxu0 0.0
    %615 = vmatprep.subr.mxu0 0.0
    %616 = vmatpush1.msra.mxu0 0.0
    %617 = vmatprep.subr.mxu0 0.0
    %618 = vmatpush1.msra.mxu0 0.0
    %619 = vmatprep.subr.mxu0 0.0
    %620 = vmatpush1.msra.mxu0 0.0
    %621 = vmatprep.subr.mxu0 0.0
    %622 = vmatpush1.msra.mxu0 0.0
    %623 = vmatprep.subr.mxu0 0.0
    %624 = vmatpush1.msra.mxu0 0.0
    %625 = vmatprep.subr.mxu0 0.0
    %626 = vmatpush1.msra.mxu0 %v535
    %627 = vmatprep.subr.mxu0 0.0
    %628 = vmatpush2.msra.mxu0 0.0
    %629 = vmatprep.subr.mxu0 0.0
    %630 = vmatpush2.msra.mxu0 0.0
    %631 = vmatprep.subr.mxu0 0.0
    %632 = vmatpush2.msra.mxu0 0.0
    %633 = vmatprep.subr.mxu0 0.0
    %634 = vmatpush2.msra.mxu0 0.0
    %635 = vmatprep.subr.mxu0 0.0
    %636 = vmatpush2.msra.mxu0 0.0
    %637 = vmatprep.subr.mxu0 0.0
    %638 = vmatpush2.msra.mxu0 0.0
    %639 = vmatprep.subr.mxu0 0.0
    %640 = vmatpush2.msra.mxu0 0.0
    %641 = vmatprep.subr.mxu0 0.0
    %642 = vmatpush2.msra.mxu0 0.0
    %643 = vmatprep.subr.mxu0 0.0
    %644 = vmatpush2.msra.mxu0 0.0
    %645 = vmatprep.subr.mxu0 0.0
    %646 = vmatpush2.msra.mxu0 0.0
    %647 = vmatprep.subr.mxu0 0.0
    %648 = vmatpush2.msra.mxu0 0.0
    %649 = vmatprep.subr.mxu0 0.0
    %650 = vmatpush2.msra.mxu0 0.0
    %651 = vmatprep.subr.mxu0 0.0
    %652 = vmatpush2.msra.mxu0 0.0
    %653 = vmatprep.subr.mxu0 0.0
    %654 = vmatpush2.msra.mxu0 0.0
    %655 = vmatprep.subr.mxu0 0.0
    %656 = vmatpush2.msra.mxu0 0.0
    %657 = vmatprep.subr.mxu0 0.0
    %658 = vmatpush2.msra.mxu0 0.0
    %659 = vmatprep.mubr.f32.mxu0 0.0
    %660 = vmatmul.mubr.f32.gmra.mxu0 %v590
    %v661 = vpop.f32.mrf.mxu0
    %v662 = vadd.f32 0.0, %v661
    %v663 = vpop.f32.mrf.mxu0
    %664 = vmatprep.mubr.f32.mxu0 0.0
    %665 = vmatmul.mubr.f32.gmra.mxu0 %v593
    %v666 = vpop.f32.mrf.mxu0
    %v667 = vadd.f32 0.0, %v666
    %v668 = vpop.f32.mrf.mxu0
    %669 = vdwg.mxu0
    %v670 = vmul.f32 %v587, %v662
    %v671 = vmul.f32 %v588, %v667
    %v672 = vmax.f32 %v670, %v671
    %v673 = vadd.f32 %v535, %v672
    %s674 = sshll.u32 %s411, 4
    %675 = dma.done %s71, %s674
    %s676 = scalar_lea.hbm %s3, 22016
    // Predicated region
    $region38: #{motion_fgnn_forward.1} parent=1 // pred_check
      _
    $region39: #{motion_fgnn_forward.1} parent=1 // pred_check_branch
      %678 = sbr.rel target = $region41
    $region40: #{motion_fgnn_forward.1} parent=1 // pred_region
      %679 = sst [smem:[#allocation10]] [#allocation19]
      %680 = sst [smem:[#allocation11]] [#allocation18]
    $region41: #{motion_fgnn_forward.1} parent=1 // pred_fallthru
      _
    %682 = shalt.err (0)
    %s684 = sshll.u32 %s56, 4
    %s685 = int_to_ptr.vmem [resolvable:$true] %s684
    %687 = dma.hbm_to_vmem [thread:$0]  %s676, 8704, %s685, %s57
    %v688 = vld [vmem:[%s70] sm:$0xf]
    %v689 = vld [vmem:[%s70 + $0x10] sm:$0xf]
    %v690 = vld [vmem:[%s70 + $0x20] sm:$0xf]
    %v691 = vld [vmem:[%s70 + $0x30] sm:$0xf]
    %v692 = vld [vmem:[%s70 + $0x40] sm:$0xf]
    %v693 = vld [vmem:[%s70 + $0x50] sm:$0xf]
    %v694 = vld [vmem:[%s70 + $0x60] sm:$0xf]
    %v695 = vld [vmem:[%s70 + $0x70] sm:$0xf]
    %v696 = vld [vmem:[%s70 + $0x80] sm:$0xf]
    %v697 = vld [vmem:[%s70 + $0x90] sm:$0xf]
    %v698 = vld [vmem:[%s70 + $0xa0] sm:$0xf]
    %v699 = vld [vmem:[%s70 + $0xb0] sm:$0xf]
    %v700 = vld [vmem:[%s70 + $0xc0] sm:$0xf]
    %v701 = vld [vmem:[%s70 + $0xd0] sm:$0xf]
    %v702 = vld [vmem:[%s70 + $0xe0] sm:$0xf]
    %v703 = vld [vmem:[%s70 + $0xf0] sm:$0xf]
    %v704 = vld [vmem:[%s70 + $0x100] sm:$0xf]
    %v705 = vld [vmem:[%s70 + $0x110] sm:$0xf]
    %v706 = vld [vmem:[#allocation6 + $0x3] ss:$0 sm:$0xff]
    %v707 = vld [vmem:[#allocation6 + $0x4] ss:$0 sm:$0xff]
    %v708 = vpack.c.bf16 %v673, %v673
    %v725 = vunpack.c.l.b16 %v688
    %v726 = vunpack.c.l.b16 %v689
    %v727 = vunpack.c.l.b16 %v690
    %v728 = vunpack.c.l.b16 %v691
    %v729 = vunpack.c.l.b16 %v692
    %v730 = vunpack.c.l.b16 %v693
    %v731 = vunpack.c.l.b16 %v694
    %v732 = vunpack.c.l.b16 %v695
    %v733 = vunpack.c.l.b16 %v696
    %v734 = vunpack.c.l.b16 %v697
    %v735 = vunpack.c.l.b16 %v698
    %v736 = vunpack.c.l.b16 %v699
    %v737 = vunpack.c.l.b16 %v700
    %v738 = vunpack.c.l.b16 %v701
    %v739 = vunpack.c.l.b16 %v702
    %v740 = vunpack.c.l.b16 %v703
    %v741 = vpack.c.b16 %v726, %v725
    %v742 = vpack.c.b16 %v728, %v727
    %v743 = vpack.c.b16 %v730, %v729
    %v744 = vpack.c.b16 %v732, %v731
    %v745 = vpack.c.b16 %v734, %v733
    %v746 = vpack.c.b16 %v736, %v735
    %v747 = vpack.c.b16 %v738, %v737
    %v748 = vpack.c.b16 %v740, %v739
    %757 = vmatprep.subr.bf16.mxu0 0
    %758 = vmatpush1.bf16.msra.mxu0 %v748
    %759 = vmatprep.subr.bf16.mxu0 0
    %760 = vmatpush1.bf16.msra.mxu0 %v747
    %761 = vmatprep.subr.bf16.mxu0 0
    %762 = vmatpush1.bf16.msra.mxu0 %v746
    %763 = vmatprep.subr.bf16.mxu0 0
    %764 = vmatpush1.bf16.msra.mxu0 %v745
    %765 = vmatprep.subr.bf16.mxu0 0
    %766 = vmatpush1.bf16.msra.mxu0 %v744
    %767 = vmatprep.subr.bf16.mxu0 0
    %768 = vmatpush1.bf16.msra.mxu0 %v743
    %769 = vmatprep.subr.bf16.mxu0 0
    %770 = vmatpush1.bf16.msra.mxu0 %v742
    %771 = vmatprep.subr.bf16.mxu0 0
    %772 = vmatpush1.bf16.msra.mxu0 %v741
    %773 = vmatprep.subr.bf16.mxu0 0
    %774 = vmatpush2.bf16.msra.mxu0 0
    %775 = vmatprep.subr.bf16.mxu0 0
    %776 = vmatpush2.bf16.msra.mxu0 0
    %777 = vmatprep.subr.bf16.mxu0 0
    %778 = vmatpush2.bf16.msra.mxu0 0
    %779 = vmatprep.subr.bf16.mxu0 0
    %780 = vmatpush2.bf16.msra.mxu0 0
    %781 = vmatprep.subr.bf16.mxu0 0
    %782 = vmatpush2.bf16.msra.mxu0 0
    %783 = vmatprep.subr.bf16.mxu0 0
    %784 = vmatpush2.bf16.msra.mxu0 0
    %785 = vmatprep.subr.bf16.mxu0 0
    %786 = vmatpush2.bf16.msra.mxu0 0
    %787 = vmatprep.subr.bf16.mxu0 0
    %788 = vmatpush2.bf16.msra.mxu0 0
    %789 = vmatprep.mubr.bf16.mxu0 0
    %790 = vmatmul.mubr.bf16.gmra.mxu0 %v708
    %v791 = vpop.f32.mrf.mxu0
    %v792 = vadd.f32 %v706, %v791
    %v793 = vpop.f32.mrf.mxu0
    %v794 = vpop.f32.mrf.mxu0
    %v795 = vpop.f32.mrf.mxu0
    %796 = vdwg.mxu0
    %v797 = vmax.f32 %v792, 0.0
    %v800 = vunpack.c.l.b16 %v704
    %v801 = vunpack.c.l.b16 %v705
    %v802 = vpack.c.b16 %v801, %v800
    %804 = vmatprep.subr.bf16.mxu0 0
    %805 = vmatpush1.bf16.msra.mxu0 0
    %806 = vmatprep.subr.bf16.mxu0 0
    %807 = vmatpush1.bf16.msra.mxu0 0
    %808 = vmatprep.subr.bf16.mxu0 0
    %809 = vmatpush1.bf16.msra.mxu0 0
    %810 = vmatprep.subr.bf16.mxu0 0
    %811 = vmatpush1.bf16.msra.mxu0 0
    %812 = vmatprep.subr.bf16.mxu0 0
    %813 = vmatpush1.bf16.msra.mxu0 0
    %814 = vmatprep.subr.bf16.mxu0 0
    %815 = vmatpush1.bf16.msra.mxu0 0
    %816 = vmatprep.subr.bf16.mxu0 0
    %817 = vmatpush1.bf16.msra.mxu0 0
    %818 = vmatprep.subr.bf16.mxu0 0
    %819 = vmatpush1.bf16.msra.mxu0 %v802
    %820 = vmatprep.subr.bf16.mxu0 0
    %821 = vmatpush2.bf16.msra.mxu0 0
    %822 = vmatprep.subr.bf16.mxu0 0
    %823 = vmatpush2.bf16.msra.mxu0 0
    %824 = vmatprep.subr.bf16.mxu0 0
    %825 = vmatpush2.bf16.msra.mxu0 0
    %826 = vmatprep.subr.bf16.mxu0 0
    %827 = vmatpush2.bf16.msra.mxu0 0
    %828 = vmatprep.subr.bf16.mxu0 0
    %829 = vmatpush2.bf16.msra.mxu0 0
    %830 = vmatprep.subr.bf16.mxu0 0
    %831 = vmatpush2.bf16.msra.mxu0 0
    %832 = vmatprep.subr.bf16.mxu0 0
    %833 = vmatpush2.bf16.msra.mxu0 0
    %834 = vmatprep.subr.bf16.mxu0 0
    %835 = vmatpush2.bf16.msra.mxu0 0
    %836 = vmatprep.mubr.bf16.mxu0 0
    %837 = vmatmul.mubr.bf16.gmra.mxu0 %v544
    %v838 = vpop.f32.mrf.mxu0
    %v839 = vadd.f32 %v707, %v838
    %v840 = vpop.f32.mrf.mxu0
    %v841 = vpop.f32.mrf.mxu0
    %v842 = vadd.f32 %v707, %v841
    %v843 = vpop.f32.mrf.mxu0
    %844 = vdwg.mxu0
    %v845 = vmax.f32 %v839, 0.0
    %v846 = vmax.f32 %v842, 0.0
    %847 = vmatprep.subr.mxu0 0.0
    %848 = vmatpush1.msra.mxu0 0.0
    %849 = vmatprep.subr.mxu0 0.0
    %850 = vmatpush1.msra.mxu0 0.0
    %851 = vmatprep.subr.mxu0 0.0
    %852 = vmatpush1.msra.mxu0 0.0
    %853 = vmatprep.subr.mxu0 0.0
    %854 = vmatpush1.msra.mxu0 0.0
    %855 = vmatprep.subr.mxu0 0.0
    %856 = vmatpush1.msra.mxu0 0.0
    %857 = vmatprep.subr.mxu0 0.0
    %858 = vmatpush1.msra.mxu0 0.0
    %859 = vmatprep.subr.mxu0 0.0
    %860 = vmatpush1.msra.mxu0 0.0
    %861 = vmatprep.subr.mxu0 0.0
    %862 = vmatpush1.msra.mxu0 0.0
    %863 = vmatprep.subr.mxu0 0.0
    %864 = vmatpush1.msra.mxu0 0.0
    %865 = vmatprep.subr.mxu0 0.0
    %866 = vmatpush1.msra.mxu0 0.0
    %867 = vmatprep.subr.mxu0 0.0
    %868 = vmatpush1.msra.mxu0 0.0
    %869 = vmatprep.subr.mxu0 0.0
    %870 = vmatpush1.msra.mxu0 0.0
    %871 = vmatprep.subr.mxu0 0.0
    %872 = vmatpush1.msra.mxu0 0.0
    %873 = vmatprep.subr.mxu0 0.0
    %874 = vmatpush1.msra.mxu0 0.0
    %875 = vmatprep.subr.mxu0 0.0
    %876 = vmatpush1.msra.mxu0 0.0
    %877 = vmatprep.subr.mxu0 0.0
    %878 = vmatpush1.msra.mxu0 %v797
    %879 = vmatprep.subr.mxu0 0.0
    %880 = vmatpush2.msra.mxu0 0.0
    %881 = vmatprep.subr.mxu0 0.0
    %882 = vmatpush2.msra.mxu0 0.0
    %883 = vmatprep.subr.mxu0 0.0
    %884 = vmatpush2.msra.mxu0 0.0
    %885 = vmatprep.subr.mxu0 0.0
    %886 = vmatpush2.msra.mxu0 0.0
    %887 = vmatprep.subr.mxu0 0.0
    %888 = vmatpush2.msra.mxu0 0.0
    %889 = vmatprep.subr.mxu0 0.0
    %890 = vmatpush2.msra.mxu0 0.0
    %891 = vmatprep.subr.mxu0 0.0
    %892 = vmatpush2.msra.mxu0 0.0
    %893 = vmatprep.subr.mxu0 0.0
    %894 = vmatpush2.msra.mxu0 0.0
    %895 = vmatprep.subr.mxu0 0.0
    %896 = vmatpush2.msra.mxu0 0.0
    %897 = vmatprep.subr.mxu0 0.0
    %898 = vmatpush2.msra.mxu0 0.0
    %899 = vmatprep.subr.mxu0 0.0
    %900 = vmatpush2.msra.mxu0 0.0
    %901 = vmatprep.subr.mxu0 0.0
    %902 = vmatpush2.msra.mxu0 0.0
    %903 = vmatprep.subr.mxu0 0.0
    %904 = vmatpush2.msra.mxu0 0.0
    %905 = vmatprep.subr.mxu0 0.0
    %906 = vmatpush2.msra.mxu0 0.0
    %907 = vmatprep.subr.mxu0 0.0
    %908 = vmatpush2.msra.mxu0 0.0
    %909 = vmatprep.subr.mxu0 0.0
    %910 = vmatpush2.msra.mxu0 0.0
    %911 = vmatprep.mubr.f32.mxu0 0.0
    %912 = vmatmul.mubr.f32.gmra.mxu0 %v590
    %v913 = vpop.f32.mrf.mxu0
    %v914 = vadd.f32 0.0, %v913
    %v915 = vpop.f32.mrf.mxu0
    %916 = vmatprep.mubr.f32.mxu0 0.0
    %917 = vmatmul.mubr.f32.gmra.mxu0 %v593
    %v918 = vpop.f32.mrf.mxu0
    %v919 = vadd.f32 0.0, %v918
    %v920 = vpop.f32.mrf.mxu0
    %921 = vdwg.mxu0
    %v922 = vmul.f32 %v845, %v914
    %v923 = vmul.f32 %v846, %v919
    %v924 = vmax.f32 %v922, %v923
    %v925 = vadd.f32 %v797, %v924
    %s926 = sshll.u32 %s411, 4
    %927 = dma.done [#allocation3], %s926
    %s928 = scalar_lea.hbm %s3, 30720
    // Predicated region
    $region42: #{motion_fgnn_forward.1} parent=1 // pred_check
      _
    $region43: #{motion_fgnn_forward.1} parent=1 // pred_check_branch
      %930 = sbr.rel target = $region45
    $region44: #{motion_fgnn_forward.1} parent=1 // pred_region
      %931 = sst [smem:[#allocation10]] [#allocation21]
      %932 = sst [smem:[#allocation11]] [#allocation20]
    $region45: #{motion_fgnn_forward.1} parent=1 // pred_fallthru
      _
    %934 = shalt.err (0)
    %s936 = sshll.u32 %s70, 4
    %s937 = int_to_ptr.vmem [resolvable:$true] %s936
    %939 = dma.hbm_to_vmem [thread:$0]  %s928, 8704, %s937, %s71
    %v940 = vld [vmem:[#allocation2] sm:$0xff]
    %v941 = vld [vmem:[#allocation2 + $0x10] sm:$0xff]
    %v942 = vld [vmem:[#allocation2 + $0x20] sm:$0xff]
    %v943 = vld [vmem:[#allocation2 + $0x30] sm:$0xff]
    %v944 = vld [vmem:[#allocation2 + $0x40] sm:$0xff]
    %v945 = vld [vmem:[#allocation2 + $0x50] sm:$0xff]
    %v946 = vld [vmem:[#allocation2 + $0x60] sm:$0xff]
    %v947 = vld [vmem:[#allocation2 + $0x70] sm:$0xff]
    %v948 = vld [vmem:[#allocation2 + $0x80] sm:$0xff]
    %v949 = vld [vmem:[#allocation2 + $0x90] sm:$0xff]
    %v950 = vld [vmem:[#allocation2 + $0xa0] sm:$0xff]
    %v951 = vld [vmem:[#allocation2 + $0xb0] sm:$0xff]
    %v952 = vld [vmem:[#allocation2 + $0xc0] sm:$0xff]
    %v953 = vld [vmem:[#allocation2 + $0xd0] sm:$0xff]
    %v954 = vld [vmem:[#allocation2 + $0xe0] sm:$0xff]
    %v955 = vld [vmem:[#allocation2 + $0xf0] sm:$0xff]
    %v956 = vld [vmem:[#allocation2 + $0x100] sm:$0xff]
    %v957 = vld [vmem:[#allocation2 + $0x110] sm:$0xff]
    %s958 = scalar_lea.vmem [#allocation6], 5
    %v959 = vld [vmem:[%s958] ss:$8 sm:$0x3]
    %s960 = scalar_lea.vmem [#allocation6], 6
    %v961 = vld [vmem:[%s960] ss:$8 sm:$0x3]
    %v962 = vpack.c.bf16 %v925, %v925
    %v964 = vlaneseq
    %v965 = vshrl.u32 %v964, 7
    %v966 = vsub.s32 0, %v965
    %v967 = vrot.slane %v959, %v966
    %v968 = vlaneseq
    %v969 = vshrl.u32 %v968, 7
    %v970 = vsub.s32 1, %v969
    %v971 = vrot.slane %v959, %v970
    %v990 = vunpack.c.l.b16 %v940
    %v991 = vunpack.c.h.b16 %v940
    %v992 = vunpack.c.l.b16 %v941
    %v993 = vunpack.c.h.b16 %v941
    %v994 = vunpack.c.l.b16 %v942
    %v995 = vunpack.c.h.b16 %v942
    %v996 = vunpack.c.l.b16 %v943
    %v997 = vunpack.c.h.b16 %v943
    %v998 = vunpack.c.l.b16 %v944
    %v999 = vunpack.c.h.b16 %v944
    %v1000 = vunpack.c.l.b16 %v945
    %v1001 = vunpack.c.h.b16 %v945
    %v1002 = vunpack.c.l.b16 %v946
    %v1003 = vunpack.c.h.b16 %v946
    %v1004 = vunpack.c.l.b16 %v947
    %v1005 = vunpack.c.h.b16 %v947
    %v1006 = vunpack.c.l.b16 %v948
    %v1007 = vunpack.c.h.b16 %v948
    %v1008 = vunpack.c.l.b16 %v949
    %v1009 = vunpack.c.h.b16 %v949
    %v1010 = vunpack.c.l.b16 %v950
    %v1011 = vunpack.c.h.b16 %v950
    %v1012 = vunpack.c.l.b16 %v951
    %v1013 = vunpack.c.h.b16 %v951
    %v1014 = vunpack.c.l.b16 %v952
    %v1015 = vunpack.c.h.b16 %v952
    %v1016 = vunpack.c.l.b16 %v953
    %v1017 = vunpack.c.h.b16 %v953
    %v1018 = vunpack.c.l.b16 %v954
    %v1019 = vunpack.c.h.b16 %v954
    %v1020 = vunpack.c.l.b16 %v955
    %v1021 = vunpack.c.h.b16 %v955
    %v1022 = vpack.c.b16 %v992, %v990
    %v1023 = vpack.c.b16 %v993, %v991
    %v1024 = vpack.c.b16 %v996, %v994
    %v1025 = vpack.c.b16 %v997, %v995
    %v1026 = vpack.c.b16 %v1000, %v998
    %v1027 = vpack.c.b16 %v1001, %v999
    %v1028 = vpack.c.b16 %v1004, %v1002
    %v1029 = vpack.c.b16 %v1005, %v1003
    %v1030 = vpack.c.b16 %v1008, %v1006
    %v1031 = vpack.c.b16 %v1009, %v1007
    %v1032 = vpack.c.b16 %v1012, %v1010
    %v1033 = vpack.c.b16 %v1013, %v1011
    %v1034 = vpack.c.b16 %v1016, %v1014
    %v1035 = vpack.c.b16 %v1017, %v1015
    %v1036 = vpack.c.b16 %v1020, %v1018
    %v1037 = vpack.c.b16 %v1021, %v1019
    %1054 = vmatprep.subr.bf16.mxu0 %v1037
    %1055 = vmatpush1.bf16.msra.mxu0 %v1036
    %1056 = vmatprep.subr.bf16.mxu0 %v1035
    %1057 = vmatpush1.bf16.msra.mxu0 %v1034
    %1058 = vmatprep.subr.bf16.mxu0 %v1033
    %1059 = vmatpush1.bf16.msra.mxu0 %v1032
    %1060 = vmatprep.subr.bf16.mxu0 %v1031
    %1061 = vmatpush1.bf16.msra.mxu0 %v1030
    %1062 = vmatprep.subr.bf16.mxu0 %v1029
    %1063 = vmatpush1.bf16.msra.mxu0 %v1028
    %1064 = vmatprep.subr.bf16.mxu0 %v1027
    %1065 = vmatpush1.bf16.msra.mxu0 %v1026
    %1066 = vmatprep.subr.bf16.mxu0 %v1025
    %1067 = vmatpush1.bf16.msra.mxu0 %v1024
    %1068 = vmatprep.subr.bf16.mxu0 %v1023
    %1069 = vmatpush1.bf16.msra.mxu0 %v1022
    %1070 = vmatprep.subr.bf16.mxu0 0
    %1071 = vmatpush2.bf16.msra.mxu0 0
    %1072 = vmatprep.subr.bf16.mxu0 0
    %1073 = vmatpush2.bf16.msra.mxu0 0
    %1074 = vmatprep.subr.bf16.mxu0 0
    %1075 = vmatpush2.bf16.msra.mxu0 0
    %1076 = vmatprep.subr.bf16.mxu0 0
    %1077 = vmatpush2.bf16.msra.mxu0 0
    %1078 = vmatprep.subr.bf16.mxu0 0
    %1079 = vmatpush2.bf16.msra.mxu0 0
    %1080 = vmatprep.subr.bf16.mxu0 0
    %1081 = vmatpush2.bf16.msra.mxu0 0
    %1082 = vmatprep.subr.bf16.mxu0 0
    %1083 = vmatpush2.bf16.msra.mxu0 0
    %1084 = vmatprep.subr.bf16.mxu0 0
    %1085 = vmatpush2.bf16.msra.mxu0 0
    %1086 = vmatprep.mubr.bf16.mxu0 0
    %1087 = vmatmul.mubr.bf16.gmra.mxu0 %v962
    %v1088 = vpop.f32.mrf.mxu0
    %v1089 = vadd.f32 %v967, %v1088
    %v1090 = vpop.f32.mrf.mxu0
    %v1091 = vadd.f32 %v971, %v1090
    %v1092 = vpop.f32.mrf.mxu0
    %v1093 = vpop.f32.mrf.mxu0
    %1094 = vdwg.mxu0
    %v1095 = vmax.f32 %v1089, 0.0
    %v1096 = vmax.f32 %v1091, 0.0
    %v1098 = vlaneseq
    %v1099 = vshrl.u32 %v1098, 7
    %v1100 = vsub.s32 0, %v1099
    %v1101 = vrot.slane %v961, %v1100
    %v1102 = vlaneseq
    %v1103 = vshrl.u32 %v1102, 7
    %v1104 = vsub.s32 1, %v1103
    %v1105 = vrot.slane %v961, %v1104
    %v1110 = vunpack.c.l.b16 %v956
    %v1111 = vunpack.c.h.b16 %v956
    %v1112 = vunpack.c.l.b16 %v957
    %v1113 = vunpack.c.h.b16 %v957
    %v1114 = vpack.c.b16 %v1112, %v1110
    %v1115 = vpack.c.b16 %v1113, %v1111
    %1118 = vmatprep.subr.bf16.mxu0 0
    %1119 = vmatpush1.bf16.msra.mxu0 0
    %1120 = vmatprep.subr.bf16.mxu0 0
    %1121 = vmatpush1.bf16.msra.mxu0 0
    %1122 = vmatprep.subr.bf16.mxu0 0
    %1123 = vmatpush1.bf16.msra.mxu0 0
    %1124 = vmatprep.subr.bf16.mxu0 0
    %1125 = vmatpush1.bf16.msra.mxu0 0
    %1126 = vmatprep.subr.bf16.mxu0 0
    %1127 = vmatpush1.bf16.msra.mxu0 0
    %1128 = vmatprep.subr.bf16.mxu0 0
    %1129 = vmatpush1.bf16.msra.mxu0 0
    %1130 = vmatprep.subr.bf16.mxu0 0
    %1131 = vmatpush1.bf16.msra.mxu0 0
    %1132 = vmatprep.subr.bf16.mxu0 %v1115
    %1133 = vmatpush1.bf16.msra.mxu0 %v1114
    %1134 = vmatprep.subr.bf16.mxu0 0
    %1135 = vmatpush2.bf16.msra.mxu0 0
    %1136 = vmatprep.subr.bf16.mxu0 0
    %1137 = vmatpush2.bf16.msra.mxu0 0
    %1138 = vmatprep.subr.bf16.mxu0 0
    %1139 = vmatpush2.bf16.msra.mxu0 0
    %1140 = vmatprep.subr.bf16.mxu0 0
    %1141 = vmatpush2.bf16.msra.mxu0 0
    %1142 = vmatprep.subr.bf16.mxu0 0
    %1143 = vmatpush2.bf16.msra.mxu0 0
    %1144 = vmatprep.subr.bf16.mxu0 0
    %1145 = vmatpush2.bf16.msra.mxu0 0
    %1146 = vmatprep.subr.bf16.mxu0 0
    %1147 = vmatpush2.bf16.msra.mxu0 0
    %1148 = vmatprep.subr.bf16.mxu0 0
    %1149 = vmatpush2.bf16.msra.mxu0 0
    %1150 = vmatprep.mubr.bf16.mxu0 0
    %1151 = vmatmul.mubr.bf16.gmra.mxu0 %v544
    %v1152 = vpop.f32.mrf.mxu0
    %v1153 = vadd.f32 %v1101, %v1152
    %v1154 = vpop.f32.mrf.mxu0
    %v1155 = vadd.f32 %v1105, %v1154
    %v1156 = vpop.f32.mrf.mxu0
    %v1157 = vadd.f32 %v1101, %v1156
    %v1158 = vpop.f32.mrf.mxu0
    %v1159 = vadd.f32 %v1105, %v1158
    %1160 = vdwg.mxu0
    %v1161 = vmax.f32 %v1153, 0.0
    %v1162 = vmax.f32 %v1155, 0.0
    %v1163 = vmax.f32 %v1157, 0.0
    %v1164 = vmax.f32 %v1159, 0.0
    %1165 = vmatprep.subr.mxu0 0.0
    %1166 = vmatpush1.msra.mxu0 0.0
    %1167 = vmatprep.subr.mxu0 0.0
    %1168 = vmatpush1.msra.mxu0 0.0
    %1169 = vmatprep.subr.mxu0 0.0
    %1170 = vmatpush1.msra.mxu0 0.0
    %1171 = vmatprep.subr.mxu0 0.0
    %1172 = vmatpush1.msra.mxu0 0.0
    %1173 = vmatprep.subr.mxu0 0.0
    %1174 = vmatpush1.msra.mxu0 0.0
    %1175 = vmatprep.subr.mxu0 0.0
    %1176 = vmatpush1.msra.mxu0 0.0
    %1177 = vmatprep.subr.mxu0 0.0
    %1178 = vmatpush1.msra.mxu0 0.0
    %1179 = vmatprep.subr.mxu0 0.0
    %1180 = vmatpush1.msra.mxu0 0.0
    %1181 = vmatprep.subr.mxu0 0.0
    %1182 = vmatpush1.msra.mxu0 0.0
    %1183 = vmatprep.subr.mxu0 0.0
    %1184 = vmatpush1.msra.mxu0 0.0
    %1185 = vmatprep.subr.mxu0 0.0
    %1186 = vmatpush1.msra.mxu0 0.0
    %1187 = vmatprep.subr.mxu0 0.0
    %1188 = vmatpush1.msra.mxu0 0.0
    %1189 = vmatprep.subr.mxu0 0.0
    %1190 = vmatpush1.msra.mxu0 0.0
    %1191 = vmatprep.subr.mxu0 0.0
    %1192 = vmatpush1.msra.mxu0 0.0
    %1193 = vmatprep.subr.mxu0 0.0
    %1194 = vmatpush1.msra.mxu0 0.0
    %1195 = vmatprep.subr.mxu0 %v1096
    %1196 = vmatpush1.msra.mxu0 %v1095
    %1197 = vmatprep.subr.mxu0 0.0
    %1198 = vmatpush2.msra.mxu0 0.0
    %1199 = vmatprep.subr.mxu0 0.0
    %1200 = vmatpush2.msra.mxu0 0.0
    %1201 = vmatprep.subr.mxu0 0.0
    %1202 = vmatpush2.msra.mxu0 0.0
    %1203 = vmatprep.subr.mxu0 0.0
    %1204 = vmatpush2.msra.mxu0 0.0
    %1205 = vmatprep.subr.mxu0 0.0
    %1206 = vmatpush2.msra.mxu0 0.0
    %1207 = vmatprep.subr.mxu0 0.0
    %1208 = vmatpush2.msra.mxu0 0.0
    %1209 = vmatprep.subr.mxu0 0.0
    %1210 = vmatpush2.msra.mxu0 0.0
    %1211 = vmatprep.subr.mxu0 0.0
    %1212 = vmatpush2.msra.mxu0 0.0
    %1213 = vmatprep.subr.mxu0 0.0
    %1214 = vmatpush2.msra.mxu0 0.0
    %1215 = vmatprep.subr.mxu0 0.0
    %1216 = vmatpush2.msra.mxu0 0.0
    %1217 = vmatprep.subr.mxu0 0.0
    %1218 = vmatpush2.msra.mxu0 0.0
    %1219 = vmatprep.subr.mxu0 0.0
    %1220 = vmatpush2.msra.mxu0 0.0
    %1221 = vmatprep.subr.mxu0 0.0
    %1222 = vmatpush2.msra.mxu0 0.0
    %1223 = vmatprep.subr.mxu0 0.0
    %1224 = vmatpush2.msra.mxu0 0.0
    %1225 = vmatprep.subr.mxu0 0.0
    %1226 = vmatpush2.msra.mxu0 0.0
    %1227 = vmatprep.subr.mxu0 0.0
    %1228 = vmatpush2.msra.mxu0 0.0
    %1229 = vmatprep.mubr.f32.mxu0 0.0
    %1230 = vmatmul.mubr.f32.gmra.mxu0 %v590
    %v1231 = vpop.f32.mrf.mxu0
    %v1232 = vadd.f32 0.0, %v1231
    %v1233 = vpop.f32.mrf.mxu0
    %v1234 = vadd.f32 0.0, %v1233
    %1235 = vmatprep.mubr.f32.mxu0 0.0
    %1236 = vmatmul.mubr.f32.gmra.mxu0 %v593
    %v1237 = vpop.f32.mrf.mxu0
    %v1238 = vadd.f32 0.0, %v1237
    %v1239 = vpop.f32.mrf.mxu0
    %v1240 = vadd.f32 0.0, %v1239
    %1241 = vdwg.mxu0
    %v1242 = vmul.f32 %v1161, %v1232
    %v1243 = vmul.f32 %v1162, %v1234
    %v1244 = vmul.f32 %v1163, %v1238
    %v1245 = vmul.f32 %v1164, %v1240
    %v1246 = vmax.f32 %v1242, %v1244
    %v1247 = vmax.f32 %v1243, %v1245
    %v1248 = vadd.f32 %v1095, %v1246
    %v1249 = vadd.f32 %v1096, %v1247
    %s1250 = smul.u32 4, 34
    %s1251 = smul.u32 %s1250, 4
    %s1252 = sshll.u32 %s1251, 4
    %1253 = dma.done %s57, %s1252
    %s1254 = scalar_lea.hbm %s3, 39424
    // Predicated region
    $region46: #{motion_fgnn_forward.1} parent=1 // pred_check
      _
    $region47: #{motion_fgnn_forward.1} parent=1 // pred_check_branch
      %1256 = sbr.rel target = $region49
    $region48: #{motion_fgnn_forward.1} parent=1 // pred_region
      %1257 = sst [smem:[#allocation10]] [#allocation23]
      %1258 = sst [smem:[#allocation11]] [#allocation22]
    $region49: #{motion_fgnn_forward.1} parent=1 // pred_fallthru
      _
    %1260 = shalt.err (0)
    %s1262 = sshll.u32 [#allocation2], 4
    %s1263 = int_to_ptr.vmem [resolvable:$true] %s1262
    %1265 = dma.hbm_to_vmem [thread:$0]  %s1254, 16896, %s1263, [#allocation3]
    %v1266 = vld [vmem:[%s56] sm:$0xff]
    %v1267 = vld [vmem:[%s56 + $0x10] sm:$0xff]
    %v1268 = vld [vmem:[%s56 + $0x20] sm:$0xff]
    %v1269 = vld [vmem:[%s56 + $0x30] sm:$0xff]
    %v1270 = vld [vmem:[%s56 + $0x40] sm:$0xff]
    %v1271 = vld [vmem:[%s56 + $0x50] sm:$0xff]
    %v1272 = vld [vmem:[%s56 + $0x60] sm:$0xff]
    %v1273 = vld [vmem:[%s56 + $0x70] sm:$0xff]
    %v1274 = vld [vmem:[%s56 + $0x80] sm:$0xff]
    %v1275 = vld [vmem:[%s56 + $0x90] sm:$0xff]
    %v1276 = vld [vmem:[%s56 + $0xa0] sm:$0xff]
    %v1277 = vld [vmem:[%s56 + $0xb0] sm:$0xff]
    %v1278 = vld [vmem:[%s56 + $0xc0] sm:$0xff]
    %v1279 = vld [vmem:[%s56 + $0xd0] sm:$0xff]
    %v1280 = vld [vmem:[%s56 + $0xe0] sm:$0xff]
    %v1281 = vld [vmem:[%s56 + $0xf0] sm:$0xff]
    %v1282 = vld [vmem:[%s56 + $0x100] sm:$0xff]
    %v1283 = vld [vmem:[%s56 + $0x110] sm:$0xff]
    %v1284 = vld [vmem:[%s56 + $0x120] sm:$0xff]
    %v1285 = vld [vmem:[%s56 + $0x130] sm:$0xff]
    %v1286 = vld [vmem:[%s56 + $0x140] sm:$0xff]
    %v1287 = vld [vmem:[%s56 + $0x150] sm:$0xff]
    %v1288 = vld [vmem:[%s56 + $0x160] sm:$0xff]
    %v1289 = vld [vmem:[%s56 + $0x170] sm:$0xff]
    %v1290 = vld [vmem:[%s56 + $0x180] sm:$0xff]
    %v1291 = vld [vmem:[%s56 + $0x190] sm:$0xff]
    %v1292 = vld [vmem:[%s56 + $0x1a0] sm:$0xff]
    %v1293 = vld [vmem:[%s56 + $0x1b0] sm:$0xff]
    %v1294 = vld [vmem:[%s56 + $0x1c0] sm:$0xff]
    %v1295 = vld [vmem:[%s56 + $0x1d0] sm:$0xff]
    %v1296 = vld [vmem:[%s56 + $0x1e0] sm:$0xff]
    %v1297 = vld [vmem:[%s56 + $0x1f0] sm:$0xff]
    %v1298 = vld [vmem:[%s56 + $0x200] sm:$0xff]
    %v1299 = vld [vmem:[%s56 + $0x210] sm:$0xff]
    %s1300 = scalar_lea.vmem [#allocation6], 7
    %v1301 = vld [vmem:[%s1300] ss:$8 sm:$0x3]
    %s1302 = scalar_lea.vmem [#allocation6], 32
    %v1303 = vld [vmem:[%s1302] ss:$8 sm:$0x3]
    %v1304 = vpack.c.bf16 %v1248, %v1248
    %v1305 = vpack.c.bf16 %v1249, %v1249
    %v1307 = vlaneseq
    %v1308 = vshrl.u32 %v1307, 7
    %v1309 = vsub.s32 0, %v1308
    %v1310 = vrot.slane %v1301, %v1309
    %v1311 = vlaneseq
    %v1312 = vshrl.u32 %v1311, 7
    %v1313 = vsub.s32 1, %v1312
    %v1314 = vrot.slane %v1301, %v1313
    %v1349 = vunpack.c.l.b16 %v1266
    %v1350 = vunpack.c.h.b16 %v1266
    %v1351 = vunpack.c.l.b16 %v1267
    %v1352 = vunpack.c.h.b16 %v1267
    %v1353 = vunpack.c.l.b16 %v1268
    %v1354 = vunpack.c.h.b16 %v1268
    %v1355 = vunpack.c.l.b16 %v1269
    %v1356 = vunpack.c.h.b16 %v1269
    %v1357 = vunpack.c.l.b16 %v1270
    %v1358 = vunpack.c.h.b16 %v1270
    %v1359 = vunpack.c.l.b16 %v1271
    %v1360 = vunpack.c.h.b16 %v1271
    %v1361 = vunpack.c.l.b16 %v1272
    %v1362 = vunpack.c.h.b16 %v1272
    %v1363 = vunpack.c.l.b16 %v1273
    %v1364 = vunpack.c.h.b16 %v1273
    %v1365 = vunpack.c.l.b16 %v1274
    %v1366 = vunpack.c.h.b16 %v1274
    %v1367 = vunpack.c.l.b16 %v1275
    %v1368 = vunpack.c.h.b16 %v1275
    %v1369 = vunpack.c.l.b16 %v1276
    %v1370 = vunpack.c.h.b16 %v1276
    %v1371 = vunpack.c.l.b16 %v1277
    %v1372 = vunpack.c.h.b16 %v1277
    %v1373 = vunpack.c.l.b16 %v1278
    %v1374 = vunpack.c.h.b16 %v1278
    %v1375 = vunpack.c.l.b16 %v1279
    %v1376 = vunpack.c.h.b16 %v1279
    %v1377 = vunpack.c.l.b16 %v1280
    %v1378 = vunpack.c.h.b16 %v1280
    %v1379 = vunpack.c.l.b16 %v1281
    %v1380 = vunpack.c.h.b16 %v1281
    %v1381 = vunpack.c.l.b16 %v1282
    %v1382 = vunpack.c.h.b16 %v1282
    %v1383 = vunpack.c.l.b16 %v1283
    %v1384 = vunpack.c.h.b16 %v1283
    %v1385 = vunpack.c.l.b16 %v1284
    %v1386 = vunpack.c.h.b16 %v1284
    %v1387 = vunpack.c.l.b16 %v1285
    %v1388 = vunpack.c.h.b16 %v1285
    %v1389 = vunpack.c.l.b16 %v1286
    %v1390 = vunpack.c.h.b16 %v1286
    %v1391 = vunpack.c.l.b16 %v1287
    %v1392 = vunpack.c.h.b16 %v1287
    %v1393 = vunpack.c.l.b16 %v1288
    %v1394 = vunpack.c.h.b16 %v1288
    %v1395 = vunpack.c.l.b16 %v1289
    %v1396 = vunpack.c.h.b16 %v1289
    %v1397 = vunpack.c.l.b16 %v1290
    %v1398 = vunpack.c.h.b16 %v1290
    %v1399 = vunpack.c.l.b16 %v1291
    %v1400 = vunpack.c.h.b16 %v1291
    %v1401 = vunpack.c.l.b16 %v1292
    %v1402 = vunpack.c.h.b16 %v1292
    %v1403 = vunpack.c.l.b16 %v1293
    %v1404 = vunpack.c.h.b16 %v1293
    %v1405 = vunpack.c.l.b16 %v1294
    %v1406 = vunpack.c.h.b16 %v1294
    %v1407 = vunpack.c.l.b16 %v1295
    %v1408 = vunpack.c.h.b16 %v1295
    %v1409 = vunpack.c.l.b16 %v1296
    %v1410 = vunpack.c.h.b16 %v1296
    %v1411 = vunpack.c.l.b16 %v1297
    %v1412 = vunpack.c.h.b16 %v1297
    %v1413 = vpack.c.b16 %v1351, %v1349
    %v1414 = vpack.c.b16 %v1352, %v1350
    %v1415 = vpack.c.b16 %v1355, %v1353
    %v1416 = vpack.c.b16 %v1356, %v1354
    %v1417 = vpack.c.b16 %v1359, %v1357
    %v1418 = vpack.c.b16 %v1360, %v1358
    %v1419 = vpack.c.b16 %v1363, %v1361
    %v1420 = vpack.c.b16 %v1364, %v1362
    %v1421 = vpack.c.b16 %v1367, %v1365
    %v1422 = vpack.c.b16 %v1368, %v1366
    %v1423 = vpack.c.b16 %v1371, %v1369
    %v1424 = vpack.c.b16 %v1372, %v1370
    %v1425 = vpack.c.b16 %v1375, %v1373
    %v1426 = vpack.c.b16 %v1376, %v1374
    %v1427 = vpack.c.b16 %v1379, %v1377
    %v1428 = vpack.c.b16 %v1380, %v1378
    %v1429 = vpack.c.b16 %v1383, %v1381
    %v1430 = vpack.c.b16 %v1384, %v1382
    %v1431 = vpack.c.b16 %v1387, %v1385
    %v1432 = vpack.c.b16 %v1388, %v1386
    %v1433 = vpack.c.b16 %v1391, %v1389
    %v1434 = vpack.c.b16 %v1392, %v1390
    %v1435 = vpack.c.b16 %v1395, %v1393
    %v1436 = vpack.c.b16 %v1396, %v1394
    %v1437 = vpack.c.b16 %v1399, %v1397
    %v1438 = vpack.c.b16 %v1400, %v1398
    %v1439 = vpack.c.b16 %v1403, %v1401
    %v1440 = vpack.c.b16 %v1404, %v1402
    %v1441 = vpack.c.b16 %v1407, %v1405
    %v1442 = vpack.c.b16 %v1408, %v1406
    %v1443 = vpack.c.b16 %v1411, %v1409
    %v1444 = vpack.c.b16 %v1412, %v1410
    %1477 = vmatprep.subr.bf16.mxu0 %v1428
    %1478 = vmatpush1.bf16.msra.mxu0 %v1427
    %1479 = vmatprep.subr.bf16.mxu0 %v1426
    %1480 = vmatpush1.bf16.msra.mxu0 %v1425
    %1481 = vmatprep.subr.bf16.mxu0 %v1424
    %1482 = vmatpush1.bf16.msra.mxu0 %v1423
    %1483 = vmatprep.subr.bf16.mxu0 %v1422
    %1484 = vmatpush1.bf16.msra.mxu0 %v1421
    %1485 = vmatprep.subr.bf16.mxu0 %v1420
    %1486 = vmatpush1.bf16.msra.mxu0 %v1419
    %1487 = vmatprep.subr.bf16.mxu0 %v1418
    %1488 = vmatpush1.bf16.msra.mxu0 %v1417
    %1489 = vmatprep.subr.bf16.mxu0 %v1416
    %1490 = vmatpush1.bf16.msra.mxu0 %v1415
    %1491 = vmatprep.subr.bf16.mxu0 %v1414
    %1492 = vmatpush1.bf16.msra.mxu0 %v1413
    %1493 = vmatprep.subr.bf16.mxu0 %v1444
    %1494 = vmatpush2.bf16.msra.mxu0 %v1443
    %1495 = vmatprep.subr.bf16.mxu0 %v1442
    %1496 = vmatpush2.bf16.msra.mxu0 %v1441
    %1497 = vmatprep.subr.bf16.mxu0 %v1440
    %1498 = vmatpush2.bf16.msra.mxu0 %v1439
    %1499 = vmatprep.subr.bf16.mxu0 %v1438
    %1500 = vmatpush2.bf16.msra.mxu0 %v1437
    %1501 = vmatprep.subr.bf16.mxu0 %v1436
    %1502 = vmatpush2.bf16.msra.mxu0 %v1435
    %1503 = vmatprep.subr.bf16.mxu0 %v1434
    %1504 = vmatpush2.bf16.msra.mxu0 %v1433
    %1505 = vmatprep.subr.bf16.mxu0 %v1432
    %1506 = vmatpush2.bf16.msra.mxu0 %v1431
    %1507 = vmatprep.subr.bf16.mxu0 %v1430
    %1508 = vmatpush2.bf16.msra.mxu0 %v1429
    %1509 = vmatprep.mubr.bf16.mxu0 %v1305
    %1510 = vmatmul.mubr.bf16.gmra.mxu0 %v1304
    %v1511 = vpop.f32.mrf.mxu0
    %v1512 = vadd.f32 %v1310, %v1511
    %v1513 = vpop.f32.mrf.mxu0
    %v1514 = vadd.f32 %v1314, %v1513
    %v1515 = vpop.f32.mrf.mxu0
    %v1516 = vpop.f32.mrf.mxu0
    %1517 = vdwg.mxu0
    %v1518 = vmax.f32 %v1512, 0.0
    %v1519 = vmax.f32 %v1514, 0.0
    %v1521 = vlaneseq
    %v1522 = vshrl.u32 %v1521, 7
    %v1523 = vsub.s32 0, %v1522
    %v1524 = vrot.slane %v1303, %v1523
    %v1525 = vlaneseq
    %v1526 = vshrl.u32 %v1525, 7
    %v1527 = vsub.s32 1, %v1526
    %v1528 = vrot.slane %v1303, %v1527
    %v1533 = vunpack.c.l.b16 %v1298
    %v1534 = vunpack.c.h.b16 %v1298
    %v1535 = vunpack.c.l.b16 %v1299
    %v1536 = vunpack.c.h.b16 %v1299
    %v1537 = vpack.c.b16 %v1535, %v1533
    %v1538 = vpack.c.b16 %v1536, %v1534
    %1541 = vmatprep.subr.bf16.mxu0 0
    %1542 = vmatpush1.bf16.msra.mxu0 0
    %1543 = vmatprep.subr.bf16.mxu0 0
    %1544 = vmatpush1.bf16.msra.mxu0 0
    %1545 = vmatprep.subr.bf16.mxu0 0
    %1546 = vmatpush1.bf16.msra.mxu0 0
    %1547 = vmatprep.subr.bf16.mxu0 0
    %1548 = vmatpush1.bf16.msra.mxu0 0
    %1549 = vmatprep.subr.bf16.mxu0 0
    %1550 = vmatpush1.bf16.msra.mxu0 0
    %1551 = vmatprep.subr.bf16.mxu0 0
    %1552 = vmatpush1.bf16.msra.mxu0 0
    %1553 = vmatprep.subr.bf16.mxu0 0
    %1554 = vmatpush1.bf16.msra.mxu0 0
    %1555 = vmatprep.subr.bf16.mxu0 %v1538
    %1556 = vmatpush1.bf16.msra.mxu0 %v1537
    %1557 = vmatprep.subr.bf16.mxu0 0
    %1558 = vmatpush2.bf16.msra.mxu0 0
    %1559 = vmatprep.subr.bf16.mxu0 0
    %1560 = vmatpush2.bf16.msra.mxu0 0
    %1561 = vmatprep.subr.bf16.mxu0 0
    %1562 = vmatpush2.bf16.msra.mxu0 0
    %1563 = vmatprep.subr.bf16.mxu0 0
    %1564 = vmatpush2.bf16.msra.mxu0 0
    %1565 = vmatprep.subr.bf16.mxu0 0
    %1566 = vmatpush2.bf16.msra.mxu0 0
    %1567 = vmatprep.subr.bf16.mxu0 0
    %1568 = vmatpush2.bf16.msra.mxu0 0
    %1569 = vmatprep.subr.bf16.mxu0 0
    %1570 = vmatpush2.bf16.msra.mxu0 0
    %1571 = vmatprep.subr.bf16.mxu0 0
    %1572 = vmatpush2.bf16.msra.mxu0 0
    %1573 = vmatprep.mubr.bf16.mxu0 0
    %1574 = vmatmul.mubr.bf16.gmra.mxu0 %v544
    %v1575 = vpop.f32.mrf.mxu0
    %v1576 = vadd.f32 %v1524, %v1575
    %v1577 = vpop.f32.mrf.mxu0
    %v1578 = vadd.f32 %v1528, %v1577
    %v1579 = vpop.f32.mrf.mxu0
    %v1580 = vadd.f32 %v1524, %v1579
    %v1581 = vpop.f32.mrf.mxu0
    %v1582 = vadd.f32 %v1528, %v1581
    %1583 = vdwg.mxu0
    %v1584 = vmax.f32 %v1576, 0.0
    %v1585 = vmax.f32 %v1578, 0.0
    %v1586 = vmax.f32 %v1580, 0.0
    %v1587 = vmax.f32 %v1582, 0.0
    %1588 = vmatprep.subr.mxu0 0.0
    %1589 = vmatpush1.msra.mxu0 0.0
    %1590 = vmatprep.subr.mxu0 0.0
    %1591 = vmatpush1.msra.mxu0 0.0
    %1592 = vmatprep.subr.mxu0 0.0
    %1593 = vmatpush1.msra.mxu0 0.0
    %1594 = vmatprep.subr.mxu0 0.0
    %1595 = vmatpush1.msra.mxu0 0.0
    %1596 = vmatprep.subr.mxu0 0.0
    %1597 = vmatpush1.msra.mxu0 0.0
    %1598 = vmatprep.subr.mxu0 0.0
    %1599 = vmatpush1.msra.mxu0 0.0
    %1600 = vmatprep.subr.mxu0 0.0
    %1601 = vmatpush1.msra.mxu0 0.0
    %1602 = vmatprep.subr.mxu0 0.0
    %1603 = vmatpush1.msra.mxu0 0.0
    %1604 = vmatprep.subr.mxu0 0.0
    %1605 = vmatpush1.msra.mxu0 0.0
    %1606 = vmatprep.subr.mxu0 0.0
    %1607 = vmatpush1.msra.mxu0 0.0
    %1608 = vmatprep.subr.mxu0 0.0
    %1609 = vmatpush1.msra.mxu0 0.0
    %1610 = vmatprep.subr.mxu0 0.0
    %1611 = vmatpush1.msra.mxu0 0.0
    %1612 = vmatprep.subr.mxu0 0.0
    %1613 = vmatpush1.msra.mxu0 0.0
    %1614 = vmatprep.subr.mxu0 0.0
    %1615 = vmatpush1.msra.mxu0 0.0
    %1616 = vmatprep.subr.mxu0 0.0
    %1617 = vmatpush1.msra.mxu0 0.0
    %1618 = vmatprep.subr.mxu0 %v1519
    %1619 = vmatpush1.msra.mxu0 %v1518
    %1620 = vmatprep.subr.mxu0 0.0
    %1621 = vmatpush2.msra.mxu0 0.0
    %1622 = vmatprep.subr.mxu0 0.0
    %1623 = vmatpush2.msra.mxu0 0.0
    %1624 = vmatprep.subr.mxu0 0.0
    %1625 = vmatpush2.msra.mxu0 0.0
    %1626 = vmatprep.subr.mxu0 0.0
    %1627 = vmatpush2.msra.mxu0 0.0
    %1628 = vmatprep.subr.mxu0 0.0
    %1629 = vmatpush2.msra.mxu0 0.0
    %1630 = vmatprep.subr.mxu0 0.0
    %1631 = vmatpush2.msra.mxu0 0.0
    %1632 = vmatprep.subr.mxu0 0.0
    %1633 = vmatpush2.msra.mxu0 0.0
    %1634 = vmatprep.subr.mxu0 0.0
    %1635 = vmatpush2.msra.mxu0 0.0
    %1636 = vmatprep.subr.mxu0 0.0
    %1637 = vmatpush2.msra.mxu0 0.0
    %1638 = vmatprep.subr.mxu0 0.0
    %1639 = vmatpush2.msra.mxu0 0.0
    %1640 = vmatprep.subr.mxu0 0.0
    %1641 = vmatpush2.msra.mxu0 0.0
    %1642 = vmatprep.subr.mxu0 0.0
    %1643 = vmatpush2.msra.mxu0 0.0
    %1644 = vmatprep.subr.mxu0 0.0
    %1645 = vmatpush2.msra.mxu0 0.0
    %1646 = vmatprep.subr.mxu0 0.0
    %1647 = vmatpush2.msra.mxu0 0.0
    %1648 = vmatprep.subr.mxu0 0.0
    %1649 = vmatpush2.msra.mxu0 0.0
    %1650 = vmatprep.subr.mxu0 0.0
    %1651 = vmatpush2.msra.mxu0 0.0
    %1652 = vmatprep.mubr.f32.mxu0 0.0
    %1653 = vmatmul.mubr.f32.gmra.mxu0 %v590
    %v1654 = vpop.f32.mrf.mxu0
    %v1655 = vadd.f32 0.0, %v1654
    %v1656 = vpop.f32.mrf.mxu0
    %v1657 = vadd.f32 0.0, %v1656
    %1658 = vmatprep.mubr.f32.mxu0 0.0
    %1659 = vmatmul.mubr.f32.gmra.mxu0 %v593
    %v1660 = vpop.f32.mrf.mxu0
    %v1661 = vadd.f32 0.0, %v1660
    %v1662 = vpop.f32.mrf.mxu0
    %v1663 = vadd.f32 0.0, %v1662
    %1664 = vdwg.mxu0
    %v1665 = vmul.f32 %v1584, %v1655
    %v1666 = vmul.f32 %v1585, %v1657
    %v1667 = vmul.f32 %v1586, %v1661
    %v1668 = vmul.f32 %v1587, %v1663
    %v1669 = vmax.f32 %v1665, %v1667
    %v1670 = vmax.f32 %v1666, %v1668
    %v1671 = vadd.f32 %v1518, %v1669
    %v1672 = vadd.f32 %v1519, %v1670
    %s1673 = sshll.u32 %s1251, 4
    %1674 = dma.done %s71, %s1673
    %s1675 = scalar_lea.hbm %s3, 56320
    // Predicated region
    $region50: #{motion_fgnn_forward.1} parent=1 // pred_check
      _
    $region51: #{motion_fgnn_forward.1} parent=1 // pred_check_branch
      %1677 = sbr.rel target = $region53
    $region52: #{motion_fgnn_forward.1} parent=1 // pred_region
      %1678 = sst [smem:[#allocation10]] [#allocation25]
      %1679 = sst [smem:[#allocation11]] [#allocation24]
    $region53: #{motion_fgnn_forward.1} parent=1 // pred_fallthru
      _
    %1681 = shalt.err (0)
    %s1683 = sshll.u32 %s56, 4
    %s1684 = int_to_ptr.vmem [resolvable:$true] %s1683
    %1686 = dma.hbm_to_vmem [thread:$0]  %s1675, 16896, %s1684, %s57
    %v1687 = vld [vmem:[%s70] sm:$0xff]
    %v1688 = vld [vmem:[%s70 + $0x8] sm:$0xff]
    %v1689 = vld [vmem:[%s70 + $0x10] sm:$0xff]
    %v1690 = vld [vmem:[%s70 + $0x18] sm:$0xff]
    %v1691 = vld [vmem:[%s70 + $0x20] sm:$0xff]
    %v1692 = vld [vmem:[%s70 + $0x28] sm:$0xff]
    %v1693 = vld [vmem:[%s70 + $0x30] sm:$0xff]
    %v1694 = vld [vmem:[%s70 + $0x38] sm:$0xff]
    %v1695 = vld [vmem:[%s70 + $0x40] sm:$0xff]
    %v1696 = vld [vmem:[%s70 + $0x48] sm:$0xff]
    %v1697 = vld [vmem:[%s70 + $0x50] sm:$0xff]
    %v1698 = vld [vmem:[%s70 + $0x58] sm:$0xff]
    %v1699 = vld [vmem:[%s70 + $0x60] sm:$0xff]
    %v1700 = vld [vmem:[%s70 + $0x68] sm:$0xff]
    %v1701 = vld [vmem:[%s70 + $0x70] sm:$0xff]
    %v1702 = vld [vmem:[%s70 + $0x78] sm:$0xff]
    %v1703 = vld [vmem:[%s70 + $0x80] sm:$0xff]
    %v1704 = vld [vmem:[%s70 + $0x88] sm:$0xff]
    %v1705 = vld [vmem:[%s70 + $0x90] sm:$0xff]
    %v1706 = vld [vmem:[%s70 + $0x98] sm:$0xff]
    %v1707 = vld [vmem:[%s70 + $0xa0] sm:$0xff]
    %v1708 = vld [vmem:[%s70 + $0xa8] sm:$0xff]
    %v1709 = vld [vmem:[%s70 + $0xb0] sm:$0xff]
    %v1710 = vld [vmem:[%s70 + $0xb8] sm:$0xff]
    %v1711 = vld [vmem:[%s70 + $0xc0] sm:$0xff]
    %v1712 = vld [vmem:[%s70 + $0xc8] sm:$0xff]
    %v1713 = vld [vmem:[%s70 + $0xd0] sm:$0xff]
    %v1714 = vld [vmem:[%s70 + $0xd8] sm:$0xff]
    %v1715 = vld [vmem:[%s70 + $0xe0] sm:$0xff]
    %v1716 = vld [vmem:[%s70 + $0xe8] sm:$0xff]
    %v1717 = vld [vmem:[%s70 + $0xf0] sm:$0xff]
    %v1718 = vld [vmem:[%s70 + $0xf8] sm:$0xff]
    %v1719 = vld [vmem:[%s70 + $0x100] sm:$0xff]
    %v1720 = vld [vmem:[%s70 + $0x108] sm:$0xff]
    %v1721 = vld [vmem:[%s70 + $0x110] sm:$0xff]
    %v1722 = vld [vmem:[%s70 + $0x118] sm:$0xff]
    %v1723 = vld [vmem:[%s70 + $0x120] sm:$0xff]
    %v1724 = vld [vmem:[%s70 + $0x128] sm:$0xff]
    %v1725 = vld [vmem:[%s70 + $0x130] sm:$0xff]
    %v1726 = vld [vmem:[%s70 + $0x138] sm:$0xff]
    %v1727 = vld [vmem:[%s70 + $0x140] sm:$0xff]
    %v1728 = vld [vmem:[%s70 + $0x148] sm:$0xff]
    %v1729 = vld [vmem:[%s70 + $0x150] sm:$0xff]
    %v1730 = vld [vmem:[%s70 + $0x158] sm:$0xff]
    %v1731 = vld [vmem:[%s70 + $0x160] sm:$0xff]
    %v1732 = vld [vmem:[%s70 + $0x168] sm:$0xff]
    %v1733 = vld [vmem:[%s70 + $0x170] sm:$0xff]
    %v1734 = vld [vmem:[%s70 + $0x178] sm:$0xff]
    %v1735 = vld [vmem:[%s70 + $0x180] sm:$0xff]
    %v1736 = vld [vmem:[%s70 + $0x188] sm:$0xff]
    %v1737 = vld [vmem:[%s70 + $0x190] sm:$0xff]
    %v1738 = vld [vmem:[%s70 + $0x198] sm:$0xff]
    %v1739 = vld [vmem:[%s70 + $0x1a0] sm:$0xff]
    %v1740 = vld [vmem:[%s70 + $0x1a8] sm:$0xff]
    %v1741 = vld [vmem:[%s70 + $0x1b0] sm:$0xff]
    %v1742 = vld [vmem:[%s70 + $0x1b8] sm:$0xff]
    %v1743 = vld [vmem:[%s70 + $0x1c0] sm:$0xff]
    %v1744 = vld [vmem:[%s70 + $0x1c8] sm:$0xff]
    %v1745 = vld [vmem:[%s70 + $0x1d0] sm:$0xff]
    %v1746 = vld [vmem:[%s70 + $0x1d8] sm:$0xff]
    %v1747 = vld [vmem:[%s70 + $0x1e0] sm:$0xff]
    %v1748 = vld [vmem:[%s70 + $0x1e8] sm:$0xff]
    %v1749 = vld [vmem:[%s70 + $0x1f0] sm:$0xff]
    %v1750 = vld [vmem:[%s70 + $0x1f8] sm:$0xff]
    %v1751 = vld [vmem:[%s70 + $0x200] sm:$0xff]
    %v1752 = vld [vmem:[%s70 + $0x208] sm:$0xff]
    %v1753 = vld [vmem:[%s70 + $0x210] sm:$0xff]
    %v1754 = vld [vmem:[%s70 + $0x218] sm:$0xff]
    %s1755 = scalar_lea.vmem [#allocation6], 33
    %v1756 = vld [vmem:[%s1755] ss:$8 sm:$0xf]
    %s1757 = scalar_lea.vmem [#allocation6], 34
    %v1758 = vld [vmem:[%s1757] ss:$8 sm:$0xf]
    %v1759 = vpack.c.bf16 %v1671, %v1671
    %v1760 = vpack.c.bf16 %v1672, %v1672
    %v1762 = vlaneseq
    %v1763 = vshrl.u32 %v1762, 7
    %v1764 = vsub.s32 0, %v1763
    %v1765 = vrot.slane %v1756, %v1764
    %v1766 = vlaneseq
    %v1767 = vshrl.u32 %v1766, 7
    %v1768 = vsub.s32 1, %v1767
    %v1769 = vrot.slane %v1756, %v1768
    %v1770 = vlaneseq
    %v1771 = vshrl.u32 %v1770, 7
    %v1772 = vsub.s32 2, %v1771
    %v1773 = vrot.slane %v1756, %v1772
    %v1774 = vlaneseq
    %v1775 = vshrl.u32 %v1774, 7
    %v1776 = vsub.s32 3, %v1775
    %v1777 = vrot.slane %v1756, %v1776
    %v1846 = vunpack.c.l.b16 %v1687
    %v1847 = vunpack.c.h.b16 %v1687
    %v1848 = vunpack.c.l.b16 %v1688
    %v1849 = vunpack.c.h.b16 %v1688
    %v1850 = vunpack.c.l.b16 %v1689
    %v1851 = vunpack.c.h.b16 %v1689
    %v1852 = vunpack.c.l.b16 %v1690
    %v1853 = vunpack.c.h.b16 %v1690
    %v1854 = vunpack.c.l.b16 %v1691
    %v1855 = vunpack.c.h.b16 %v1691
    %v1856 = vunpack.c.l.b16 %v1692
    %v1857 = vunpack.c.h.b16 %v1692
    %v1858 = vunpack.c.l.b16 %v1693
    %v1859 = vunpack.c.h.b16 %v1693
    %v1860 = vunpack.c.l.b16 %v1694
    %v1861 = vunpack.c.h.b16 %v1694
    %v1862 = vunpack.c.l.b16 %v1695
    %v1863 = vunpack.c.h.b16 %v1695
    %v1864 = vunpack.c.l.b16 %v1696
    %v1865 = vunpack.c.h.b16 %v1696
    %v1866 = vunpack.c.l.b16 %v1697
    %v1867 = vunpack.c.h.b16 %v1697
    %v1868 = vunpack.c.l.b16 %v1698
    %v1869 = vunpack.c.h.b16 %v1698
    %v1870 = vunpack.c.l.b16 %v1699
    %v1871 = vunpack.c.h.b16 %v1699
    %v1872 = vunpack.c.l.b16 %v1700
    %v1873 = vunpack.c.h.b16 %v1700
    %v1874 = vunpack.c.l.b16 %v1701
    %v1875 = vunpack.c.h.b16 %v1701
    %v1876 = vunpack.c.l.b16 %v1702
    %v1877 = vunpack.c.h.b16 %v1702
    %v1878 = vunpack.c.l.b16 %v1703
    %v1879 = vunpack.c.h.b16 %v1703
    %v1880 = vunpack.c.l.b16 %v1704
    %v1881 = vunpack.c.h.b16 %v1704
    %v1882 = vunpack.c.l.b16 %v1705
    %v1883 = vunpack.c.h.b16 %v1705
    %v1884 = vunpack.c.l.b16 %v1706
    %v1885 = vunpack.c.h.b16 %v1706
    %v1886 = vunpack.c.l.b16 %v1707
    %v1887 = vunpack.c.h.b16 %v1707
    %v1888 = vunpack.c.l.b16 %v1708
    %v1889 = vunpack.c.h.b16 %v1708
    %v1890 = vunpack.c.l.b16 %v1709
    %v1891 = vunpack.c.h.b16 %v1709
    %v1892 = vunpack.c.l.b16 %v1710
    %v1893 = vunpack.c.h.b16 %v1710
    %v1894 = vunpack.c.l.b16 %v1711
    %v1895 = vunpack.c.h.b16 %v1711
    %v1896 = vunpack.c.l.b16 %v1712
    %v1897 = vunpack.c.h.b16 %v1712
    %v1898 = vunpack.c.l.b16 %v1713
    %v1899 = vunpack.c.h.b16 %v1713
    %v1900 = vunpack.c.l.b16 %v1714
    %v1901 = vunpack.c.h.b16 %v1714
    %v1902 = vunpack.c.l.b16 %v1715
    %v1903 = vunpack.c.h.b16 %v1715
    %v1904 = vunpack.c.l.b16 %v1716
    %v1905 = vunpack.c.h.b16 %v1716
    %v1906 = vunpack.c.l.b16 %v1717
    %v1907 = vunpack.c.h.b16 %v1717
    %v1908 = vunpack.c.l.b16 %v1718
    %v1909 = vunpack.c.h.b16 %v1718
    %v1910 = vunpack.c.l.b16 %v1719
    %v1911 = vunpack.c.h.b16 %v1719
    %v1912 = vunpack.c.l.b16 %v1720
    %v1913 = vunpack.c.h.b16 %v1720
    %v1914 = vunpack.c.l.b16 %v1721
    %v1915 = vunpack.c.h.b16 %v1721
    %v1916 = vunpack.c.l.b16 %v1722
    %v1917 = vunpack.c.h.b16 %v1722
    %v1918 = vunpack.c.l.b16 %v1723
    %v1919 = vunpack.c.h.b16 %v1723
    %v1920 = vunpack.c.l.b16 %v1724
    %v1921 = vunpack.c.h.b16 %v1724
    %v1922 = vunpack.c.l.b16 %v1725
    %v1923 = vunpack.c.h.b16 %v1725
    %v1924 = vunpack.c.l.b16 %v1726
    %v1925 = vunpack.c.h.b16 %v1726
    %v1926 = vunpack.c.l.b16 %v1727
    %v1927 = vunpack.c.h.b16 %v1727
    %v1928 = vunpack.c.l.b16 %v1728
    %v1929 = vunpack.c.h.b16 %v1728
    %v1930 = vunpack.c.l.b16 %v1729
    %v1931 = vunpack.c.h.b16 %v1729
    %v1932 = vunpack.c.l.b16 %v1730
    %v1933 = vunpack.c.h.b16 %v1730
    %v1934 = vunpack.c.l.b16 %v1731
    %v1935 = vunpack.c.h.b16 %v1731
    %v1936 = vunpack.c.l.b16 %v1732
    %v1937 = vunpack.c.h.b16 %v1732
    %v1938 = vunpack.c.l.b16 %v1733
    %v1939 = vunpack.c.h.b16 %v1733
    %v1940 = vunpack.c.l.b16 %v1734
    %v1941 = vunpack.c.h.b16 %v1734
    %v1942 = vunpack.c.l.b16 %v1735
    %v1943 = vunpack.c.h.b16 %v1735
    %v1944 = vunpack.c.l.b16 %v1736
    %v1945 = vunpack.c.h.b16 %v1736
    %v1946 = vunpack.c.l.b16 %v1737
    %v1947 = vunpack.c.h.b16 %v1737
    %v1948 = vunpack.c.l.b16 %v1738
    %v1949 = vunpack.c.h.b16 %v1738
    %v1950 = vunpack.c.l.b16 %v1739
    %v1951 = vunpack.c.h.b16 %v1739
    %v1952 = vunpack.c.l.b16 %v1740
    %v1953 = vunpack.c.h.b16 %v1740
    %v1954 = vunpack.c.l.b16 %v1741
    %v1955 = vunpack.c.h.b16 %v1741
    %v1956 = vunpack.c.l.b16 %v1742
    %v1957 = vunpack.c.h.b16 %v1742
    %v1958 = vunpack.c.l.b16 %v1743
    %v1959 = vunpack.c.h.b16 %v1743
    %v1960 = vunpack.c.l.b16 %v1744
    %v1961 = vunpack.c.h.b16 %v1744
    %v1962 = vunpack.c.l.b16 %v1745
    %v1963 = vunpack.c.h.b16 %v1745
    %v1964 = vunpack.c.l.b16 %v1746
    %v1965 = vunpack.c.h.b16 %v1746
    %v1966 = vunpack.c.l.b16 %v1747
    %v1967 = vunpack.c.h.b16 %v1747
    %v1968 = vunpack.c.l.b16 %v1748
    %v1969 = vunpack.c.h.b16 %v1748
    %v1970 = vunpack.c.l.b16 %v1749
    %v1971 = vunpack.c.h.b16 %v1749
    %v1972 = vunpack.c.l.b16 %v1750
    %v1973 = vunpack.c.h.b16 %v1750
    %v1974 = vpack.c.b16 %v1850, %v1846
    %v1975 = vpack.c.b16 %v1851, %v1847
    %v1976 = vpack.c.b16 %v1852, %v1848
    %v1977 = vpack.c.b16 %v1853, %v1849
    %v1978 = vpack.c.b16 %v1858, %v1854
    %v1979 = vpack.c.b16 %v1859, %v1855
    %v1980 = vpack.c.b16 %v1860, %v1856
    %v1981 = vpack.c.b16 %v1861, %v1857
    %v1982 = vpack.c.b16 %v1866, %v1862
    %v1983 = vpack.c.b16 %v1867, %v1863
    %v1984 = vpack.c.b16 %v1868, %v1864
    %v1985 = vpack.c.b16 %v1869, %v1865
    %v1986 = vpack.c.b16 %v1874, %v1870
    %v1987 = vpack.c.b16 %v1875, %v1871
    %v1988 = vpack.c.b16 %v1876, %v1872
    %v1989 = vpack.c.b16 %v1877, %v1873
    %v1990 = vpack.c.b16 %v1882, %v1878
    %v1991 = vpack.c.b16 %v1883, %v1879
    %v1992 = vpack.c.b16 %v1884, %v1880
    %v1993 = vpack.c.b16 %v1885, %v1881
    %v1994 = vpack.c.b16 %v1890, %v1886
    %v1995 = vpack.c.b16 %v1891, %v1887
    %v1996 = vpack.c.b16 %v1892, %v1888
    %v1997 = vpack.c.b16 %v1893, %v1889
    %v1998 = vpack.c.b16 %v1898, %v1894
    %v1999 = vpack.c.b16 %v1899, %v1895
    %v2000 = vpack.c.b16 %v1900, %v1896
    %v2001 = vpack.c.b16 %v1901, %v1897
    %v2002 = vpack.c.b16 %v1906, %v1902
    %v2003 = vpack.c.b16 %v1907, %v1903
    %v2004 = vpack.c.b16 %v1908, %v1904
    %v2005 = vpack.c.b16 %v1909, %v1905
    %v2006 = vpack.c.b16 %v1914, %v1910
    %v2007 = vpack.c.b16 %v1915, %v1911
    %v2008 = vpack.c.b16 %v1916, %v1912
    %v2009 = vpack.c.b16 %v1917, %v1913
    %v2010 = vpack.c.b16 %v1922, %v1918
    %v2011 = vpack.c.b16 %v1923, %v1919
    %v2012 = vpack.c.b16 %v1924, %v1920
    %v2013 = vpack.c.b16 %v1925, %v1921
    %v2014 = vpack.c.b16 %v1930, %v1926
    %v2015 = vpack.c.b16 %v1931, %v1927
    %v2016 = vpack.c.b16 %v1932, %v1928
    %v2017 = vpack.c.b16 %v1933, %v1929
    %v2018 = vpack.c.b16 %v1938, %v1934
    %v2019 = vpack.c.b16 %v1939, %v1935
    %v2020 = vpack.c.b16 %v1940, %v1936
    %v2021 = vpack.c.b16 %v1941, %v1937
    %v2022 = vpack.c.b16 %v1946, %v1942
    %v2023 = vpack.c.b16 %v1947, %v1943
    %v2024 = vpack.c.b16 %v1948, %v1944
    %v2025 = vpack.c.b16 %v1949, %v1945
    %v2026 = vpack.c.b16 %v1954, %v1950
    %v2027 = vpack.c.b16 %v1955, %v1951
    %v2028 = vpack.c.b16 %v1956, %v1952
    %v2029 = vpack.c.b16 %v1957, %v1953
    %v2030 = vpack.c.b16 %v1962, %v1958
    %v2031 = vpack.c.b16 %v1963, %v1959
    %v2032 = vpack.c.b16 %v1964, %v1960
    %v2033 = vpack.c.b16 %v1965, %v1961
    %v2034 = vpack.c.b16 %v1970, %v1966
    %v2035 = vpack.c.b16 %v1971, %v1967
    %v2036 = vpack.c.b16 %v1972, %v1968
    %v2037 = vpack.c.b16 %v1973, %v1969
    %2102 = vmatprep.subr.bf16.mxu0 %v2003
    %2103 = vmatpush1.bf16.msra.mxu0 %v2002
    %2104 = vmatprep.subr.bf16.mxu0 %v1999
    %2105 = vmatpush1.bf16.msra.mxu0 %v1998
    %2106 = vmatprep.subr.bf16.mxu0 %v1995
    %2107 = vmatpush1.bf16.msra.mxu0 %v1994
    %2108 = vmatprep.subr.bf16.mxu0 %v1991
    %2109 = vmatpush1.bf16.msra.mxu0 %v1990
    %2110 = vmatprep.subr.bf16.mxu0 %v1987
    %2111 = vmatpush1.bf16.msra.mxu0 %v1986
    %2112 = vmatprep.subr.bf16.mxu0 %v1983
    %2113 = vmatpush1.bf16.msra.mxu0 %v1982
    %2114 = vmatprep.subr.bf16.mxu0 %v1979
    %2115 = vmatpush1.bf16.msra.mxu0 %v1978
    %2116 = vmatprep.subr.bf16.mxu0 %v1975
    %2117 = vmatpush1.bf16.msra.mxu0 %v1974
    %2118 = vmatprep.subr.bf16.mxu0 %v2035
    %2119 = vmatpush2.bf16.msra.mxu0 %v2034
    %2120 = vmatprep.subr.bf16.mxu0 %v2031
    %2121 = vmatpush2.bf16.msra.mxu0 %v2030
    %2122 = vmatprep.subr.bf16.mxu0 %v2027
    %2123 = vmatpush2.bf16.msra.mxu0 %v2026
    %2124 = vmatprep.subr.bf16.mxu0 %v2023
    %2125 = vmatpush2.bf16.msra.mxu0 %v2022
    %2126 = vmatprep.subr.bf16.mxu0 %v2019
    %2127 = vmatpush2.bf16.msra.mxu0 %v2018
    %2128 = vmatprep.subr.bf16.mxu0 %v2015
    %2129 = vmatpush2.bf16.msra.mxu0 %v2014
    %2130 = vmatprep.subr.bf16.mxu0 %v2011
    %2131 = vmatpush2.bf16.msra.mxu0 %v2010
    %2132 = vmatprep.subr.bf16.mxu0 %v2007
    %2133 = vmatpush2.bf16.msra.mxu0 %v2006
    %2134 = vmatprep.mubr.bf16.mxu0 %v1760
    %2135 = vmatmul.mubr.bf16.gmra.mxu0 %v1759
    %v2136 = vpop.f32.mrf.mxu0
    %v2137 = vadd.f32 %v1765, %v2136
    %v2138 = vpop.f32.mrf.mxu0
    %v2139 = vadd.f32 %v1769, %v2138
    %v2140 = vpop.f32.mrf.mxu0
    %v2141 = vpop.f32.mrf.mxu0
    %2142 = vdwg.mxu0
    %2143 = vmatprep.subr.bf16.mxu0 %v2005
    %2144 = vmatpush1.bf16.msra.mxu0 %v2004
    %2145 = vmatprep.subr.bf16.mxu0 %v2001
    %2146 = vmatpush1.bf16.msra.mxu0 %v2000
    %2147 = vmatprep.subr.bf16.mxu0 %v1997
    %2148 = vmatpush1.bf16.msra.mxu0 %v1996
    %2149 = vmatprep.subr.bf16.mxu0 %v1993
    %2150 = vmatpush1.bf16.msra.mxu0 %v1992
    %2151 = vmatprep.subr.bf16.mxu0 %v1989
    %2152 = vmatpush1.bf16.msra.mxu0 %v1988
    %2153 = vmatprep.subr.bf16.mxu0 %v1985
    %2154 = vmatpush1.bf16.msra.mxu0 %v1984
    %2155 = vmatprep.subr.bf16.mxu0 %v1981
    %2156 = vmatpush1.bf16.msra.mxu0 %v1980
    %2157 = vmatprep.subr.bf16.mxu0 %v1977
    %2158 = vmatpush1.bf16.msra.mxu0 %v1976
    %2159 = vmatprep.subr.bf16.mxu0 %v2037
    %2160 = vmatpush2.bf16.msra.mxu0 %v2036
    %2161 = vmatprep.subr.bf16.mxu0 %v2033
    %2162 = vmatpush2.bf16.msra.mxu0 %v2032
    %2163 = vmatprep.subr.bf16.mxu0 %v2029
    %2164 = vmatpush2.bf16.msra.mxu0 %v2028
    %2165 = vmatprep.subr.bf16.mxu0 %v2025
    %2166 = vmatpush2.bf16.msra.mxu0 %v2024
    %2167 = vmatprep.subr.bf16.mxu0 %v2021
    %2168 = vmatpush2.bf16.msra.mxu0 %v2020
    %2169 = vmatprep.subr.bf16.mxu0 %v2017
    %2170 = vmatpush2.bf16.msra.mxu0 %v2016
    %2171 = vmatprep.subr.bf16.mxu0 %v2013
    %2172 = vmatpush2.bf16.msra.mxu0 %v2012
    %2173 = vmatprep.subr.bf16.mxu0 %v2009
    %2174 = vmatpush2.bf16.msra.mxu0 %v2008
    %2175 = vmatprep.mubr.bf16.mxu0 %v1760
    %2176 = vmatmul.mubr.bf16.gmra.mxu0 %v1759
    %v2177 = vpop.f32.mrf.mxu0
    %v2178 = vadd.f32 %v1773, %v2177
    %v2179 = vpop.f32.mrf.mxu0
    %v2180 = vadd.f32 %v1777, %v2179
    %v2181 = vpop.f32.mrf.mxu0
    %v2182 = vpop.f32.mrf.mxu0
    %2183 = vdwg.mxu0
    %v2184 = vmax.f32 %v2137, 0.0
    %v2185 = vmax.f32 %v2139, 0.0
    %v2186 = vmax.f32 %v2178, 0.0
    %v2187 = vmax.f32 %v2180, 0.0
    %v2189 = vlaneseq
    %v2190 = vshrl.u32 %v2189, 7
    %v2191 = vsub.s32 0, %v2190
    %v2192 = vrot.slane %v1758, %v2191
    %v2193 = vlaneseq
    %v2194 = vshrl.u32 %v2193, 7
    %v2195 = vsub.s32 1, %v2194
    %v2196 = vrot.slane %v1758, %v2195
    %v2197 = vlaneseq
    %v2198 = vshrl.u32 %v2197, 7
    %v2199 = vsub.s32 2, %v2198
    %v2200 = vrot.slane %v1758, %v2199
    %v2201 = vlaneseq
    %v2202 = vshrl.u32 %v2201, 7
    %v2203 = vsub.s32 3, %v2202
    %v2204 = vrot.slane %v1758, %v2203
    %v2213 = vunpack.c.l.b16 %v1751
    %v2214 = vunpack.c.h.b16 %v1751
    %v2215 = vunpack.c.l.b16 %v1752
    %v2216 = vunpack.c.h.b16 %v1752
    %v2217 = vunpack.c.l.b16 %v1753
    %v2218 = vunpack.c.h.b16 %v1753
    %v2219 = vunpack.c.l.b16 %v1754
    %v2220 = vunpack.c.h.b16 %v1754
    %v2221 = vpack.c.b16 %v2217, %v2213
    %v2222 = vpack.c.b16 %v2218, %v2214
    %v2223 = vpack.c.b16 %v2219, %v2215
    %v2224 = vpack.c.b16 %v2220, %v2216
    %2229 = vmatprep.subr.bf16.mxu0 0
    %2230 = vmatpush1.bf16.msra.mxu0 0
    %2231 = vmatprep.subr.bf16.mxu0 0
    %2232 = vmatpush1.bf16.msra.mxu0 0
    %2233 = vmatprep.subr.bf16.mxu0 0
    %2234 = vmatpush1.bf16.msra.mxu0 0
    %2235 = vmatprep.subr.bf16.mxu0 0
    %2236 = vmatpush1.bf16.msra.mxu0 0
    %2237 = vmatprep.subr.bf16.mxu0 0
    %2238 = vmatpush1.bf16.msra.mxu0 0
    %2239 = vmatprep.subr.bf16.mxu0 0
    %2240 = vmatpush1.bf16.msra.mxu0 0
    %2241 = vmatprep.subr.bf16.mxu0 0
    %2242 = vmatpush1.bf16.msra.mxu0 0
    %2243 = vmatprep.subr.bf16.mxu0 %v2222
    %2244 = vmatpush1.bf16.msra.mxu0 %v2221
    %2245 = vmatprep.subr.bf16.mxu0 0
    %2246 = vmatpush2.bf16.msra.mxu0 0
    %2247 = vmatprep.subr.bf16.mxu0 0
    %2248 = vmatpush2.bf16.msra.mxu0 0
    %2249 = vmatprep.subr.bf16.mxu0 0
    %2250 = vmatpush2.bf16.msra.mxu0 0
    %2251 = vmatprep.subr.bf16.mxu0 0
    %2252 = vmatpush2.bf16.msra.mxu0 0
    %2253 = vmatprep.subr.bf16.mxu0 0
    %2254 = vmatpush2.bf16.msra.mxu0 0
    %2255 = vmatprep.subr.bf16.mxu0 0
    %2256 = vmatpush2.bf16.msra.mxu0 0
    %2257 = vmatprep.subr.bf16.mxu0 0
    %2258 = vmatpush2.bf16.msra.mxu0 0
    %2259 = vmatprep.subr.bf16.mxu0 0
    %2260 = vmatpush2.bf16.msra.mxu0 0
    %2261 = vmatprep.mubr.bf16.mxu0 0
    %2262 = vmatmul.mubr.bf16.gmra.mxu0 %v544
    %v2263 = vpop.f32.mrf.mxu0
    %v2264 = vadd.f32 %v2192, %v2263
    %v2265 = vpop.f32.mrf.mxu0
    %v2266 = vadd.f32 %v2196, %v2265
    %v2267 = vpop.f32.mrf.mxu0
    %v2268 = vadd.f32 %v2192, %v2267
    %v2269 = vpop.f32.mrf.mxu0
    %v2270 = vadd.f32 %v2196, %v2269
    %2271 = vdwg.mxu0
    %2272 = vmatprep.subr.bf16.mxu0 0
    %2273 = vmatpush1.bf16.msra.mxu0 0
    %2274 = vmatprep.subr.bf16.mxu0 0
    %2275 = vmatpush1.bf16.msra.mxu0 0
    %2276 = vmatprep.subr.bf16.mxu0 0
    %2277 = vmatpush1.bf16.msra.mxu0 0
    %2278 = vmatprep.subr.bf16.mxu0 0
    %2279 = vmatpush1.bf16.msra.mxu0 0
    %2280 = vmatprep.subr.bf16.mxu0 0
    %2281 = vmatpush1.bf16.msra.mxu0 0
    %2282 = vmatprep.subr.bf16.mxu0 0
    %2283 = vmatpush1.bf16.msra.mxu0 0
    %2284 = vmatprep.subr.bf16.mxu0 0
    %2285 = vmatpush1.bf16.msra.mxu0 0
    %2286 = vmatprep.subr.bf16.mxu0 %v2224
    %2287 = vmatpush1.bf16.msra.mxu0 %v2223
    %2288 = vmatprep.subr.bf16.mxu0 0
    %2289 = vmatpush2.bf16.msra.mxu0 0
    %2290 = vmatprep.subr.bf16.mxu0 0
    %2291 = vmatpush2.bf16.msra.mxu0 0
    %2292 = vmatprep.subr.bf16.mxu0 0
    %2293 = vmatpush2.bf16.msra.mxu0 0
    %2294 = vmatprep.subr.bf16.mxu0 0
    %2295 = vmatpush2.bf16.msra.mxu0 0
    %2296 = vmatprep.subr.bf16.mxu0 0
    %2297 = vmatpush2.bf16.msra.mxu0 0
    %2298 = vmatprep.subr.bf16.mxu0 0
    %2299 = vmatpush2.bf16.msra.mxu0 0
    %2300 = vmatprep.subr.bf16.mxu0 0
    %2301 = vmatpush2.bf16.msra.mxu0 0
    %2302 = vmatprep.subr.bf16.mxu0 0
    %2303 = vmatpush2.bf16.msra.mxu0 0
    %2304 = vmatprep.mubr.bf16.mxu0 0
    %2305 = vmatmul.mubr.bf16.gmra.mxu0 %v544
    %v2306 = vpop.f32.mrf.mxu0
    %v2307 = vadd.f32 %v2200, %v2306
    %v2308 = vpop.f32.mrf.mxu0
    %v2309 = vadd.f32 %v2204, %v2308
    %v2310 = vpop.f32.mrf.mxu0
    %v2311 = vadd.f32 %v2200, %v2310
    %v2312 = vpop.f32.mrf.mxu0
    %v2313 = vadd.f32 %v2204, %v2312
    %2314 = vdwg.mxu0
    %v2315 = vmax.f32 %v2264, 0.0
    %v2316 = vmax.f32 %v2266, 0.0
    %v2317 = vmax.f32 %v2307, 0.0
    %v2318 = vmax.f32 %v2309, 0.0
    %v2319 = vmax.f32 %v2268, 0.0
    %v2320 = vmax.f32 %v2270, 0.0
    %v2321 = vmax.f32 %v2311, 0.0
    %v2322 = vmax.f32 %v2313, 0.0
    %2323 = vmatprep.subr.mxu0 0.0
    %2324 = vmatpush1.msra.mxu0 0.0
    %2325 = vmatprep.subr.mxu0 0.0
    %2326 = vmatpush1.msra.mxu0 0.0
    %2327 = vmatprep.subr.mxu0 0.0
    %2328 = vmatpush1.msra.mxu0 0.0
    %2329 = vmatprep.subr.mxu0 0.0
    %2330 = vmatpush1.msra.mxu0 0.0
    %2331 = vmatprep.subr.mxu0 0.0
    %2332 = vmatpush1.msra.mxu0 0.0
    %2333 = vmatprep.subr.mxu0 0.0
    %2334 = vmatpush1.msra.mxu0 0.0
    %2335 = vmatprep.subr.mxu0 0.0
    %2336 = vmatpush1.msra.mxu0 0.0
    %2337 = vmatprep.subr.mxu0 0.0
    %2338 = vmatpush1.msra.mxu0 0.0
    %2339 = vmatprep.subr.mxu0 0.0
    %2340 = vmatpush1.msra.mxu0 0.0
    %2341 = vmatprep.subr.mxu0 0.0
    %2342 = vmatpush1.msra.mxu0 0.0
    %2343 = vmatprep.subr.mxu0 0.0
    %2344 = vmatpush1.msra.mxu0 0.0
    %2345 = vmatprep.subr.mxu0 0.0
    %2346 = vmatpush1.msra.mxu0 0.0
    %2347 = vmatprep.subr.mxu0 0.0
    %2348 = vmatpush1.msra.mxu0 0.0
    %2349 = vmatprep.subr.mxu0 0.0
    %2350 = vmatpush1.msra.mxu0 0.0
    %2351 = vmatprep.subr.mxu0 0.0
    %2352 = vmatpush1.msra.mxu0 0.0
    %2353 = vmatprep.subr.mxu0 %v2185
    %2354 = vmatpush1.msra.mxu0 %v2184
    %2355 = vmatprep.subr.mxu0 0.0
    %2356 = vmatpush2.msra.mxu0 0.0
    %2357 = vmatprep.subr.mxu0 0.0
    %2358 = vmatpush2.msra.mxu0 0.0
    %2359 = vmatprep.subr.mxu0 0.0
    %2360 = vmatpush2.msra.mxu0 0.0
    %2361 = vmatprep.subr.mxu0 0.0
    %2362 = vmatpush2.msra.mxu0 0.0
    %2363 = vmatprep.subr.mxu0 0.0
    %2364 = vmatpush2.msra.mxu0 0.0
    %2365 = vmatprep.subr.mxu0 0.0
    %2366 = vmatpush2.msra.mxu0 0.0
    %2367 = vmatprep.subr.mxu0 0.0
    %2368 = vmatpush2.msra.mxu0 0.0
    %2369 = vmatprep.subr.mxu0 0.0
    %2370 = vmatpush2.msra.mxu0 0.0
    %2371 = vmatprep.subr.mxu0 0.0
    %2372 = vmatpush2.msra.mxu0 0.0
    %2373 = vmatprep.subr.mxu0 0.0
    %2374 = vmatpush2.msra.mxu0 0.0
    %2375 = vmatprep.subr.mxu0 0.0
    %2376 = vmatpush2.msra.mxu0 0.0
    %2377 = vmatprep.subr.mxu0 0.0
    %2378 = vmatpush2.msra.mxu0 0.0
    %2379 = vmatprep.subr.mxu0 0.0
    %2380 = vmatpush2.msra.mxu0 0.0
    %2381 = vmatprep.subr.mxu0 0.0
    %2382 = vmatpush2.msra.mxu0 0.0
    %2383 = vmatprep.subr.mxu0 0.0
    %2384 = vmatpush2.msra.mxu0 0.0
    %2385 = vmatprep.subr.mxu0 0.0
    %2386 = vmatpush2.msra.mxu0 0.0
    %2387 = vmatprep.mubr.f32.mxu0 0.0
    %2388 = vmatmul.mubr.f32.gmra.mxu0 %v590
    %v2389 = vpop.f32.mrf.mxu0
    %v2390 = vadd.f32 0.0, %v2389
    %v2391 = vpop.f32.mrf.mxu0
    %v2392 = vadd.f32 0.0, %v2391
    %2393 = vmatprep.mubr.f32.mxu0 0.0
    %2394 = vmatmul.mubr.f32.gmra.mxu0 %v593
    %v2395 = vpop.f32.mrf.mxu0
    %v2396 = vadd.f32 0.0, %v2395
    %v2397 = vpop.f32.mrf.mxu0
    %v2398 = vadd.f32 0.0, %v2397
    %2399 = vdwg.mxu0
    %2400 = vmatprep.subr.mxu0 0.0
    %2401 = vmatpush1.msra.mxu0 0.0
    %2402 = vmatprep.subr.mxu0 0.0
    %2403 = vmatpush1.msra.mxu0 0.0
    %2404 = vmatprep.subr.mxu0 0.0
    %2405 = vmatpush1.msra.mxu0 0.0
    %2406 = vmatprep.subr.mxu0 0.0
    %2407 = vmatpush1.msra.mxu0 0.0
    %2408 = vmatprep.subr.mxu0 0.0
    %2409 = vmatpush1.msra.mxu0 0.0
    %2410 = vmatprep.subr.mxu0 0.0
    %2411 = vmatpush1.msra.mxu0 0.0
    %2412 = vmatprep.subr.mxu0 0.0
    %2413 = vmatpush1.msra.mxu0 0.0
    %2414 = vmatprep.subr.mxu0 0.0
    %2415 = vmatpush1.msra.mxu0 0.0
    %2416 = vmatprep.subr.mxu0 0.0
    %2417 = vmatpush1.msra.mxu0 0.0
    %2418 = vmatprep.subr.mxu0 0.0
    %2419 = vmatpush1.msra.mxu0 0.0
    %2420 = vmatprep.subr.mxu0 0.0
    %2421 = vmatpush1.msra.mxu0 0.0
    %2422 = vmatprep.subr.mxu0 0.0
    %2423 = vmatpush1.msra.mxu0 0.0
    %2424 = vmatprep.subr.mxu0 0.0
    %2425 = vmatpush1.msra.mxu0 0.0
    %2426 = vmatprep.subr.mxu0 0.0
    %2427 = vmatpush1.msra.mxu0 0.0
    %2428 = vmatprep.subr.mxu0 0.0
    %2429 = vmatpush1.msra.mxu0 0.0
    %2430 = vmatprep.subr.mxu0 %v2187
    %2431 = vmatpush1.msra.mxu0 %v2186
    %2432 = vmatprep.subr.mxu0 0.0
    %2433 = vmatpush2.msra.mxu0 0.0
    %2434 = vmatprep.subr.mxu0 0.0
    %2435 = vmatpush2.msra.mxu0 0.0
    %2436 = vmatprep.subr.mxu0 0.0
    %2437 = vmatpush2.msra.mxu0 0.0
    %2438 = vmatprep.subr.mxu0 0.0
    %2439 = vmatpush2.msra.mxu0 0.0
    %2440 = vmatprep.subr.mxu0 0.0
    %2441 = vmatpush2.msra.mxu0 0.0
    %2442 = vmatprep.subr.mxu0 0.0
    %2443 = vmatpush2.msra.mxu0 0.0
    %2444 = vmatprep.subr.mxu0 0.0
    %2445 = vmatpush2.msra.mxu0 0.0
    %2446 = vmatprep.subr.mxu0 0.0
    %2447 = vmatpush2.msra.mxu0 0.0
    %2448 = vmatprep.subr.mxu0 0.0
    %2449 = vmatpush2.msra.mxu0 0.0
    %2450 = vmatprep.subr.mxu0 0.0
    %2451 = vmatpush2.msra.mxu0 0.0
    %2452 = vmatprep.subr.mxu0 0.0
    %2453 = vmatpush2.msra.mxu0 0.0
    %2454 = vmatprep.subr.mxu0 0.0
    %2455 = vmatpush2.msra.mxu0 0.0
    %2456 = vmatprep.subr.mxu0 0.0
    %2457 = vmatpush2.msra.mxu0 0.0
    %2458 = vmatprep.subr.mxu0 0.0
    %2459 = vmatpush2.msra.mxu0 0.0
    %2460 = vmatprep.subr.mxu0 0.0
    %2461 = vmatpush2.msra.mxu0 0.0
    %2462 = vmatprep.subr.mxu0 0.0
    %2463 = vmatpush2.msra.mxu0 0.0
    %2464 = vmatprep.mubr.f32.mxu0 0.0
    %2465 = vmatmul.mubr.f32.gmra.mxu0 %v590
    %v2466 = vpop.f32.mrf.mxu0
    %v2467 = vadd.f32 0.0, %v2466
    %v2468 = vpop.f32.mrf.mxu0
    %v2469 = vadd.f32 0.0, %v2468
    %2470 = vmatprep.mubr.f32.mxu0 0.0
    %2471 = vmatmul.mubr.f32.gmra.mxu0 %v593
    %v2472 = vpop.f32.mrf.mxu0
    %v2473 = vadd.f32 0.0, %v2472
    %v2474 = vpop.f32.mrf.mxu0
    %v2475 = vadd.f32 0.0, %v2474
    %2476 = vdwg.mxu0
    %v2477 = vmul.f32 %v2315, %v2390
    %v2478 = vmul.f32 %v2316, %v2392
    %v2479 = vmul.f32 %v2317, %v2467
    %v2480 = vmul.f32 %v2318, %v2469
    %v2481 = vmul.f32 %v2319, %v2396
    %v2482 = vmul.f32 %v2320, %v2398
    %v2483 = vmul.f32 %v2321, %v2473
    %v2484 = vmul.f32 %v2322, %v2475
    %v2485 = vmax.f32 %v2477, %v2481
    %v2486 = vmax.f32 %v2478, %v2482
    %v2487 = vmax.f32 %v2479, %v2483
    %v2488 = vmax.f32 %v2480, %v2484
    %v2489 = vadd.f32 %v2184, %v2485
    %v2490 = vadd.f32 %v2185, %v2486
    %v2491 = vadd.f32 %v2186, %v2487
    %v2492 = vadd.f32 %v2187, %v2488
    %s2493 = smul.u32 4, 66
    %s2494 = smul.u32 %s2493, 4
    %s2495 = sshll.u32 %s2494, 4
    %2496 = dma.done [#allocation3], %s2495
    %s2497 = scalar_lea.hbm %s3, 73216
    // Predicated region
    $region54: #{motion_fgnn_forward.1} parent=1 // pred_check
      _
    $region55: #{motion_fgnn_forward.1} parent=1 // pred_check_branch
      %2499 = sbr.rel target = $region57
    $region56: #{motion_fgnn_forward.1} parent=1 // pred_region
      %2500 = sst [smem:[#allocation10]] [#allocation27]
      %2501 = sst [smem:[#allocation11]] [#allocation26]
    $region57: #{motion_fgnn_forward.1} parent=1 // pred_fallthru
      _
    %2503 = shalt.err (0)
    %s2505 = sshll.u32 %s70, 4
    %s2506 = int_to_ptr.vmem [resolvable:$true] %s2505
    %2508 = dma.hbm_to_vmem [thread:$0]  %s2497, 8704, %s2506, %s71
    %v2509 = vld [vmem:[#allocation2] sm:$0xff]
    %v2510 = vld [vmem:[#allocation2 + $0x8] sm:$0xff]
    %v2511 = vld [vmem:[#allocation2 + $0x10] sm:$0xff]
    %v2512 = vld [vmem:[#allocation2 + $0x18] sm:$0xff]
    %v2513 = vld [vmem:[#allocation2 + $0x20] sm:$0xff]
    %v2514 = vld [vmem:[#allocation2 + $0x28] sm:$0xff]
    %v2515 = vld [vmem:[#allocation2 + $0x30] sm:$0xff]
    %v2516 = vld [vmem:[#allocation2 + $0x38] sm:$0xff]
    %v2517 = vld [vmem:[#allocation2 + $0x40] sm:$0xff]
    %v2518 = vld [vmem:[#allocation2 + $0x48] sm:$0xff]
    %v2519 = vld [vmem:[#allocation2 + $0x50] sm:$0xff]
    %v2520 = vld [vmem:[#allocation2 + $0x58] sm:$0xff]
    %v2521 = vld [vmem:[#allocation2 + $0x60] sm:$0xff]
    %v2522 = vld [vmem:[#allocation2 + $0x68] sm:$0xff]
    %v2523 = vld [vmem:[#allocation2 + $0x70] sm:$0xff]
    %v2524 = vld [vmem:[#allocation2 + $0x78] sm:$0xff]
    %v2525 = vld [vmem:[#allocation2 + $0x80] sm:$0xff]
    %v2526 = vld [vmem:[#allocation2 + $0x88] sm:$0xff]
    %v2527 = vld [vmem:[#allocation2 + $0x90] sm:$0xff]
    %v2528 = vld [vmem:[#allocation2 + $0x98] sm:$0xff]
    %v2529 = vld [vmem:[#allocation2 + $0xa0] sm:$0xff]
    %v2530 = vld [vmem:[#allocation2 + $0xa8] sm:$0xff]
    %v2531 = vld [vmem:[#allocation2 + $0xb0] sm:$0xff]
    %v2532 = vld [vmem:[#allocation2 + $0xb8] sm:$0xff]
    %v2533 = vld [vmem:[#allocation2 + $0xc0] sm:$0xff]
    %v2534 = vld [vmem:[#allocation2 + $0xc8] sm:$0xff]
    %v2535 = vld [vmem:[#allocation2 + $0xd0] sm:$0xff]
    %v2536 = vld [vmem:[#allocation2 + $0xd8] sm:$0xff]
    %v2537 = vld [vmem:[#allocation2 + $0xe0] sm:$0xff]
    %v2538 = vld [vmem:[#allocation2 + $0xe8] sm:$0xff]
    %v2539 = vld [vmem:[#allocation2 + $0xf0] sm:$0xff]
    %v2540 = vld [vmem:[#allocation2 + $0xf8] sm:$0xff]
    %v2541 = vld [vmem:[#allocation2 + $0x100] sm:$0xff]
    %v2542 = vld [vmem:[#allocation2 + $0x108] sm:$0xff]
    %v2543 = vld [vmem:[#allocation2 + $0x110] sm:$0xff]
    %v2544 = vld [vmem:[#allocation2 + $0x118] sm:$0xff]
    %v2545 = vld [vmem:[#allocation2 + $0x120] sm:$0xff]
    %v2546 = vld [vmem:[#allocation2 + $0x128] sm:$0xff]
    %v2547 = vld [vmem:[#allocation2 + $0x130] sm:$0xff]
    %v2548 = vld [vmem:[#allocation2 + $0x138] sm:$0xff]
    %v2549 = vld [vmem:[#allocation2 + $0x140] sm:$0xff]
    %v2550 = vld [vmem:[#allocation2 + $0x148] sm:$0xff]
    %v2551 = vld [vmem:[#allocation2 + $0x150] sm:$0xff]
    %v2552 = vld [vmem:[#allocation2 + $0x158] sm:$0xff]
    %v2553 = vld [vmem:[#allocation2 + $0x160] sm:$0xff]
    %v2554 = vld [vmem:[#allocation2 + $0x168] sm:$0xff]
    %v2555 = vld [vmem:[#allocation2 + $0x170] sm:$0xff]
    %v2556 = vld [vmem:[#allocation2 + $0x178] sm:$0xff]
    %v2557 = vld [vmem:[#allocation2 + $0x180] sm:$0xff]
    %v2558 = vld [vmem:[#allocation2 + $0x188] sm:$0xff]
    %v2559 = vld [vmem:[#allocation2 + $0x190] sm:$0xff]
    %v2560 = vld [vmem:[#allocation2 + $0x198] sm:$0xff]
    %v2561 = vld [vmem:[#allocation2 + $0x1a0] sm:$0xff]
    %v2562 = vld [vmem:[#allocation2 + $0x1a8] sm:$0xff]
    %v2563 = vld [vmem:[#allocation2 + $0x1b0] sm:$0xff]
    %v2564 = vld [vmem:[#allocation2 + $0x1b8] sm:$0xff]
    %v2565 = vld [vmem:[#allocation2 + $0x1c0] sm:$0xff]
    %v2566 = vld [vmem:[#allocation2 + $0x1c8] sm:$0xff]
    %v2567 = vld [vmem:[#allocation2 + $0x1d0] sm:$0xff]
    %v2568 = vld [vmem:[#allocation2 + $0x1d8] sm:$0xff]
    %v2569 = vld [vmem:[#allocation2 + $0x1e0] sm:$0xff]
    %v2570 = vld [vmem:[#allocation2 + $0x1e8] sm:$0xff]
    %v2571 = vld [vmem:[#allocation2 + $0x1f0] sm:$0xff]
    %v2572 = vld [vmem:[#allocation2 + $0x1f8] sm:$0xff]
    %v2573 = vld [vmem:[#allocation2 + $0x200] sm:$0xff]
    %v2574 = vld [vmem:[#allocation2 + $0x208] sm:$0xff]
    %v2575 = vld [vmem:[#allocation2 + $0x210] sm:$0xff]
    %v2576 = vld [vmem:[#allocation2 + $0x218] sm:$0xff]
    %v2577 = vld [vmem:[#allocation2 + $0x220] sm:$0xff]
    %v2578 = vld [vmem:[#allocation2 + $0x228] sm:$0xff]
    %v2579 = vld [vmem:[#allocation2 + $0x230] sm:$0xff]
    %v2580 = vld [vmem:[#allocation2 + $0x238] sm:$0xff]
    %v2581 = vld [vmem:[#allocation2 + $0x240] sm:$0xff]
    %v2582 = vld [vmem:[#allocation2 + $0x248] sm:$0xff]
    %v2583 = vld [vmem:[#allocation2 + $0x250] sm:$0xff]
    %v2584 = vld [vmem:[#allocation2 + $0x258] sm:$0xff]
    %v2585 = vld [vmem:[#allocation2 + $0x260] sm:$0xff]
    %v2586 = vld [vmem:[#allocation2 + $0x268] sm:$0xff]
    %v2587 = vld [vmem:[#allocation2 + $0x270] sm:$0xff]
    %v2588 = vld [vmem:[#allocation2 + $0x278] sm:$0xff]
    %v2589 = vld [vmem:[#allocation2 + $0x280] sm:$0xff]
    %v2590 = vld [vmem:[#allocation2 + $0x288] sm:$0xff]
    %v2591 = vld [vmem:[#allocation2 + $0x290] sm:$0xff]
    %v2592 = vld [vmem:[#allocation2 + $0x298] sm:$0xff]
    %v2593 = vld [vmem:[#allocation2 + $0x2a0] sm:$0xff]
    %v2594 = vld [vmem:[#allocation2 + $0x2a8] sm:$0xff]
    %v2595 = vld [vmem:[#allocation2 + $0x2b0] sm:$0xff]
    %v2596 = vld [vmem:[#allocation2 + $0x2b8] sm:$0xff]
    %v2597 = vld [vmem:[#allocation2 + $0x2c0] sm:$0xff]
    %v2598 = vld [vmem:[#allocation2 + $0x2c8] sm:$0xff]
    %v2599 = vld [vmem:[#allocation2 + $0x2d0] sm:$0xff]
    %v2600 = vld [vmem:[#allocation2 + $0x2d8] sm:$0xff]
    %v2601 = vld [vmem:[#allocation2 + $0x2e0] sm:$0xff]
    %v2602 = vld [vmem:[#allocation2 + $0x2e8] sm:$0xff]
    %v2603 = vld [vmem:[#allocation2 + $0x2f0] sm:$0xff]
    %v2604 = vld [vmem:[#allocation2 + $0x2f8] sm:$0xff]
    %v2605 = vld [vmem:[#allocation2 + $0x300] sm:$0xff]
    %v2606 = vld [vmem:[#allocation2 + $0x308] sm:$0xff]
    %v2607 = vld [vmem:[#allocation2 + $0x310] sm:$0xff]
    %v2608 = vld [vmem:[#allocation2 + $0x318] sm:$0xff]
    %v2609 = vld [vmem:[#allocation2 + $0x320] sm:$0xff]
    %v2610 = vld [vmem:[#allocation2 + $0x328] sm:$0xff]
    %v2611 = vld [vmem:[#allocation2 + $0x330] sm:$0xff]
    %v2612 = vld [vmem:[#allocation2 + $0x338] sm:$0xff]
    %v2613 = vld [vmem:[#allocation2 + $0x340] sm:$0xff]
    %v2614 = vld [vmem:[#allocation2 + $0x348] sm:$0xff]
    %v2615 = vld [vmem:[#allocation2 + $0x350] sm:$0xff]
    %v2616 = vld [vmem:[#allocation2 + $0x358] sm:$0xff]
    %v2617 = vld [vmem:[#allocation2 + $0x360] sm:$0xff]
    %v2618 = vld [vmem:[#allocation2 + $0x368] sm:$0xff]
    %v2619 = vld [vmem:[#allocation2 + $0x370] sm:$0xff]
    %v2620 = vld [vmem:[#allocation2 + $0x378] sm:$0xff]
    %v2621 = vld [vmem:[#allocation2 + $0x380] sm:$0xff]
    %v2622 = vld [vmem:[#allocation2 + $0x388] sm:$0xff]
    %v2623 = vld [vmem:[#allocation2 + $0x390] sm:$0xff]
    %v2624 = vld [vmem:[#allocation2 + $0x398] sm:$0xff]
    %v2625 = vld [vmem:[#allocation2 + $0x3a0] sm:$0xff]
    %v2626 = vld [vmem:[#allocation2 + $0x3a8] sm:$0xff]
    %v2627 = vld [vmem:[#allocation2 + $0x3b0] sm:$0xff]
    %v2628 = vld [vmem:[#allocation2 + $0x3b8] sm:$0xff]
    %v2629 = vld [vmem:[#allocation2 + $0x3c0] sm:$0xff]
    %v2630 = vld [vmem:[#allocation2 + $0x3c8] sm:$0xff]
    %v2631 = vld [vmem:[#allocation2 + $0x3d0] sm:$0xff]
    %v2632 = vld [vmem:[#allocation2 + $0x3d8] sm:$0xff]
    %v2633 = vld [vmem:[#allocation2 + $0x3e0] sm:$0xff]
    %v2634 = vld [vmem:[#allocation2 + $0x3e8] sm:$0xff]
    %v2635 = vld [vmem:[#allocation2 + $0x3f0] sm:$0xff]
    %v2636 = vld [vmem:[#allocation2 + $0x3f8] sm:$0xff]
    %v2637 = vld [vmem:[#allocation2 + $0x400] sm:$0xff]
    %v2638 = vld [vmem:[#allocation2 + $0x408] sm:$0xff]
    %v2639 = vld [vmem:[#allocation2 + $0x410] sm:$0xff]
    %v2640 = vld [vmem:[#allocation2 + $0x418] sm:$0xff]
    %s2641 = scalar_lea.vmem [#allocation6], 35
    %v2642 = vld [vmem:[%s2641] ss:$8 sm:$0xf]
    %s2643 = scalar_lea.vmem [#allocation6], 36
    %v2644 = vld [vmem:[%s2643] ss:$8 sm:$0xf]
    %v2645 = vpack.c.bf16 %v2489, %v2489
    %v2646 = vpack.c.bf16 %v2490, %v2490
    %v2647 = vpack.c.bf16 %v2491, %v2491
    %v2648 = vpack.c.bf16 %v2492, %v2492
    %v2650 = vlaneseq
    %v2651 = vshrl.u32 %v2650, 7
    %v2652 = vsub.s32 0, %v2651
    %v2653 = vrot.slane %v2642, %v2652
    %v2654 = vlaneseq
    %v2655 = vshrl.u32 %v2654, 7
    %v2656 = vsub.s32 1, %v2655
    %v2657 = vrot.slane %v2642, %v2656
    %v2658 = vlaneseq
    %v2659 = vshrl.u32 %v2658, 7
    %v2660 = vsub.s32 2, %v2659
    %v2661 = vrot.slane %v2642, %v2660
    %v2662 = vlaneseq
    %v2663 = vshrl.u32 %v2662, 7
    %v2664 = vsub.s32 3, %v2663
    %v2665 = vrot.slane %v2642, %v2664
    %v2798 = vunpack.c.l.b16 %v2509
    %v2799 = vunpack.c.h.b16 %v2509
    %v2800 = vunpack.c.l.b16 %v2510
    %v2801 = vunpack.c.h.b16 %v2510
    %v2802 = vunpack.c.l.b16 %v2511
    %v2803 = vunpack.c.h.b16 %v2511
    %v2804 = vunpack.c.l.b16 %v2512
    %v2805 = vunpack.c.h.b16 %v2512
    %v2806 = vunpack.c.l.b16 %v2513
    %v2807 = vunpack.c.h.b16 %v2513
    %v2808 = vunpack.c.l.b16 %v2514
    %v2809 = vunpack.c.h.b16 %v2514
    %v2810 = vunpack.c.l.b16 %v2515
    %v2811 = vunpack.c.h.b16 %v2515
    %v2812 = vunpack.c.l.b16 %v2516
    %v2813 = vunpack.c.h.b16 %v2516
    %v2814 = vunpack.c.l.b16 %v2517
    %v2815 = vunpack.c.h.b16 %v2517
    %v2816 = vunpack.c.l.b16 %v2518
    %v2817 = vunpack.c.h.b16 %v2518
    %v2818 = vunpack.c.l.b16 %v2519
    %v2819 = vunpack.c.h.b16 %v2519
    %v2820 = vunpack.c.l.b16 %v2520
    %v2821 = vunpack.c.h.b16 %v2520
    %v2822 = vunpack.c.l.b16 %v2521
    %v2823 = vunpack.c.h.b16 %v2521
    %v2824 = vunpack.c.l.b16 %v2522
    %v2825 = vunpack.c.h.b16 %v2522
    %v2826 = vunpack.c.l.b16 %v2523
    %v2827 = vunpack.c.h.b16 %v2523
    %v2828 = vunpack.c.l.b16 %v2524
    %v2829 = vunpack.c.h.b16 %v2524
    %v2830 = vunpack.c.l.b16 %v2525
    %v2831 = vunpack.c.h.b16 %v2525
    %v2832 = vunpack.c.l.b16 %v2526
    %v2833 = vunpack.c.h.b16 %v2526
    %v2834 = vunpack.c.l.b16 %v2527
    %v2835 = vunpack.c.h.b16 %v2527
    %v2836 = vunpack.c.l.b16 %v2528
    %v2837 = vunpack.c.h.b16 %v2528
    %v2838 = vunpack.c.l.b16 %v2529
    %v2839 = vunpack.c.h.b16 %v2529
    %v2840 = vunpack.c.l.b16 %v2530
    %v2841 = vunpack.c.h.b16 %v2530
    %v2842 = vunpack.c.l.b16 %v2531
    %v2843 = vunpack.c.h.b16 %v2531
    %v2844 = vunpack.c.l.b16 %v2532
    %v2845 = vunpack.c.h.b16 %v2532
    %v2846 = vunpack.c.l.b16 %v2533
    %v2847 = vunpack.c.h.b16 %v2533
    %v2848 = vunpack.c.l.b16 %v2534
    %v2849 = vunpack.c.h.b16 %v2534
    %v2850 = vunpack.c.l.b16 %v2535
    %v2851 = vunpack.c.h.b16 %v2535
    %v2852 = vunpack.c.l.b16 %v2536
    %v2853 = vunpack.c.h.b16 %v2536
    %v2854 = vunpack.c.l.b16 %v2537
    %v2855 = vunpack.c.h.b16 %v2537
    %v2856 = vunpack.c.l.b16 %v2538
    %v2857 = vunpack.c.h.b16 %v2538
    %v2858 = vunpack.c.l.b16 %v2539
    %v2859 = vunpack.c.h.b16 %v2539
    %v2860 = vunpack.c.l.b16 %v2540
    %v2861 = vunpack.c.h.b16 %v2540
    %v2862 = vunpack.c.l.b16 %v2541
    %v2863 = vunpack.c.h.b16 %v2541
    %v2864 = vunpack.c.l.b16 %v2542
    %v2865 = vunpack.c.h.b16 %v2542
    %v2866 = vunpack.c.l.b16 %v2543
    %v2867 = vunpack.c.h.b16 %v2543
    %v2868 = vunpack.c.l.b16 %v2544
    %v2869 = vunpack.c.h.b16 %v2544
    %v2870 = vunpack.c.l.b16 %v2545
    %v2871 = vunpack.c.h.b16 %v2545
    %v2872 = vunpack.c.l.b16 %v2546
    %v2873 = vunpack.c.h.b16 %v2546
    %v2874 = vunpack.c.l.b16 %v2547
    %v2875 = vunpack.c.h.b16 %v2547
    %v2876 = vunpack.c.l.b16 %v2548
    %v2877 = vunpack.c.h.b16 %v2548
    %v2878 = vunpack.c.l.b16 %v2549
    %v2879 = vunpack.c.h.b16 %v2549
    %v2880 = vunpack.c.l.b16 %v2550
    %v2881 = vunpack.c.h.b16 %v2550
    %v2882 = vunpack.c.l.b16 %v2551
    %v2883 = vunpack.c.h.b16 %v2551
    %v2884 = vunpack.c.l.b16 %v2552
    %v2885 = vunpack.c.h.b16 %v2552
    %v2886 = vunpack.c.l.b16 %v2553
    %v2887 = vunpack.c.h.b16 %v2553
    %v2888 = vunpack.c.l.b16 %v2554
    %v2889 = vunpack.c.h.b16 %v2554
    %v2890 = vunpack.c.l.b16 %v2555
    %v2891 = vunpack.c.h.b16 %v2555
    %v2892 = vunpack.c.l.b16 %v2556
    %v2893 = vunpack.c.h.b16 %v2556
    %v2894 = vunpack.c.l.b16 %v2557
    %v2895 = vunpack.c.h.b16 %v2557
    %v2896 = vunpack.c.l.b16 %v2558
    %v2897 = vunpack.c.h.b16 %v2558
    %v2898 = vunpack.c.l.b16 %v2559
    %v2899 = vunpack.c.h.b16 %v2559
    %v2900 = vunpack.c.l.b16 %v2560
    %v2901 = vunpack.c.h.b16 %v2560
    %v2902 = vunpack.c.l.b16 %v2561
    %v2903 = vunpack.c.h.b16 %v2561
    %v2904 = vunpack.c.l.b16 %v2562
    %v2905 = vunpack.c.h.b16 %v2562
    %v2906 = vunpack.c.l.b16 %v2563
    %v2907 = vunpack.c.h.b16 %v2563
    %v2908 = vunpack.c.l.b16 %v2564
    %v2909 = vunpack.c.h.b16 %v2564
    %v2910 = vunpack.c.l.b16 %v2565
    %v2911 = vunpack.c.h.b16 %v2565
    %v2912 = vunpack.c.l.b16 %v2566
    %v2913 = vunpack.c.h.b16 %v2566
    %v2914 = vunpack.c.l.b16 %v2567
    %v2915 = vunpack.c.h.b16 %v2567
    %v2916 = vunpack.c.l.b16 %v2568
    %v2917 = vunpack.c.h.b16 %v2568
    %v2918 = vunpack.c.l.b16 %v2569
    %v2919 = vunpack.c.h.b16 %v2569
    %v2920 = vunpack.c.l.b16 %v2570
    %v2921 = vunpack.c.h.b16 %v2570
    %v2922 = vunpack.c.l.b16 %v2571
    %v2923 = vunpack.c.h.b16 %v2571
    %v2924 = vunpack.c.l.b16 %v2572
    %v2925 = vunpack.c.h.b16 %v2572
    %v2926 = vunpack.c.l.b16 %v2573
    %v2927 = vunpack.c.h.b16 %v2573
    %v2928 = vunpack.c.l.b16 %v2574
    %v2929 = vunpack.c.h.b16 %v2574
    %v2930 = vunpack.c.l.b16 %v2575
    %v2931 = vunpack.c.h.b16 %v2575
    %v2932 = vunpack.c.l.b16 %v2576
    %v2933 = vunpack.c.h.b16 %v2576
    %v2934 = vunpack.c.l.b16 %v2577
    %v2935 = vunpack.c.h.b16 %v2577
    %v2936 = vunpack.c.l.b16 %v2578
    %v2937 = vunpack.c.h.b16 %v2578
    %v2938 = vunpack.c.l.b16 %v2579
    %v2939 = vunpack.c.h.b16 %v2579
    %v2940 = vunpack.c.l.b16 %v2580
    %v2941 = vunpack.c.h.b16 %v2580
    %v2942 = vunpack.c.l.b16 %v2581
    %v2943 = vunpack.c.h.b16 %v2581
    %v2944 = vunpack.c.l.b16 %v2582
    %v2945 = vunpack.c.h.b16 %v2582
    %v2946 = vunpack.c.l.b16 %v2583
    %v2947 = vunpack.c.h.b16 %v2583
    %v2948 = vunpack.c.l.b16 %v2584
    %v2949 = vunpack.c.h.b16 %v2584
    %v2950 = vunpack.c.l.b16 %v2585
    %v2951 = vunpack.c.h.b16 %v2585
    %v2952 = vunpack.c.l.b16 %v2586
    %v2953 = vunpack.c.h.b16 %v2586
    %v2954 = vunpack.c.l.b16 %v2587
    %v2955 = vunpack.c.h.b16 %v2587
    %v2956 = vunpack.c.l.b16 %v2588
    %v2957 = vunpack.c.h.b16 %v2588
    %v2958 = vunpack.c.l.b16 %v2589
    %v2959 = vunpack.c.h.b16 %v2589
    %v2960 = vunpack.c.l.b16 %v2590
    %v2961 = vunpack.c.h.b16 %v2590
    %v2962 = vunpack.c.l.b16 %v2591
    %v2963 = vunpack.c.h.b16 %v2591
    %v2964 = vunpack.c.l.b16 %v2592
    %v2965 = vunpack.c.h.b16 %v2592
    %v2966 = vunpack.c.l.b16 %v2593
    %v2967 = vunpack.c.h.b16 %v2593
    %v2968 = vunpack.c.l.b16 %v2594
    %v2969 = vunpack.c.h.b16 %v2594
    %v2970 = vunpack.c.l.b16 %v2595
    %v2971 = vunpack.c.h.b16 %v2595
    %v2972 = vunpack.c.l.b16 %v2596
    %v2973 = vunpack.c.h.b16 %v2596
    %v2974 = vunpack.c.l.b16 %v2597
    %v2975 = vunpack.c.h.b16 %v2597
    %v2976 = vunpack.c.l.b16 %v2598
    %v2977 = vunpack.c.h.b16 %v2598
    %v2978 = vunpack.c.l.b16 %v2599
    %v2979 = vunpack.c.h.b16 %v2599
    %v2980 = vunpack.c.l.b16 %v2600
    %v2981 = vunpack.c.h.b16 %v2600
    %v2982 = vunpack.c.l.b16 %v2601
    %v2983 = vunpack.c.h.b16 %v2601
    %v2984 = vunpack.c.l.b16 %v2602
    %v2985 = vunpack.c.h.b16 %v2602
    %v2986 = vunpack.c.l.b16 %v2603
    %v2987 = vunpack.c.h.b16 %v2603
    %v2988 = vunpack.c.l.b16 %v2604
    %v2989 = vunpack.c.h.b16 %v2604
    %v2990 = vunpack.c.l.b16 %v2605
    %v2991 = vunpack.c.h.b16 %v2605
    %v2992 = vunpack.c.l.b16 %v2606
    %v2993 = vunpack.c.h.b16 %v2606
    %v2994 = vunpack.c.l.b16 %v2607
    %v2995 = vunpack.c.h.b16 %v2607
    %v2996 = vunpack.c.l.b16 %v2608
    %v2997 = vunpack.c.h.b16 %v2608
    %v2998 = vunpack.c.l.b16 %v2609
    %v2999 = vunpack.c.h.b16 %v2609
    %v3000 = vunpack.c.l.b16 %v2610
    %v3001 = vunpack.c.h.b16 %v2610
    %v3002 = vunpack.c.l.b16 %v2611
    %v3003 = vunpack.c.h.b16 %v2611
    %v3004 = vunpack.c.l.b16 %v2612
    %v3005 = vunpack.c.h.b16 %v2612
    %v3006 = vunpack.c.l.b16 %v2613
    %v3007 = vunpack.c.h.b16 %v2613
    %v3008 = vunpack.c.l.b16 %v2614
    %v3009 = vunpack.c.h.b16 %v2614
    %v3010 = vunpack.c.l.b16 %v2615
    %v3011 = vunpack.c.h.b16 %v2615
    %v3012 = vunpack.c.l.b16 %v2616
    %v3013 = vunpack.c.h.b16 %v2616
    %v3014 = vunpack.c.l.b16 %v2617
    %v3015 = vunpack.c.h.b16 %v2617
    %v3016 = vunpack.c.l.b16 %v2618
    %v3017 = vunpack.c.h.b16 %v2618
    %v3018 = vunpack.c.l.b16 %v2619
    %v3019 = vunpack.c.h.b16 %v2619
    %v3020 = vunpack.c.l.b16 %v2620
    %v3021 = vunpack.c.h.b16 %v2620
    %v3022 = vunpack.c.l.b16 %v2621
    %v3023 = vunpack.c.h.b16 %v2621
    %v3024 = vunpack.c.l.b16 %v2622
    %v3025 = vunpack.c.h.b16 %v2622
    %v3026 = vunpack.c.l.b16 %v2623
    %v3027 = vunpack.c.h.b16 %v2623
    %v3028 = vunpack.c.l.b16 %v2624
    %v3029 = vunpack.c.h.b16 %v2624
    %v3030 = vunpack.c.l.b16 %v2625
    %v3031 = vunpack.c.h.b16 %v2625
    %v3032 = vunpack.c.l.b16 %v2626
    %v3033 = vunpack.c.h.b16 %v2626
    %v3034 = vunpack.c.l.b16 %v2627
    %v3035 = vunpack.c.h.b16 %v2627
    %v3036 = vunpack.c.l.b16 %v2628
    %v3037 = vunpack.c.h.b16 %v2628
    %v3038 = vunpack.c.l.b16 %v2629
    %v3039 = vunpack.c.h.b16 %v2629
    %v3040 = vunpack.c.l.b16 %v2630
    %v3041 = vunpack.c.h.b16 %v2630
    %v3042 = vunpack.c.l.b16 %v2631
    %v3043 = vunpack.c.h.b16 %v2631
    %v3044 = vunpack.c.l.b16 %v2632
    %v3045 = vunpack.c.h.b16 %v2632
    %v3046 = vunpack.c.l.b16 %v2633
    %v3047 = vunpack.c.h.b16 %v2633
    %v3048 = vunpack.c.l.b16 %v2634
    %v3049 = vunpack.c.h.b16 %v2634
    %v3050 = vunpack.c.l.b16 %v2635
    %v3051 = vunpack.c.h.b16 %v2635
    %v3052 = vunpack.c.l.b16 %v2636
    %v3053 = vunpack.c.h.b16 %v2636
    %v3054 = vpack.c.b16 %v2802, %v2798
    %v3055 = vpack.c.b16 %v2803, %v2799
    %v3056 = vpack.c.b16 %v2804, %v2800
    %v3057 = vpack.c.b16 %v2805, %v2801
    %v3058 = vpack.c.b16 %v2810, %v2806
    %v3059 = vpack.c.b16 %v2811, %v2807
    %v3060 = vpack.c.b16 %v2812, %v2808
    %v3061 = vpack.c.b16 %v2813, %v2809
    %v3062 = vpack.c.b16 %v2818, %v2814
    %v3063 = vpack.c.b16 %v2819, %v2815
    %v3064 = vpack.c.b16 %v2820, %v2816
    %v3065 = vpack.c.b16 %v2821, %v2817
    %v3066 = vpack.c.b16 %v2826, %v2822
    %v3067 = vpack.c.b16 %v2827, %v2823
    %v3068 = vpack.c.b16 %v2828, %v2824
    %v3069 = vpack.c.b16 %v2829, %v2825
    %v3070 = vpack.c.b16 %v2834, %v2830
    %v3071 = vpack.c.b16 %v2835, %v2831
    %v3072 = vpack.c.b16 %v2836, %v2832
    %v3073 = vpack.c.b16 %v2837, %v2833
    %v3074 = vpack.c.b16 %v2842, %v2838
    %v3075 = vpack.c.b16 %v2843, %v2839
    %v3076 = vpack.c.b16 %v2844, %v2840
    %v3077 = vpack.c.b16 %v2845, %v2841
    %v3078 = vpack.c.b16 %v2850, %v2846
    %v3079 = vpack.c.b16 %v2851, %v2847
    %v3080 = vpack.c.b16 %v2852, %v2848
    %v3081 = vpack.c.b16 %v2853, %v2849
    %v3082 = vpack.c.b16 %v2858, %v2854
    %v3083 = vpack.c.b16 %v2859, %v2855
    %v3084 = vpack.c.b16 %v2860, %v2856
    %v3085 = vpack.c.b16 %v2861, %v2857
    %v3086 = vpack.c.b16 %v2866, %v2862
    %v3087 = vpack.c.b16 %v2867, %v2863
    %v3088 = vpack.c.b16 %v2868, %v2864
    %v3089 = vpack.c.b16 %v2869, %v2865
    %v3090 = vpack.c.b16 %v2874, %v2870
    %v3091 = vpack.c.b16 %v2875, %v2871
    %v3092 = vpack.c.b16 %v2876, %v2872
    %v3093 = vpack.c.b16 %v2877, %v2873
    %v3094 = vpack.c.b16 %v2882, %v2878
    %v3095 = vpack.c.b16 %v2883, %v2879
    %v3096 = vpack.c.b16 %v2884, %v2880
    %v3097 = vpack.c.b16 %v2885, %v2881
    %v3098 = vpack.c.b16 %v2890, %v2886
    %v3099 = vpack.c.b16 %v2891, %v2887
    %v3100 = vpack.c.b16 %v2892, %v2888
    %v3101 = vpack.c.b16 %v2893, %v2889
    %v3102 = vpack.c.b16 %v2898, %v2894
    %v3103 = vpack.c.b16 %v2899, %v2895
    %v3104 = vpack.c.b16 %v2900, %v2896
    %v3105 = vpack.c.b16 %v2901, %v2897
    %v3106 = vpack.c.b16 %v2906, %v2902
    %v3107 = vpack.c.b16 %v2907, %v2903
    %v3108 = vpack.c.b16 %v2908, %v2904
    %v3109 = vpack.c.b16 %v2909, %v2905
    %v3110 = vpack.c.b16 %v2914, %v2910
    %v3111 = vpack.c.b16 %v2915, %v2911
    %v3112 = vpack.c.b16 %v2916, %v2912
    %v3113 = vpack.c.b16 %v2917, %v2913
    %v3114 = vpack.c.b16 %v2922, %v2918
    %v3115 = vpack.c.b16 %v2923, %v2919
    %v3116 = vpack.c.b16 %v2924, %v2920
    %v3117 = vpack.c.b16 %v2925, %v2921
    %v3118 = vpack.c.b16 %v2930, %v2926
    %v3119 = vpack.c.b16 %v2931, %v2927
    %v3120 = vpack.c.b16 %v2932, %v2928
    %v3121 = vpack.c.b16 %v2933, %v2929
    %v3122 = vpack.c.b16 %v2938, %v2934
    %v3123 = vpack.c.b16 %v2939, %v2935
    %v3124 = vpack.c.b16 %v2940, %v2936
    %v3125 = vpack.c.b16 %v2941, %v2937
    %v3126 = vpack.c.b16 %v2946, %v2942
    %v3127 = vpack.c.b16 %v2947, %v2943
    %v3128 = vpack.c.b16 %v2948, %v2944
    %v3129 = vpack.c.b16 %v2949, %v2945
    %v3130 = vpack.c.b16 %v2954, %v2950
    %v3131 = vpack.c.b16 %v2955, %v2951
    %v3132 = vpack.c.b16 %v2956, %v2952
    %v3133 = vpack.c.b16 %v2957, %v2953
    %v3134 = vpack.c.b16 %v2962, %v2958
    %v3135 = vpack.c.b16 %v2963, %v2959
    %v3136 = vpack.c.b16 %v2964, %v2960
    %v3137 = vpack.c.b16 %v2965, %v2961
    %v3138 = vpack.c.b16 %v2970, %v2966
    %v3139 = vpack.c.b16 %v2971, %v2967
    %v3140 = vpack.c.b16 %v2972, %v2968
    %v3141 = vpack.c.b16 %v2973, %v2969
    %v3142 = vpack.c.b16 %v2978, %v2974
    %v3143 = vpack.c.b16 %v2979, %v2975
    %v3144 = vpack.c.b16 %v2980, %v2976
    %v3145 = vpack.c.b16 %v2981, %v2977
    %v3146 = vpack.c.b16 %v2986, %v2982
    %v3147 = vpack.c.b16 %v2987, %v2983
    %v3148 = vpack.c.b16 %v2988, %v2984
    %v3149 = vpack.c.b16 %v2989, %v2985
    %v3150 = vpack.c.b16 %v2994, %v2990
    %v3151 = vpack.c.b16 %v2995, %v2991
    %v3152 = vpack.c.b16 %v2996, %v2992
    %v3153 = vpack.c.b16 %v2997, %v2993
    %v3154 = vpack.c.b16 %v3002, %v2998
    %v3155 = vpack.c.b16 %v3003, %v2999
    %v3156 = vpack.c.b16 %v3004, %v3000
    %v3157 = vpack.c.b16 %v3005, %v3001
    %v3158 = vpack.c.b16 %v3010, %v3006
    %v3159 = vpack.c.b16 %v3011, %v3007
    %v3160 = vpack.c.b16 %v3012, %v3008
    %v3161 = vpack.c.b16 %v3013, %v3009
    %v3162 = vpack.c.b16 %v3018, %v3014
    %v3163 = vpack.c.b16 %v3019, %v3015
    %v3164 = vpack.c.b16 %v3020, %v3016
    %v3165 = vpack.c.b16 %v3021, %v3017
    %v3166 = vpack.c.b16 %v3026, %v3022
    %v3167 = vpack.c.b16 %v3027, %v3023
    %v3168 = vpack.c.b16 %v3028, %v3024
    %v3169 = vpack.c.b16 %v3029, %v3025
    %v3170 = vpack.c.b16 %v3034, %v3030
    %v3171 = vpack.c.b16 %v3035, %v3031
    %v3172 = vpack.c.b16 %v3036, %v3032
    %v3173 = vpack.c.b16 %v3037, %v3033
    %v3174 = vpack.c.b16 %v3042, %v3038
    %v3175 = vpack.c.b16 %v3043, %v3039
    %v3176 = vpack.c.b16 %v3044, %v3040
    %v3177 = vpack.c.b16 %v3045, %v3041
    %v3178 = vpack.c.b16 %v3050, %v3046
    %v3179 = vpack.c.b16 %v3051, %v3047
    %v3180 = vpack.c.b16 %v3052, %v3048
    %v3181 = vpack.c.b16 %v3053, %v3049
    %3310 = vmatprep.subr.bf16.mxu0 %v3083
    %3311 = vmatpush1.bf16.msra.mxu0 %v3082
    %3312 = vmatprep.subr.bf16.mxu0 %v3079
    %3313 = vmatpush1.bf16.msra.mxu0 %v3078
    %3314 = vmatprep.subr.bf16.mxu0 %v3075
    %3315 = vmatpush1.bf16.msra.mxu0 %v3074
    %3316 = vmatprep.subr.bf16.mxu0 %v3071
    %3317 = vmatpush1.bf16.msra.mxu0 %v3070
    %3318 = vmatprep.subr.bf16.mxu0 %v3067
    %3319 = vmatpush1.bf16.msra.mxu0 %v3066
    %3320 = vmatprep.subr.bf16.mxu0 %v3063
    %3321 = vmatpush1.bf16.msra.mxu0 %v3062
    %3322 = vmatprep.subr.bf16.mxu0 %v3059
    %3323 = vmatpush1.bf16.msra.mxu0 %v3058
    %3324 = vmatprep.subr.bf16.mxu0 %v3055
    %3325 = vmatpush1.bf16.msra.mxu0 %v3054
    %3326 = vmatprep.subr.bf16.mxu0 %v3115
    %3327 = vmatpush2.bf16.msra.mxu0 %v3114
    %3328 = vmatprep.subr.bf16.mxu0 %v3111
    %3329 = vmatpush2.bf16.msra.mxu0 %v3110
    %3330 = vmatprep.subr.bf16.mxu0 %v3107
    %3331 = vmatpush2.bf16.msra.mxu0 %v3106
    %3332 = vmatprep.subr.bf16.mxu0 %v3103
    %3333 = vmatpush2.bf16.msra.mxu0 %v3102
    %3334 = vmatprep.subr.bf16.mxu0 %v3099
    %3335 = vmatpush2.bf16.msra.mxu0 %v3098
    %3336 = vmatprep.subr.bf16.mxu0 %v3095
    %3337 = vmatpush2.bf16.msra.mxu0 %v3094
    %3338 = vmatprep.subr.bf16.mxu0 %v3091
    %3339 = vmatpush2.bf16.msra.mxu0 %v3090
    %3340 = vmatprep.subr.bf16.mxu0 %v3087
    %3341 = vmatpush2.bf16.msra.mxu0 %v3086
    %3342 = vmatprep.mubr.bf16.mxu0 %v2646
    %3343 = vmatmul.mubr.bf16.gmra.mxu0 %v2645
    %v3344 = vpop.f32.mrf.mxu0
    %v3345 = vadd.f32 %v2653, %v3344
    %v3346 = vpop.f32.mrf.mxu0
    %v3347 = vadd.f32 %v2657, %v3346
    %v3348 = vpop.f32.mrf.mxu0
    %v3349 = vpop.f32.mrf.mxu0
    %3350 = vdwg.mxu0
    %3351 = vmatprep.subr.bf16.mxu0 %v3147
    %3352 = vmatpush1.bf16.msra.mxu0 %v3146
    %3353 = vmatprep.subr.bf16.mxu0 %v3143
    %3354 = vmatpush1.bf16.msra.mxu0 %v3142
    %3355 = vmatprep.subr.bf16.mxu0 %v3139
    %3356 = vmatpush1.bf16.msra.mxu0 %v3138
    %3357 = vmatprep.subr.bf16.mxu0 %v3135
    %3358 = vmatpush1.bf16.msra.mxu0 %v3134
    %3359 = vmatprep.subr.bf16.mxu0 %v3131
    %3360 = vmatpush1.bf16.msra.mxu0 %v3130
    %3361 = vmatprep.subr.bf16.mxu0 %v3127
    %3362 = vmatpush1.bf16.msra.mxu0 %v3126
    %3363 = vmatprep.subr.bf16.mxu0 %v3123
    %3364 = vmatpush1.bf16.msra.mxu0 %v3122
    %3365 = vmatprep.subr.bf16.mxu0 %v3119
    %3366 = vmatpush1.bf16.msra.mxu0 %v3118
    %3367 = vmatprep.subr.bf16.mxu0 %v3179
    %3368 = vmatpush2.bf16.msra.mxu0 %v3178
    %3369 = vmatprep.subr.bf16.mxu0 %v3175
    %3370 = vmatpush2.bf16.msra.mxu0 %v3174
    %3371 = vmatprep.subr.bf16.mxu0 %v3171
    %3372 = vmatpush2.bf16.msra.mxu0 %v3170
    %3373 = vmatprep.subr.bf16.mxu0 %v3167
    %3374 = vmatpush2.bf16.msra.mxu0 %v3166
    %3375 = vmatprep.subr.bf16.mxu0 %v3163
    %3376 = vmatpush2.bf16.msra.mxu0 %v3162
    %3377 = vmatprep.subr.bf16.mxu0 %v3159
    %3378 = vmatpush2.bf16.msra.mxu0 %v3158
    %3379 = vmatprep.subr.bf16.mxu0 %v3155
    %3380 = vmatpush2.bf16.msra.mxu0 %v3154
    %3381 = vmatprep.subr.bf16.mxu0 %v3151
    %3382 = vmatpush2.bf16.msra.mxu0 %v3150
    %3383 = vmatprep.mubr.bf16.mxu0 %v2648
    %3384 = vmatmul.mubr.bf16.gmra.mxu0 %v2647
    %v3385 = vpop.f32.mrf.mxu0
    %v3386 = vadd.f32 %v3345, %v3385
    %v3387 = vpop.f32.mrf.mxu0
    %v3388 = vadd.f32 %v3347, %v3387
    %v3389 = vpop.f32.mrf.mxu0
    %v3390 = vpop.f32.mrf.mxu0
    %3391 = vdwg.mxu0
    %3392 = vmatprep.subr.bf16.mxu0 %v3085
    %3393 = vmatpush1.bf16.msra.mxu0 %v3084
    %3394 = vmatprep.subr.bf16.mxu0 %v3081
    %3395 = vmatpush1.bf16.msra.mxu0 %v3080
    %3396 = vmatprep.subr.bf16.mxu0 %v3077
    %3397 = vmatpush1.bf16.msra.mxu0 %v3076
    %3398 = vmatprep.subr.bf16.mxu0 %v3073
    %3399 = vmatpush1.bf16.msra.mxu0 %v3072
    %3400 = vmatprep.subr.bf16.mxu0 %v3069
    %3401 = vmatpush1.bf16.msra.mxu0 %v3068
    %3402 = vmatprep.subr.bf16.mxu0 %v3065
    %3403 = vmatpush1.bf16.msra.mxu0 %v3064
    %3404 = vmatprep.subr.bf16.mxu0 %v3061
    %3405 = vmatpush1.bf16.msra.mxu0 %v3060
    %3406 = vmatprep.subr.bf16.mxu0 %v3057
    %3407 = vmatpush1.bf16.msra.mxu0 %v3056
    %3408 = vmatprep.subr.bf16.mxu0 %v3117
    %3409 = vmatpush2.bf16.msra.mxu0 %v3116
    %3410 = vmatprep.subr.bf16.mxu0 %v3113
    %3411 = vmatpush2.bf16.msra.mxu0 %v3112
    %3412 = vmatprep.subr.bf16.mxu0 %v3109
    %3413 = vmatpush2.bf16.msra.mxu0 %v3108
    %3414 = vmatprep.subr.bf16.mxu0 %v3105
    %3415 = vmatpush2.bf16.msra.mxu0 %v3104
    %3416 = vmatprep.subr.bf16.mxu0 %v3101
    %3417 = vmatpush2.bf16.msra.mxu0 %v3100
    %3418 = vmatprep.subr.bf16.mxu0 %v3097
    %3419 = vmatpush2.bf16.msra.mxu0 %v3096
    %3420 = vmatprep.subr.bf16.mxu0 %v3093
    %3421 = vmatpush2.bf16.msra.mxu0 %v3092
    %3422 = vmatprep.subr.bf16.mxu0 %v3089
    %3423 = vmatpush2.bf16.msra.mxu0 %v3088
    %3424 = vmatprep.mubr.bf16.mxu0 %v2646
    %3425 = vmatmul.mubr.bf16.gmra.mxu0 %v2645
    %v3426 = vpop.f32.mrf.mxu0
    %v3427 = vadd.f32 %v2661, %v3426
    %v3428 = vpop.f32.mrf.mxu0
    %v3429 = vadd.f32 %v2665, %v3428
    %v3430 = vpop.f32.mrf.mxu0
    %v3431 = vpop.f32.mrf.mxu0
    %3432 = vdwg.mxu0
    %3433 = vmatprep.subr.bf16.mxu0 %v3149
    %3434 = vmatpush1.bf16.msra.mxu0 %v3148
    %3435 = vmatprep.subr.bf16.mxu0 %v3145
    %3436 = vmatpush1.bf16.msra.mxu0 %v3144
    %3437 = vmatprep.subr.bf16.mxu0 %v3141
    %3438 = vmatpush1.bf16.msra.mxu0 %v3140
    %3439 = vmatprep.subr.bf16.mxu0 %v3137
    %3440 = vmatpush1.bf16.msra.mxu0 %v3136
    %3441 = vmatprep.subr.bf16.mxu0 %v3133
    %3442 = vmatpush1.bf16.msra.mxu0 %v3132
    %3443 = vmatprep.subr.bf16.mxu0 %v3129
    %3444 = vmatpush1.bf16.msra.mxu0 %v3128
    %3445 = vmatprep.subr.bf16.mxu0 %v3125
    %3446 = vmatpush1.bf16.msra.mxu0 %v3124
    %3447 = vmatprep.subr.bf16.mxu0 %v3121
    %3448 = vmatpush1.bf16.msra.mxu0 %v3120
    %3449 = vmatprep.subr.bf16.mxu0 %v3181
    %3450 = vmatpush2.bf16.msra.mxu0 %v3180
    %3451 = vmatprep.subr.bf16.mxu0 %v3177
    %3452 = vmatpush2.bf16.msra.mxu0 %v3176
    %3453 = vmatprep.subr.bf16.mxu0 %v3173
    %3454 = vmatpush2.bf16.msra.mxu0 %v3172
    %3455 = vmatprep.subr.bf16.mxu0 %v3169
    %3456 = vmatpush2.bf16.msra.mxu0 %v3168
    %3457 = vmatprep.subr.bf16.mxu0 %v3165
    %3458 = vmatpush2.bf16.msra.mxu0 %v3164
    %3459 = vmatprep.subr.bf16.mxu0 %v3161
    %3460 = vmatpush2.bf16.msra.mxu0 %v3160
    %3461 = vmatprep.subr.bf16.mxu0 %v3157
    %3462 = vmatpush2.bf16.msra.mxu0 %v3156
    %3463 = vmatprep.subr.bf16.mxu0 %v3153
    %3464 = vmatpush2.bf16.msra.mxu0 %v3152
    %3465 = vmatprep.mubr.bf16.mxu0 %v2648
    %3466 = vmatmul.mubr.bf16.gmra.mxu0 %v2647
    %v3467 = vpop.f32.mrf.mxu0
    %v3468 = vadd.f32 %v3427, %v3467
    %v3469 = vpop.f32.mrf.mxu0
    %v3470 = vadd.f32 %v3429, %v3469
    %v3471 = vpop.f32.mrf.mxu0
    %v3472 = vpop.f32.mrf.mxu0
    %3473 = vdwg.mxu0
    %v3474 = vmax.f32 %v3386, 0.0
    %v3475 = vmax.f32 %v3388, 0.0
    %v3476 = vmax.f32 %v3468, 0.0
    %v3477 = vmax.f32 %v3470, 0.0
    %v3479 = vlaneseq
    %v3480 = vshrl.u32 %v3479, 7
    %v3481 = vsub.s32 0, %v3480
    %v3482 = vrot.slane %v2644, %v3481
    %v3483 = vlaneseq
    %v3484 = vshrl.u32 %v3483, 7
    %v3485 = vsub.s32 1, %v3484
    %v3486 = vrot.slane %v2644, %v3485
    %v3487 = vlaneseq
    %v3488 = vshrl.u32 %v3487, 7
    %v3489 = vsub.s32 2, %v3488
    %v3490 = vrot.slane %v2644, %v3489
    %v3491 = vlaneseq
    %v3492 = vshrl.u32 %v3491, 7
    %v3493 = vsub.s32 3, %v3492
    %v3494 = vrot.slane %v2644, %v3493
    %v3503 = vunpack.c.l.b16 %v2637
    %v3504 = vunpack.c.h.b16 %v2637
    %v3505 = vunpack.c.l.b16 %v2638
    %v3506 = vunpack.c.h.b16 %v2638
    %v3507 = vunpack.c.l.b16 %v2639
    %v3508 = vunpack.c.h.b16 %v2639
    %v3509 = vunpack.c.l.b16 %v2640
    %v3510 = vunpack.c.h.b16 %v2640
    %v3511 = vpack.c.b16 %v3507, %v3503
    %v3512 = vpack.c.b16 %v3508, %v3504
    %v3513 = vpack.c.b16 %v3509, %v3505
    %v3514 = vpack.c.b16 %v3510, %v3506
    %3519 = vmatprep.subr.bf16.mxu0 0
    %3520 = vmatpush1.bf16.msra.mxu0 0
    %3521 = vmatprep.subr.bf16.mxu0 0
    %3522 = vmatpush1.bf16.msra.mxu0 0
    %3523 = vmatprep.subr.bf16.mxu0 0
    %3524 = vmatpush1.bf16.msra.mxu0 0
    %3525 = vmatprep.subr.bf16.mxu0 0
    %3526 = vmatpush1.bf16.msra.mxu0 0
    %3527 = vmatprep.subr.bf16.mxu0 0
    %3528 = vmatpush1.bf16.msra.mxu0 0
    %3529 = vmatprep.subr.bf16.mxu0 0
    %3530 = vmatpush1.bf16.msra.mxu0 0
    %3531 = vmatprep.subr.bf16.mxu0 0
    %3532 = vmatpush1.bf16.msra.mxu0 0
    %3533 = vmatprep.subr.bf16.mxu0 %v3512
    %3534 = vmatpush1.bf16.msra.mxu0 %v3511
    %3535 = vmatprep.subr.bf16.mxu0 0
    %3536 = vmatpush2.bf16.msra.mxu0 0
    %3537 = vmatprep.subr.bf16.mxu0 0
    %3538 = vmatpush2.bf16.msra.mxu0 0
    %3539 = vmatprep.subr.bf16.mxu0 0
    %3540 = vmatpush2.bf16.msra.mxu0 0
    %3541 = vmatprep.subr.bf16.mxu0 0
    %3542 = vmatpush2.bf16.msra.mxu0 0
    %3543 = vmatprep.subr.bf16.mxu0 0
    %3544 = vmatpush2.bf16.msra.mxu0 0
    %3545 = vmatprep.subr.bf16.mxu0 0
    %3546 = vmatpush2.bf16.msra.mxu0 0
    %3547 = vmatprep.subr.bf16.mxu0 0
    %3548 = vmatpush2.bf16.msra.mxu0 0
    %3549 = vmatprep.subr.bf16.mxu0 0
    %3550 = vmatpush2.bf16.msra.mxu0 0
    %3551 = vmatprep.mubr.bf16.mxu0 0
    %3552 = vmatmul.mubr.bf16.gmra.mxu0 %v544
    %v3553 = vpop.f32.mrf.mxu0
    %v3554 = vadd.f32 %v3482, %v3553
    %v3555 = vpop.f32.mrf.mxu0
    %v3556 = vadd.f32 %v3486, %v3555
    %v3557 = vpop.f32.mrf.mxu0
    %v3558 = vadd.f32 %v3482, %v3557
    %v3559 = vpop.f32.mrf.mxu0
    %v3560 = vadd.f32 %v3486, %v3559
    %3561 = vdwg.mxu0
    %3562 = vmatprep.subr.bf16.mxu0 0
    %3563 = vmatpush1.bf16.msra.mxu0 0
    %3564 = vmatprep.subr.bf16.mxu0 0
    %3565 = vmatpush1.bf16.msra.mxu0 0
    %3566 = vmatprep.subr.bf16.mxu0 0
    %3567 = vmatpush1.bf16.msra.mxu0 0
    %3568 = vmatprep.subr.bf16.mxu0 0
    %3569 = vmatpush1.bf16.msra.mxu0 0
    %3570 = vmatprep.subr.bf16.mxu0 0
    %3571 = vmatpush1.bf16.msra.mxu0 0
    %3572 = vmatprep.subr.bf16.mxu0 0
    %3573 = vmatpush1.bf16.msra.mxu0 0
    %3574 = vmatprep.subr.bf16.mxu0 0
    %3575 = vmatpush1.bf16.msra.mxu0 0
    %3576 = vmatprep.subr.bf16.mxu0 %v3514
    %3577 = vmatpush1.bf16.msra.mxu0 %v3513
    %3578 = vmatprep.subr.bf16.mxu0 0
    %3579 = vmatpush2.bf16.msra.mxu0 0
    %3580 = vmatprep.subr.bf16.mxu0 0
    %3581 = vmatpush2.bf16.msra.mxu0 0
    %3582 = vmatprep.subr.bf16.mxu0 0
    %3583 = vmatpush2.bf16.msra.mxu0 0
    %3584 = vmatprep.subr.bf16.mxu0 0
    %3585 = vmatpush2.bf16.msra.mxu0 0
    %3586 = vmatprep.subr.bf16.mxu0 0
    %3587 = vmatpush2.bf16.msra.mxu0 0
    %3588 = vmatprep.subr.bf16.mxu0 0
    %3589 = vmatpush2.bf16.msra.mxu0 0
    %3590 = vmatprep.subr.bf16.mxu0 0
    %3591 = vmatpush2.bf16.msra.mxu0 0
    %3592 = vmatprep.subr.bf16.mxu0 0
    %3593 = vmatpush2.bf16.msra.mxu0 0
    %3594 = vmatprep.mubr.bf16.mxu0 0
    %3595 = vmatmul.mubr.bf16.gmra.mxu0 %v544
    %v3596 = vpop.f32.mrf.mxu0
    %v3597 = vadd.f32 %v3490, %v3596
    %v3598 = vpop.f32.mrf.mxu0
    %v3599 = vadd.f32 %v3494, %v3598
    %v3600 = vpop.f32.mrf.mxu0
    %v3601 = vadd.f32 %v3490, %v3600
    %v3602 = vpop.f32.mrf.mxu0
    %v3603 = vadd.f32 %v3494, %v3602
    %3604 = vdwg.mxu0
    %v3605 = vmax.f32 %v3554, 0.0
    %v3606 = vmax.f32 %v3556, 0.0
    %v3607 = vmax.f32 %v3597, 0.0
    %v3608 = vmax.f32 %v3599, 0.0
    %v3609 = vmax.f32 %v3558, 0.0
    %v3610 = vmax.f32 %v3560, 0.0
    %v3611 = vmax.f32 %v3601, 0.0
    %v3612 = vmax.f32 %v3603, 0.0
    %3613 = vmatprep.subr.mxu0 0.0
    %3614 = vmatpush1.msra.mxu0 0.0
    %3615 = vmatprep.subr.mxu0 0.0
    %3616 = vmatpush1.msra.mxu0 0.0
    %3617 = vmatprep.subr.mxu0 0.0
    %3618 = vmatpush1.msra.mxu0 0.0
    %3619 = vmatprep.subr.mxu0 0.0
    %3620 = vmatpush1.msra.mxu0 0.0
    %3621 = vmatprep.subr.mxu0 0.0
    %3622 = vmatpush1.msra.mxu0 0.0
    %3623 = vmatprep.subr.mxu0 0.0
    %3624 = vmatpush1.msra.mxu0 0.0
    %3625 = vmatprep.subr.mxu0 0.0
    %3626 = vmatpush1.msra.mxu0 0.0
    %3627 = vmatprep.subr.mxu0 0.0
    %3628 = vmatpush1.msra.mxu0 0.0
    %3629 = vmatprep.subr.mxu0 0.0
    %3630 = vmatpush1.msra.mxu0 0.0
    %3631 = vmatprep.subr.mxu0 0.0
    %3632 = vmatpush1.msra.mxu0 0.0
    %3633 = vmatprep.subr.mxu0 0.0
    %3634 = vmatpush1.msra.mxu0 0.0
    %3635 = vmatprep.subr.mxu0 0.0
    %3636 = vmatpush1.msra.mxu0 0.0
    %3637 = vmatprep.subr.mxu0 0.0
    %3638 = vmatpush1.msra.mxu0 0.0
    %3639 = vmatprep.subr.mxu0 0.0
    %3640 = vmatpush1.msra.mxu0 0.0
    %3641 = vmatprep.subr.mxu0 0.0
    %3642 = vmatpush1.msra.mxu0 0.0
    %3643 = vmatprep.subr.mxu0 %v3475
    %3644 = vmatpush1.msra.mxu0 %v3474
    %3645 = vmatprep.subr.mxu0 0.0
    %3646 = vmatpush2.msra.mxu0 0.0
    %3647 = vmatprep.subr.mxu0 0.0
    %3648 = vmatpush2.msra.mxu0 0.0
    %3649 = vmatprep.subr.mxu0 0.0
    %3650 = vmatpush2.msra.mxu0 0.0
    %3651 = vmatprep.subr.mxu0 0.0
    %3652 = vmatpush2.msra.mxu0 0.0
    %3653 = vmatprep.subr.mxu0 0.0
    %3654 = vmatpush2.msra.mxu0 0.0
    %3655 = vmatprep.subr.mxu0 0.0
    %3656 = vmatpush2.msra.mxu0 0.0
    %3657 = vmatprep.subr.mxu0 0.0
    %3658 = vmatpush2.msra.mxu0 0.0
    %3659 = vmatprep.subr.mxu0 0.0
    %3660 = vmatpush2.msra.mxu0 0.0
    %3661 = vmatprep.subr.mxu0 0.0
    %3662 = vmatpush2.msra.mxu0 0.0
    %3663 = vmatprep.subr.mxu0 0.0
    %3664 = vmatpush2.msra.mxu0 0.0
    %3665 = vmatprep.subr.mxu0 0.0
    %3666 = vmatpush2.msra.mxu0 0.0
    %3667 = vmatprep.subr.mxu0 0.0
    %3668 = vmatpush2.msra.mxu0 0.0
    %3669 = vmatprep.subr.mxu0 0.0
    %3670 = vmatpush2.msra.mxu0 0.0
    %3671 = vmatprep.subr.mxu0 0.0
    %3672 = vmatpush2.msra.mxu0 0.0
    %3673 = vmatprep.subr.mxu0 0.0
    %3674 = vmatpush2.msra.mxu0 0.0
    %3675 = vmatprep.subr.mxu0 0.0
    %3676 = vmatpush2.msra.mxu0 0.0
    %3677 = vmatprep.mubr.f32.mxu0 0.0
    %3678 = vmatmul.mubr.f32.gmra.mxu0 %v590
    %v3679 = vpop.f32.mrf.mxu0
    %v3680 = vadd.f32 0.0, %v3679
    %v3681 = vpop.f32.mrf.mxu0
    %v3682 = vadd.f32 0.0, %v3681
    %3683 = vmatprep.mubr.f32.mxu0 0.0
    %3684 = vmatmul.mubr.f32.gmra.mxu0 %v593
    %v3685 = vpop.f32.mrf.mxu0
    %v3686 = vadd.f32 0.0, %v3685
    %v3687 = vpop.f32.mrf.mxu0
    %v3688 = vadd.f32 0.0, %v3687
    %3689 = vdwg.mxu0
    %3690 = vmatprep.subr.mxu0 0.0
    %3691 = vmatpush1.msra.mxu0 0.0
    %3692 = vmatprep.subr.mxu0 0.0
    %3693 = vmatpush1.msra.mxu0 0.0
    %3694 = vmatprep.subr.mxu0 0.0
    %3695 = vmatpush1.msra.mxu0 0.0
    %3696 = vmatprep.subr.mxu0 0.0
    %3697 = vmatpush1.msra.mxu0 0.0
    %3698 = vmatprep.subr.mxu0 0.0
    %3699 = vmatpush1.msra.mxu0 0.0
    %3700 = vmatprep.subr.mxu0 0.0
    %3701 = vmatpush1.msra.mxu0 0.0
    %3702 = vmatprep.subr.mxu0 0.0
    %3703 = vmatpush1.msra.mxu0 0.0
    %3704 = vmatprep.subr.mxu0 0.0
    %3705 = vmatpush1.msra.mxu0 0.0
    %3706 = vmatprep.subr.mxu0 0.0
    %3707 = vmatpush1.msra.mxu0 0.0
    %3708 = vmatprep.subr.mxu0 0.0
    %3709 = vmatpush1.msra.mxu0 0.0
    %3710 = vmatprep.subr.mxu0 0.0
    %3711 = vmatpush1.msra.mxu0 0.0
    %3712 = vmatprep.subr.mxu0 0.0
    %3713 = vmatpush1.msra.mxu0 0.0
    %3714 = vmatprep.subr.mxu0 0.0
    %3715 = vmatpush1.msra.mxu0 0.0
    %3716 = vmatprep.subr.mxu0 0.0
    %3717 = vmatpush1.msra.mxu0 0.0
    %3718 = vmatprep.subr.mxu0 0.0
    %3719 = vmatpush1.msra.mxu0 0.0
    %3720 = vmatprep.subr.mxu0 %v3477
    %3721 = vmatpush1.msra.mxu0 %v3476
    %3722 = vmatprep.subr.mxu0 0.0
    %3723 = vmatpush2.msra.mxu0 0.0
    %3724 = vmatprep.subr.mxu0 0.0
    %3725 = vmatpush2.msra.mxu0 0.0
    %3726 = vmatprep.subr.mxu0 0.0
    %3727 = vmatpush2.msra.mxu0 0.0
    %3728 = vmatprep.subr.mxu0 0.0
    %3729 = vmatpush2.msra.mxu0 0.0
    %3730 = vmatprep.subr.mxu0 0.0
    %3731 = vmatpush2.msra.mxu0 0.0
    %3732 = vmatprep.subr.mxu0 0.0
    %3733 = vmatpush2.msra.mxu0 0.0
    %3734 = vmatprep.subr.mxu0 0.0
    %3735 = vmatpush2.msra.mxu0 0.0
    %3736 = vmatprep.subr.mxu0 0.0
    %3737 = vmatpush2.msra.mxu0 0.0
    %3738 = vmatprep.subr.mxu0 0.0
    %3739 = vmatpush2.msra.mxu0 0.0
    %3740 = vmatprep.subr.mxu0 0.0
    %3741 = vmatpush2.msra.mxu0 0.0
    %3742 = vmatprep.subr.mxu0 0.0
    %3743 = vmatpush2.msra.mxu0 0.0
    %3744 = vmatprep.subr.mxu0 0.0
    %3745 = vmatpush2.msra.mxu0 0.0
    %3746 = vmatprep.subr.mxu0 0.0
    %3747 = vmatpush2.msra.mxu0 0.0
    %3748 = vmatprep.subr.mxu0 0.0
    %3749 = vmatpush2.msra.mxu0 0.0
    %3750 = vmatprep.subr.mxu0 0.0
    %3751 = vmatpush2.msra.mxu0 0.0
    %3752 = vmatprep.subr.mxu0 0.0
    %3753 = vmatpush2.msra.mxu0 0.0
    %3754 = vmatprep.mubr.f32.mxu0 0.0
    %3755 = vmatmul.mubr.f32.gmra.mxu0 %v590
    %v3756 = vpop.f32.mrf.mxu0
    %v3757 = vadd.f32 0.0, %v3756
    %v3758 = vpop.f32.mrf.mxu0
    %v3759 = vadd.f32 0.0, %v3758
    %3760 = vmatprep.mubr.f32.mxu0 0.0
    %3761 = vmatmul.mubr.f32.gmra.mxu0 %v593
    %v3762 = vpop.f32.mrf.mxu0
    %v3763 = vadd.f32 0.0, %v3762
    %v3764 = vpop.f32.mrf.mxu0
    %v3765 = vadd.f32 0.0, %v3764
    %3766 = vdwg.mxu0
    %v3767 = vmul.f32 %v3605, %v3680
    %v3768 = vmul.f32 %v3606, %v3682
    %v3769 = vmul.f32 %v3607, %v3757
    %v3770 = vmul.f32 %v3608, %v3759
    %v3771 = vmul.f32 %v3609, %v3686
    %v3772 = vmul.f32 %v3610, %v3688
    %v3773 = vmul.f32 %v3611, %v3763
    %v3774 = vmul.f32 %v3612, %v3765
    %v3775 = vmax.f32 %v3767, %v3771
    %v3776 = vmax.f32 %v3768, %v3772
    %v3777 = vmax.f32 %v3769, %v3773
    %v3778 = vmax.f32 %v3770, %v3774
    %v3779 = vadd.f32 %v3474, %v3775
    %v3780 = vadd.f32 %v3475, %v3776
    %v3781 = vadd.f32 %v3476, %v3777
    %v3782 = vadd.f32 %v3477, %v3778
    %s3783 = sshll.u32 %s2494, 4
    %3784 = dma.done %s57, %s3783
    %s3785 = scalar_lea.hbm %s3, 81920
    // Predicated region
    $region58: #{motion_fgnn_forward.1} parent=1 // pred_check
      _
    $region59: #{motion_fgnn_forward.1} parent=1 // pred_check_branch
      %3787 = sbr.rel target = $region61
    $region60: #{motion_fgnn_forward.1} parent=1 // pred_region
      %3788 = sst [smem:[#allocation10]] [#allocation29]
      %3789 = sst [smem:[#allocation11]] [#allocation28]
    $region61: #{motion_fgnn_forward.1} parent=1 // pred_fallthru
      _
    %3791 = shalt.err (0)
    %s3793 = sshll.u32 [#allocation2], 4
    %s3794 = int_to_ptr.vmem [resolvable:$true] %s3793
    %3796 = dma.hbm_to_vmem [thread:$0]  %s3785, 8704, %s3794, [#allocation3]
    %v3797 = vld [vmem:[%s56] sm:$0xff]
    %v3798 = vld [vmem:[%s56 + $0x10] sm:$0xff]
    %v3799 = vld [vmem:[%s56 + $0x20] sm:$0xff]
    %v3800 = vld [vmem:[%s56 + $0x30] sm:$0xff]
    %v3801 = vld [vmem:[%s56 + $0x40] sm:$0xff]
    %v3802 = vld [vmem:[%s56 + $0x50] sm:$0xff]
    %v3803 = vld [vmem:[%s56 + $0x60] sm:$0xff]
    %v3804 = vld [vmem:[%s56 + $0x70] sm:$0xff]
    %v3805 = vld [vmem:[%s56 + $0x80] sm:$0xff]
    %v3806 = vld [vmem:[%s56 + $0x90] sm:$0xff]
    %v3807 = vld [vmem:[%s56 + $0xa0] sm:$0xff]
    %v3808 = vld [vmem:[%s56 + $0xb0] sm:$0xff]
    %v3809 = vld [vmem:[%s56 + $0xc0] sm:$0xff]
    %v3810 = vld [vmem:[%s56 + $0xd0] sm:$0xff]
    %v3811 = vld [vmem:[%s56 + $0xe0] sm:$0xff]
    %v3812 = vld [vmem:[%s56 + $0xf0] sm:$0xff]
    %v3813 = vld [vmem:[%s56 + $0x100] sm:$0xff]
    %v3814 = vld [vmem:[%s56 + $0x110] sm:$0xff]
    %v3815 = vld [vmem:[%s56 + $0x120] sm:$0xff]
    %v3816 = vld [vmem:[%s56 + $0x130] sm:$0xff]
    %v3817 = vld [vmem:[%s56 + $0x140] sm:$0xff]
    %v3818 = vld [vmem:[%s56 + $0x150] sm:$0xff]
    %v3819 = vld [vmem:[%s56 + $0x160] sm:$0xff]
    %v3820 = vld [vmem:[%s56 + $0x170] sm:$0xff]
    %v3821 = vld [vmem:[%s56 + $0x180] sm:$0xff]
    %v3822 = vld [vmem:[%s56 + $0x190] sm:$0xff]
    %v3823 = vld [vmem:[%s56 + $0x1a0] sm:$0xff]
    %v3824 = vld [vmem:[%s56 + $0x1b0] sm:$0xff]
    %v3825 = vld [vmem:[%s56 + $0x1c0] sm:$0xff]
    %v3826 = vld [vmem:[%s56 + $0x1d0] sm:$0xff]
    %v3827 = vld [vmem:[%s56 + $0x1e0] sm:$0xff]
    %v3828 = vld [vmem:[%s56 + $0x1f0] sm:$0xff]
    %v3829 = vld [vmem:[%s56 + $0x200] sm:$0xff]
    %v3830 = vld [vmem:[%s56 + $0x210] sm:$0xff]
    %v3831 = vld [vmem:[%s56 + $0x220] sm:$0xff]
    %v3832 = vld [vmem:[%s56 + $0x230] sm:$0xff]
    %v3833 = vld [vmem:[%s56 + $0x240] sm:$0xff]
    %v3834 = vld [vmem:[%s56 + $0x250] sm:$0xff]
    %v3835 = vld [vmem:[%s56 + $0x260] sm:$0xff]
    %v3836 = vld [vmem:[%s56 + $0x270] sm:$0xff]
    %v3837 = vld [vmem:[%s56 + $0x280] sm:$0xff]
    %v3838 = vld [vmem:[%s56 + $0x290] sm:$0xff]
    %v3839 = vld [vmem:[%s56 + $0x2a0] sm:$0xff]
    %v3840 = vld [vmem:[%s56 + $0x2b0] sm:$0xff]
    %v3841 = vld [vmem:[%s56 + $0x2c0] sm:$0xff]
    %v3842 = vld [vmem:[%s56 + $0x2d0] sm:$0xff]
    %v3843 = vld [vmem:[%s56 + $0x2e0] sm:$0xff]
    %v3844 = vld [vmem:[%s56 + $0x2f0] sm:$0xff]
    %v3845 = vld [vmem:[%s56 + $0x300] sm:$0xff]
    %v3846 = vld [vmem:[%s56 + $0x310] sm:$0xff]
    %v3847 = vld [vmem:[%s56 + $0x320] sm:$0xff]
    %v3848 = vld [vmem:[%s56 + $0x330] sm:$0xff]
    %v3849 = vld [vmem:[%s56 + $0x340] sm:$0xff]
    %v3850 = vld [vmem:[%s56 + $0x350] sm:$0xff]
    %v3851 = vld [vmem:[%s56 + $0x360] sm:$0xff]
    %v3852 = vld [vmem:[%s56 + $0x370] sm:$0xff]
    %v3853 = vld [vmem:[%s56 + $0x380] sm:$0xff]
    %v3854 = vld [vmem:[%s56 + $0x390] sm:$0xff]
    %v3855 = vld [vmem:[%s56 + $0x3a0] sm:$0xff]
    %v3856 = vld [vmem:[%s56 + $0x3b0] sm:$0xff]
    %v3857 = vld [vmem:[%s56 + $0x3c0] sm:$0xff]
    %v3858 = vld [vmem:[%s56 + $0x3d0] sm:$0xff]
    %v3859 = vld [vmem:[%s56 + $0x3e0] sm:$0xff]
    %v3860 = vld [vmem:[%s56 + $0x3f0] sm:$0xff]
    %v3861 = vld [vmem:[%s56 + $0x400] sm:$0xff]
    %v3862 = vld [vmem:[%s56 + $0x410] sm:$0xff]
    %s3863 = scalar_lea.vmem [#allocation6], 37
    %v3864 = vld [vmem:[%s3863] ss:$8 sm:$0x3]
    %s3865 = scalar_lea.vmem [#allocation6], 38
    %v3866 = vld [vmem:[%s3865] ss:$8 sm:$0x3]
    %v3867 = vpack.c.bf16 %v3779, %v3779
    %v3868 = vpack.c.bf16 %v3780, %v3780
    %v3869 = vpack.c.bf16 %v3781, %v3781
    %v3870 = vpack.c.bf16 %v3782, %v3782
    %v3872 = vlaneseq
    %v3873 = vshrl.u32 %v3872, 7
    %v3874 = vsub.s32 0, %v3873
    %v3875 = vrot.slane %v3864, %v3874
    %v3876 = vlaneseq
    %v3877 = vshrl.u32 %v3876, 7
    %v3878 = vsub.s32 1, %v3877
    %v3879 = vrot.slane %v3864, %v3878
    %v3946 = vunpack.c.l.b16 %v3797
    %v3947 = vunpack.c.h.b16 %v3797
    %v3948 = vunpack.c.l.b16 %v3798
    %v3949 = vunpack.c.h.b16 %v3798
    %v3950 = vunpack.c.l.b16 %v3799
    %v3951 = vunpack.c.h.b16 %v3799
    %v3952 = vunpack.c.l.b16 %v3800
    %v3953 = vunpack.c.h.b16 %v3800
    %v3954 = vunpack.c.l.b16 %v3801
    %v3955 = vunpack.c.h.b16 %v3801
    %v3956 = vunpack.c.l.b16 %v3802
    %v3957 = vunpack.c.h.b16 %v3802
    %v3958 = vunpack.c.l.b16 %v3803
    %v3959 = vunpack.c.h.b16 %v3803
    %v3960 = vunpack.c.l.b16 %v3804
    %v3961 = vunpack.c.h.b16 %v3804
    %v3962 = vunpack.c.l.b16 %v3805
    %v3963 = vunpack.c.h.b16 %v3805
    %v3964 = vunpack.c.l.b16 %v3806
    %v3965 = vunpack.c.h.b16 %v3806
    %v3966 = vunpack.c.l.b16 %v3807
    %v3967 = vunpack.c.h.b16 %v3807
    %v3968 = vunpack.c.l.b16 %v3808
    %v3969 = vunpack.c.h.b16 %v3808
    %v3970 = vunpack.c.l.b16 %v3809
    %v3971 = vunpack.c.h.b16 %v3809
    %v3972 = vunpack.c.l.b16 %v3810
    %v3973 = vunpack.c.h.b16 %v3810
    %v3974 = vunpack.c.l.b16 %v3811
    %v3975 = vunpack.c.h.b16 %v3811
    %v3976 = vunpack.c.l.b16 %v3812
    %v3977 = vunpack.c.h.b16 %v3812
    %v3978 = vunpack.c.l.b16 %v3813
    %v3979 = vunpack.c.h.b16 %v3813
    %v3980 = vunpack.c.l.b16 %v3814
    %v3981 = vunpack.c.h.b16 %v3814
    %v3982 = vunpack.c.l.b16 %v3815
    %v3983 = vunpack.c.h.b16 %v3815
    %v3984 = vunpack.c.l.b16 %v3816
    %v3985 = vunpack.c.h.b16 %v3816
    %v3986 = vunpack.c.l.b16 %v3817
    %v3987 = vunpack.c.h.b16 %v3817
    %v3988 = vunpack.c.l.b16 %v3818
    %v3989 = vunpack.c.h.b16 %v3818
    %v3990 = vunpack.c.l.b16 %v3819
    %v3991 = vunpack.c.h.b16 %v3819
    %v3992 = vunpack.c.l.b16 %v3820
    %v3993 = vunpack.c.h.b16 %v3820
    %v3994 = vunpack.c.l.b16 %v3821
    %v3995 = vunpack.c.h.b16 %v3821
    %v3996 = vunpack.c.l.b16 %v3822
    %v3997 = vunpack.c.h.b16 %v3822
    %v3998 = vunpack.c.l.b16 %v3823
    %v3999 = vunpack.c.h.b16 %v3823
    %v4000 = vunpack.c.l.b16 %v3824
    %v4001 = vunpack.c.h.b16 %v3824
    %v4002 = vunpack.c.l.b16 %v3825
    %v4003 = vunpack.c.h.b16 %v3825
    %v4004 = vunpack.c.l.b16 %v3826
    %v4005 = vunpack.c.h.b16 %v3826
    %v4006 = vunpack.c.l.b16 %v3827
    %v4007 = vunpack.c.h.b16 %v3827
    %v4008 = vunpack.c.l.b16 %v3828
    %v4009 = vunpack.c.h.b16 %v3828
    %v4010 = vunpack.c.l.b16 %v3829
    %v4011 = vunpack.c.h.b16 %v3829
    %v4012 = vunpack.c.l.b16 %v3830
    %v4013 = vunpack.c.h.b16 %v3830
    %v4014 = vunpack.c.l.b16 %v3831
    %v4015 = vunpack.c.h.b16 %v3831
    %v4016 = vunpack.c.l.b16 %v3832
    %v4017 = vunpack.c.h.b16 %v3832
    %v4018 = vunpack.c.l.b16 %v3833
    %v4019 = vunpack.c.h.b16 %v3833
    %v4020 = vunpack.c.l.b16 %v3834
    %v4021 = vunpack.c.h.b16 %v3834
    %v4022 = vunpack.c.l.b16 %v3835
    %v4023 = vunpack.c.h.b16 %v3835
    %v4024 = vunpack.c.l.b16 %v3836
    %v4025 = vunpack.c.h.b16 %v3836
    %v4026 = vunpack.c.l.b16 %v3837
    %v4027 = vunpack.c.h.b16 %v3837
    %v4028 = vunpack.c.l.b16 %v3838
    %v4029 = vunpack.c.h.b16 %v3838
    %v4030 = vunpack.c.l.b16 %v3839
    %v4031 = vunpack.c.h.b16 %v3839
    %v4032 = vunpack.c.l.b16 %v3840
    %v4033 = vunpack.c.h.b16 %v3840
    %v4034 = vunpack.c.l.b16 %v3841
    %v4035 = vunpack.c.h.b16 %v3841
    %v4036 = vunpack.c.l.b16 %v3842
    %v4037 = vunpack.c.h.b16 %v3842
    %v4038 = vunpack.c.l.b16 %v3843
    %v4039 = vunpack.c.h.b16 %v3843
    %v4040 = vunpack.c.l.b16 %v3844
    %v4041 = vunpack.c.h.b16 %v3844
    %v4042 = vunpack.c.l.b16 %v3845
    %v4043 = vunpack.c.h.b16 %v3845
    %v4044 = vunpack.c.l.b16 %v3846
    %v4045 = vunpack.c.h.b16 %v3846
    %v4046 = vunpack.c.l.b16 %v3847
    %v4047 = vunpack.c.h.b16 %v3847
    %v4048 = vunpack.c.l.b16 %v3848
    %v4049 = vunpack.c.h.b16 %v3848
    %v4050 = vunpack.c.l.b16 %v3849
    %v4051 = vunpack.c.h.b16 %v3849
    %v4052 = vunpack.c.l.b16 %v3850
    %v4053 = vunpack.c.h.b16 %v3850
    %v4054 = vunpack.c.l.b16 %v3851
    %v4055 = vunpack.c.h.b16 %v3851
    %v4056 = vunpack.c.l.b16 %v3852
    %v4057 = vunpack.c.h.b16 %v3852
    %v4058 = vunpack.c.l.b16 %v3853
    %v4059 = vunpack.c.h.b16 %v3853
    %v4060 = vunpack.c.l.b16 %v3854
    %v4061 = vunpack.c.h.b16 %v3854
    %v4062 = vunpack.c.l.b16 %v3855
    %v4063 = vunpack.c.h.b16 %v3855
    %v4064 = vunpack.c.l.b16 %v3856
    %v4065 = vunpack.c.h.b16 %v3856
    %v4066 = vunpack.c.l.b16 %v3857
    %v4067 = vunpack.c.h.b16 %v3857
    %v4068 = vunpack.c.l.b16 %v3858
    %v4069 = vunpack.c.h.b16 %v3858
    %v4070 = vunpack.c.l.b16 %v3859
    %v4071 = vunpack.c.h.b16 %v3859
    %v4072 = vunpack.c.l.b16 %v3860
    %v4073 = vunpack.c.h.b16 %v3860
    %v4074 = vpack.c.b16 %v3948, %v3946
    %v4075 = vpack.c.b16 %v3949, %v3947
    %v4076 = vpack.c.b16 %v3952, %v3950
    %v4077 = vpack.c.b16 %v3953, %v3951
    %v4078 = vpack.c.b16 %v3956, %v3954
    %v4079 = vpack.c.b16 %v3957, %v3955
    %v4080 = vpack.c.b16 %v3960, %v3958
    %v4081 = vpack.c.b16 %v3961, %v3959
    %v4082 = vpack.c.b16 %v3964, %v3962
    %v4083 = vpack.c.b16 %v3965, %v3963
    %v4084 = vpack.c.b16 %v3968, %v3966
    %v4085 = vpack.c.b16 %v3969, %v3967
    %v4086 = vpack.c.b16 %v3972, %v3970
    %v4087 = vpack.c.b16 %v3973, %v3971
    %v4088 = vpack.c.b16 %v3976, %v3974
    %v4089 = vpack.c.b16 %v3977, %v3975
    %v4090 = vpack.c.b16 %v3980, %v3978
    %v4091 = vpack.c.b16 %v3981, %v3979
    %v4092 = vpack.c.b16 %v3984, %v3982
    %v4093 = vpack.c.b16 %v3985, %v3983
    %v4094 = vpack.c.b16 %v3988, %v3986
    %v4095 = vpack.c.b16 %v3989, %v3987
    %v4096 = vpack.c.b16 %v3992, %v3990
    %v4097 = vpack.c.b16 %v3993, %v3991
    %v4098 = vpack.c.b16 %v3996, %v3994
    %v4099 = vpack.c.b16 %v3997, %v3995
    %v4100 = vpack.c.b16 %v4000, %v3998
    %v4101 = vpack.c.b16 %v4001, %v3999
    %v4102 = vpack.c.b16 %v4004, %v4002
    %v4103 = vpack.c.b16 %v4005, %v4003
    %v4104 = vpack.c.b16 %v4008, %v4006
    %v4105 = vpack.c.b16 %v4009, %v4007
    %v4106 = vpack.c.b16 %v4012, %v4010
    %v4107 = vpack.c.b16 %v4013, %v4011
    %v4108 = vpack.c.b16 %v4016, %v4014
    %v4109 = vpack.c.b16 %v4017, %v4015
    %v4110 = vpack.c.b16 %v4020, %v4018
    %v4111 = vpack.c.b16 %v4021, %v4019
    %v4112 = vpack.c.b16 %v4024, %v4022
    %v4113 = vpack.c.b16 %v4025, %v4023
    %v4114 = vpack.c.b16 %v4028, %v4026
    %v4115 = vpack.c.b16 %v4029, %v4027
    %v4116 = vpack.c.b16 %v4032, %v4030
    %v4117 = vpack.c.b16 %v4033, %v4031
    %v4118 = vpack.c.b16 %v4036, %v4034
    %v4119 = vpack.c.b16 %v4037, %v4035
    %v4120 = vpack.c.b16 %v4040, %v4038
    %v4121 = vpack.c.b16 %v4041, %v4039
    %v4122 = vpack.c.b16 %v4044, %v4042
    %v4123 = vpack.c.b16 %v4045, %v4043
    %v4124 = vpack.c.b16 %v4048, %v4046
    %v4125 = vpack.c.b16 %v4049, %v4047
    %v4126 = vpack.c.b16 %v4052, %v4050
    %v4127 = vpack.c.b16 %v4053, %v4051
    %v4128 = vpack.c.b16 %v4056, %v4054
    %v4129 = vpack.c.b16 %v4057, %v4055
    %v4130 = vpack.c.b16 %v4060, %v4058
    %v4131 = vpack.c.b16 %v4061, %v4059
    %v4132 = vpack.c.b16 %v4064, %v4062
    %v4133 = vpack.c.b16 %v4065, %v4063
    %v4134 = vpack.c.b16 %v4068, %v4066
    %v4135 = vpack.c.b16 %v4069, %v4067
    %v4136 = vpack.c.b16 %v4072, %v4070
    %v4137 = vpack.c.b16 %v4073, %v4071
    %4202 = vmatprep.subr.bf16.mxu0 %v4089
    %4203 = vmatpush1.bf16.msra.mxu0 %v4088
    %4204 = vmatprep.subr.bf16.mxu0 %v4087
    %4205 = vmatpush1.bf16.msra.mxu0 %v4086
    %4206 = vmatprep.subr.bf16.mxu0 %v4085
    %4207 = vmatpush1.bf16.msra.mxu0 %v4084
    %4208 = vmatprep.subr.bf16.mxu0 %v4083
    %4209 = vmatpush1.bf16.msra.mxu0 %v4082
    %4210 = vmatprep.subr.bf16.mxu0 %v4081
    %4211 = vmatpush1.bf16.msra.mxu0 %v4080
    %4212 = vmatprep.subr.bf16.mxu0 %v4079
    %4213 = vmatpush1.bf16.msra.mxu0 %v4078
    %4214 = vmatprep.subr.bf16.mxu0 %v4077
    %4215 = vmatpush1.bf16.msra.mxu0 %v4076
    %4216 = vmatprep.subr.bf16.mxu0 %v4075
    %4217 = vmatpush1.bf16.msra.mxu0 %v4074
    %4218 = vmatprep.subr.bf16.mxu0 %v4105
    %4219 = vmatpush2.bf16.msra.mxu0 %v4104
    %4220 = vmatprep.subr.bf16.mxu0 %v4103
    %4221 = vmatpush2.bf16.msra.mxu0 %v4102
    %4222 = vmatprep.subr.bf16.mxu0 %v4101
    %4223 = vmatpush2.bf16.msra.mxu0 %v4100
    %4224 = vmatprep.subr.bf16.mxu0 %v4099
    %4225 = vmatpush2.bf16.msra.mxu0 %v4098
    %4226 = vmatprep.subr.bf16.mxu0 %v4097
    %4227 = vmatpush2.bf16.msra.mxu0 %v4096
    %4228 = vmatprep.subr.bf16.mxu0 %v4095
    %4229 = vmatpush2.bf16.msra.mxu0 %v4094
    %4230 = vmatprep.subr.bf16.mxu0 %v4093
    %4231 = vmatpush2.bf16.msra.mxu0 %v4092
    %4232 = vmatprep.subr.bf16.mxu0 %v4091
    %4233 = vmatpush2.bf16.msra.mxu0 %v4090
    %4234 = vmatprep.mubr.bf16.mxu0 %v3868
    %4235 = vmatmul.mubr.bf16.gmra.mxu0 %v3867
    %v4236 = vpop.f32.mrf.mxu0
    %v4237 = vadd.f32 %v3875, %v4236
    %v4238 = vpop.f32.mrf.mxu0
    %v4239 = vadd.f32 %v3879, %v4238
    %v4240 = vpop.f32.mrf.mxu0
    %v4241 = vpop.f32.mrf.mxu0
    %4242 = vdwg.mxu0
    %4243 = vmatprep.subr.bf16.mxu0 %v4121
    %4244 = vmatpush1.bf16.msra.mxu0 %v4120
    %4245 = vmatprep.subr.bf16.mxu0 %v4119
    %4246 = vmatpush1.bf16.msra.mxu0 %v4118
    %4247 = vmatprep.subr.bf16.mxu0 %v4117
    %4248 = vmatpush1.bf16.msra.mxu0 %v4116
    %4249 = vmatprep.subr.bf16.mxu0 %v4115
    %4250 = vmatpush1.bf16.msra.mxu0 %v4114
    %4251 = vmatprep.subr.bf16.mxu0 %v4113
    %4252 = vmatpush1.bf16.msra.mxu0 %v4112
    %4253 = vmatprep.subr.bf16.mxu0 %v4111
    %4254 = vmatpush1.bf16.msra.mxu0 %v4110
    %4255 = vmatprep.subr.bf16.mxu0 %v4109
    %4256 = vmatpush1.bf16.msra.mxu0 %v4108
    %4257 = vmatprep.subr.bf16.mxu0 %v4107
    %4258 = vmatpush1.bf16.msra.mxu0 %v4106
    %4259 = vmatprep.subr.bf16.mxu0 %v4137
    %4260 = vmatpush2.bf16.msra.mxu0 %v4136
    %4261 = vmatprep.subr.bf16.mxu0 %v4135
    %4262 = vmatpush2.bf16.msra.mxu0 %v4134
    %4263 = vmatprep.subr.bf16.mxu0 %v4133
    %4264 = vmatpush2.bf16.msra.mxu0 %v4132
    %4265 = vmatprep.subr.bf16.mxu0 %v4131
    %4266 = vmatpush2.bf16.msra.mxu0 %v4130
    %4267 = vmatprep.subr.bf16.mxu0 %v4129
    %4268 = vmatpush2.bf16.msra.mxu0 %v4128
    %4269 = vmatprep.subr.bf16.mxu0 %v4127
    %4270 = vmatpush2.bf16.msra.mxu0 %v4126
    %4271 = vmatprep.subr.bf16.mxu0 %v4125
    %4272 = vmatpush2.bf16.msra.mxu0 %v4124
    %4273 = vmatprep.subr.bf16.mxu0 %v4123
    %4274 = vmatpush2.bf16.msra.mxu0 %v4122
    %4275 = vmatprep.mubr.bf16.mxu0 %v3870
    %4276 = vmatmul.mubr.bf16.gmra.mxu0 %v3869
    %v4277 = vpop.f32.mrf.mxu0
    %v4278 = vadd.f32 %v4237, %v4277
    %v4279 = vpop.f32.mrf.mxu0
    %v4280 = vadd.f32 %v4239, %v4279
    %v4281 = vpop.f32.mrf.mxu0
    %v4282 = vpop.f32.mrf.mxu0
    %4283 = vdwg.mxu0
    %v4284 = vmax.f32 %v4278, 0.0
    %v4285 = vmax.f32 %v4280, 0.0
    %v4287 = vlaneseq
    %v4288 = vshrl.u32 %v4287, 7
    %v4289 = vsub.s32 0, %v4288
    %v4290 = vrot.slane %v3866, %v4289
    %v4291 = vlaneseq
    %v4292 = vshrl.u32 %v4291, 7
    %v4293 = vsub.s32 1, %v4292
    %v4294 = vrot.slane %v3866, %v4293
    %v4299 = vunpack.c.l.b16 %v3861
    %v4300 = vunpack.c.h.b16 %v3861
    %v4301 = vunpack.c.l.b16 %v3862
    %v4302 = vunpack.c.h.b16 %v3862
    %v4303 = vpack.c.b16 %v4301, %v4299
    %v4304 = vpack.c.b16 %v4302, %v4300
    %4307 = vmatprep.subr.bf16.mxu0 0
    %4308 = vmatpush1.bf16.msra.mxu0 0
    %4309 = vmatprep.subr.bf16.mxu0 0
    %4310 = vmatpush1.bf16.msra.mxu0 0
    %4311 = vmatprep.subr.bf16.mxu0 0
    %4312 = vmatpush1.bf16.msra.mxu0 0
    %4313 = vmatprep.subr.bf16.mxu0 0
    %4314 = vmatpush1.bf16.msra.mxu0 0
    %4315 = vmatprep.subr.bf16.mxu0 0
    %4316 = vmatpush1.bf16.msra.mxu0 0
    %4317 = vmatprep.subr.bf16.mxu0 0
    %4318 = vmatpush1.bf16.msra.mxu0 0
    %4319 = vmatprep.subr.bf16.mxu0 0
    %4320 = vmatpush1.bf16.msra.mxu0 0
    %4321 = vmatprep.subr.bf16.mxu0 %v4304
    %4322 = vmatpush1.bf16.msra.mxu0 %v4303
    %4323 = vmatprep.subr.bf16.mxu0 0
    %4324 = vmatpush2.bf16.msra.mxu0 0
    %4325 = vmatprep.subr.bf16.mxu0 0
    %4326 = vmatpush2.bf16.msra.mxu0 0
    %4327 = vmatprep.subr.bf16.mxu0 0
    %4328 = vmatpush2.bf16.msra.mxu0 0
    %4329 = vmatprep.subr.bf16.mxu0 0
    %4330 = vmatpush2.bf16.msra.mxu0 0
    %4331 = vmatprep.subr.bf16.mxu0 0
    %4332 = vmatpush2.bf16.msra.mxu0 0
    %4333 = vmatprep.subr.bf16.mxu0 0
    %4334 = vmatpush2.bf16.msra.mxu0 0
    %4335 = vmatprep.subr.bf16.mxu0 0
    %4336 = vmatpush2.bf16.msra.mxu0 0
    %4337 = vmatprep.subr.bf16.mxu0 0
    %4338 = vmatpush2.bf16.msra.mxu0 0
    %4339 = vmatprep.mubr.bf16.mxu0 0
    %4340 = vmatmul.mubr.bf16.gmra.mxu0 %v544
    %v4341 = vpop.f32.mrf.mxu0
    %v4342 = vadd.f32 %v4290, %v4341
    %v4343 = vpop.f32.mrf.mxu0
    %v4344 = vadd.f32 %v4294, %v4343
    %v4345 = vpop.f32.mrf.mxu0
    %v4346 = vadd.f32 %v4290, %v4345
    %v4347 = vpop.f32.mrf.mxu0
    %v4348 = vadd.f32 %v4294, %v4347
    %4349 = vdwg.mxu0
    %v4350 = vmax.f32 %v4342, 0.0
    %v4351 = vmax.f32 %v4344, 0.0
    %v4352 = vmax.f32 %v4346, 0.0
    %v4353 = vmax.f32 %v4348, 0.0
    %4354 = vmatprep.subr.mxu0 0.0
    %4355 = vmatpush1.msra.mxu0 0.0
    %4356 = vmatprep.subr.mxu0 0.0
    %4357 = vmatpush1.msra.mxu0 0.0
    %4358 = vmatprep.subr.mxu0 0.0
    %4359 = vmatpush1.msra.mxu0 0.0
    %4360 = vmatprep.subr.mxu0 0.0
    %4361 = vmatpush1.msra.mxu0 0.0
    %4362 = vmatprep.subr.mxu0 0.0
    %4363 = vmatpush1.msra.mxu0 0.0
    %4364 = vmatprep.subr.mxu0 0.0
    %4365 = vmatpush1.msra.mxu0 0.0
    %4366 = vmatprep.subr.mxu0 0.0
    %4367 = vmatpush1.msra.mxu0 0.0
    %4368 = vmatprep.subr.mxu0 0.0
    %4369 = vmatpush1.msra.mxu0 0.0
    %4370 = vmatprep.subr.mxu0 0.0
    %4371 = vmatpush1.msra.mxu0 0.0
    %4372 = vmatprep.subr.mxu0 0.0
    %4373 = vmatpush1.msra.mxu0 0.0
    %4374 = vmatprep.subr.mxu0 0.0
    %4375 = vmatpush1.msra.mxu0 0.0
    %4376 = vmatprep.subr.mxu0 0.0
    %4377 = vmatpush1.msra.mxu0 0.0
    %4378 = vmatprep.subr.mxu0 0.0
    %4379 = vmatpush1.msra.mxu0 0.0
    %4380 = vmatprep.subr.mxu0 0.0
    %4381 = vmatpush1.msra.mxu0 0.0
    %4382 = vmatprep.subr.mxu0 0.0
    %4383 = vmatpush1.msra.mxu0 0.0
    %4384 = vmatprep.subr.mxu0 %v4285
    %4385 = vmatpush1.msra.mxu0 %v4284
    %4386 = vmatprep.subr.mxu0 0.0
    %4387 = vmatpush2.msra.mxu0 0.0
    %4388 = vmatprep.subr.mxu0 0.0
    %4389 = vmatpush2.msra.mxu0 0.0
    %4390 = vmatprep.subr.mxu0 0.0
    %4391 = vmatpush2.msra.mxu0 0.0
    %4392 = vmatprep.subr.mxu0 0.0
    %4393 = vmatpush2.msra.mxu0 0.0
    %4394 = vmatprep.subr.mxu0 0.0
    %4395 = vmatpush2.msra.mxu0 0.0
    %4396 = vmatprep.subr.mxu0 0.0
    %4397 = vmatpush2.msra.mxu0 0.0
    %4398 = vmatprep.subr.mxu0 0.0
    %4399 = vmatpush2.msra.mxu0 0.0
    %4400 = vmatprep.subr.mxu0 0.0
    %4401 = vmatpush2.msra.mxu0 0.0
    %4402 = vmatprep.subr.mxu0 0.0
    %4403 = vmatpush2.msra.mxu0 0.0
    %4404 = vmatprep.subr.mxu0 0.0
    %4405 = vmatpush2.msra.mxu0 0.0
    %4406 = vmatprep.subr.mxu0 0.0
    %4407 = vmatpush2.msra.mxu0 0.0
    %4408 = vmatprep.subr.mxu0 0.0
    %4409 = vmatpush2.msra.mxu0 0.0
    %4410 = vmatprep.subr.mxu0 0.0
    %4411 = vmatpush2.msra.mxu0 0.0
    %4412 = vmatprep.subr.mxu0 0.0
    %4413 = vmatpush2.msra.mxu0 0.0
    %4414 = vmatprep.subr.mxu0 0.0
    %4415 = vmatpush2.msra.mxu0 0.0
    %4416 = vmatprep.subr.mxu0 0.0
    %4417 = vmatpush2.msra.mxu0 0.0
    %4418 = vmatprep.mubr.f32.mxu0 0.0
    %4419 = vmatmul.mubr.f32.gmra.mxu0 %v590
    %v4420 = vpop.f32.mrf.mxu0
    %v4421 = vadd.f32 0.0, %v4420
    %v4422 = vpop.f32.mrf.mxu0
    %v4423 = vadd.f32 0.0, %v4422
    %4424 = vmatprep.mubr.f32.mxu0 0.0
    %4425 = vmatmul.mubr.f32.gmra.mxu0 %v593
    %v4426 = vpop.f32.mrf.mxu0
    %v4427 = vadd.f32 0.0, %v4426
    %v4428 = vpop.f32.mrf.mxu0
    %v4429 = vadd.f32 0.0, %v4428
    %4430 = vdwg.mxu0
    %v4431 = vmul.f32 %v4350, %v4421
    %v4432 = vmul.f32 %v4351, %v4423
    %v4433 = vmul.f32 %v4352, %v4427
    %v4434 = vmul.f32 %v4353, %v4429
    %v4435 = vmax.f32 %v4431, %v4433
    %v4436 = vmax.f32 %v4432, %v4434
    %v4437 = vadd.f32 %v4284, %v4435
    %v4438 = vadd.f32 %v4285, %v4436
    %s4439 = sshll.u32 %s1251, 4
    %4440 = dma.done %s71, %s4439
    %s4441 = scalar_lea.hbm %s3, 90624
    // Predicated region
    $region62: #{motion_fgnn_forward.1} parent=1 // pred_check
      _
    $region63: #{motion_fgnn_forward.1} parent=1 // pred_check_branch
      %4443 = sbr.rel target = $region65
    $region64: #{motion_fgnn_forward.1} parent=1 // pred_region
      %4444 = sst [smem:[#allocation10]] [#allocation31]
      %4445 = sst [smem:[#allocation11]] [#allocation30]
    $region65: #{motion_fgnn_forward.1} parent=1 // pred_fallthru
      _
    %4447 = shalt.err (0)
    %s4449 = sshll.u32 %s56, 4
    %s4450 = int_to_ptr.vmem [resolvable:$true] %s4449
    %4452 = dma.hbm_to_vmem [thread:$0]  %s4441, 4608, %s4450, %s57
    %v4453 = vld [vmem:[%s70] sm:$0xff]
    %v4454 = vld [vmem:[%s70 + $0x10] sm:$0xff]
    %v4455 = vld [vmem:[%s70 + $0x20] sm:$0xff]
    %v4456 = vld [vmem:[%s70 + $0x30] sm:$0xff]
    %v4457 = vld [vmem:[%s70 + $0x40] sm:$0xff]
    %v4458 = vld [vmem:[%s70 + $0x50] sm:$0xff]
    %v4459 = vld [vmem:[%s70 + $0x60] sm:$0xff]
    %v4460 = vld [vmem:[%s70 + $0x70] sm:$0xff]
    %v4461 = vld [vmem:[%s70 + $0x80] sm:$0xff]
    %v4462 = vld [vmem:[%s70 + $0x90] sm:$0xff]
    %v4463 = vld [vmem:[%s70 + $0xa0] sm:$0xff]
    %v4464 = vld [vmem:[%s70 + $0xb0] sm:$0xff]
    %v4465 = vld [vmem:[%s70 + $0xc0] sm:$0xff]
    %v4466 = vld [vmem:[%s70 + $0xd0] sm:$0xff]
    %v4467 = vld [vmem:[%s70 + $0xe0] sm:$0xff]
    %v4468 = vld [vmem:[%s70 + $0xf0] sm:$0xff]
    %v4469 = vld [vmem:[%s70 + $0x100] sm:$0xff]
    %v4470 = vld [vmem:[%s70 + $0x110] sm:$0xff]
    %v4471 = vld [vmem:[%s70 + $0x120] sm:$0xff]
    %v4472 = vld [vmem:[%s70 + $0x130] sm:$0xff]
    %v4473 = vld [vmem:[%s70 + $0x140] sm:$0xff]
    %v4474 = vld [vmem:[%s70 + $0x150] sm:$0xff]
    %v4475 = vld [vmem:[%s70 + $0x160] sm:$0xff]
    %v4476 = vld [vmem:[%s70 + $0x170] sm:$0xff]
    %v4477 = vld [vmem:[%s70 + $0x180] sm:$0xff]
    %v4478 = vld [vmem:[%s70 + $0x190] sm:$0xff]
    %v4479 = vld [vmem:[%s70 + $0x1a0] sm:$0xff]
    %v4480 = vld [vmem:[%s70 + $0x1b0] sm:$0xff]
    %v4481 = vld [vmem:[%s70 + $0x1c0] sm:$0xff]
    %v4482 = vld [vmem:[%s70 + $0x1d0] sm:$0xff]
    %v4483 = vld [vmem:[%s70 + $0x1e0] sm:$0xff]
    %v4484 = vld [vmem:[%s70 + $0x1f0] sm:$0xff]
    %v4485 = vld [vmem:[%s70 + $0x200] sm:$0xff]
    %v4486 = vld [vmem:[%s70 + $0x210] sm:$0xff]
    %s4487 = scalar_lea.vmem [#allocation6], 39
    %v4488 = vld [vmem:[%s4487] ss:$8 sm:$0x3]
    %s4489 = scalar_lea.vmem [#allocation6], 64
    %v4490 = vld [vmem:[%s4489] ss:$8 sm:$0x3]
    %v4491 = vpack.c.bf16 %v4437, %v4437
    %v4492 = vpack.c.bf16 %v4438, %v4438
    %v4494 = vlaneseq
    %v4495 = vshrl.u32 %v4494, 7
    %v4496 = vsub.s32 0, %v4495
    %v4497 = vrot.slane %v4488, %v4496
    %v4498 = vlaneseq
    %v4499 = vshrl.u32 %v4498, 7
    %v4500 = vsub.s32 1, %v4499
    %v4501 = vrot.slane %v4488, %v4500
    %v4536 = vunpack.c.l.b16 %v4453
    %v4537 = vunpack.c.h.b16 %v4453
    %v4538 = vunpack.c.l.b16 %v4454
    %v4539 = vunpack.c.h.b16 %v4454
    %v4540 = vunpack.c.l.b16 %v4455
    %v4541 = vunpack.c.h.b16 %v4455
    %v4542 = vunpack.c.l.b16 %v4456
    %v4543 = vunpack.c.h.b16 %v4456
    %v4544 = vunpack.c.l.b16 %v4457
    %v4545 = vunpack.c.h.b16 %v4457
    %v4546 = vunpack.c.l.b16 %v4458
    %v4547 = vunpack.c.h.b16 %v4458
    %v4548 = vunpack.c.l.b16 %v4459
    %v4549 = vunpack.c.h.b16 %v4459
    %v4550 = vunpack.c.l.b16 %v4460
    %v4551 = vunpack.c.h.b16 %v4460
    %v4552 = vunpack.c.l.b16 %v4461
    %v4553 = vunpack.c.h.b16 %v4461
    %v4554 = vunpack.c.l.b16 %v4462
    %v4555 = vunpack.c.h.b16 %v4462
    %v4556 = vunpack.c.l.b16 %v4463
    %v4557 = vunpack.c.h.b16 %v4463
    %v4558 = vunpack.c.l.b16 %v4464
    %v4559 = vunpack.c.h.b16 %v4464
    %v4560 = vunpack.c.l.b16 %v4465
    %v4561 = vunpack.c.h.b16 %v4465
    %v4562 = vunpack.c.l.b16 %v4466
    %v4563 = vunpack.c.h.b16 %v4466
    %v4564 = vunpack.c.l.b16 %v4467
    %v4565 = vunpack.c.h.b16 %v4467
    %v4566 = vunpack.c.l.b16 %v4468
    %v4567 = vunpack.c.h.b16 %v4468
    %v4568 = vunpack.c.l.b16 %v4469
    %v4569 = vunpack.c.h.b16 %v4469
    %v4570 = vunpack.c.l.b16 %v4470
    %v4571 = vunpack.c.h.b16 %v4470
    %v4572 = vunpack.c.l.b16 %v4471
    %v4573 = vunpack.c.h.b16 %v4471
    %v4574 = vunpack.c.l.b16 %v4472
    %v4575 = vunpack.c.h.b16 %v4472
    %v4576 = vunpack.c.l.b16 %v4473
    %v4577 = vunpack.c.h.b16 %v4473
    %v4578 = vunpack.c.l.b16 %v4474
    %v4579 = vunpack.c.h.b16 %v4474
    %v4580 = vunpack.c.l.b16 %v4475
    %v4581 = vunpack.c.h.b16 %v4475
    %v4582 = vunpack.c.l.b16 %v4476
    %v4583 = vunpack.c.h.b16 %v4476
    %v4584 = vunpack.c.l.b16 %v4477
    %v4585 = vunpack.c.h.b16 %v4477
    %v4586 = vunpack.c.l.b16 %v4478
    %v4587 = vunpack.c.h.b16 %v4478
    %v4588 = vunpack.c.l.b16 %v4479
    %v4589 = vunpack.c.h.b16 %v4479
    %v4590 = vunpack.c.l.b16 %v4480
    %v4591 = vunpack.c.h.b16 %v4480
    %v4592 = vunpack.c.l.b16 %v4481
    %v4593 = vunpack.c.h.b16 %v4481
    %v4594 = vunpack.c.l.b16 %v4482
    %v4595 = vunpack.c.h.b16 %v4482
    %v4596 = vunpack.c.l.b16 %v4483
    %v4597 = vunpack.c.h.b16 %v4483
    %v4598 = vunpack.c.l.b16 %v4484
    %v4599 = vunpack.c.h.b16 %v4484
    %v4600 = vpack.c.b16 %v4538, %v4536
    %v4601 = vpack.c.b16 %v4539, %v4537
    %v4602 = vpack.c.b16 %v4542, %v4540
    %v4603 = vpack.c.b16 %v4543, %v4541
    %v4604 = vpack.c.b16 %v4546, %v4544
    %v4605 = vpack.c.b16 %v4547, %v4545
    %v4606 = vpack.c.b16 %v4550, %v4548
    %v4607 = vpack.c.b16 %v4551, %v4549
    %v4608 = vpack.c.b16 %v4554, %v4552
    %v4609 = vpack.c.b16 %v4555, %v4553
    %v4610 = vpack.c.b16 %v4558, %v4556
    %v4611 = vpack.c.b16 %v4559, %v4557
    %v4612 = vpack.c.b16 %v4562, %v4560
    %v4613 = vpack.c.b16 %v4563, %v4561
    %v4614 = vpack.c.b16 %v4566, %v4564
    %v4615 = vpack.c.b16 %v4567, %v4565
    %v4616 = vpack.c.b16 %v4570, %v4568
    %v4617 = vpack.c.b16 %v4571, %v4569
    %v4618 = vpack.c.b16 %v4574, %v4572
    %v4619 = vpack.c.b16 %v4575, %v4573
    %v4620 = vpack.c.b16 %v4578, %v4576
    %v4621 = vpack.c.b16 %v4579, %v4577
    %v4622 = vpack.c.b16 %v4582, %v4580
    %v4623 = vpack.c.b16 %v4583, %v4581
    %v4624 = vpack.c.b16 %v4586, %v4584
    %v4625 = vpack.c.b16 %v4587, %v4585
    %v4626 = vpack.c.b16 %v4590, %v4588
    %v4627 = vpack.c.b16 %v4591, %v4589
    %v4628 = vpack.c.b16 %v4594, %v4592
    %v4629 = vpack.c.b16 %v4595, %v4593
    %v4630 = vpack.c.b16 %v4598, %v4596
    %v4631 = vpack.c.b16 %v4599, %v4597
    %4664 = vmatprep.subr.bf16.mxu0 %v4615
    %4665 = vmatpush1.bf16.msra.mxu0 %v4614
    %4666 = vmatprep.subr.bf16.mxu0 %v4613
    %4667 = vmatpush1.bf16.msra.mxu0 %v4612
    %4668 = vmatprep.subr.bf16.mxu0 %v4611
    %4669 = vmatpush1.bf16.msra.mxu0 %v4610
    %4670 = vmatprep.subr.bf16.mxu0 %v4609
    %4671 = vmatpush1.bf16.msra.mxu0 %v4608
    %4672 = vmatprep.subr.bf16.mxu0 %v4607
    %4673 = vmatpush1.bf16.msra.mxu0 %v4606
    %4674 = vmatprep.subr.bf16.mxu0 %v4605
    %4675 = vmatpush1.bf16.msra.mxu0 %v4604
    %4676 = vmatprep.subr.bf16.mxu0 %v4603
    %4677 = vmatpush1.bf16.msra.mxu0 %v4602
    %4678 = vmatprep.subr.bf16.mxu0 %v4601
    %4679 = vmatpush1.bf16.msra.mxu0 %v4600
    %4680 = vmatprep.subr.bf16.mxu0 %v4631
    %4681 = vmatpush2.bf16.msra.mxu0 %v4630
    %4682 = vmatprep.subr.bf16.mxu0 %v4629
    %4683 = vmatpush2.bf16.msra.mxu0 %v4628
    %4684 = vmatprep.subr.bf16.mxu0 %v4627
    %4685 = vmatpush2.bf16.msra.mxu0 %v4626
    %4686 = vmatprep.subr.bf16.mxu0 %v4625
    %4687 = vmatpush2.bf16.msra.mxu0 %v4624
    %4688 = vmatprep.subr.bf16.mxu0 %v4623
    %4689 = vmatpush2.bf16.msra.mxu0 %v4622
    %4690 = vmatprep.subr.bf16.mxu0 %v4621
    %4691 = vmatpush2.bf16.msra.mxu0 %v4620
    %4692 = vmatprep.subr.bf16.mxu0 %v4619
    %4693 = vmatpush2.bf16.msra.mxu0 %v4618
    %4694 = vmatprep.subr.bf16.mxu0 %v4617
    %4695 = vmatpush2.bf16.msra.mxu0 %v4616
    %4696 = vmatprep.mubr.bf16.mxu0 %v4492
    %4697 = vmatmul.mubr.bf16.gmra.mxu0 %v4491
    %v4698 = vpop.f32.mrf.mxu0
    %v4699 = vadd.f32 %v4497, %v4698
    %v4700 = vpop.f32.mrf.mxu0
    %v4701 = vadd.f32 %v4501, %v4700
    %v4702 = vpop.f32.mrf.mxu0
    %v4703 = vpop.f32.mrf.mxu0
    %4704 = vdwg.mxu0
    %v4705 = vmax.f32 %v4699, 0.0
    %v4706 = vmax.f32 %v4701, 0.0
    %v4708 = vlaneseq
    %v4709 = vshrl.u32 %v4708, 7
    %v4710 = vsub.s32 0, %v4709
    %v4711 = vrot.slane %v4490, %v4710
    %v4712 = vlaneseq
    %v4713 = vshrl.u32 %v4712, 7
    %v4714 = vsub.s32 1, %v4713
    %v4715 = vrot.slane %v4490, %v4714
    %v4720 = vunpack.c.l.b16 %v4485
    %v4721 = vunpack.c.h.b16 %v4485
    %v4722 = vunpack.c.l.b16 %v4486
    %v4723 = vunpack.c.h.b16 %v4486
    %v4724 = vpack.c.b16 %v4722, %v4720
    %v4725 = vpack.c.b16 %v4723, %v4721
    %4728 = vmatprep.subr.bf16.mxu0 0
    %4729 = vmatpush1.bf16.msra.mxu0 0
    %4730 = vmatprep.subr.bf16.mxu0 0
    %4731 = vmatpush1.bf16.msra.mxu0 0
    %4732 = vmatprep.subr.bf16.mxu0 0
    %4733 = vmatpush1.bf16.msra.mxu0 0
    %4734 = vmatprep.subr.bf16.mxu0 0
    %4735 = vmatpush1.bf16.msra.mxu0 0
    %4736 = vmatprep.subr.bf16.mxu0 0
    %4737 = vmatpush1.bf16.msra.mxu0 0
    %4738 = vmatprep.subr.bf16.mxu0 0
    %4739 = vmatpush1.bf16.msra.mxu0 0
    %4740 = vmatprep.subr.bf16.mxu0 0
    %4741 = vmatpush1.bf16.msra.mxu0 0
    %4742 = vmatprep.subr.bf16.mxu0 %v4725
    %4743 = vmatpush1.bf16.msra.mxu0 %v4724
    %4744 = vmatprep.subr.bf16.mxu0 0
    %4745 = vmatpush2.bf16.msra.mxu0 0
    %4746 = vmatprep.subr.bf16.mxu0 0
    %4747 = vmatpush2.bf16.msra.mxu0 0
    %4748 = vmatprep.subr.bf16.mxu0 0
    %4749 = vmatpush2.bf16.msra.mxu0 0
    %4750 = vmatprep.subr.bf16.mxu0 0
    %4751 = vmatpush2.bf16.msra.mxu0 0
    %4752 = vmatprep.subr.bf16.mxu0 0
    %4753 = vmatpush2.bf16.msra.mxu0 0
    %4754 = vmatprep.subr.bf16.mxu0 0
    %4755 = vmatpush2.bf16.msra.mxu0 0
    %4756 = vmatprep.subr.bf16.mxu0 0
    %4757 = vmatpush2.bf16.msra.mxu0 0
    %4758 = vmatprep.subr.bf16.mxu0 0
    %4759 = vmatpush2.bf16.msra.mxu0 0
    %4760 = vmatprep.mubr.bf16.mxu0 0
    %4761 = vmatmul.mubr.bf16.gmra.mxu0 %v544
    %v4762 = vpop.f32.mrf.mxu0
    %v4763 = vadd.f32 %v4711, %v4762
    %v4764 = vpop.f32.mrf.mxu0
    %v4765 = vadd.f32 %v4715, %v4764
    %v4766 = vpop.f32.mrf.mxu0
    %v4767 = vadd.f32 %v4711, %v4766
    %v4768 = vpop.f32.mrf.mxu0
    %v4769 = vadd.f32 %v4715, %v4768
    %4770 = vdwg.mxu0
    %v4771 = vmax.f32 %v4763, 0.0
    %v4772 = vmax.f32 %v4765, 0.0
    %v4773 = vmax.f32 %v4767, 0.0
    %v4774 = vmax.f32 %v4769, 0.0
    %4775 = vmatprep.subr.mxu0 0.0
    %4776 = vmatpush1.msra.mxu0 0.0
    %4777 = vmatprep.subr.mxu0 0.0
    %4778 = vmatpush1.msra.mxu0 0.0
    %4779 = vmatprep.subr.mxu0 0.0
    %4780 = vmatpush1.msra.mxu0 0.0
    %4781 = vmatprep.subr.mxu0 0.0
    %4782 = vmatpush1.msra.mxu0 0.0
    %4783 = vmatprep.subr.mxu0 0.0
    %4784 = vmatpush1.msra.mxu0 0.0
    %4785 = vmatprep.subr.mxu0 0.0
    %4786 = vmatpush1.msra.mxu0 0.0
    %4787 = vmatprep.subr.mxu0 0.0
    %4788 = vmatpush1.msra.mxu0 0.0
    %4789 = vmatprep.subr.mxu0 0.0
    %4790 = vmatpush1.msra.mxu0 0.0
    %4791 = vmatprep.subr.mxu0 0.0
    %4792 = vmatpush1.msra.mxu0 0.0
    %4793 = vmatprep.subr.mxu0 0.0
    %4794 = vmatpush1.msra.mxu0 0.0
    %4795 = vmatprep.subr.mxu0 0.0
    %4796 = vmatpush1.msra.mxu0 0.0
    %4797 = vmatprep.subr.mxu0 0.0
    %4798 = vmatpush1.msra.mxu0 0.0
    %4799 = vmatprep.subr.mxu0 0.0
    %4800 = vmatpush1.msra.mxu0 0.0
    %4801 = vmatprep.subr.mxu0 0.0
    %4802 = vmatpush1.msra.mxu0 0.0
    %4803 = vmatprep.subr.mxu0 0.0
    %4804 = vmatpush1.msra.mxu0 0.0
    %4805 = vmatprep.subr.mxu0 %v4706
    %4806 = vmatpush1.msra.mxu0 %v4705
    %4807 = vmatprep.subr.mxu0 0.0
    %4808 = vmatpush2.msra.mxu0 0.0
    %4809 = vmatprep.subr.mxu0 0.0
    %4810 = vmatpush2.msra.mxu0 0.0
    %4811 = vmatprep.subr.mxu0 0.0
    %4812 = vmatpush2.msra.mxu0 0.0
    %4813 = vmatprep.subr.mxu0 0.0
    %4814 = vmatpush2.msra.mxu0 0.0
    %4815 = vmatprep.subr.mxu0 0.0
    %4816 = vmatpush2.msra.mxu0 0.0
    %4817 = vmatprep.subr.mxu0 0.0
    %4818 = vmatpush2.msra.mxu0 0.0
    %4819 = vmatprep.subr.mxu0 0.0
    %4820 = vmatpush2.msra.mxu0 0.0
    %4821 = vmatprep.subr.mxu0 0.0
    %4822 = vmatpush2.msra.mxu0 0.0
    %4823 = vmatprep.subr.mxu0 0.0
    %4824 = vmatpush2.msra.mxu0 0.0
    %4825 = vmatprep.subr.mxu0 0.0
    %4826 = vmatpush2.msra.mxu0 0.0
    %4827 = vmatprep.subr.mxu0 0.0
    %4828 = vmatpush2.msra.mxu0 0.0
    %4829 = vmatprep.subr.mxu0 0.0
    %4830 = vmatpush2.msra.mxu0 0.0
    %4831 = vmatprep.subr.mxu0 0.0
    %4832 = vmatpush2.msra.mxu0 0.0
    %4833 = vmatprep.subr.mxu0 0.0
    %4834 = vmatpush2.msra.mxu0 0.0
    %4835 = vmatprep.subr.mxu0 0.0
    %4836 = vmatpush2.msra.mxu0 0.0
    %4837 = vmatprep.subr.mxu0 0.0
    %4838 = vmatpush2.msra.mxu0 0.0
    %4839 = vmatprep.mubr.f32.mxu0 0.0
    %4840 = vmatmul.mubr.f32.gmra.mxu0 %v590
    %v4841 = vpop.f32.mrf.mxu0
    %v4842 = vadd.f32 0.0, %v4841
    %v4843 = vpop.f32.mrf.mxu0
    %v4844 = vadd.f32 0.0, %v4843
    %4845 = vmatprep.mubr.f32.mxu0 0.0
    %4846 = vmatmul.mubr.f32.gmra.mxu0 %v593
    %v4847 = vpop.f32.mrf.mxu0
    %v4848 = vadd.f32 0.0, %v4847
    %v4849 = vpop.f32.mrf.mxu0
    %v4850 = vadd.f32 0.0, %v4849
    %4851 = vdwg.mxu0
    %v4852 = vmul.f32 %v4771, %v4842
    %v4853 = vmul.f32 %v4772, %v4844
    %v4854 = vmul.f32 %v4773, %v4848
    %v4855 = vmul.f32 %v4774, %v4850
    %v4856 = vmax.f32 %v4852, %v4854
    %v4857 = vmax.f32 %v4853, %v4855
    %v4858 = vadd.f32 %v4705, %v4856
    %v4859 = vadd.f32 %v4706, %v4857
    %s4860 = sshll.u32 %s1251, 4
    %4861 = dma.done [#allocation3], %s4860
    %s4862 = scalar_lea.hbm %s3, 95232
    // Predicated region
    $region66: #{motion_fgnn_forward.1} parent=1 // pred_check
      _
    $region67: #{motion_fgnn_forward.1} parent=1 // pred_check_branch
      %4864 = sbr.rel target = $region69
    $region68: #{motion_fgnn_forward.1} parent=1 // pred_region
      %4865 = sst [smem:[#allocation10]] [#allocation33]
      %4866 = sst [smem:[#allocation11]] [#allocation32]
    $region69: #{motion_fgnn_forward.1} parent=1 // pred_fallthru
      _
    %4868 = shalt.err (0)
    %s4870 = sshll.u32 %s70, 4
    %s4871 = int_to_ptr.vmem [resolvable:$true] %s4870
    %4873 = dma.hbm_to_vmem [thread:$0]  %s4862, 4608, %s4871, %s71
    %v4874 = vld [vmem:[#allocation2] sm:$0xf]
    %v4875 = vld [vmem:[#allocation2 + $0x10] sm:$0xf]
    %v4876 = vld [vmem:[#allocation2 + $0x20] sm:$0xf]
    %v4877 = vld [vmem:[#allocation2 + $0x30] sm:$0xf]
    %v4878 = vld [vmem:[#allocation2 + $0x40] sm:$0xf]
    %v4879 = vld [vmem:[#allocation2 + $0x50] sm:$0xf]
    %v4880 = vld [vmem:[#allocation2 + $0x60] sm:$0xf]
    %v4881 = vld [vmem:[#allocation2 + $0x70] sm:$0xf]
    %v4882 = vld [vmem:[#allocation2 + $0x80] sm:$0xf]
    %v4883 = vld [vmem:[#allocation2 + $0x90] sm:$0xf]
    %v4884 = vld [vmem:[#allocation2 + $0xa0] sm:$0xf]
    %v4885 = vld [vmem:[#allocation2 + $0xb0] sm:$0xf]
    %v4886 = vld [vmem:[#allocation2 + $0xc0] sm:$0xf]
    %v4887 = vld [vmem:[#allocation2 + $0xd0] sm:$0xf]
    %v4888 = vld [vmem:[#allocation2 + $0xe0] sm:$0xf]
    %v4889 = vld [vmem:[#allocation2 + $0xf0] sm:$0xf]
    %v4890 = vld [vmem:[#allocation2 + $0x100] sm:$0xf]
    %v4891 = vld [vmem:[#allocation2 + $0x110] sm:$0xf]
    %v4892 = vld [vmem:[#allocation2 + $0x120] sm:$0xf]
    %v4893 = vld [vmem:[#allocation2 + $0x130] sm:$0xf]
    %v4894 = vld [vmem:[#allocation2 + $0x140] sm:$0xf]
    %v4895 = vld [vmem:[#allocation2 + $0x150] sm:$0xf]
    %v4896 = vld [vmem:[#allocation2 + $0x160] sm:$0xf]
    %v4897 = vld [vmem:[#allocation2 + $0x170] sm:$0xf]
    %v4898 = vld [vmem:[#allocation2 + $0x180] sm:$0xf]
    %v4899 = vld [vmem:[#allocation2 + $0x190] sm:$0xf]
    %v4900 = vld [vmem:[#allocation2 + $0x1a0] sm:$0xf]
    %v4901 = vld [vmem:[#allocation2 + $0x1b0] sm:$0xf]
    %v4902 = vld [vmem:[#allocation2 + $0x1c0] sm:$0xf]
    %v4903 = vld [vmem:[#allocation2 + $0x1d0] sm:$0xf]
    %v4904 = vld [vmem:[#allocation2 + $0x1e0] sm:$0xf]
    %v4905 = vld [vmem:[#allocation2 + $0x1f0] sm:$0xf]
    %v4906 = vld [vmem:[#allocation2 + $0x200] sm:$0xf]
    %v4907 = vld [vmem:[#allocation2 + $0x210] sm:$0xf]
    %v4908 = vld [vmem:[#allocation6 + $0x41] ss:$0 sm:$0xff]
    %v4909 = vld [vmem:[#allocation6 + $0x42] ss:$0 sm:$0xff]
    %v4910 = vpack.c.bf16 %v4858, %v4858
    %v4911 = vpack.c.bf16 %v4859, %v4859
    %v4944 = vunpack.c.l.b16 %v4874
    %v4945 = vunpack.c.l.b16 %v4875
    %v4946 = vunpack.c.l.b16 %v4876
    %v4947 = vunpack.c.l.b16 %v4877
    %v4948 = vunpack.c.l.b16 %v4878
    %v4949 = vunpack.c.l.b16 %v4879
    %v4950 = vunpack.c.l.b16 %v4880
    %v4951 = vunpack.c.l.b16 %v4881
    %v4952 = vunpack.c.l.b16 %v4882
    %v4953 = vunpack.c.l.b16 %v4883
    %v4954 = vunpack.c.l.b16 %v4884
    %v4955 = vunpack.c.l.b16 %v4885
    %v4956 = vunpack.c.l.b16 %v4886
    %v4957 = vunpack.c.l.b16 %v4887
    %v4958 = vunpack.c.l.b16 %v4888
    %v4959 = vunpack.c.l.b16 %v4889
    %v4960 = vunpack.c.l.b16 %v4890
    %v4961 = vunpack.c.l.b16 %v4891
    %v4962 = vunpack.c.l.b16 %v4892
    %v4963 = vunpack.c.l.b16 %v4893
    %v4964 = vunpack.c.l.b16 %v4894
    %v4965 = vunpack.c.l.b16 %v4895
    %v4966 = vunpack.c.l.b16 %v4896
    %v4967 = vunpack.c.l.b16 %v4897
    %v4968 = vunpack.c.l.b16 %v4898
    %v4969 = vunpack.c.l.b16 %v4899
    %v4970 = vunpack.c.l.b16 %v4900
    %v4971 = vunpack.c.l.b16 %v4901
    %v4972 = vunpack.c.l.b16 %v4902
    %v4973 = vunpack.c.l.b16 %v4903
    %v4974 = vunpack.c.l.b16 %v4904
    %v4975 = vunpack.c.l.b16 %v4905
    %v4976 = vpack.c.b16 %v4945, %v4944
    %v4977 = vpack.c.b16 %v4947, %v4946
    %v4978 = vpack.c.b16 %v4949, %v4948
    %v4979 = vpack.c.b16 %v4951, %v4950
    %v4980 = vpack.c.b16 %v4953, %v4952
    %v4981 = vpack.c.b16 %v4955, %v4954
    %v4982 = vpack.c.b16 %v4957, %v4956
    %v4983 = vpack.c.b16 %v4959, %v4958
    %v4984 = vpack.c.b16 %v4961, %v4960
    %v4985 = vpack.c.b16 %v4963, %v4962
    %v4986 = vpack.c.b16 %v4965, %v4964
    %v4987 = vpack.c.b16 %v4967, %v4966
    %v4988 = vpack.c.b16 %v4969, %v4968
    %v4989 = vpack.c.b16 %v4971, %v4970
    %v4990 = vpack.c.b16 %v4973, %v4972
    %v4991 = vpack.c.b16 %v4975, %v4974
    %5008 = vmatprep.subr.bf16.mxu0 0
    %5009 = vmatpush1.bf16.msra.mxu0 %v4983
    %5010 = vmatprep.subr.bf16.mxu0 0
    %5011 = vmatpush1.bf16.msra.mxu0 %v4982
    %5012 = vmatprep.subr.bf16.mxu0 0
    %5013 = vmatpush1.bf16.msra.mxu0 %v4981
    %5014 = vmatprep.subr.bf16.mxu0 0
    %5015 = vmatpush1.bf16.msra.mxu0 %v4980
    %5016 = vmatprep.subr.bf16.mxu0 0
    %5017 = vmatpush1.bf16.msra.mxu0 %v4979
    %5018 = vmatprep.subr.bf16.mxu0 0
    %5019 = vmatpush1.bf16.msra.mxu0 %v4978
    %5020 = vmatprep.subr.bf16.mxu0 0
    %5021 = vmatpush1.bf16.msra.mxu0 %v4977
    %5022 = vmatprep.subr.bf16.mxu0 0
    %5023 = vmatpush1.bf16.msra.mxu0 %v4976
    %5024 = vmatprep.subr.bf16.mxu0 0
    %5025 = vmatpush2.bf16.msra.mxu0 %v4991
    %5026 = vmatprep.subr.bf16.mxu0 0
    %5027 = vmatpush2.bf16.msra.mxu0 %v4990
    %5028 = vmatprep.subr.bf16.mxu0 0
    %5029 = vmatpush2.bf16.msra.mxu0 %v4989
    %5030 = vmatprep.subr.bf16.mxu0 0
    %5031 = vmatpush2.bf16.msra.mxu0 %v4988
    %5032 = vmatprep.subr.bf16.mxu0 0
    %5033 = vmatpush2.bf16.msra.mxu0 %v4987
    %5034 = vmatprep.subr.bf16.mxu0 0
    %5035 = vmatpush2.bf16.msra.mxu0 %v4986
    %5036 = vmatprep.subr.bf16.mxu0 0
    %5037 = vmatpush2.bf16.msra.mxu0 %v4985
    %5038 = vmatprep.subr.bf16.mxu0 0
    %5039 = vmatpush2.bf16.msra.mxu0 %v4984
    %5040 = vmatprep.mubr.bf16.mxu0 %v4911
    %5041 = vmatmul.mubr.bf16.gmra.mxu0 %v4910
    %v5042 = vpop.f32.mrf.mxu0
    %v5043 = vadd.f32 %v4908, %v5042
    %v5044 = vpop.f32.mrf.mxu0
    %v5045 = vpop.f32.mrf.mxu0
    %v5046 = vpop.f32.mrf.mxu0
    %5047 = vdwg.mxu0
    %v5048 = vmax.f32 %v5043, 0.0
    %v5051 = vunpack.c.l.b16 %v4906
    %v5052 = vunpack.c.l.b16 %v4907
    %v5053 = vpack.c.b16 %v5052, %v5051
    %5055 = vmatprep.subr.bf16.mxu0 0
    %5056 = vmatpush1.bf16.msra.mxu0 0
    %5057 = vmatprep.subr.bf16.mxu0 0
    %5058 = vmatpush1.bf16.msra.mxu0 0
    %5059 = vmatprep.subr.bf16.mxu0 0
    %5060 = vmatpush1.bf16.msra.mxu0 0
    %5061 = vmatprep.subr.bf16.mxu0 0
    %5062 = vmatpush1.bf16.msra.mxu0 0
    %5063 = vmatprep.subr.bf16.mxu0 0
    %5064 = vmatpush1.bf16.msra.mxu0 0
    %5065 = vmatprep.subr.bf16.mxu0 0
    %5066 = vmatpush1.bf16.msra.mxu0 0
    %5067 = vmatprep.subr.bf16.mxu0 0
    %5068 = vmatpush1.bf16.msra.mxu0 0
    %5069 = vmatprep.subr.bf16.mxu0 0
    %5070 = vmatpush1.bf16.msra.mxu0 %v5053
    %5071 = vmatprep.subr.bf16.mxu0 0
    %5072 = vmatpush2.bf16.msra.mxu0 0
    %5073 = vmatprep.subr.bf16.mxu0 0
    %5074 = vmatpush2.bf16.msra.mxu0 0
    %5075 = vmatprep.subr.bf16.mxu0 0
    %5076 = vmatpush2.bf16.msra.mxu0 0
    %5077 = vmatprep.subr.bf16.mxu0 0
    %5078 = vmatpush2.bf16.msra.mxu0 0
    %5079 = vmatprep.subr.bf16.mxu0 0
    %5080 = vmatpush2.bf16.msra.mxu0 0
    %5081 = vmatprep.subr.bf16.mxu0 0
    %5082 = vmatpush2.bf16.msra.mxu0 0
    %5083 = vmatprep.subr.bf16.mxu0 0
    %5084 = vmatpush2.bf16.msra.mxu0 0
    %5085 = vmatprep.subr.bf16.mxu0 0
    %5086 = vmatpush2.bf16.msra.mxu0 0
    %5087 = vmatprep.mubr.bf16.mxu0 0
    %5088 = vmatmul.mubr.bf16.gmra.mxu0 %v544
    %v5089 = vpop.f32.mrf.mxu0
    %v5090 = vadd.f32 %v4909, %v5089
    %v5091 = vpop.f32.mrf.mxu0
    %v5092 = vpop.f32.mrf.mxu0
    %v5093 = vadd.f32 %v4909, %v5092
    %v5094 = vpop.f32.mrf.mxu0
    %5095 = vdwg.mxu0
    %v5096 = vmax.f32 %v5090, 0.0
    %v5097 = vmax.f32 %v5093, 0.0
    %5098 = vmatprep.subr.mxu0 0.0
    %5099 = vmatpush1.msra.mxu0 0.0
    %5100 = vmatprep.subr.mxu0 0.0
    %5101 = vmatpush1.msra.mxu0 0.0
    %5102 = vmatprep.subr.mxu0 0.0
    %5103 = vmatpush1.msra.mxu0 0.0
    %5104 = vmatprep.subr.mxu0 0.0
    %5105 = vmatpush1.msra.mxu0 0.0
    %5106 = vmatprep.subr.mxu0 0.0
    %5107 = vmatpush1.msra.mxu0 0.0
    %5108 = vmatprep.subr.mxu0 0.0
    %5109 = vmatpush1.msra.mxu0 0.0
    %5110 = vmatprep.subr.mxu0 0.0
    %5111 = vmatpush1.msra.mxu0 0.0
    %5112 = vmatprep.subr.mxu0 0.0
    %5113 = vmatpush1.msra.mxu0 0.0
    %5114 = vmatprep.subr.mxu0 0.0
    %5115 = vmatpush1.msra.mxu0 0.0
    %5116 = vmatprep.subr.mxu0 0.0
    %5117 = vmatpush1.msra.mxu0 0.0
    %5118 = vmatprep.subr.mxu0 0.0
    %5119 = vmatpush1.msra.mxu0 0.0
    %5120 = vmatprep.subr.mxu0 0.0
    %5121 = vmatpush1.msra.mxu0 0.0
    %5122 = vmatprep.subr.mxu0 0.0
    %5123 = vmatpush1.msra.mxu0 0.0
    %5124 = vmatprep.subr.mxu0 0.0
    %5125 = vmatpush1.msra.mxu0 0.0
    %5126 = vmatprep.subr.mxu0 0.0
    %5127 = vmatpush1.msra.mxu0 0.0
    %5128 = vmatprep.subr.mxu0 0.0
    %5129 = vmatpush1.msra.mxu0 %v5048
    %5130 = vmatprep.subr.mxu0 0.0
    %5131 = vmatpush2.msra.mxu0 0.0
    %5132 = vmatprep.subr.mxu0 0.0
    %5133 = vmatpush2.msra.mxu0 0.0
    %5134 = vmatprep.subr.mxu0 0.0
    %5135 = vmatpush2.msra.mxu0 0.0
    %5136 = vmatprep.subr.mxu0 0.0
    %5137 = vmatpush2.msra.mxu0 0.0
    %5138 = vmatprep.subr.mxu0 0.0
    %5139 = vmatpush2.msra.mxu0 0.0
    %5140 = vmatprep.subr.mxu0 0.0
    %5141 = vmatpush2.msra.mxu0 0.0
    %5142 = vmatprep.subr.mxu0 0.0
    %5143 = vmatpush2.msra.mxu0 0.0
    %5144 = vmatprep.subr.mxu0 0.0
    %5145 = vmatpush2.msra.mxu0 0.0
    %5146 = vmatprep.subr.mxu0 0.0
    %5147 = vmatpush2.msra.mxu0 0.0
    %5148 = vmatprep.subr.mxu0 0.0
    %5149 = vmatpush2.msra.mxu0 0.0
    %5150 = vmatprep.subr.mxu0 0.0
    %5151 = vmatpush2.msra.mxu0 0.0
    %5152 = vmatprep.subr.mxu0 0.0
    %5153 = vmatpush2.msra.mxu0 0.0
    %5154 = vmatprep.subr.mxu0 0.0
    %5155 = vmatpush2.msra.mxu0 0.0
    %5156 = vmatprep.subr.mxu0 0.0
    %5157 = vmatpush2.msra.mxu0 0.0
    %5158 = vmatprep.subr.mxu0 0.0
    %5159 = vmatpush2.msra.mxu0 0.0
    %5160 = vmatprep.subr.mxu0 0.0
    %5161 = vmatpush2.msra.mxu0 0.0
    %5162 = vmatprep.mubr.f32.mxu0 0.0
    %5163 = vmatmul.mubr.f32.gmra.mxu0 %v590
    %v5164 = vpop.f32.mrf.mxu0
    %v5165 = vadd.f32 0.0, %v5164
    %v5166 = vpop.f32.mrf.mxu0
    %5167 = vmatprep.mubr.f32.mxu0 0.0
    %5168 = vmatmul.mubr.f32.gmra.mxu0 %v593
    %v5169 = vpop.f32.mrf.mxu0
    %v5170 = vadd.f32 0.0, %v5169
    %v5171 = vpop.f32.mrf.mxu0
    %5172 = vdwg.mxu0
    %v5173 = vmul.f32 %v5096, %v5165
    %v5174 = vmul.f32 %v5097, %v5170
    %v5175 = vmax.f32 %v5173, %v5174
    %v5176 = vadd.f32 %v5048, %v5175
    %s5177 = sshll.u32 %s411, 4
    %5178 = dma.done %s57, %s5177
    %v5179 = vld [vmem:[%s56] sm:$0xf]
    %v5180 = vld [vmem:[%s56 + $0x10] sm:$0xf]
    %v5181 = vld [vmem:[%s56 + $0x20] sm:$0xf]
    %v5182 = vld [vmem:[%s56 + $0x30] sm:$0xf]
    %v5183 = vld [vmem:[%s56 + $0x40] sm:$0xf]
    %v5184 = vld [vmem:[%s56 + $0x50] sm:$0xf]
    %v5185 = vld [vmem:[%s56 + $0x60] sm:$0xf]
    %v5186 = vld [vmem:[%s56 + $0x70] sm:$0xf]
    %v5187 = vld [vmem:[%s56 + $0x80] sm:$0xf]
    %v5188 = vld [vmem:[%s56 + $0x90] sm:$0xf]
    %v5189 = vld [vmem:[%s56 + $0xa0] sm:$0xf]
    %v5190 = vld [vmem:[%s56 + $0xb0] sm:$0xf]
    %v5191 = vld [vmem:[%s56 + $0xc0] sm:$0xf]
    %v5192 = vld [vmem:[%s56 + $0xd0] sm:$0xf]
    %v5193 = vld [vmem:[%s56 + $0xe0] sm:$0xf]
    %v5194 = vld [vmem:[%s56 + $0xf0] sm:$0xf]
    %v5195 = vld [vmem:[%s56 + $0x100] sm:$0xf]
    %v5196 = vld [vmem:[%s56 + $0x110] sm:$0xf]
    %v5197 = vld [vmem:[#allocation6 + $0x43] ss:$0 sm:$0xff]
    %v5198 = vld [vmem:[#allocation6 + $0x44] ss:$0 sm:$0xff]
    %v5199 = vpack.c.bf16 %v5176, %v5176
    %v5216 = vunpack.c.l.b16 %v5179
    %v5217 = vunpack.c.l.b16 %v5180
    %v5218 = vunpack.c.l.b16 %v5181
    %v5219 = vunpack.c.l.b16 %v5182
    %v5220 = vunpack.c.l.b16 %v5183
    %v5221 = vunpack.c.l.b16 %v5184
    %v5222 = vunpack.c.l.b16 %v5185
    %v5223 = vunpack.c.l.b16 %v5186
    %v5224 = vunpack.c.l.b16 %v5187
    %v5225 = vunpack.c.l.b16 %v5188
    %v5226 = vunpack.c.l.b16 %v5189
    %v5227 = vunpack.c.l.b16 %v5190
    %v5228 = vunpack.c.l.b16 %v5191
    %v5229 = vunpack.c.l.b16 %v5192
    %v5230 = vunpack.c.l.b16 %v5193
    %v5231 = vunpack.c.l.b16 %v5194
    %v5232 = vpack.c.b16 %v5217, %v5216
    %v5233 = vpack.c.b16 %v5219, %v5218
    %v5234 = vpack.c.b16 %v5221, %v5220
    %v5235 = vpack.c.b16 %v5223, %v5222
    %v5236 = vpack.c.b16 %v5225, %v5224
    %v5237 = vpack.c.b16 %v5227, %v5226
    %v5238 = vpack.c.b16 %v5229, %v5228
    %v5239 = vpack.c.b16 %v5231, %v5230
    %5248 = vmatprep.subr.bf16.mxu0 0
    %5249 = vmatpush1.bf16.msra.mxu0 %v5239
    %5250 = vmatprep.subr.bf16.mxu0 0
    %5251 = vmatpush1.bf16.msra.mxu0 %v5238
    %5252 = vmatprep.subr.bf16.mxu0 0
    %5253 = vmatpush1.bf16.msra.mxu0 %v5237
    %5254 = vmatprep.subr.bf16.mxu0 0
    %5255 = vmatpush1.bf16.msra.mxu0 %v5236
    %5256 = vmatprep.subr.bf16.mxu0 0
    %5257 = vmatpush1.bf16.msra.mxu0 %v5235
    %5258 = vmatprep.subr.bf16.mxu0 0
    %5259 = vmatpush1.bf16.msra.mxu0 %v5234
    %5260 = vmatprep.subr.bf16.mxu0 0
    %5261 = vmatpush1.bf16.msra.mxu0 %v5233
    %5262 = vmatprep.subr.bf16.mxu0 0
    %5263 = vmatpush1.bf16.msra.mxu0 %v5232
    %5264 = vmatprep.subr.bf16.mxu0 0
    %5265 = vmatpush2.bf16.msra.mxu0 0
    %5266 = vmatprep.subr.bf16.mxu0 0
    %5267 = vmatpush2.bf16.msra.mxu0 0
    %5268 = vmatprep.subr.bf16.mxu0 0
    %5269 = vmatpush2.bf16.msra.mxu0 0
    %5270 = vmatprep.subr.bf16.mxu0 0
    %5271 = vmatpush2.bf16.msra.mxu0 0
    %5272 = vmatprep.subr.bf16.mxu0 0
    %5273 = vmatpush2.bf16.msra.mxu0 0
    %5274 = vmatprep.subr.bf16.mxu0 0
    %5275 = vmatpush2.bf16.msra.mxu0 0
    %5276 = vmatprep.subr.bf16.mxu0 0
    %5277 = vmatpush2.bf16.msra.mxu0 0
    %5278 = vmatprep.subr.bf16.mxu0 0
    %5279 = vmatpush2.bf16.msra.mxu0 0
    %5280 = vmatprep.mubr.bf16.mxu0 0
    %5281 = vmatmul.mubr.bf16.gmra.mxu0 %v5199
    %v5282 = vpop.f32.mrf.mxu0
    %v5283 = vadd.f32 %v5197, %v5282
    %v5284 = vpop.f32.mrf.mxu0
    %v5285 = vpop.f32.mrf.mxu0
    %v5286 = vpop.f32.mrf.mxu0
    %5287 = vdwg.mxu0
    %v5288 = vmax.f32 %v5283, 0.0
    %v5291 = vunpack.c.l.b16 %v5195
    %v5292 = vunpack.c.l.b16 %v5196
    %v5293 = vpack.c.b16 %v5292, %v5291
    %5295 = vmatprep.subr.bf16.mxu0 0
    %5296 = vmatpush1.bf16.msra.mxu0 0
    %5297 = vmatprep.subr.bf16.mxu0 0
    %5298 = vmatpush1.bf16.msra.mxu0 0
    %5299 = vmatprep.subr.bf16.mxu0 0
    %5300 = vmatpush1.bf16.msra.mxu0 0
    %5301 = vmatprep.subr.bf16.mxu0 0
    %5302 = vmatpush1.bf16.msra.mxu0 0
    %5303 = vmatprep.subr.bf16.mxu0 0
    %5304 = vmatpush1.bf16.msra.mxu0 0
    %5305 = vmatprep.subr.bf16.mxu0 0
    %5306 = vmatpush1.bf16.msra.mxu0 0
    %5307 = vmatprep.subr.bf16.mxu0 0
    %5308 = vmatpush1.bf16.msra.mxu0 0
    %5309 = vmatprep.subr.bf16.mxu0 0
    %5310 = vmatpush1.bf16.msra.mxu0 %v5293
    %5311 = vmatprep.subr.bf16.mxu0 0
    %5312 = vmatpush2.bf16.msra.mxu0 0
    %5313 = vmatprep.subr.bf16.mxu0 0
    %5314 = vmatpush2.bf16.msra.mxu0 0
    %5315 = vmatprep.subr.bf16.mxu0 0
    %5316 = vmatpush2.bf16.msra.mxu0 0
    %5317 = vmatprep.subr.bf16.mxu0 0
    %5318 = vmatpush2.bf16.msra.mxu0 0
    %5319 = vmatprep.subr.bf16.mxu0 0
    %5320 = vmatpush2.bf16.msra.mxu0 0
    %5321 = vmatprep.subr.bf16.mxu0 0
    %5322 = vmatpush2.bf16.msra.mxu0 0
    %5323 = vmatprep.subr.bf16.mxu0 0
    %5324 = vmatpush2.bf16.msra.mxu0 0
    %5325 = vmatprep.subr.bf16.mxu0 0
    %5326 = vmatpush2.bf16.msra.mxu0 0
    %5327 = vmatprep.mubr.bf16.mxu0 0
    %5328 = vmatmul.mubr.bf16.gmra.mxu0 %v544
    %v5329 = vpop.f32.mrf.mxu0
    %v5330 = vadd.f32 %v5198, %v5329
    %v5331 = vpop.f32.mrf.mxu0
    %v5332 = vpop.f32.mrf.mxu0
    %v5333 = vadd.f32 %v5198, %v5332
    %v5334 = vpop.f32.mrf.mxu0
    %5335 = vdwg.mxu0
    %v5336 = vmax.f32 %v5330, 0.0
    %v5337 = vmax.f32 %v5333, 0.0
    %5338 = vmatprep.subr.mxu0 0.0
    %5339 = vmatpush1.msra.mxu0 0.0
    %5340 = vmatprep.subr.mxu0 0.0
    %5341 = vmatpush1.msra.mxu0 0.0
    %5342 = vmatprep.subr.mxu0 0.0
    %5343 = vmatpush1.msra.mxu0 0.0
    %5344 = vmatprep.subr.mxu0 0.0
    %5345 = vmatpush1.msra.mxu0 0.0
    %5346 = vmatprep.subr.mxu0 0.0
    %5347 = vmatpush1.msra.mxu0 0.0
    %5348 = vmatprep.subr.mxu0 0.0
    %5349 = vmatpush1.msra.mxu0 0.0
    %5350 = vmatprep.subr.mxu0 0.0
    %5351 = vmatpush1.msra.mxu0 0.0
    %5352 = vmatprep.subr.mxu0 0.0
    %5353 = vmatpush1.msra.mxu0 0.0
    %5354 = vmatprep.subr.mxu0 0.0
    %5355 = vmatpush1.msra.mxu0 0.0
    %5356 = vmatprep.subr.mxu0 0.0
    %5357 = vmatpush1.msra.mxu0 0.0
    %5358 = vmatprep.subr.mxu0 0.0
    %5359 = vmatpush1.msra.mxu0 0.0
    %5360 = vmatprep.subr.mxu0 0.0
    %5361 = vmatpush1.msra.mxu0 0.0
    %5362 = vmatprep.subr.mxu0 0.0
    %5363 = vmatpush1.msra.mxu0 0.0
    %5364 = vmatprep.subr.mxu0 0.0
    %5365 = vmatpush1.msra.mxu0 0.0
    %5366 = vmatprep.subr.mxu0 0.0
    %5367 = vmatpush1.msra.mxu0 0.0
    %5368 = vmatprep.subr.mxu0 0.0
    %5369 = vmatpush1.msra.mxu0 %v5288
    %5370 = vmatprep.subr.mxu0 0.0
    %5371 = vmatpush2.msra.mxu0 0.0
    %5372 = vmatprep.subr.mxu0 0.0
    %5373 = vmatpush2.msra.mxu0 0.0
    %5374 = vmatprep.subr.mxu0 0.0
    %5375 = vmatpush2.msra.mxu0 0.0
    %5376 = vmatprep.subr.mxu0 0.0
    %5377 = vmatpush2.msra.mxu0 0.0
    %5378 = vmatprep.subr.mxu0 0.0
    %5379 = vmatpush2.msra.mxu0 0.0
    %5380 = vmatprep.subr.mxu0 0.0
    %5381 = vmatpush2.msra.mxu0 0.0
    %5382 = vmatprep.subr.mxu0 0.0
    %5383 = vmatpush2.msra.mxu0 0.0
    %5384 = vmatprep.subr.mxu0 0.0
    %5385 = vmatpush2.msra.mxu0 0.0
    %5386 = vmatprep.subr.mxu0 0.0
    %5387 = vmatpush2.msra.mxu0 0.0
    %5388 = vmatprep.subr.mxu0 0.0
    %5389 = vmatpush2.msra.mxu0 0.0
    %5390 = vmatprep.subr.mxu0 0.0
    %5391 = vmatpush2.msra.mxu0 0.0
    %5392 = vmatprep.subr.mxu0 0.0
    %5393 = vmatpush2.msra.mxu0 0.0
    %5394 = vmatprep.subr.mxu0 0.0
    %5395 = vmatpush2.msra.mxu0 0.0
    %5396 = vmatprep.subr.mxu0 0.0
    %5397 = vmatpush2.msra.mxu0 0.0
    %5398 = vmatprep.subr.mxu0 0.0
    %5399 = vmatpush2.msra.mxu0 0.0
    %5400 = vmatprep.subr.mxu0 0.0
    %5401 = vmatpush2.msra.mxu0 0.0
    %5402 = vmatprep.mubr.f32.mxu0 0.0
    %5403 = vmatmul.mubr.f32.gmra.mxu0 %v590
    %v5404 = vpop.f32.mrf.mxu0
    %v5405 = vadd.f32 0.0, %v5404
    %v5406 = vpop.f32.mrf.mxu0
    %5407 = vmatprep.mubr.f32.mxu0 0.0
    %5408 = vmatmul.mubr.f32.gmra.mxu0 %v593
    %v5409 = vpop.f32.mrf.mxu0
    %v5410 = vadd.f32 0.0, %v5409
    %v5411 = vpop.f32.mrf.mxu0
    %5412 = vdwg.mxu0
    %v5413 = vmul.f32 %v5336, %v5405
    %v5414 = vmul.f32 %v5337, %v5410
    %v5415 = vmax.f32 %v5413, %v5414
    %v5416 = vadd.f32 %v5288, %v5415
    %s5417 = sshll.u32 %s411, 4
    %5418 = dma.done %s71, %s5417
    %v5419 = vld [vmem:[%s70] sm:$0xf]
    %v5420 = vld [vmem:[%s70 + $0x10] sm:$0xf]
    %v5421 = vld [vmem:[%s70 + $0x20] sm:$0xf]
    %v5422 = vld [vmem:[%s70 + $0x30] sm:$0xf]
    %v5423 = vld [vmem:[%s70 + $0x40] sm:$0xf]
    %v5424 = vld [vmem:[%s70 + $0x50] sm:$0xf]
    %v5425 = vld [vmem:[%s70 + $0x60] sm:$0xf]
    %v5426 = vld [vmem:[%s70 + $0x70] sm:$0xf]
    %v5427 = vld [vmem:[%s70 + $0x80] sm:$0xf]
    %v5428 = vld [vmem:[%s70 + $0x90] sm:$0xf]
    %v5429 = vld [vmem:[%s70 + $0xa0] sm:$0xf]
    %v5430 = vld [vmem:[%s70 + $0xb0] sm:$0xf]
    %v5431 = vld [vmem:[%s70 + $0xc0] sm:$0xf]
    %v5432 = vld [vmem:[%s70 + $0xd0] sm:$0xf]
    %v5433 = vld [vmem:[%s70 + $0xe0] sm:$0xf]
    %v5434 = vld [vmem:[%s70 + $0xf0] sm:$0xf]
    %v5435 = vld [vmem:[%s70 + $0x100] sm:$0xf]
    %v5436 = vld [vmem:[%s70 + $0x110] sm:$0xf]
    %v5437 = vld [vmem:[#allocation6 + $0x45] ss:$0 sm:$0xff]
    %v5438 = vld [vmem:[#allocation6 + $0x46] ss:$0 sm:$0xff]
    %v5439 = vpack.c.bf16 %v5416, %v5416
    %v5456 = vunpack.c.l.b16 %v5419
    %v5457 = vunpack.c.l.b16 %v5420
    %v5458 = vunpack.c.l.b16 %v5421
    %v5459 = vunpack.c.l.b16 %v5422
    %v5460 = vunpack.c.l.b16 %v5423
    %v5461 = vunpack.c.l.b16 %v5424
    %v5462 = vunpack.c.l.b16 %v5425
    %v5463 = vunpack.c.l.b16 %v5426
    %v5464 = vunpack.c.l.b16 %v5427
    %v5465 = vunpack.c.l.b16 %v5428
    %v5466 = vunpack.c.l.b16 %v5429
    %v5467 = vunpack.c.l.b16 %v5430
    %v5468 = vunpack.c.l.b16 %v5431
    %v5469 = vunpack.c.l.b16 %v5432
    %v5470 = vunpack.c.l.b16 %v5433
    %v5471 = vunpack.c.l.b16 %v5434
    %v5472 = vpack.c.b16 %v5457, %v5456
    %v5473 = vpack.c.b16 %v5459, %v5458
    %v5474 = vpack.c.b16 %v5461, %v5460
    %v5475 = vpack.c.b16 %v5463, %v5462
    %v5476 = vpack.c.b16 %v5465, %v5464
    %v5477 = vpack.c.b16 %v5467, %v5466
    %v5478 = vpack.c.b16 %v5469, %v5468
    %v5479 = vpack.c.b16 %v5471, %v5470
    %5488 = vmatprep.subr.bf16.mxu0 0
    %5489 = vmatpush1.bf16.msra.mxu0 %v5479
    %5490 = vmatprep.subr.bf16.mxu0 0
    %5491 = vmatpush1.bf16.msra.mxu0 %v5478
    %5492 = vmatprep.subr.bf16.mxu0 0
    %5493 = vmatpush1.bf16.msra.mxu0 %v5477
    %5494 = vmatprep.subr.bf16.mxu0 0
    %5495 = vmatpush1.bf16.msra.mxu0 %v5476
    %5496 = vmatprep.subr.bf16.mxu0 0
    %5497 = vmatpush1.bf16.msra.mxu0 %v5475
    %5498 = vmatprep.subr.bf16.mxu0 0
    %5499 = vmatpush1.bf16.msra.mxu0 %v5474
    %5500 = vmatprep.subr.bf16.mxu0 0
    %5501 = vmatpush1.bf16.msra.mxu0 %v5473
    %5502 = vmatprep.subr.bf16.mxu0 0
    %5503 = vmatpush1.bf16.msra.mxu0 %v5472
    %5504 = vmatprep.subr.bf16.mxu0 0
    %5505 = vmatpush2.bf16.msra.mxu0 0
    %5506 = vmatprep.subr.bf16.mxu0 0
    %5507 = vmatpush2.bf16.msra.mxu0 0
    %5508 = vmatprep.subr.bf16.mxu0 0
    %5509 = vmatpush2.bf16.msra.mxu0 0
    %5510 = vmatprep.subr.bf16.mxu0 0
    %5511 = vmatpush2.bf16.msra.mxu0 0
    %5512 = vmatprep.subr.bf16.mxu0 0
    %5513 = vmatpush2.bf16.msra.mxu0 0
    %5514 = vmatprep.subr.bf16.mxu0 0
    %5515 = vmatpush2.bf16.msra.mxu0 0
    %5516 = vmatprep.subr.bf16.mxu0 0
    %5517 = vmatpush2.bf16.msra.mxu0 0
    %5518 = vmatprep.subr.bf16.mxu0 0
    %5519 = vmatpush2.bf16.msra.mxu0 0
    %5520 = vmatprep.mubr.bf16.mxu0 0
    %5521 = vmatmul.mubr.bf16.gmra.mxu0 %v5439
    %v5522 = vpop.f32.mrf.mxu0
    %v5523 = vadd.f32 %v5437, %v5522
    %v5524 = vpop.f32.mrf.mxu0
    %v5525 = vpop.f32.mrf.mxu0
    %v5526 = vpop.f32.mrf.mxu0
    %5527 = vdwg.mxu0
    %v5528 = vmax.f32 %v5523, 0.0
    %v5531 = vunpack.c.l.b16 %v5435
    %v5532 = vunpack.c.l.b16 %v5436
    %v5533 = vpack.c.b16 %v5532, %v5531
    %5535 = vmatprep.subr.bf16.mxu0 0
    %5536 = vmatpush1.bf16.msra.mxu0 0
    %5537 = vmatprep.subr.bf16.mxu0 0
    %5538 = vmatpush1.bf16.msra.mxu0 0
    %5539 = vmatprep.subr.bf16.mxu0 0
    %5540 = vmatpush1.bf16.msra.mxu0 0
    %5541 = vmatprep.subr.bf16.mxu0 0
    %5542 = vmatpush1.bf16.msra.mxu0 0
    %5543 = vmatprep.subr.bf16.mxu0 0
    %5544 = vmatpush1.bf16.msra.mxu0 0
    %5545 = vmatprep.subr.bf16.mxu0 0
    %5546 = vmatpush1.bf16.msra.mxu0 0
    %5547 = vmatprep.subr.bf16.mxu0 0
    %5548 = vmatpush1.bf16.msra.mxu0 0
    %5549 = vmatprep.subr.bf16.mxu0 0
    %5550 = vmatpush1.bf16.msra.mxu0 %v5533
    %5551 = vmatprep.subr.bf16.mxu0 0
    %5552 = vmatpush2.bf16.msra.mxu0 0
    %5553 = vmatprep.subr.bf16.mxu0 0
    %5554 = vmatpush2.bf16.msra.mxu0 0
    %5555 = vmatprep.subr.bf16.mxu0 0
    %5556 = vmatpush2.bf16.msra.mxu0 0
    %5557 = vmatprep.subr.bf16.mxu0 0
    %5558 = vmatpush2.bf16.msra.mxu0 0
    %5559 = vmatprep.subr.bf16.mxu0 0
    %5560 = vmatpush2.bf16.msra.mxu0 0
    %5561 = vmatprep.subr.bf16.mxu0 0
    %5562 = vmatpush2.bf16.msra.mxu0 0
    %5563 = vmatprep.subr.bf16.mxu0 0
    %5564 = vmatpush2.bf16.msra.mxu0 0
    %5565 = vmatprep.subr.bf16.mxu0 0
    %5566 = vmatpush2.bf16.msra.mxu0 0
    %5567 = vmatprep.mubr.bf16.mxu0 0
    %5568 = vmatmul.mubr.bf16.gmra.mxu0 %v544
    %v5569 = vpop.f32.mrf.mxu0
    %v5570 = vadd.f32 %v5438, %v5569
    %v5571 = vpop.f32.mrf.mxu0
    %v5572 = vpop.f32.mrf.mxu0
    %v5573 = vadd.f32 %v5438, %v5572
    %v5574 = vpop.f32.mrf.mxu0
    %5575 = vdwg.mxu0
    %v5576 = vmax.f32 %v5570, 0.0
    %v5577 = vmax.f32 %v5573, 0.0
    %5578 = vmatprep.subr.mxu0 0.0
    %5579 = vmatpush1.msra.mxu0 0.0
    %5580 = vmatprep.subr.mxu0 0.0
    %5581 = vmatpush1.msra.mxu0 0.0
    %5582 = vmatprep.subr.mxu0 0.0
    %5583 = vmatpush1.msra.mxu0 0.0
    %5584 = vmatprep.subr.mxu0 0.0
    %5585 = vmatpush1.msra.mxu0 0.0
    %5586 = vmatprep.subr.mxu0 0.0
    %5587 = vmatpush1.msra.mxu0 0.0
    %5588 = vmatprep.subr.mxu0 0.0
    %5589 = vmatpush1.msra.mxu0 0.0
    %5590 = vmatprep.subr.mxu0 0.0
    %5591 = vmatpush1.msra.mxu0 0.0
    %5592 = vmatprep.subr.mxu0 0.0
    %5593 = vmatpush1.msra.mxu0 0.0
    %5594 = vmatprep.subr.mxu0 0.0
    %5595 = vmatpush1.msra.mxu0 0.0
    %5596 = vmatprep.subr.mxu0 0.0
    %5597 = vmatpush1.msra.mxu0 0.0
    %5598 = vmatprep.subr.mxu0 0.0
    %5599 = vmatpush1.msra.mxu0 0.0
    %5600 = vmatprep.subr.mxu0 0.0
    %5601 = vmatpush1.msra.mxu0 0.0
    %5602 = vmatprep.subr.mxu0 0.0
    %5603 = vmatpush1.msra.mxu0 0.0
    %5604 = vmatprep.subr.mxu0 0.0
    %5605 = vmatpush1.msra.mxu0 0.0
    %5606 = vmatprep.subr.mxu0 0.0
    %5607 = vmatpush1.msra.mxu0 0.0
    %5608 = vmatprep.subr.mxu0 0.0
    %5609 = vmatpush1.msra.mxu0 %v5528
    %5610 = vmatprep.subr.mxu0 0.0
    %5611 = vmatpush2.msra.mxu0 0.0
    %5612 = vmatprep.subr.mxu0 0.0
    %5613 = vmatpush2.msra.mxu0 0.0
    %5614 = vmatprep.subr.mxu0 0.0
    %5615 = vmatpush2.msra.mxu0 0.0
    %5616 = vmatprep.subr.mxu0 0.0
    %5617 = vmatpush2.msra.mxu0 0.0
    %5618 = vmatprep.subr.mxu0 0.0
    %5619 = vmatpush2.msra.mxu0 0.0
    %5620 = vmatprep.subr.mxu0 0.0
    %5621 = vmatpush2.msra.mxu0 0.0
    %5622 = vmatprep.subr.mxu0 0.0
    %5623 = vmatpush2.msra.mxu0 0.0
    %5624 = vmatprep.subr.mxu0 0.0
    %5625 = vmatpush2.msra.mxu0 0.0
    %5626 = vmatprep.subr.mxu0 0.0
    %5627 = vmatpush2.msra.mxu0 0.0
    %5628 = vmatprep.subr.mxu0 0.0
    %5629 = vmatpush2.msra.mxu0 0.0
    %5630 = vmatprep.subr.mxu0 0.0
    %5631 = vmatpush2.msra.mxu0 0.0
    %5632 = vmatprep.subr.mxu0 0.0
    %5633 = vmatpush2.msra.mxu0 0.0
    %5634 = vmatprep.subr.mxu0 0.0
    %5635 = vmatpush2.msra.mxu0 0.0
    %5636 = vmatprep.subr.mxu0 0.0
    %5637 = vmatpush2.msra.mxu0 0.0
    %5638 = vmatprep.subr.mxu0 0.0
    %5639 = vmatpush2.msra.mxu0 0.0
    %5640 = vmatprep.subr.mxu0 0.0
    %5641 = vmatpush2.msra.mxu0 0.0
    %5642 = vmatprep.mubr.f32.mxu0 0.0
    %5643 = vmatmul.mubr.f32.gmra.mxu0 %v590
    %v5644 = vpop.f32.mrf.mxu0
    %v5645 = vadd.f32 0.0, %v5644
    %v5646 = vpop.f32.mrf.mxu0
    %5647 = vmatprep.mubr.f32.mxu0 0.0
    %5648 = vmatmul.mubr.f32.gmra.mxu0 %v593
    %v5649 = vpop.f32.mrf.mxu0
    %v5650 = vadd.f32 0.0, %v5649
    %v5651 = vpop.f32.mrf.mxu0
    %5652 = vdwg.mxu0
    %v5653 = vmul.f32 %v5576, %v5645
    %v5654 = vmul.f32 %v5577, %v5650
    %v5655 = vmax.f32 %v5653, %v5654
    %v5656 = vadd.f32 %v5528, %v5655
    %5657 = vst [vmem:[%s4] sm:$0xff] %v5656
    // Predicated region
    $region70: #{motion_fgnn_forward.1} parent=1 // pred_check
      _
    $region71: #{motion_fgnn_forward.1} parent=1 // pred_check_branch
      %5659 = sbr.rel (0) target = $region73
    $region72: #{motion_fgnn_forward.1} parent=1 // pred_region
      _
    $region73: #{motion_fgnn_forward.1} parent=1 // pred_fallthru
      _
    // Predicated region
    $region74: #{motion_fgnn_forward.1} parent=1 // pred_check
      _
    $region75: #{motion_fgnn_forward.1} parent=1 // pred_check_branch
      %5661 = sbr.rel (0) target = $region77
    $region76: #{motion_fgnn_forward.1} parent=1 // pred_region
      _
    $region77: #{motion_fgnn_forward.1} parent=1 // pred_fallthru
      _
    %5662 = vsyncpa [#allocation5], 1
    %5663 = vsyncpa [#allocation7], 1
  %5664 = vsyncmov [#allocation3]
  %s5665 = vpop.sfrf %5664
  %p5666 = scmp.eq.s32.totalorder %s5665, 0
  %p5667 = pneg %p5666
  %5669 = shalt.err (%p5667)
  %s5670 = scalar_lea.sflag [#allocation3], 1
  %5671 = vsyncmov %s5670
  %s5672 = vpop.sfrf %5671
  %p5673 = scmp.eq.s32.totalorder %s5672, 0
  %p5674 = pneg %p5673
  %5676 = shalt.err (%p5674)
  %s5677 = scalar_lea.sflag [#allocation3], 2
  %5678 = vsyncmov %s5677
  %s5679 = vpop.sfrf %5678
  %p5680 = scmp.eq.s32.totalorder %s5679, 0
  %p5681 = pneg %p5680
  %5683 = shalt.err (%p5681)

</llo_original>
